<compile_context>
chip_gen: v6e
topology: v6e:2x2x1
jax: 0.10.0
libtpu: 0.0.40
codegen_flags: <defaults>
</compile_context>

<pallas_src>
import functools
import numpy as np

import jax
import jax.numpy as jnp
from jax.experimental import pallas as pl
from jax.experimental.pallas import tpu as pltpu


# --------------------------------------------------------------------------
# Host-side (numpy) constant builders: gather / scatter / pooling matrices.
# --------------------------------------------------------------------------

def _conv_gather_matrix(hin, win, hout, wout, kh, kw, stride, pad, mpad):
    """G[mo, t*mpad + mi] = 1 iff input pixel mi feeds output pixel mo at tap t."""
    g = np.zeros((hout * wout, kh * kw * mpad), np.float32)
    for yo in range(hout):
        for xo in range(wout):
            for dy in range(kh):
                for dx in range(kw):
                    yi = yo * stride + dy - pad
                    xi = xo * stride + dx - pad
                    if 0 <= yi < hin and 0 <= xi < win:
                        t = dy * kw + dx
                        g[yo * wout + xo, t * mpad + yi * win + xi] = 1.0
    return g


def _deconv_scatter_matrix(hin, win, hout, wout, kh, kw, stride, pad, mpad):
    """ConvTranspose2d: input (yi,xi) scatters tap (ky,kx) to (yi*s+ky-p, xi*s+kx-p)."""
    g = np.zeros((hout * wout, kh * kw * mpad), np.float32)
    for yi in range(hin):
        for xi in range(win):
            for ky in range(kh):
                for kx in range(kw):
                    yo = yi * stride + ky - pad
                    xo = xi * stride + kx - pad
                    if 0 <= yo < hout and 0 <= xo < wout:
                        t = ky * kw + kx
                        g[yo * wout + xo, t * mpad + yi * win + xi] = 1.0
    return g


def _pool_select_matrices(hin, win, k, stride):
    hout = (hin - k) // stride + 1
    wout = (win - k) // stride + 1
    p = np.zeros((k * k, hout * wout, hin * win), np.float32)
    for a in range(k):
        for b in range(k):
            for i in range(hout):
                for j in range(wout):
                    p[a * k + b, i * wout + j,
                      (i * stride + a) * win + (j * stride + b)] = 1.0
    return p


def _col1_gather_indices():
    """Flat indices into the padded 30x30 input for the fused conv1+pool1 stage.

    idx[q, p, t]: q = 2x2 pool-window position, p = 5x5 pool-output position,
    t = 3x3 conv tap (conv1 is stride 3, padding 1)."""
    idx = np.zeros((4, 25, 9), np.int32)
    for a in range(2):
        for b in range(2):
            for i in range(5):
                for j in range(5):
                    for dy in range(3):
                        for dx in range(3):
                            yy = 3 * (2 * i + a) + dy        # padded coords
                            xx = 3 * (2 * j + b) + dx
                            idx[a * 2 + b, i * 5 + j, dy * 3 + dx] = yy * 30 + xx
    return idx


# Sublane-aligned per-tap strides inside the shared tap-stacking scratch.
_MP_C2 = 32                 # conv2:   Min = 5*5 = 25 -> pad to 32
_MP_D1 = 8                  # deconv1: Min = 2*2 = 4  -> pad to 8
_MP_D2 = 32                 # deconv2: Min = 5*5 = 25 -> pad to 32
_ZROWS = 25 * _MP_D2        # 800 rows: largest tap stack (deconv2), reused by all

_G_CONV2 = _conv_gather_matrix(5, 5, 3, 3, 3, 3, 2, 1, _MP_C2)          # (9, 288)
_P_POOL2 = _pool_select_matrices(3, 3, 2, 1)                            # (4, 4, 9)
_G_DECONV1 = _deconv_scatter_matrix(2, 2, 5, 5, 3, 3, 2, 0, _MP_D1)     # (25, 72)
_G_DECONV2 = _deconv_scatter_matrix(5, 5, 15, 15, 5, 5, 3, 1, _MP_D2)   # (225, 800)
_COL1_IDX = _col1_gather_indices().reshape(-1)                          # (900,)


# --------------------------------------------------------------------------
# Fused whole-network Pallas kernel (one grid step == one image).
# --------------------------------------------------------------------------

def _autoencoder_kernel(col1_ref, w1_ref, b1_ref,
                        w2_ref, b2_ref, g2_ref, p2_ref,
                        wd1_ref, bd1_ref, gd1_ref,
                        wd2_ref, bd2_ref, gd2_ref,
                        w3_ref, b3_ref,
                        out_ref, zbig_ref):
    f32 = jnp.float32

    # Shared tap-stacking scratch (reused by conv2 / deconv1 / deconv2).  Zero it
    # once so the sublane-alignment pad rows contribute exact zeros to the
    # gather/scatter matmuls (their G columns are zero, but stale VMEM could
    # otherwise hold NaNs).
    zbig_ref[...] = jnp.zeros_like(zbig_ref)

    # ---- encoder: Conv2d(1,64,3,s3,p1) + ReLU + MaxPool2d(2,2)  (fused, VPU) --
    w1 = w1_ref[...]                                   # (9, 64)  tap-major
    pooled = None
    for q in range(4):                                 # 2x2 pool-window positions
        col = col1_ref[0, q]                           # (25, 9) [pool pixel, tap]
        acc = jnp.zeros((25, 64), f32)
        for t in range(9):                             # 9 broadcast FMAs (VPU)
            acc = acc + col[:, t:t + 1] * w1[t:t + 1, :]
        pooled = acc if pooled is None else jnp.maximum(pooled, acc)
    h1 = jnp.maximum(pooled + b1_ref[...], 0.0)        # (25, 64) == 5x5x64

    # ---- encoder: Conv2d(64,64,3,s2,p1) + ReLU ----
    for t in range(9):
        z = jnp.dot(h1, w2_ref[t], preferred_element_type=f32)        # (25, 64)
        zbig_ref[t * _MP_C2:t * _MP_C2 + 25, :] = z
    c2 = jnp.dot(g2_ref[...], zbig_ref[0:9 * _MP_C2, :],
                 preferred_element_type=f32)                          # (9, 64)
    c2 = jnp.maximum(c2 + b2_ref[...], 0.0)                           # 3x3x64

    # ---- encoder: MaxPool2d(2, stride=1) via 4 selection matmuls + max ----
    h2 = None
    for q in range(4):
        v = jnp.dot(p2_ref[q], c2, preferred_element_type=f32)        # (4, 64)
        h2 = v if h2 is None else jnp.maximum(h2, v)                  # 2x2x64

    # ---- decoder: ConvTranspose2d(64,64,3,s2) + ReLU ----
    for t in range(9):
        z = jnp.dot(h2, wd1_ref[t], preferred_element_type=f32)       # (4, 64)
        zbig_ref[t * _MP_D1:t * _MP_D1 + 4, :] = z
    d1 = jnp.dot(gd1_ref[...], zbig_ref[0:9 * _MP_D1, :],
                 preferred_element_type=f32)                          # (25, 64)
    d1 = jnp.maximum(d1 + bd1_ref[...], 0.0)                          # 5x5x64

    # ---- decoder: ConvTranspose2d(64,64,5,s3,p1) + ReLU ----
    for t in range(25):
        z = jnp.dot(d1, wd2_ref[t], preferred_element_type=f32)       # (25, 64)
        zbig_ref[t * _MP_D2:t * _MP_D2 + 25, :] = z
    d2 = jnp.dot(gd2_ref[...], zbig_ref[...],
                 preferred_element_type=f32)                          # (225, 64)
    d2 = jnp.maximum(d2 + bd2_ref[...], 0.0)                          # 15x15x64

    # ---- decoder: ConvTranspose2d(64,1,2,s2,p1) + Sigmoid ----
    # Every output pixel has exactly one contributing tap, so this is a single
    # (225,64)x(64,4) matmul producing the 4 stride-2 sub-pixel planes; the
    # interleave to 28x28 is a pure reindex done in the wrapper.
    p = jnp.dot(d2, w3_ref[...], preferred_element_type=f32) + b3_ref[...]
    out_ref[0] = jax.nn.sigmoid(p)                                    # (225, 4)


# --------------------------------------------------------------------------
# Wrapper.
# --------------------------------------------------------------------------

def _const_spec(shape):
    nd = len(shape)
    return pl.BlockSpec(shape, lambda b, _nd=nd: (0,) * _nd)


def model_forward(params, x_nchw):
    B = x_nchw.shape[0]
    x = x_nchw.reshape(B, 28, 28).astype(jnp.float32)

    # Fused conv1+pool1 input gather (network input only; 3.6 KB per image).
    xp = jnp.pad(x, ((0, 0), (1, 1), (1, 1)))                  # (B, 30, 30)
    col1 = jnp.take(xp.reshape(B, 900), jnp.asarray(_COL1_IDX), axis=1)
    col1 = col1.reshape(B, 4, 25, 9)

    # Tap-major weight layouts (tiny one-time transposes).
    w1 = jnp.transpose(params["conv1_w"][:, 0], (1, 2, 0)).reshape(9, 64)
    w2 = jnp.transpose(params["conv2_w"], (2, 3, 1, 0)).reshape(9, 64, 64)
    wd1 = jnp.transpose(params["deconv1_w"], (2, 3, 0, 1)).reshape(9, 64, 64)
    wd2 = jnp.transpose(params["deconv2_w"], (2, 3, 0, 1)).reshape(25, 64, 64)
    w3 = params["deconv3_w"][:, 0].reshape(64, 4)

    b1 = params["conv1_b"].reshape(1, 64)
    b2 = params["conv2_b"].reshape(1, 64)
    bd1 = params["deconv1_b"].reshape(1, 64)
    bd2 = params["deconv2_b"].reshape(1, 64)
    b3 = params["deconv3_b"].reshape(1, 1)

    g2 = jnp.asarray(_G_CONV2)
    p2 = jnp.asarray(_P_POOL2)
    gd1 = jnp.asarray(_G_DECONV1)
    gd2 = jnp.asarray(_G_DECONV2)

    in_arrays = (col1, w1, b1, w2, b2, g2, p2, wd1, bd1, gd1, wd2, bd2, gd2, w3, b3)

    macs = B * (4 * 25 * 9 * 64 + 9 * 25 * 64 * 64 + 9 * 288 * 64
                + 4 * 4 * 9 * 64 + 9 * 4 * 64 * 64 + 25 * 72 * 64
                + 25 * 25 * 64 * 64 + 225 * 800 * 64 + 225 * 64 * 4)
    bytes_accessed = int(sum(int(a.size) for a in in_arrays) * 4 + B * 225 * 4 * 4)

    grid_spec = pltpu.PrefetchScalarGridSpec(
        num_scalar_prefetch=0,
        grid=(B,),
        in_specs=[
            pl.BlockSpec((1, 4, 25, 9), lambda b: (b, 0, 0, 0)),   # col1 per image
            _const_spec((9, 64)), _const_spec((1, 64)),            # w1, b1
            _const_spec((9, 64, 64)), _const_spec((1, 64)),        # w2, b2
            _const_spec((9, 9 * _MP_C2)), _const_spec((4, 4, 9)),  # G2, P2
            _const_spec((9, 64, 64)), _const_spec((1, 64)),        # wd1, bd1
            _const_spec((25, 9 * _MP_D1)),                         # Gd1
            _const_spec((25, 64, 64)), _const_spec((1, 64)),       # wd2, bd2
            _const_spec((225, 25 * _MP_D2)),                       # Gd2
            _const_spec((64, 4)), _const_spec((1, 1)),             # w3, b3
        ],
        out_specs=pl.BlockSpec((1, 225, 4), lambda b: (b, 0, 0)),
        scratch_shapes=[pltpu.VMEM((_ZROWS, 64), jnp.float32)],
    )

    planes = pl.pallas_call(
        _autoencoder_kernel,
        out_shape=jax.ShapeDtypeStruct((B, 225, 4), jnp.float32),
        grid_spec=grid_spec,
        compiler_params=pltpu.CompilerParams(
            dimension_semantics=("parallel",),
            vmem_limit_bytes=32 * 1024 * 1024),
        cost_estimate=pl.CostEstimate(
            flops=2 * macs,
            transcendentals=B * 225 * 4,
            bytes_accessed=bytes_accessed),
    )(*in_arrays)

    # deconv3 sub-pixel interleave:
    #   planes[b, iy*15+ix, ky*2+kx] -> out[b, 2*iy+ky-1, 2*ix+kx-1]
    r = planes.reshape(B, 15, 15, 2, 2)
    r = jnp.transpose(r, (0, 1, 3, 2, 4)).reshape(B, 30, 30)
    return r[:, 1:29, 1:29].reshape(B, 1, 28, 28)


# --------------------------------------------------------------------------
# Pure-JAX reference (same PyTorch semantics) and parameter init.
# --------------------------------------------------------------------------

def _reference_forward(params, x_nchw):
    dn = ("NCHW", "OIHW", "NCHW")
    prec = jax.lax.Precision.HIGHEST

    def conv(x, w, b, stride, pad):
        y = jax.lax.conv_general_dilated(
            x, w, (stride, stride), [(pad, pad), (pad, pad)],
            dimension_numbers=dn, precision=prec)
        return y + b.reshape(1, -1, 1, 1)

    def conv_t(x, w, b, stride, pad):
        k = w.shape[2]
        wf = jnp.transpose(w[:, :, ::-1, ::-1], (1, 0, 2, 3))
        y = jax.lax.conv_general_dilated(
            x, wf, (1, 1), [(k - 1 - pad, k - 1 - pad)] * 2,
            lhs_dilation=(stride, stride), dimension_numbers=dn, precision=prec)
        return y + b.reshape(1, -1, 1, 1)

    def pool(x, k, s):
        return jax.lax.reduce_window(x, -jnp.inf, jax.lax.max,
                                     (1, 1, k, k), (1, 1, s, s), "VALID")

    h = jax.nn.relu(conv(x_nchw, params["conv1_w"], params["conv1_b"], 3, 1))
    h = pool(h, 2, 2)
    h = jax.nn.relu(conv(h, params["conv2_w"], params["conv2_b"], 2, 1))
    h = pool(h, 2, 1)
    h = jax.nn.relu(conv_t(h, params["deconv1_w"], params["deconv1_b"], 2, 0))
    h = jax.nn.relu(conv_t(h, params["deconv2_w"], params["deconv2_b"], 3, 1))
    return jax.nn.sigmoid(conv_t(h, params["deconv3_w"], params["deconv3_b"], 2, 1))


def init_params(key):
    def uinit(k, shape, fan_in):
        bound = 1.0 / (fan_in ** 0.5)
        return jax.random.uniform(k, shape, jnp.float32, -bound, bound)

    ks = jax.random.split(key, 10)
    return {
        "conv1_w": uinit(ks[0], (64, 1, 3, 3), 1 * 3 * 3),
        "conv1_b": uinit(ks[1], (64,), 1 * 3 * 3),
        "conv2_w": uinit(ks[2], (64, 64, 3, 3), 64 * 3 * 3),
        "conv2_b": uinit(ks[3], (64,), 64 * 3 * 3),
        "deconv1_w": uinit(ks[4], (64, 64, 3, 3), 64 * 3 * 3),
        "deconv1_b": uinit(ks[5], (64,), 64 * 3 * 3),
        "deconv2_w": uinit(ks[6], (64, 64, 5, 5), 64 * 5 * 5),
        "deconv2_b": uinit(ks[7], (64,), 64 * 5 * 5),
        "deconv3_w": uinit(ks[8], (64, 1, 2, 2), 64 * 2 * 2),
        "deconv3_b": uinit(ks[9], (1,), 64 * 2 * 2),
    }


if __name__ == "__main__":
    key = jax.random.PRNGKey(0)
    pkey, xkey = jax.random.split(key)
    params = init_params(pkey)
    # MNIST-like input implied by the module (1 channel, 28x28).
    x = jax.random.uniform(xkey, (2, 1, 28, 28), jnp.float32)

    y = jax.jit(model_forward)(params, x)
    y = jax.block_until_ready(y)
    assert y.shape == (2, 1, 28, 28), y.shape
    assert bool(jnp.all(jnp.isfinite(y)))
    assert bool(jnp.all((y >= 0.0) & (y <= 1.0)))

    y_ref = jax.block_until_ready(jax.jit(_reference_forward)(params, x))
    err = float(jnp.max(jnp.abs(y - y_ref)))
    assert err < 2e-2, f"mismatch vs pure-JAX reference: {err}"

    print("KERNEL_OK")
</pallas_src>

<mosaic_0001>
module attributes {stable_mosaic.version = 11 : i64} {
  func.func @_autoencoder_kernel(%arg0: i32, %arg1: memref<1x4x25x9xf32, #tpu.memory_space<vmem>>, %arg2: memref<9x64xf32, #tpu.memory_space<vmem>>, %arg3: memref<1x64xf32, #tpu.memory_space<vmem>>, %arg4: memref<9x64x64xf32, #tpu.memory_space<vmem>>, %arg5: memref<1x64xf32, #tpu.memory_space<vmem>>, %arg6: memref<9x288xf32, #tpu.memory_space<vmem>>, %arg7: memref<4x4x9xf32, #tpu.memory_space<vmem>>, %arg8: memref<9x64x64xf32, #tpu.memory_space<vmem>>, %arg9: memref<1x64xf32, #tpu.memory_space<vmem>>, %arg10: memref<25x72xf32, #tpu.memory_space<vmem>>, %arg11: memref<25x64x64xf32, #tpu.memory_space<vmem>>, %arg12: memref<1x64xf32, #tpu.memory_space<vmem>>, %arg13: memref<225x800xf32, #tpu.memory_space<vmem>>, %arg14: memref<64x4xf32, #tpu.memory_space<vmem>>, %arg15: memref<1x1xf32, #tpu.memory_space<vmem>>, %arg16: memref<1x225x4xf32, #tpu.memory_space<vmem>>, %arg17: memref<800x64xf32, #tpu.memory_space<vmem>>) attributes {dimension_semantics = [#tpu.dimension_semantics<parallel>], iteration_bounds = array<i64: 2>, scalar_prefetch = 0 : i64, scratch_operands = 1 : i64, tpu.core_type = #tpu.core_type<tc>, window_params = [{transform_indices = @transform_0, window_bounds = array<i64: 1, 4, 25, 9>}, {pipeline_mode = #tpu.pipeline_mode<synchronous>, transform_indices = @transform_1, window_bounds = array<i64: 9, 64>}, {pipeline_mode = #tpu.pipeline_mode<synchronous>, transform_indices = @transform_2, window_bounds = array<i64: 1, 64>}, {pipeline_mode = #tpu.pipeline_mode<synchronous>, transform_indices = @transform_3, window_bounds = array<i64: 9, 64, 64>}, {pipeline_mode = #tpu.pipeline_mode<synchronous>, transform_indices = @transform_4, window_bounds = array<i64: 1, 64>}, {pipeline_mode = #tpu.pipeline_mode<synchronous>, transform_indices = @transform_5, window_bounds = array<i64: 9, 288>}, {pipeline_mode = #tpu.pipeline_mode<synchronous>, transform_indices = @transform_6, window_bounds = array<i64: 4, 4, 9>}, {pipeline_mode = #tpu.pipeline_mode<synchronous>, transform_indices = @transform_7, window_bounds = array<i64: 9, 64, 64>}, {pipeline_mode = #tpu.pipeline_mode<synchronous>, transform_indices = @transform_8, window_bounds = array<i64: 1, 64>}, {pipeline_mode = #tpu.pipeline_mode<synchronous>, transform_indices = @transform_9, window_bounds = array<i64: 25, 72>}, {pipeline_mode = #tpu.pipeline_mode<synchronous>, transform_indices = @transform_10, window_bounds = array<i64: 25, 64, 64>}, {pipeline_mode = #tpu.pipeline_mode<synchronous>, transform_indices = @transform_11, window_bounds = array<i64: 1, 64>}, {pipeline_mode = #tpu.pipeline_mode<synchronous>, transform_indices = @transform_12, window_bounds = array<i64: 225, 800>}, {pipeline_mode = #tpu.pipeline_mode<synchronous>, transform_indices = @transform_13, window_bounds = array<i64: 64, 4>}, {pipeline_mode = #tpu.pipeline_mode<synchronous>, transform_indices = @transform_14, window_bounds = array<i64: 1, 1>}, {transform_indices = @transform_15, window_bounds = array<i64: 1, 225, 4>}]} {
    %cst = arith.constant 0.000000e+00 : f32
    %0 = vector.broadcast %cst : f32 to vector<800x64xf32>
    %c0 = arith.constant 0 : index
    %c0_0 = arith.constant 0 : index
    %1 = vector.load %arg17[%c0, %c0_0] : memref<800x64xf32, #tpu.memory_space<vmem>>, vector<800x64xf32>
    tpu.vector_store %arg17[%c0, %c0_0], %0 {strides = array<i32>} : memref<800x64xf32, #tpu.memory_space<vmem>>, vector<800x64xf32>,
    %c0_1 = arith.constant 0 : index
    %c0_2 = arith.constant 0 : index
    %2 = vector.load %arg2[%c0_1, %c0_2] : memref<9x64xf32, #tpu.memory_space<vmem>>, vector<9x64xf32>
    %c0_3 = arith.constant 0 : index
    %c0_4 = arith.constant 0 : index
    %c0_5 = arith.constant 0 : index
    %c0_6 = arith.constant 0 : index
    %3 = vector.load %arg1[%c0_3, %c0_4, %c0_5, %c0_6] : memref<1x4x25x9xf32, #tpu.memory_space<vmem>>, vector<1x1x25x9xf32>
    %4 = vector.shape_cast %3 : vector<1x1x25x9xf32> to vector<25x9xf32>
    %cst_7 = arith.constant 0.000000e+00 : f32
    %5 = vector.broadcast %cst_7 : f32 to vector<25x64xf32>
    %6 = vector.extract_strided_slice %4 {offsets = [0, 0], sizes = [25, 1], strides = [1, 1]} : vector<25x9xf32> to vector<25x1xf32>
    %7 = vector.extract_strided_slice %2 {offsets = [0, 0], sizes = [1, 64], strides = [1, 1]} : vector<9x64xf32> to vector<1x64xf32>
    %8 = vector.broadcast %6 : vector<25x1xf32> to vector<25x64xf32>
    %9 = vector.broadcast %7 : vector<1x64xf32> to vector<25x64xf32>
    %10 = arith.mulf %8, %9 : vector<25x64xf32>
    %11 = arith.addf %5, %10 : vector<25x64xf32>
    %12 = vector.extract_strided_slice %4 {offsets = [0, 1], sizes = [25, 1], strides = [1, 1]} : vector<25x9xf32> to vector<25x1xf32>
    %13 = vector.extract_strided_slice %2 {offsets = [1, 0], sizes = [1, 64], strides = [1, 1]} : vector<9x64xf32> to vector<1x64xf32>
    %14 = vector.broadcast %12 : vector<25x1xf32> to vector<25x64xf32>
    %15 = vector.broadcast %13 : vector<1x64xf32> to vector<25x64xf32>
    %16 = arith.mulf %14, %15 : vector<25x64xf32>
    %17 = arith.addf %11, %16 : vector<25x64xf32>
    %18 = vector.extract_strided_slice %4 {offsets = [0, 2], sizes = [25, 1], strides = [1, 1]} : vector<25x9xf32> to vector<25x1xf32>
    %19 = vector.extract_strided_slice %2 {offsets = [2, 0], sizes = [1, 64], strides = [1, 1]} : vector<9x64xf32> to vector<1x64xf32>
    %20 = vector.broadcast %18 : vector<25x1xf32> to vector<25x64xf32>
    %21 = vector.broadcast %19 : vector<1x64xf32> to vector<25x64xf32>
    %22 = arith.mulf %20, %21 : vector<25x64xf32>
    %23 = arith.addf %17, %22 : vector<25x64xf32>
    %24 = vector.extract_strided_slice %4 {offsets = [0, 3], sizes = [25, 1], strides = [1, 1]} : vector<25x9xf32> to vector<25x1xf32>
    %25 = vector.extract_strided_slice %2 {offsets = [3, 0], sizes = [1, 64], strides = [1, 1]} : vector<9x64xf32> to vector<1x64xf32>
    %26 = vector.broadcast %24 : vector<25x1xf32> to vector<25x64xf32>
    %27 = vector.broadcast %25 : vector<1x64xf32> to vector<25x64xf32>
    %28 = arith.mulf %26, %27 : vector<25x64xf32>
    %29 = arith.addf %23, %28 : vector<25x64xf32>
    %30 = vector.extract_strided_slice %4 {offsets = [0, 4], sizes = [25, 1], strides = [1, 1]} : vector<25x9xf32> to vector<25x1xf32>
    %31 = vector.extract_strided_slice %2 {offsets = [4, 0], sizes = [1, 64], strides = [1, 1]} : vector<9x64xf32> to vector<1x64xf32>
    %32 = vector.broadcast %30 : vector<25x1xf32> to vector<25x64xf32>
    %33 = vector.broadcast %31 : vector<1x64xf32> to vector<25x64xf32>
    %34 = arith.mulf %32, %33 : vector<25x64xf32>
    %35 = arith.addf %29, %34 : vector<25x64xf32>
    %36 = vector.extract_strided_slice %4 {offsets = [0, 5], sizes = [25, 1], strides = [1, 1]} : vector<25x9xf32> to vector<25x1xf32>
    %37 = vector.extract_strided_slice %2 {offsets = [5, 0], sizes = [1, 64], strides = [1, 1]} : vector<9x64xf32> to vector<1x64xf32>
    %38 = vector.broadcast %36 : vector<25x1xf32> to vector<25x64xf32>
    %39 = vector.broadcast %37 : vector<1x64xf32> to vector<25x64xf32>
    %40 = arith.mulf %38, %39 : vector<25x64xf32>
    %41 = arith.addf %35, %40 : vector<25x64xf32>
    %42 = vector.extract_strided_slice %4 {offsets = [0, 6], sizes = [25, 1], strides = [1, 1]} : vector<25x9xf32> to vector<25x1xf32>
    %43 = vector.extract_strided_slice %2 {offsets = [6, 0], sizes = [1, 64], strides = [1, 1]} : vector<9x64xf32> to vector<1x64xf32>
    %44 = vector.broadcast %42 : vector<25x1xf32> to vector<25x64xf32>
    %45 = vector.broadcast %43 : vector<1x64xf32> to vector<25x64xf32>
    %46 = arith.mulf %44, %45 : vector<25x64xf32>
    %47 = arith.addf %41, %46 : vector<25x64xf32>
    %48 = vector.extract_strided_slice %4 {offsets = [0, 7], sizes = [25, 1], strides = [1, 1]} : vector<25x9xf32> to vector<25x1xf32>
    %49 = vector.extract_strided_slice %2 {offsets = [7, 0], sizes = [1, 64], strides = [1, 1]} : vector<9x64xf32> to vector<1x64xf32>
    %50 = vector.broadcast %48 : vector<25x1xf32> to vector<25x64xf32>
    %51 = vector.broadcast %49 : vector<1x64xf32> to vector<25x64xf32>
    %52 = arith.mulf %50, %51 : vector<25x64xf32>
    %53 = arith.addf %47, %52 : vector<25x64xf32>
    %54 = vector.extract_strided_slice %4 {offsets = [0, 8], sizes = [25, 1], strides = [1, 1]} : vector<25x9xf32> to vector<25x1xf32>
    %55 = vector.extract_strided_slice %2 {offsets = [8, 0], sizes = [1, 64], strides = [1, 1]} : vector<9x64xf32> to vector<1x64xf32>
    %56 = vector.broadcast %54 : vector<25x1xf32> to vector<25x64xf32>
    %57 = vector.broadcast %55 : vector<1x64xf32> to vector<25x64xf32>
    %58 = arith.mulf %56, %57 : vector<25x64xf32>
    %59 = arith.addf %53, %58 : vector<25x64xf32>
    %c0_8 = arith.constant 0 : index
    %c1 = arith.constant 1 : index
    %c0_9 = arith.constant 0 : index
    %c0_10 = arith.constant 0 : index
    %60 = vector.load %arg1[%c0_8, %c1, %c0_9, %c0_10] : memref<1x4x25x9xf32, #tpu.memory_space<vmem>>, vector<1x1x25x9xf32>
    %61 = vector.shape_cast %60 : vector<1x1x25x9xf32> to vector<25x9xf32>
    %cst_11 = arith.constant 0.000000e+00 : f32
    %62 = vector.broadcast %cst_11 : f32 to vector<25x64xf32>
    %63 = vector.extract_strided_slice %61 {offsets = [0, 0], sizes = [25, 1], strides = [1, 1]} : vector<25x9xf32> to vector<25x1xf32>
    %64 = vector.extract_strided_slice %2 {offsets = [0, 0], sizes = [1, 64], strides = [1, 1]} : vector<9x64xf32> to vector<1x64xf32>
    %65 = vector.broadcast %63 : vector<25x1xf32> to vector<25x64xf32>
    %66 = vector.broadcast %64 : vector<1x64xf32> to vector<25x64xf32>
    %67 = arith.mulf %65, %66 : vector<25x64xf32>
    %68 = arith.addf %62, %67 : vector<25x64xf32>
    %69 = vector.extract_strided_slice %61 {offsets = [0, 1], sizes = [25, 1], strides = [1, 1]} : vector<25x9xf32> to vector<25x1xf32>
    %70 = vector.extract_strided_slice %2 {offsets = [1, 0], sizes = [1, 64], strides = [1, 1]} : vector<9x64xf32> to vector<1x64xf32>
    %71 = vector.broadcast %69 : vector<25x1xf32> to vector<25x64xf32>
    %72 = vector.broadcast %70 : vector<1x64xf32> to vector<25x64xf32>
    %73 = arith.mulf %71, %72 : vector<25x64xf32>
    %74 = arith.addf %68, %73 : vector<25x64xf32>
    %75 = vector.extract_strided_slice %61 {offsets = [0, 2], sizes = [25, 1], strides = [1, 1]} : vector<25x9xf32> to vector<25x1xf32>
    %76 = vector.extract_strided_slice %2 {offsets = [2, 0], sizes = [1, 64], strides = [1, 1]} : vector<9x64xf32> to vector<1x64xf32>
    %77 = vector.broadcast %75 : vector<25x1xf32> to vector<25x64xf32>
    %78 = vector.broadcast %76 : vector<1x64xf32> to vector<25x64xf32>
    %79 = arith.mulf %77, %78 : vector<25x64xf32>
    %80 = arith.addf %74, %79 : vector<25x64xf32>
    %81 = vector.extract_strided_slice %61 {offsets = [0, 3], sizes = [25, 1], strides = [1, 1]} : vector<25x9xf32> to vector<25x1xf32>
    %82 = vector.extract_strided_slice %2 {offsets = [3, 0], sizes = [1, 64], strides = [1, 1]} : vector<9x64xf32> to vector<1x64xf32>
    %83 = vector.broadcast %81 : vector<25x1xf32> to vector<25x64xf32>
    %84 = vector.broadcast %82 : vector<1x64xf32> to vector<25x64xf32>
    %85 = arith.mulf %83, %84 : vector<25x64xf32>
    %86 = arith.addf %80, %85 : vector<25x64xf32>
    %87 = vector.extract_strided_slice %61 {offsets = [0, 4], sizes = [25, 1], strides = [1, 1]} : vector<25x9xf32> to vector<25x1xf32>
    %88 = vector.extract_strided_slice %2 {offsets = [4, 0], sizes = [1, 64], strides = [1, 1]} : vector<9x64xf32> to vector<1x64xf32>
    %89 = vector.broadcast %87 : vector<25x1xf32> to vector<25x64xf32>
    %90 = vector.broadcast %88 : vector<1x64xf32> to vector<25x64xf32>
    %91 = arith.mulf %89, %90 : vector<25x64xf32>
    %92 = arith.addf %86, %91 : vector<25x64xf32>
    %93 = vector.extract_strided_slice %61 {offsets = [0, 5], sizes = [25, 1], strides = [1, 1]} : vector<25x9xf32> to vector<25x1xf32>
    %94 = vector.extract_strided_slice %2 {offsets = [5, 0], sizes = [1, 64], strides = [1, 1]} : vector<9x64xf32> to vector<1x64xf32>
    %95 = vector.broadcast %93 : vector<25x1xf32> to vector<25x64xf32>
    %96 = vector.broadcast %94 : vector<1x64xf32> to vector<25x64xf32>
    %97 = arith.mulf %95, %96 : vector<25x64xf32>
    %98 = arith.addf %92, %97 : vector<25x64xf32>
    %99 = vector.extract_strided_slice %61 {offsets = [0, 6], sizes = [25, 1], strides = [1, 1]} : vector<25x9xf32> to vector<25x1xf32>
    %100 = vector.extract_strided_slice %2 {offsets = [6, 0], sizes = [1, 64], strides = [1, 1]} : vector<9x64xf32> to vector<1x64xf32>
    %101 = vector.broadcast %99 : vector<25x1xf32> to vector<25x64xf32>
    %102 = vector.broadcast %100 : vector<1x64xf32> to vector<25x64xf32>
    %103 = arith.mulf %101, %102 : vector<25x64xf32>
    %104 = arith.addf %98, %103 : vector<25x64xf32>
    %105 = vector.extract_strided_slice %61 {offsets = [0, 7], sizes = [25, 1], strides = [1, 1]} : vector<25x9xf32> to vector<25x1xf32>
    %106 = vector.extract_strided_slice %2 {offsets = [7, 0], sizes = [1, 64], strides = [1, 1]} : vector<9x64xf32> to vector<1x64xf32>
    %107 = vector.broadcast %105 : vector<25x1xf32> to vector<25x64xf32>
    %108 = vector.broadcast %106 : vector<1x64xf32> to vector<25x64xf32>
    %109 = arith.mulf %107, %108 : vector<25x64xf32>
    %110 = arith.addf %104, %109 : vector<25x64xf32>
    %111 = vector.extract_strided_slice %61 {offsets = [0, 8], sizes = [25, 1], strides = [1, 1]} : vector<25x9xf32> to vector<25x1xf32>
    %112 = vector.extract_strided_slice %2 {offsets = [8, 0], sizes = [1, 64], strides = [1, 1]} : vector<9x64xf32> to vector<1x64xf32>
    %113 = vector.broadcast %111 : vector<25x1xf32> to vector<25x64xf32>
    %114 = vector.broadcast %112 : vector<1x64xf32> to vector<25x64xf32>
    %115 = arith.mulf %113, %114 : vector<25x64xf32>
    %116 = arith.addf %110, %115 : vector<25x64xf32>
    %117 = arith.maximumf %59, %116 : vector<25x64xf32>
    %c0_12 = arith.constant 0 : index
    %c2 = arith.constant 2 : index
    %c0_13 = arith.constant 0 : index
    %c0_14 = arith.constant 0 : index
    %118 = vector.load %arg1[%c0_12, %c2, %c0_13, %c0_14] : memref<1x4x25x9xf32, #tpu.memory_space<vmem>>, vector<1x1x25x9xf32>
    %119 = vector.shape_cast %118 : vector<1x1x25x9xf32> to vector<25x9xf32>
    %cst_15 = arith.constant 0.000000e+00 : f32
    %120 = vector.broadcast %cst_15 : f32 to vector<25x64xf32>
    %121 = vector.extract_strided_slice %119 {offsets = [0, 0], sizes = [25, 1], strides = [1, 1]} : vector<25x9xf32> to vector<25x1xf32>
    %122 = vector.extract_strided_slice %2 {offsets = [0, 0], sizes = [1, 64], strides = [1, 1]} : vector<9x64xf32> to vector<1x64xf32>
    %123 = vector.broadcast %121 : vector<25x1xf32> to vector<25x64xf32>
    %124 = vector.broadcast %122 : vector<1x64xf32> to vector<25x64xf32>
    %125 = arith.mulf %123, %124 : vector<25x64xf32>
    %126 = arith.addf %120, %125 : vector<25x64xf32>
    %127 = vector.extract_strided_slice %119 {offsets = [0, 1], sizes = [25, 1], strides = [1, 1]} : vector<25x9xf32> to vector<25x1xf32>
    %128 = vector.extract_strided_slice %2 {offsets = [1, 0], sizes = [1, 64], strides = [1, 1]} : vector<9x64xf32> to vector<1x64xf32>
    %129 = vector.broadcast %127 : vector<25x1xf32> to vector<25x64xf32>
    %130 = vector.broadcast %128 : vector<1x64xf32> to vector<25x64xf32>
    %131 = arith.mulf %129, %130 : vector<25x64xf32>
    %132 = arith.addf %126, %131 : vector<25x64xf32>
    %133 = vector.extract_strided_slice %119 {offsets = [0, 2], sizes = [25, 1], strides = [1, 1]} : vector<25x9xf32> to vector<25x1xf32>
    %134 = vector.extract_strided_slice %2 {offsets = [2, 0], sizes = [1, 64], strides = [1, 1]} : vector<9x64xf32> to vector<1x64xf32>
    %135 = vector.broadcast %133 : vector<25x1xf32> to vector<25x64xf32>
    %136 = vector.broadcast %134 : vector<1x64xf32> to vector<25x64xf32>
    %137 = arith.mulf %135, %136 : vector<25x64xf32>
    %138 = arith.addf %132, %137 : vector<25x64xf32>
    %139 = vector.extract_strided_slice %119 {offsets = [0, 3], sizes = [25, 1], strides = [1, 1]} : vector<25x9xf32> to vector<25x1xf32>
    %140 = vector.extract_strided_slice %2 {offsets = [3, 0], sizes = [1, 64], strides = [1, 1]} : vector<9x64xf32> to vector<1x64xf32>
    %141 = vector.broadcast %139 : vector<25x1xf32> to vector<25x64xf32>
    %142 = vector.broadcast %140 : vector<1x64xf32> to vector<25x64xf32>
    %143 = arith.mulf %141, %142 : vector<25x64xf32>
    %144 = arith.addf %138, %143 : vector<25x64xf32>
    %145 = vector.extract_strided_slice %119 {offsets = [0, 4], sizes = [25, 1], strides = [1, 1]} : vector<25x9xf32> to vector<25x1xf32>
    %146 = vector.extract_strided_slice %2 {offsets = [4, 0], sizes = [1, 64], strides = [1, 1]} : vector<9x64xf32> to vector<1x64xf32>
    %147 = vector.broadcast %145 : vector<25x1xf32> to vector<25x64xf32>
    %148 = vector.broadcast %146 : vector<1x64xf32> to vector<25x64xf32>
    %149 = arith.mulf %147, %148 : vector<25x64xf32>
    %150 = arith.addf %144, %149 : vector<25x64xf32>
    %151 = vector.extract_strided_slice %119 {offsets = [0, 5], sizes = [25, 1], strides = [1, 1]} : vector<25x9xf32> to vector<25x1xf32>
    %152 = vector.extract_strided_slice %2 {offsets = [5, 0], sizes = [1, 64], strides = [1, 1]} : vector<9x64xf32> to vector<1x64xf32>
    %153 = vector.broadcast %151 : vector<25x1xf32> to vector<25x64xf32>
    %154 = vector.broadcast %152 : vector<1x64xf32> to vector<25x64xf32>
    %155 = arith.mulf %153, %154 : vector<25x64xf32>
    %156 = arith.addf %150, %155 : vector<25x64xf32>
    %157 = vector.extract_strided_slice %119 {offsets = [0, 6], sizes = [25, 1], strides = [1, 1]} : vector<25x9xf32> to vector<25x1xf32>
    %158 = vector.extract_strided_slice %2 {offsets = [6, 0], sizes = [1, 64], strides = [1, 1]} : vector<9x64xf32> to vector<1x64xf32>
    %159 = vector.broadcast %157 : vector<25x1xf32> to vector<25x64xf32>
    %160 = vector.broadcast %158 : vector<1x64xf32> to vector<25x64xf32>
    %161 = arith.mulf %159, %160 : vector<25x64xf32>
    %162 = arith.addf %156, %161 : vector<25x64xf32>
    %163 = vector.extract_strided_slice %119 {offsets = [0, 7], sizes = [25, 1], strides = [1, 1]} : vector<25x9xf32> to vector<25x1xf32>
    %164 = vector.extract_strided_slice %2 {offsets = [7, 0], sizes = [1, 64], strides = [1, 1]} : vector<9x64xf32> to vector<1x64xf32>
    %165 = vector.broadcast %163 : vector<25x1xf32> to vector<25x64xf32>
    %166 = vector.broadcast %164 : vector<1x64xf32> to vector<25x64xf32>
    %167 = arith.mulf %165, %166 : vector<25x64xf32>
    %168 = arith.addf %162, %167 : vector<25x64xf32>
    %169 = vector.extract_strided_slice %119 {offsets = [0, 8], sizes = [25, 1], strides = [1, 1]} : vector<25x9xf32> to vector<25x1xf32>
    %170 = vector.extract_strided_slice %2 {offsets = [8, 0], sizes = [1, 64], strides = [1, 1]} : vector<9x64xf32> to vector<1x64xf32>
    %171 = vector.broadcast %169 : vector<25x1xf32> to vector<25x64xf32>
    %172 = vector.broadcast %170 : vector<1x64xf32> to vector<25x64xf32>
    %173 = arith.mulf %171, %172 : vector<25x64xf32>
    %174 = arith.addf %168, %173 : vector<25x64xf32>
    %175 = arith.maximumf %117, %174 : vector<25x64xf32>
    %c0_16 = arith.constant 0 : index
    %c3 = arith.constant 3 : index
    %c0_17 = arith.constant 0 : index
    %c0_18 = arith.constant 0 : index
    %176 = vector.load %arg1[%c0_16, %c3, %c0_17, %c0_18] : memref<1x4x25x9xf32, #tpu.memory_space<vmem>>, vector<1x1x25x9xf32>
    %177 = vector.shape_cast %176 : vector<1x1x25x9xf32> to vector<25x9xf32>
    %cst_19 = arith.constant 0.000000e+00 : f32
    %178 = vector.broadcast %cst_19 : f32 to vector<25x64xf32>
    %179 = vector.extract_strided_slice %177 {offsets = [0, 0], sizes = [25, 1], strides = [1, 1]} : vector<25x9xf32> to vector<25x1xf32>
    %180 = vector.extract_strided_slice %2 {offsets = [0, 0], sizes = [1, 64], strides = [1, 1]} : vector<9x64xf32> to vector<1x64xf32>
    %181 = vector.broadcast %179 : vector<25x1xf32> to vector<25x64xf32>
    %182 = vector.broadcast %180 : vector<1x64xf32> to vector<25x64xf32>
    %183 = arith.mulf %181, %182 : vector<25x64xf32>
    %184 = arith.addf %178, %183 : vector<25x64xf32>
    %185 = vector.extract_strided_slice %177 {offsets = [0, 1], sizes = [25, 1], strides = [1, 1]} : vector<25x9xf32> to vector<25x1xf32>
    %186 = vector.extract_strided_slice %2 {offsets = [1, 0], sizes = [1, 64], strides = [1, 1]} : vector<9x64xf32> to vector<1x64xf32>
    %187 = vector.broadcast %185 : vector<25x1xf32> to vector<25x64xf32>
    %188 = vector.broadcast %186 : vector<1x64xf32> to vector<25x64xf32>
    %189 = arith.mulf %187, %188 : vector<25x64xf32>
    %190 = arith.addf %184, %189 : vector<25x64xf32>
    %191 = vector.extract_strided_slice %177 {offsets = [0, 2], sizes = [25, 1], strides = [1, 1]} : vector<25x9xf32> to vector<25x1xf32>
    %192 = vector.extract_strided_slice %2 {offsets = [2, 0], sizes = [1, 64], strides = [1, 1]} : vector<9x64xf32> to vector<1x64xf32>
    %193 = vector.broadcast %191 : vector<25x1xf32> to vector<25x64xf32>
    %194 = vector.broadcast %192 : vector<1x64xf32> to vector<25x64xf32>
    %195 = arith.mulf %193, %194 : vector<25x64xf32>
    %196 = arith.addf %190, %195 : vector<25x64xf32>
    %197 = vector.extract_strided_slice %177 {offsets = [0, 3], sizes = [25, 1], strides = [1, 1]} : vector<25x9xf32> to vector<25x1xf32>
    %198 = vector.extract_strided_slice %2 {offsets = [3, 0], sizes = [1, 64], strides = [1, 1]} : vector<9x64xf32> to vector<1x64xf32>
    %199 = vector.broadcast %197 : vector<25x1xf32> to vector<25x64xf32>
    %200 = vector.broadcast %198 : vector<1x64xf32> to vector<25x64xf32>
    %201 = arith.mulf %199, %200 : vector<25x64xf32>
    %202 = arith.addf %196, %201 : vector<25x64xf32>
    %203 = vector.extract_strided_slice %177 {offsets = [0, 4], sizes = [25, 1], strides = [1, 1]} : vector<25x9xf32> to vector<25x1xf32>
    %204 = vector.extract_strided_slice %2 {offsets = [4, 0], sizes = [1, 64], strides = [1, 1]} : vector<9x64xf32> to vector<1x64xf32>
    %205 = vector.broadcast %203 : vector<25x1xf32> to vector<25x64xf32>
    %206 = vector.broadcast %204 : vector<1x64xf32> to vector<25x64xf32>
    %207 = arith.mulf %205, %206 : vector<25x64xf32>
    %208 = arith.addf %202, %207 : vector<25x64xf32>
    %209 = vector.extract_strided_slice %177 {offsets = [0, 5], sizes = [25, 1], strides = [1, 1]} : vector<25x9xf32> to vector<25x1xf32>
    %210 = vector.extract_strided_slice %2 {offsets = [5, 0], sizes = [1, 64], strides = [1, 1]} : vector<9x64xf32> to vector<1x64xf32>
    %211 = vector.broadcast %209 : vector<25x1xf32> to vector<25x64xf32>
    %212 = vector.broadcast %210 : vector<1x64xf32> to vector<25x64xf32>
    %213 = arith.mulf %211, %212 : vector<25x64xf32>
    %214 = arith.addf %208, %213 : vector<25x64xf32>
    %215 = vector.extract_strided_slice %177 {offsets = [0, 6], sizes = [25, 1], strides = [1, 1]} : vector<25x9xf32> to vector<25x1xf32>
    %216 = vector.extract_strided_slice %2 {offsets = [6, 0], sizes = [1, 64], strides = [1, 1]} : vector<9x64xf32> to vector<1x64xf32>
    %217 = vector.broadcast %215 : vector<25x1xf32> to vector<25x64xf32>
    %218 = vector.broadcast %216 : vector<1x64xf32> to vector<25x64xf32>
    %219 = arith.mulf %217, %218 : vector<25x64xf32>
    %220 = arith.addf %214, %219 : vector<25x64xf32>
    %221 = vector.extract_strided_slice %177 {offsets = [0, 7], sizes = [25, 1], strides = [1, 1]} : vector<25x9xf32> to vector<25x1xf32>
    %222 = vector.extract_strided_slice %2 {offsets = [7, 0], sizes = [1, 64], strides = [1, 1]} : vector<9x64xf32> to vector<1x64xf32>
    %223 = vector.broadcast %221 : vector<25x1xf32> to vector<25x64xf32>
    %224 = vector.broadcast %222 : vector<1x64xf32> to vector<25x64xf32>
    %225 = arith.mulf %223, %224 : vector<25x64xf32>
    %226 = arith.addf %220, %225 : vector<25x64xf32>
    %227 = vector.extract_strided_slice %177 {offsets = [0, 8], sizes = [25, 1], strides = [1, 1]} : vector<25x9xf32> to vector<25x1xf32>
    %228 = vector.extract_strided_slice %2 {offsets = [8, 0], sizes = [1, 64], strides = [1, 1]} : vector<9x64xf32> to vector<1x64xf32>
    %229 = vector.broadcast %227 : vector<25x1xf32> to vector<25x64xf32>
    %230 = vector.broadcast %228 : vector<1x64xf32> to vector<25x64xf32>
    %231 = arith.mulf %229, %230 : vector<25x64xf32>
    %232 = arith.addf %226, %231 : vector<25x64xf32>
    %233 = arith.maximumf %175, %232 : vector<25x64xf32>
    %c0_20 = arith.constant 0 : index
    %c0_21 = arith.constant 0 : index
    %234 = vector.load %arg3[%c0_20, %c0_21] : memref<1x64xf32, #tpu.memory_space<vmem>>, vector<1x64xf32>
    %235 = vector.broadcast %234 : vector<1x64xf32> to vector<25x64xf32>
    %236 = arith.addf %233, %235 : vector<25x64xf32>
    %cst_22 = arith.constant 0.000000e+00 : f32
    %237 = vector.broadcast %cst_22 : f32 to vector<25x64xf32>
    %238 = arith.maximumf %236, %237 : vector<25x64xf32>
    %c0_23 = arith.constant 0 : index
    %c0_24 = arith.constant 0 : index
    %c0_25 = arith.constant 0 : index
    %239 = vector.load %arg4[%c0_23, %c0_24, %c0_25] : memref<9x64x64xf32, #tpu.memory_space<vmem>>, vector<1x64x64xf32>
    %240 = vector.shape_cast %239 : vector<1x64x64xf32> to vector<64x64xf32>
    %cst_26 = arith.constant dense<0.000000e+00> : vector<25x64xf32>
    %241 = tpu.matmul %238, %240, %cst_26 {dimension_numbers = #tpu.dot_dimension_numbers<[1], [0], [0], [1], [0, 0, 1, 1], [], []>} : vector<25x64xf32>, vector<64x64xf32>, vector<25x64xf32> -> vector<25x64xf32>
    %c0_27 = arith.constant 0 : index
    %c0_28 = arith.constant 0 : index
    %242 = vector.load %arg17[%c0_27, %c0_28] : memref<800x64xf32, #tpu.memory_space<vmem>>, vector<25x64xf32>
    tpu.vector_store %arg17[%c0_27, %c0_28], %241 {strides = array<i32>} : memref<800x64xf32, #tpu.memory_space<vmem>>, vector<25x64xf32>,
    %c1_29 = arith.constant 1 : index
    %c0_30 = arith.constant 0 : index
    %c0_31 = arith.constant 0 : index
    %243 = vector.load %arg4[%c1_29, %c0_30, %c0_31] : memref<9x64x64xf32, #tpu.memory_space<vmem>>, vector<1x64x64xf32>
    %244 = vector.shape_cast %243 : vector<1x64x64xf32> to vector<64x64xf32>
    %cst_32 = arith.constant dense<0.000000e+00> : vector<25x64xf32>
    %245 = tpu.matmul %238, %244, %cst_32 {dimension_numbers = #tpu.dot_dimension_numbers<[1], [0], [0], [1], [0, 0, 1, 1], [], []>} : vector<25x64xf32>, vector<64x64xf32>, vector<25x64xf32> -> vector<25x64xf32>
    %c32 = arith.constant 32 : index
    %c0_33 = arith.constant 0 : index
    %246 = vector.load %arg17[%c32, %c0_33] : memref<800x64xf32, #tpu.memory_space<vmem>>, vector<25x64xf32>
    tpu.vector_store %arg17[%c32, %c0_33], %245 {strides = array<i32>} : memref<800x64xf32, #tpu.memory_space<vmem>>, vector<25x64xf32>,
    %c2_34 = arith.constant 2 : index
    %c0_35 = arith.constant 0 : index
    %c0_36 = arith.constant 0 : index
    %247 = vector.load %arg4[%c2_34, %c0_35, %c0_36] : memref<9x64x64xf32, #tpu.memory_space<vmem>>, vector<1x64x64xf32>
    %248 = vector.shape_cast %247 : vector<1x64x64xf32> to vector<64x64xf32>
    %cst_37 = arith.constant dense<0.000000e+00> : vector<25x64xf32>
    %249 = tpu.matmul %238, %248, %cst_37 {dimension_numbers = #tpu.dot_dimension_numbers<[1], [0], [0], [1], [0, 0, 1, 1], [], []>} : vector<25x64xf32>, vector<64x64xf32>, vector<25x64xf32> -> vector<25x64xf32>
    %c64 = arith.constant 64 : index
    %c0_38 = arith.constant 0 : index
    %250 = vector.load %arg17[%c64, %c0_38] : memref<800x64xf32, #tpu.memory_space<vmem>>, vector<25x64xf32>
    tpu.vector_store %arg17[%c64, %c0_38], %249 {strides = array<i32>} : memref<800x64xf32, #tpu.memory_space<vmem>>, vector<25x64xf32>,
    %c3_39 = arith.constant 3 : index
    %c0_40 = arith.constant 0 : index
    %c0_41 = arith.constant 0 : index
    %251 = vector.load %arg4[%c3_39, %c0_40, %c0_41] : memref<9x64x64xf32, #tpu.memory_space<vmem>>, vector<1x64x64xf32>
    %252 = vector.shape_cast %251 : vector<1x64x64xf32> to vector<64x64xf32>
    %cst_42 = arith.constant dense<0.000000e+00> : vector<25x64xf32>
    %253 = tpu.matmul %238, %252, %cst_42 {dimension_numbers = #tpu.dot_dimension_numbers<[1], [0], [0], [1], [0, 0, 1, 1], [], []>} : vector<25x64xf32>, vector<64x64xf32>, vector<25x64xf32> -> vector<25x64xf32>
    %c96 = arith.constant 96 : index
    %c0_43 = arith.constant 0 : index
    %254 = vector.load %arg17[%c96, %c0_43] : memref<800x64xf32, #tpu.memory_space<vmem>>, vector<25x64xf32>
    tpu.vector_store %arg17[%c96, %c0_43], %253 {strides = array<i32>} : memref<800x64xf32, #tpu.memory_space<vmem>>, vector<25x64xf32>,
    %c4 = arith.constant 4 : index
    %c0_44 = arith.constant 0 : index
    %c0_45 = arith.constant 0 : index
    %255 = vector.load %arg4[%c4, %c0_44, %c0_45] : memref<9x64x64xf32, #tpu.memory_space<vmem>>, vector<1x64x64xf32>
    %256 = vector.shape_cast %255 : vector<1x64x64xf32> to vector<64x64xf32>
    %cst_46 = arith.constant dense<0.000000e+00> : vector<25x64xf32>
    %257 = tpu.matmul %238, %256, %cst_46 {dimension_numbers = #tpu.dot_dimension_numbers<[1], [0], [0], [1], [0, 0, 1, 1], [], []>} : vector<25x64xf32>, vector<64x64xf32>, vector<25x64xf32> -> vector<25x64xf32>
    %c128 = arith.constant 128 : index
    %c0_47 = arith.constant 0 : index
    %258 = vector.load %arg17[%c128, %c0_47] : memref<800x64xf32, #tpu.memory_space<vmem>>, vector<25x64xf32>
    tpu.vector_store %arg17[%c128, %c0_47], %257 {strides = array<i32>} : memref<800x64xf32, #tpu.memory_space<vmem>>, vector<25x64xf32>,
    %c5 = arith.constant 5 : index
    %c0_48 = arith.constant 0 : index
    %c0_49 = arith.constant 0 : index
    %259 = vector.load %arg4[%c5, %c0_48, %c0_49] : memref<9x64x64xf32, #tpu.memory_space<vmem>>, vector<1x64x64xf32>
    %260 = vector.shape_cast %259 : vector<1x64x64xf32> to vector<64x64xf32>
    %cst_50 = arith.constant dense<0.000000e+00> : vector<25x64xf32>
    %261 = tpu.matmul %238, %260, %cst_50 {dimension_numbers = #tpu.dot_dimension_numbers<[1], [0], [0], [1], [0, 0, 1, 1], [], []>} : vector<25x64xf32>, vector<64x64xf32>, vector<25x64xf32> -> vector<25x64xf32>
    %c160 = arith.constant 160 : index
    %c0_51 = arith.constant 0 : index
    %262 = vector.load %arg17[%c160, %c0_51] : memref<800x64xf32, #tpu.memory_space<vmem>>, vector<25x64xf32>
    tpu.vector_store %arg17[%c160, %c0_51], %261 {strides = array<i32>} : memref<800x64xf32, #tpu.memory_space<vmem>>, vector<25x64xf32>,
    %c6 = arith.constant 6 : index
    %c0_52 = arith.constant 0 : index
    %c0_53 = arith.constant 0 : index
    %263 = vector.load %arg4[%c6, %c0_52, %c0_53] : memref<9x64x64xf32, #tpu.memory_space<vmem>>, vector<1x64x64xf32>
    %264 = vector.shape_cast %263 : vector<1x64x64xf32> to vector<64x64xf32>
    %cst_54 = arith.constant dense<0.000000e+00> : vector<25x64xf32>
    %265 = tpu.matmul %238, %264, %cst_54 {dimension_numbers = #tpu.dot_dimension_numbers<[1], [0], [0], [1], [0, 0, 1, 1], [], []>} : vector<25x64xf32>, vector<64x64xf32>, vector<25x64xf32> -> vector<25x64xf32>
    %c192 = arith.constant 192 : index
    %c0_55 = arith.constant 0 : index
    %266 = vector.load %arg17[%c192, %c0_55] : memref<800x64xf32, #tpu.memory_space<vmem>>, vector<25x64xf32>
    tpu.vector_store %arg17[%c192, %c0_55], %265 {strides = array<i32>} : memref<800x64xf32, #tpu.memory_space<vmem>>, vector<25x64xf32>,
    %c7 = arith.constant 7 : index
    %c0_56 = arith.constant 0 : index
    %c0_57 = arith.constant 0 : index
    %267 = vector.load %arg4[%c7, %c0_56, %c0_57] : memref<9x64x64xf32, #tpu.memory_space<vmem>>, vector<1x64x64xf32>
    %268 = vector.shape_cast %267 : vector<1x64x64xf32> to vector<64x64xf32>
    %cst_58 = arith.constant dense<0.000000e+00> : vector<25x64xf32>
    %269 = tpu.matmul %238, %268, %cst_58 {dimension_numbers = #tpu.dot_dimension_numbers<[1], [0], [0], [1], [0, 0, 1, 1], [], []>} : vector<25x64xf32>, vector<64x64xf32>, vector<25x64xf32> -> vector<25x64xf32>
    %c224 = arith.constant 224 : index
    %c0_59 = arith.constant 0 : index
    %270 = vector.load %arg17[%c224, %c0_59] : memref<800x64xf32, #tpu.memory_space<vmem>>, vector<25x64xf32>
    tpu.vector_store %arg17[%c224, %c0_59], %269 {strides = array<i32>} : memref<800x64xf32, #tpu.memory_space<vmem>>, vector<25x64xf32>,
    %c8 = arith.constant 8 : index
    %c0_60 = arith.constant 0 : index
    %c0_61 = arith.constant 0 : index
    %271 = vector.load %arg4[%c8, %c0_60, %c0_61] : memref<9x64x64xf32, #tpu.memory_space<vmem>>, vector<1x64x64xf32>
    %272 = vector.shape_cast %271 : vector<1x64x64xf32> to vector<64x64xf32>
    %cst_62 = arith.constant dense<0.000000e+00> : vector<25x64xf32>
    %273 = tpu.matmul %238, %272, %cst_62 {dimension_numbers = #tpu.dot_dimension_numbers<[1], [0], [0], [1], [0, 0, 1, 1], [], []>} : vector<25x64xf32>, vector<64x64xf32>, vector<25x64xf32> -> vector<25x64xf32>
    %c256 = arith.constant 256 : index
    %c0_63 = arith.constant 0 : index
    %274 = vector.load %arg17[%c256, %c0_63] : memref<800x64xf32, #tpu.memory_space<vmem>>, vector<25x64xf32>
    tpu.vector_store %arg17[%c256, %c0_63], %273 {strides = array<i32>} : memref<800x64xf32, #tpu.memory_space<vmem>>, vector<25x64xf32>,
    %c0_64 = arith.constant 0 : index
    %c0_65 = arith.constant 0 : index
    %275 = vector.load %arg6[%c0_64, %c0_65] : memref<9x288xf32, #tpu.memory_space<vmem>>, vector<9x288xf32>
    %c0_66 = arith.constant 0 : index
    %c0_67 = arith.constant 0 : index
    %276 = vector.load %arg17[%c0_66, %c0_67] : memref<800x64xf32, #tpu.memory_space<vmem>>, vector<288x64xf32>
    %cst_68 = arith.constant dense<0.000000e+00> : vector<9x64xf32>
    %277 = tpu.matmul %275, %276, %cst_68 {dimension_numbers = #tpu.dot_dimension_numbers<[1], [0], [0], [1], [0, 0, 1, 1], [], []>} : vector<9x288xf32>, vector<288x64xf32>, vector<9x64xf32> -> vector<9x64xf32>
    %c0_69 = arith.constant 0 : index
    %c0_70 = arith.constant 0 : index
    %278 = vector.load %arg5[%c0_69, %c0_70] : memref<1x64xf32, #tpu.memory_space<vmem>>, vector<1x64xf32>
    %279 = vector.broadcast %278 : vector<1x64xf32> to vector<9x64xf32>
    %280 = arith.addf %277, %279 : vector<9x64xf32>
    %cst_71 = arith.constant 0.000000e+00 : f32
    %281 = vector.broadcast %cst_71 : f32 to vector<9x64xf32>
    %282 = arith.maximumf %280, %281 : vector<9x64xf32>
    %c0_72 = arith.constant 0 : index
    %c0_73 = arith.constant 0 : index
    %c0_74 = arith.constant 0 : index
    %283 = vector.load %arg7[%c0_72, %c0_73, %c0_74] : memref<4x4x9xf32, #tpu.memory_space<vmem>>, vector<1x4x9xf32>
    %284 = vector.shape_cast %283 : vector<1x4x9xf32> to vector<4x9xf32>
    %cst_75 = arith.constant dense<0.000000e+00> : vector<4x64xf32>
    %285 = tpu.matmul %284, %282, %cst_75 {dimension_numbers = #tpu.dot_dimension_numbers<[1], [0], [0], [1], [0, 0, 1, 1], [], []>} : vector<4x9xf32>, vector<9x64xf32>, vector<4x64xf32> -> vector<4x64xf32>
    %c1_76 = arith.constant 1 : index
    %c0_77 = arith.constant 0 : index
    %c0_78 = arith.constant 0 : index
    %286 = vector.load %arg7[%c1_76, %c0_77, %c0_78] : memref<4x4x9xf32, #tpu.memory_space<vmem>>, vector<1x4x9xf32>
    %287 = vector.shape_cast %286 : vector<1x4x9xf32> to vector<4x9xf32>
    %cst_79 = arith.constant dense<0.000000e+00> : vector<4x64xf32>
    %288 = tpu.matmul %287, %282, %cst_79 {dimension_numbers = #tpu.dot_dimension_numbers<[1], [0], [0], [1], [0, 0, 1, 1], [], []>} : vector<4x9xf32>, vector<9x64xf32>, vector<4x64xf32> -> vector<4x64xf32>
    %289 = arith.maximumf %285, %288 : vector<4x64xf32>
    %c2_80 = arith.constant 2 : index
    %c0_81 = arith.constant 0 : index
    %c0_82 = arith.constant 0 : index
    %290 = vector.load %arg7[%c2_80, %c0_81, %c0_82] : memref<4x4x9xf32, #tpu.memory_space<vmem>>, vector<1x4x9xf32>
    %291 = vector.shape_cast %290 : vector<1x4x9xf32> to vector<4x9xf32>
    %cst_83 = arith.constant dense<0.000000e+00> : vector<4x64xf32>
    %292 = tpu.matmul %291, %282, %cst_83 {dimension_numbers = #tpu.dot_dimension_numbers<[1], [0], [0], [1], [0, 0, 1, 1], [], []>} : vector<4x9xf32>, vector<9x64xf32>, vector<4x64xf32> -> vector<4x64xf32>
    %293 = arith.maximumf %289, %292 : vector<4x64xf32>
    %c3_84 = arith.constant 3 : index
    %c0_85 = arith.constant 0 : index
    %c0_86 = arith.constant 0 : index
    %294 = vector.load %arg7[%c3_84, %c0_85, %c0_86] : memref<4x4x9xf32, #tpu.memory_space<vmem>>, vector<1x4x9xf32>
    %295 = vector.shape_cast %294 : vector<1x4x9xf32> to vector<4x9xf32>
    %cst_87 = arith.constant dense<0.000000e+00> : vector<4x64xf32>
    %296 = tpu.matmul %295, %282, %cst_87 {dimension_numbers = #tpu.dot_dimension_numbers<[1], [0], [0], [1], [0, 0, 1, 1], [], []>} : vector<4x9xf32>, vector<9x64xf32>, vector<4x64xf32> -> vector<4x64xf32>
    %297 = arith.maximumf %293, %296 : vector<4x64xf32>
    %c0_88 = arith.constant 0 : index
    %c0_89 = arith.constant 0 : index
    %c0_90 = arith.constant 0 : index
    %298 = vector.load %arg8[%c0_88, %c0_89, %c0_90] : memref<9x64x64xf32, #tpu.memory_space<vmem>>, vector<1x64x64xf32>
    %299 = vector.shape_cast %298 : vector<1x64x64xf32> to vector<64x64xf32>
    %cst_91 = arith.constant dense<0.000000e+00> : vector<4x64xf32>
    %300 = tpu.matmul %297, %299, %cst_91 {dimension_numbers = #tpu.dot_dimension_numbers<[1], [0], [0], [1], [0, 0, 1, 1], [], []>} : vector<4x64xf32>, vector<64x64xf32>, vector<4x64xf32> -> vector<4x64xf32>
    %c0_92 = arith.constant 0 : index
    %c0_93 = arith.constant 0 : index
    %301 = vector.load %arg17[%c0_92, %c0_93] : memref<800x64xf32, #tpu.memory_space<vmem>>, vector<4x64xf32>
    tpu.vector_store %arg17[%c0_92, %c0_93], %300 {strides = array<i32>} : memref<800x64xf32, #tpu.memory_space<vmem>>, vector<4x64xf32>,
    %c1_94 = arith.constant 1 : index
    %c0_95 = arith.constant 0 : index
    %c0_96 = arith.constant 0 : index
    %302 = vector.load %arg8[%c1_94, %c0_95, %c0_96] : memref<9x64x64xf32, #tpu.memory_space<vmem>>, vector<1x64x64xf32>
    %303 = vector.shape_cast %302 : vector<1x64x64xf32> to vector<64x64xf32>
    %cst_97 = arith.constant dense<0.000000e+00> : vector<4x64xf32>
    %304 = tpu.matmul %297, %303, %cst_97 {dimension_numbers = #tpu.dot_dimension_numbers<[1], [0], [0], [1], [0, 0, 1, 1], [], []>} : vector<4x64xf32>, vector<64x64xf32>, vector<4x64xf32> -> vector<4x64xf32>
    %c8_98 = arith.constant 8 : index
    %c0_99 = arith.constant 0 : index
    %305 = vector.load %arg17[%c8_98, %c0_99] : memref<800x64xf32, #tpu.memory_space<vmem>>, vector<4x64xf32>
    tpu.vector_store %arg17[%c8_98, %c0_99], %304 {strides = array<i32>} : memref<800x64xf32, #tpu.memory_space<vmem>>, vector<4x64xf32>,
    %c2_100 = arith.constant 2 : index
    %c0_101 = arith.constant 0 : index
    %c0_102 = arith.constant 0 : index
    %306 = vector.load %arg8[%c2_100, %c0_101, %c0_102] : memref<9x64x64xf32, #tpu.memory_space<vmem>>, vector<1x64x64xf32>
    %307 = vector.shape_cast %306 : vector<1x64x64xf32> to vector<64x64xf32>
    %cst_103 = arith.constant dense<0.000000e+00> : vector<4x64xf32>
    %308 = tpu.matmul %297, %307, %cst_103 {dimension_numbers = #tpu.dot_dimension_numbers<[1], [0], [0], [1], [0, 0, 1, 1], [], []>} : vector<4x64xf32>, vector<64x64xf32>, vector<4x64xf32> -> vector<4x64xf32>
    %c16 = arith.constant 16 : index
    %c0_104 = arith.constant 0 : index
    %309 = vector.load %arg17[%c16, %c0_104] : memref<800x64xf32, #tpu.memory_space<vmem>>, vector<4x64xf32>
    tpu.vector_store %arg17[%c16, %c0_104], %308 {strides = array<i32>} : memref<800x64xf32, #tpu.memory_space<vmem>>, vector<4x64xf32>,
    %c3_105 = arith.constant 3 : index
    %c0_106 = arith.constant 0 : index
    %c0_107 = arith.constant 0 : index
    %310 = vector.load %arg8[%c3_105, %c0_106, %c0_107] : memref<9x64x64xf32, #tpu.memory_space<vmem>>, vector<1x64x64xf32>
    %311 = vector.shape_cast %310 : vector<1x64x64xf32> to vector<64x64xf32>
    %cst_108 = arith.constant dense<0.000000e+00> : vector<4x64xf32>
    %312 = tpu.matmul %297, %311, %cst_108 {dimension_numbers = #tpu.dot_dimension_numbers<[1], [0], [0], [1], [0, 0, 1, 1], [], []>} : vector<4x64xf32>, vector<64x64xf32>, vector<4x64xf32> -> vector<4x64xf32>
    %c24 = arith.constant 24 : index
    %c0_109 = arith.constant 0 : index
    %313 = vector.load %arg17[%c24, %c0_109] : memref<800x64xf32, #tpu.memory_space<vmem>>, vector<4x64xf32>
    tpu.vector_store %arg17[%c24, %c0_109], %312 {strides = array<i32>} : memref<800x64xf32, #tpu.memory_space<vmem>>, vector<4x64xf32>,
    %c4_110 = arith.constant 4 : index
    %c0_111 = arith.constant 0 : index
    %c0_112 = arith.constant 0 : index
    %314 = vector.load %arg8[%c4_110, %c0_111, %c0_112] : memref<9x64x64xf32, #tpu.memory_space<vmem>>, vector<1x64x64xf32>
    %315 = vector.shape_cast %314 : vector<1x64x64xf32> to vector<64x64xf32>
    %cst_113 = arith.constant dense<0.000000e+00> : vector<4x64xf32>
    %316 = tpu.matmul %297, %315, %cst_113 {dimension_numbers = #tpu.dot_dimension_numbers<[1], [0], [0], [1], [0, 0, 1, 1], [], []>} : vector<4x64xf32>, vector<64x64xf32>, vector<4x64xf32> -> vector<4x64xf32>
    %c32_114 = arith.constant 32 : index
    %c0_115 = arith.constant 0 : index
    %317 = vector.load %arg17[%c32_114, %c0_115] : memref<800x64xf32, #tpu.memory_space<vmem>>, vector<4x64xf32>
    tpu.vector_store %arg17[%c32_114, %c0_115], %316 {strides = array<i32>} : memref<800x64xf32, #tpu.memory_space<vmem>>, vector<4x64xf32>,
    %c5_116 = arith.constant 5 : index
    %c0_117 = arith.constant 0 : index
    %c0_118 = arith.constant 0 : index
    %318 = vector.load %arg8[%c5_116, %c0_117, %c0_118] : memref<9x64x64xf32, #tpu.memory_space<vmem>>, vector<1x64x64xf32>
    %319 = vector.shape_cast %318 : vector<1x64x64xf32> to vector<64x64xf32>
    %cst_119 = arith.constant dense<0.000000e+00> : vector<4x64xf32>
    %320 = tpu.matmul %297, %319, %cst_119 {dimension_numbers = #tpu.dot_dimension_numbers<[1], [0], [0], [1], [0, 0, 1, 1], [], []>} : vector<4x64xf32>, vector<64x64xf32>, vector<4x64xf32> -> vector<4x64xf32>
    %c40 = arith.constant 40 : index
    %c0_120 = arith.constant 0 : index
    %321 = vector.load %arg17[%c40, %c0_120] : memref<800x64xf32, #tpu.memory_space<vmem>>, vector<4x64xf32>
    tpu.vector_store %arg17[%c40, %c0_120], %320 {strides = array<i32>} : memref<800x64xf32, #tpu.memory_space<vmem>>, vector<4x64xf32>,
    %c6_121 = arith.constant 6 : index
    %c0_122 = arith.constant 0 : index
    %c0_123 = arith.constant 0 : index
    %322 = vector.load %arg8[%c6_121, %c0_122, %c0_123] : memref<9x64x64xf32, #tpu.memory_space<vmem>>, vector<1x64x64xf32>
    %323 = vector.shape_cast %322 : vector<1x64x64xf32> to vector<64x64xf32>
    %cst_124 = arith.constant dense<0.000000e+00> : vector<4x64xf32>
    %324 = tpu.matmul %297, %323, %cst_124 {dimension_numbers = #tpu.dot_dimension_numbers<[1], [0], [0], [1], [0, 0, 1, 1], [], []>} : vector<4x64xf32>, vector<64x64xf32>, vector<4x64xf32> -> vector<4x64xf32>
    %c48 = arith.constant 48 : index
    %c0_125 = arith.constant 0 : index
    %325 = vector.load %arg17[%c48, %c0_125] : memref<800x64xf32, #tpu.memory_space<vmem>>, vector<4x64xf32>
    tpu.vector_store %arg17[%c48, %c0_125], %324 {strides = array<i32>} : memref<800x64xf32, #tpu.memory_space<vmem>>, vector<4x64xf32>,
    %c7_126 = arith.constant 7 : index
    %c0_127 = arith.constant 0 : index
    %c0_128 = arith.constant 0 : index
    %326 = vector.load %arg8[%c7_126, %c0_127, %c0_128] : memref<9x64x64xf32, #tpu.memory_space<vmem>>, vector<1x64x64xf32>
    %327 = vector.shape_cast %326 : vector<1x64x64xf32> to vector<64x64xf32>
    %cst_129 = arith.constant dense<0.000000e+00> : vector<4x64xf32>
    %328 = tpu.matmul %297, %327, %cst_129 {dimension_numbers = #tpu.dot_dimension_numbers<[1], [0], [0], [1], [0, 0, 1, 1], [], []>} : vector<4x64xf32>, vector<64x64xf32>, vector<4x64xf32> -> vector<4x64xf32>
    %c56 = arith.constant 56 : index
    %c0_130 = arith.constant 0 : index
    %329 = vector.load %arg17[%c56, %c0_130] : memref<800x64xf32, #tpu.memory_space<vmem>>, vector<4x64xf32>
    tpu.vector_store %arg17[%c56, %c0_130], %328 {strides = array<i32>} : memref<800x64xf32, #tpu.memory_space<vmem>>, vector<4x64xf32>,
    %c8_131 = arith.constant 8 : index
    %c0_132 = arith.constant 0 : index
    %c0_133 = arith.constant 0 : index
    %330 = vector.load %arg8[%c8_131, %c0_132, %c0_133] : memref<9x64x64xf32, #tpu.memory_space<vmem>>, vector<1x64x64xf32>
    %331 = vector.shape_cast %330 : vector<1x64x64xf32> to vector<64x64xf32>
    %cst_134 = arith.constant dense<0.000000e+00> : vector<4x64xf32>
    %332 = tpu.matmul %297, %331, %cst_134 {dimension_numbers = #tpu.dot_dimension_numbers<[1], [0], [0], [1], [0, 0, 1, 1], [], []>} : vector<4x64xf32>, vector<64x64xf32>, vector<4x64xf32> -> vector<4x64xf32>
    %c64_135 = arith.constant 64 : index
    %c0_136 = arith.constant 0 : index
    %333 = vector.load %arg17[%c64_135, %c0_136] : memref<800x64xf32, #tpu.memory_space<vmem>>, vector<4x64xf32>
    tpu.vector_store %arg17[%c64_135, %c0_136], %332 {strides = array<i32>} : memref<800x64xf32, #tpu.memory_space<vmem>>, vector<4x64xf32>,
    %c0_137 = arith.constant 0 : index
    %c0_138 = arith.constant 0 : index
    %334 = vector.load %arg10[%c0_137, %c0_138] : memref<25x72xf32, #tpu.memory_space<vmem>>, vector<25x72xf32>
    %c0_139 = arith.constant 0 : index
    %c0_140 = arith.constant 0 : index
    %335 = vector.load %arg17[%c0_139, %c0_140] : memref<800x64xf32, #tpu.memory_space<vmem>>, vector<72x64xf32>
    %cst_141 = arith.constant dense<0.000000e+00> : vector<25x64xf32>
    %336 = tpu.matmul %334, %335, %cst_141 {dimension_numbers = #tpu.dot_dimension_numbers<[1], [0], [0], [1], [0, 0, 1, 1], [], []>} : vector<25x72xf32>, vector<72x64xf32>, vector<25x64xf32> -> vector<25x64xf32>
    %c0_142 = arith.constant 0 : index
    %c0_143 = arith.constant 0 : index
    %337 = vector.load %arg9[%c0_142, %c0_143] : memref<1x64xf32, #tpu.memory_space<vmem>>, vector<1x64xf32>
    %338 = vector.broadcast %337 : vector<1x64xf32> to vector<25x64xf32>
    %339 = arith.addf %336, %338 : vector<25x64xf32>
    %cst_144 = arith.constant 0.000000e+00 : f32
    %340 = vector.broadcast %cst_144 : f32 to vector<25x64xf32>
    %341 = arith.maximumf %339, %340 : vector<25x64xf32>
    %c0_145 = arith.constant 0 : index
    %c0_146 = arith.constant 0 : index
    %c0_147 = arith.constant 0 : index
    %342 = vector.load %arg11[%c0_145, %c0_146, %c0_147] : memref<25x64x64xf32, #tpu.memory_space<vmem>>, vector<1x64x64xf32>
    %343 = vector.shape_cast %342 : vector<1x64x64xf32> to vector<64x64xf32>
    %cst_148 = arith.constant dense<0.000000e+00> : vector<25x64xf32>
    %344 = tpu.matmul %341, %343, %cst_148 {dimension_numbers = #tpu.dot_dimension_numbers<[1], [0], [0], [1], [0, 0, 1, 1], [], []>} : vector<25x64xf32>, vector<64x64xf32>, vector<25x64xf32> -> vector<25x64xf32>
    %c0_149 = arith.constant 0 : index
    %c0_150 = arith.constant 0 : index
    %345 = vector.load %arg17[%c0_149, %c0_150] : memref<800x64xf32, #tpu.memory_space<vmem>>, vector<25x64xf32>
    tpu.vector_store %arg17[%c0_149, %c0_150], %344 {strides = array<i32>} : memref<800x64xf32, #tpu.memory_space<vmem>>, vector<25x64xf32>,
    %c1_151 = arith.constant 1 : index
    %c0_152 = arith.constant 0 : index
    %c0_153 = arith.constant 0 : index
    %346 = vector.load %arg11[%c1_151, %c0_152, %c0_153] : memref<25x64x64xf32, #tpu.memory_space<vmem>>, vector<1x64x64xf32>
    %347 = vector.shape_cast %346 : vector<1x64x64xf32> to vector<64x64xf32>
    %cst_154 = arith.constant dense<0.000000e+00> : vector<25x64xf32>
    %348 = tpu.matmul %341, %347, %cst_154 {dimension_numbers = #tpu.dot_dimension_numbers<[1], [0], [0], [1], [0, 0, 1, 1], [], []>} : vector<25x64xf32>, vector<64x64xf32>, vector<25x64xf32> -> vector<25x64xf32>
    %c32_155 = arith.constant 32 : index
    %c0_156 = arith.constant 0 : index
    %349 = vector.load %arg17[%c32_155, %c0_156] : memref<800x64xf32, #tpu.memory_space<vmem>>, vector<25x64xf32>
    tpu.vector_store %arg17[%c32_155, %c0_156], %348 {strides = array<i32>} : memref<800x64xf32, #tpu.memory_space<vmem>>, vector<25x64xf32>,
    %c2_157 = arith.constant 2 : index
    %c0_158 = arith.constant 0 : index
    %c0_159 = arith.constant 0 : index
    %350 = vector.load %arg11[%c2_157, %c0_158, %c0_159] : memref<25x64x64xf32, #tpu.memory_space<vmem>>, vector<1x64x64xf32>
    %351 = vector.shape_cast %350 : vector<1x64x64xf32> to vector<64x64xf32>
    %cst_160 = arith.constant dense<0.000000e+00> : vector<25x64xf32>
    %352 = tpu.matmul %341, %351, %cst_160 {dimension_numbers = #tpu.dot_dimension_numbers<[1], [0], [0], [1], [0, 0, 1, 1], [], []>} : vector<25x64xf32>, vector<64x64xf32>, vector<25x64xf32> -> vector<25x64xf32>
    %c64_161 = arith.constant 64 : index
    %c0_162 = arith.constant 0 : index
    %353 = vector.load %arg17[%c64_161, %c0_162] : memref<800x64xf32, #tpu.memory_space<vmem>>, vector<25x64xf32>
    tpu.vector_store %arg17[%c64_161, %c0_162], %352 {strides = array<i32>} : memref<800x64xf32, #tpu.memory_space<vmem>>, vector<25x64xf32>,
    %c3_163 = arith.constant 3 : index
    %c0_164 = arith.constant 0 : index
    %c0_165 = arith.constant 0 : index
    %354 = vector.load %arg11[%c3_163, %c0_164, %c0_165] : memref<25x64x64xf32, #tpu.memory_space<vmem>>, vector<1x64x64xf32>
    %355 = vector.shape_cast %354 : vector<1x64x64xf32> to vector<64x64xf32>
    %cst_166 = arith.constant dense<0.000000e+00> : vector<25x64xf32>
    %356 = tpu.matmul %341, %355, %cst_166 {dimension_numbers = #tpu.dot_dimension_numbers<[1], [0], [0], [1], [0, 0, 1, 1], [], []>} : vector<25x64xf32>, vector<64x64xf32>, vector<25x64xf32> -> vector<25x64xf32>
    %c96_167 = arith.constant 96 : index
    %c0_168 = arith.constant 0 : index
    %357 = vector.load %arg17[%c96_167, %c0_168] : memref<800x64xf32, #tpu.memory_space<vmem>>, vector<25x64xf32>
    tpu.vector_store %arg17[%c96_167, %c0_168], %356 {strides = array<i32>} : memref<800x64xf32, #tpu.memory_space<vmem>>, vector<25x64xf32>,
    %c4_169 = arith.constant 4 : index
    %c0_170 = arith.constant 0 : index
    %c0_171 = arith.constant 0 : index
    %358 = vector.load %arg11[%c4_169, %c0_170, %c0_171] : memref<25x64x64xf32, #tpu.memory_space<vmem>>, vector<1x64x64xf32>
    %359 = vector.shape_cast %358 : vector<1x64x64xf32> to vector<64x64xf32>
    %cst_172 = arith.constant dense<0.000000e+00> : vector<25x64xf32>
    %360 = tpu.matmul %341, %359, %cst_172 {dimension_numbers = #tpu.dot_dimension_numbers<[1], [0], [0], [1], [0, 0, 1, 1], [], []>} : vector<25x64xf32>, vector<64x64xf32>, vector<25x64xf32> -> vector<25x64xf32>
    %c128_173 = arith.constant 128 : index
    %c0_174 = arith.constant 0 : index
    %361 = vector.load %arg17[%c128_173, %c0_174] : memref<800x64xf32, #tpu.memory_space<vmem>>, vector<25x64xf32>
    tpu.vector_store %arg17[%c128_173, %c0_174], %360 {strides = array<i32>} : memref<800x64xf32, #tpu.memory_space<vmem>>, vector<25x64xf32>,
    %c5_175 = arith.constant 5 : index
    %c0_176 = arith.constant 0 : index
    %c0_177 = arith.constant 0 : index
    %362 = vector.load %arg11[%c5_175, %c0_176, %c0_177] : memref<25x64x64xf32, #tpu.memory_space<vmem>>, vector<1x64x64xf32>
    %363 = vector.shape_cast %362 : vector<1x64x64xf32> to vector<64x64xf32>
    %cst_178 = arith.constant dense<0.000000e+00> : vector<25x64xf32>
    %364 = tpu.matmul %341, %363, %cst_178 {dimension_numbers = #tpu.dot_dimension_numbers<[1], [0], [0], [1], [0, 0, 1, 1], [], []>} : vector<25x64xf32>, vector<64x64xf32>, vector<25x64xf32> -> vector<25x64xf32>
    %c160_179 = arith.constant 160 : index
    %c0_180 = arith.constant 0 : index
    %365 = vector.load %arg17[%c160_179, %c0_180] : memref<800x64xf32, #tpu.memory_space<vmem>>, vector<25x64xf32>
    tpu.vector_store %arg17[%c160_179, %c0_180], %364 {strides = array<i32>} : memref<800x64xf32, #tpu.memory_space<vmem>>, vector<25x64xf32>,
    %c6_181 = arith.constant 6 : index
    %c0_182 = arith.constant 0 : index
    %c0_183 = arith.constant 0 : index
    %366 = vector.load %arg11[%c6_181, %c0_182, %c0_183] : memref<25x64x64xf32, #tpu.memory_space<vmem>>, vector<1x64x64xf32>
    %367 = vector.shape_cast %366 : vector<1x64x64xf32> to vector<64x64xf32>
    %cst_184 = arith.constant dense<0.000000e+00> : vector<25x64xf32>
    %368 = tpu.matmul %341, %367, %cst_184 {dimension_numbers = #tpu.dot_dimension_numbers<[1], [0], [0], [1], [0, 0, 1, 1], [], []>} : vector<25x64xf32>, vector<64x64xf32>, vector<25x64xf32> -> vector<25x64xf32>
    %c192_185 = arith.constant 192 : index
    %c0_186 = arith.constant 0 : index
    %369 = vector.load %arg17[%c192_185, %c0_186] : memref<800x64xf32, #tpu.memory_space<vmem>>, vector<25x64xf32>
    tpu.vector_store %arg17[%c192_185, %c0_186], %368 {strides = array<i32>} : memref<800x64xf32, #tpu.memory_space<vmem>>, vector<25x64xf32>,
    %c7_187 = arith.constant 7 : index
    %c0_188 = arith.constant 0 : index
    %c0_189 = arith.constant 0 : index
    %370 = vector.load %arg11[%c7_187, %c0_188, %c0_189] : memref<25x64x64xf32, #tpu.memory_space<vmem>>, vector<1x64x64xf32>
    %371 = vector.shape_cast %370 : vector<1x64x64xf32> to vector<64x64xf32>
    %cst_190 = arith.constant dense<0.000000e+00> : vector<25x64xf32>
    %372 = tpu.matmul %341, %371, %cst_190 {dimension_numbers = #tpu.dot_dimension_numbers<[1], [0], [0], [1], [0, 0, 1, 1], [], []>} : vector<25x64xf32>, vector<64x64xf32>, vector<25x64xf32> -> vector<25x64xf32>
    %c224_191 = arith.constant 224 : index
    %c0_192 = arith.constant 0 : index
    %373 = vector.load %arg17[%c224_191, %c0_192] : memref<800x64xf32, #tpu.memory_space<vmem>>, vector<25x64xf32>
    tpu.vector_store %arg17[%c224_191, %c0_192], %372 {strides = array<i32>} : memref<800x64xf32, #tpu.memory_space<vmem>>, vector<25x64xf32>,
    %c8_193 = arith.constant 8 : index
    %c0_194 = arith.constant 0 : index
    %c0_195 = arith.constant 0 : index
    %374 = vector.load %arg11[%c8_193, %c0_194, %c0_195] : memref<25x64x64xf32, #tpu.memory_space<vmem>>, vector<1x64x64xf32>
    %375 = vector.shape_cast %374 : vector<1x64x64xf32> to vector<64x64xf32>
    %cst_196 = arith.constant dense<0.000000e+00> : vector<25x64xf32>
    %376 = tpu.matmul %341, %375, %cst_196 {dimension_numbers = #tpu.dot_dimension_numbers<[1], [0], [0], [1], [0, 0, 1, 1], [], []>} : vector<25x64xf32>, vector<64x64xf32>, vector<25x64xf32> -> vector<25x64xf32>
    %c256_197 = arith.constant 256 : index
    %c0_198 = arith.constant 0 : index
    %377 = vector.load %arg17[%c256_197, %c0_198] : memref<800x64xf32, #tpu.memory_space<vmem>>, vector<25x64xf32>
    tpu.vector_store %arg17[%c256_197, %c0_198], %376 {strides = array<i32>} : memref<800x64xf32, #tpu.memory_space<vmem>>, vector<25x64xf32>,
    %c9 = arith.constant 9 : index
    %c0_199 = arith.constant 0 : index
    %c0_200 = arith.constant 0 : index
    %378 = vector.load %arg11[%c9, %c0_199, %c0_200] : memref<25x64x64xf32, #tpu.memory_space<vmem>>, vector<1x64x64xf32>
    %379 = vector.shape_cast %378 : vector<1x64x64xf32> to vector<64x64xf32>
    %cst_201 = arith.constant dense<0.000000e+00> : vector<25x64xf32>
    %380 = tpu.matmul %341, %379, %cst_201 {dimension_numbers = #tpu.dot_dimension_numbers<[1], [0], [0], [1], [0, 0, 1, 1], [], []>} : vector<25x64xf32>, vector<64x64xf32>, vector<25x64xf32> -> vector<25x64xf32>
    %c288 = arith.constant 288 : index
    %c0_202 = arith.constant 0 : index
    %381 = vector.load %arg17[%c288, %c0_202] : memref<800x64xf32, #tpu.memory_space<vmem>>, vector<25x64xf32>
    tpu.vector_store %arg17[%c288, %c0_202], %380 {strides = array<i32>} : memref<800x64xf32, #tpu.memory_space<vmem>>, vector<25x64xf32>,
    %c10 = arith.constant 10 : index
    %c0_203 = arith.constant 0 : index
    %c0_204 = arith.constant 0 : index
    %382 = vector.load %arg11[%c10, %c0_203, %c0_204] : memref<25x64x64xf32, #tpu.memory_space<vmem>>, vector<1x64x64xf32>
    %383 = vector.shape_cast %382 : vector<1x64x64xf32> to vector<64x64xf32>
    %cst_205 = arith.constant dense<0.000000e+00> : vector<25x64xf32>
    %384 = tpu.matmul %341, %383, %cst_205 {dimension_numbers = #tpu.dot_dimension_numbers<[1], [0], [0], [1], [0, 0, 1, 1], [], []>} : vector<25x64xf32>, vector<64x64xf32>, vector<25x64xf32> -> vector<25x64xf32>
    %c320 = arith.constant 320 : index
    %c0_206 = arith.constant 0 : index
    %385 = vector.load %arg17[%c320, %c0_206] : memref<800x64xf32, #tpu.memory_space<vmem>>, vector<25x64xf32>
    tpu.vector_store %arg17[%c320, %c0_206], %384 {strides = array<i32>} : memref<800x64xf32, #tpu.memory_space<vmem>>, vector<25x64xf32>,
    %c11 = arith.constant 11 : index
    %c0_207 = arith.constant 0 : index
    %c0_208 = arith.constant 0 : index
    %386 = vector.load %arg11[%c11, %c0_207, %c0_208] : memref<25x64x64xf32, #tpu.memory_space<vmem>>, vector<1x64x64xf32>
    %387 = vector.shape_cast %386 : vector<1x64x64xf32> to vector<64x64xf32>
    %cst_209 = arith.constant dense<0.000000e+00> : vector<25x64xf32>
    %388 = tpu.matmul %341, %387, %cst_209 {dimension_numbers = #tpu.dot_dimension_numbers<[1], [0], [0], [1], [0, 0, 1, 1], [], []>} : vector<25x64xf32>, vector<64x64xf32>, vector<25x64xf32> -> vector<25x64xf32>
    %c352 = arith.constant 352 : index
    %c0_210 = arith.constant 0 : index
    %389 = vector.load %arg17[%c352, %c0_210] : memref<800x64xf32, #tpu.memory_space<vmem>>, vector<25x64xf32>
    tpu.vector_store %arg17[%c352, %c0_210], %388 {strides = array<i32>} : memref<800x64xf32, #tpu.memory_space<vmem>>, vector<25x64xf32>,
    %c12 = arith.constant 12 : index
    %c0_211 = arith.constant 0 : index
    %c0_212 = arith.constant 0 : index
    %390 = vector.load %arg11[%c12, %c0_211, %c0_212] : memref<25x64x64xf32, #tpu.memory_space<vmem>>, vector<1x64x64xf32>
    %391 = vector.shape_cast %390 : vector<1x64x64xf32> to vector<64x64xf32>
    %cst_213 = arith.constant dense<0.000000e+00> : vector<25x64xf32>
    %392 = tpu.matmul %341, %391, %cst_213 {dimension_numbers = #tpu.dot_dimension_numbers<[1], [0], [0], [1], [0, 0, 1, 1], [], []>} : vector<25x64xf32>, vector<64x64xf32>, vector<25x64xf32> -> vector<25x64xf32>
    %c384 = arith.constant 384 : index
    %c0_214 = arith.constant 0 : index
    %393 = vector.load %arg17[%c384, %c0_214] : memref<800x64xf32, #tpu.memory_space<vmem>>, vector<25x64xf32>
    tpu.vector_store %arg17[%c384, %c0_214], %392 {strides = array<i32>} : memref<800x64xf32, #tpu.memory_space<vmem>>, vector<25x64xf32>,
    %c13 = arith.constant 13 : index
    %c0_215 = arith.constant 0 : index
    %c0_216 = arith.constant 0 : index
    %394 = vector.load %arg11[%c13, %c0_215, %c0_216] : memref<25x64x64xf32, #tpu.memory_space<vmem>>, vector<1x64x64xf32>
    %395 = vector.shape_cast %394 : vector<1x64x64xf32> to vector<64x64xf32>
    %cst_217 = arith.constant dense<0.000000e+00> : vector<25x64xf32>
    %396 = tpu.matmul %341, %395, %cst_217 {dimension_numbers = #tpu.dot_dimension_numbers<[1], [0], [0], [1], [0, 0, 1, 1], [], []>} : vector<25x64xf32>, vector<64x64xf32>, vector<25x64xf32> -> vector<25x64xf32>
    %c416 = arith.constant 416 : index
    %c0_218 = arith.constant 0 : index
    %397 = vector.load %arg17[%c416, %c0_218] : memref<800x64xf32, #tpu.memory_space<vmem>>, vector<25x64xf32>
    tpu.vector_store %arg17[%c416, %c0_218], %396 {strides = array<i32>} : memref<800x64xf32, #tpu.memory_space<vmem>>, vector<25x64xf32>,
    %c14 = arith.constant 14 : index
    %c0_219 = arith.constant 0 : index
    %c0_220 = arith.constant 0 : index
    %398 = vector.load %arg11[%c14, %c0_219, %c0_220] : memref<25x64x64xf32, #tpu.memory_space<vmem>>, vector<1x64x64xf32>
    %399 = vector.shape_cast %398 : vector<1x64x64xf32> to vector<64x64xf32>
    %cst_221 = arith.constant dense<0.000000e+00> : vector<25x64xf32>
    %400 = tpu.matmul %341, %399, %cst_221 {dimension_numbers = #tpu.dot_dimension_numbers<[1], [0], [0], [1], [0, 0, 1, 1], [], []>} : vector<25x64xf32>, vector<64x64xf32>, vector<25x64xf32> -> vector<25x64xf32>
    %c448 = arith.constant 448 : index
    %c0_222 = arith.constant 0 : index
    %401 = vector.load %arg17[%c448, %c0_222] : memref<800x64xf32, #tpu.memory_space<vmem>>, vector<25x64xf32>
    tpu.vector_store %arg17[%c448, %c0_222], %400 {strides = array<i32>} : memref<800x64xf32, #tpu.memory_space<vmem>>, vector<25x64xf32>,
    %c15 = arith.constant 15 : index
    %c0_223 = arith.constant 0 : index
    %c0_224 = arith.constant 0 : index
    %402 = vector.load %arg11[%c15, %c0_223, %c0_224] : memref<25x64x64xf32, #tpu.memory_space<vmem>>, vector<1x64x64xf32>
    %403 = vector.shape_cast %402 : vector<1x64x64xf32> to vector<64x64xf32>
    %cst_225 = arith.constant dense<0.000000e+00> : vector<25x64xf32>
    %404 = tpu.matmul %341, %403, %cst_225 {dimension_numbers = #tpu.dot_dimension_numbers<[1], [0], [0], [1], [0, 0, 1, 1], [], []>} : vector<25x64xf32>, vector<64x64xf32>, vector<25x64xf32> -> vector<25x64xf32>
    %c480 = arith.constant 480 : index
    %c0_226 = arith.constant 0 : index
    %405 = vector.load %arg17[%c480, %c0_226] : memref<800x64xf32, #tpu.memory_space<vmem>>, vector<25x64xf32>
    tpu.vector_store %arg17[%c480, %c0_226], %404 {strides = array<i32>} : memref<800x64xf32, #tpu.memory_space<vmem>>, vector<25x64xf32>,
    %c16_227 = arith.constant 16 : index
    %c0_228 = arith.constant 0 : index
    %c0_229 = arith.constant 0 : index
    %406 = vector.load %arg11[%c16_227, %c0_228, %c0_229] : memref<25x64x64xf32, #tpu.memory_space<vmem>>, vector<1x64x64xf32>
    %407 = vector.shape_cast %406 : vector<1x64x64xf32> to vector<64x64xf32>
    %cst_230 = arith.constant dense<0.000000e+00> : vector<25x64xf32>
    %408 = tpu.matmul %341, %407, %cst_230 {dimension_numbers = #tpu.dot_dimension_numbers<[1], [0], [0], [1], [0, 0, 1, 1], [], []>} : vector<25x64xf32>, vector<64x64xf32>, vector<25x64xf32> -> vector<25x64xf32>
    %c512 = arith.constant 512 : index
    %c0_231 = arith.constant 0 : index
    %409 = vector.load %arg17[%c512, %c0_231] : memref<800x64xf32, #tpu.memory_space<vmem>>, vector<25x64xf32>
    tpu.vector_store %arg17[%c512, %c0_231], %408 {strides = array<i32>} : memref<800x64xf32, #tpu.memory_space<vmem>>, vector<25x64xf32>,
    %c17 = arith.constant 17 : index
    %c0_232 = arith.constant 0 : index
    %c0_233 = arith.constant 0 : index
    %410 = vector.load %arg11[%c17, %c0_232, %c0_233] : memref<25x64x64xf32, #tpu.memory_space<vmem>>, vector<1x64x64xf32>
    %411 = vector.shape_cast %410 : vector<1x64x64xf32> to vector<64x64xf32>
    %cst_234 = arith.constant dense<0.000000e+00> : vector<25x64xf32>
    %412 = tpu.matmul %341, %411, %cst_234 {dimension_numbers = #tpu.dot_dimension_numbers<[1], [0], [0], [1], [0, 0, 1, 1], [], []>} : vector<25x64xf32>, vector<64x64xf32>, vector<25x64xf32> -> vector<25x64xf32>
    %c544 = arith.constant 544 : index
    %c0_235 = arith.constant 0 : index
    %413 = vector.load %arg17[%c544, %c0_235] : memref<800x64xf32, #tpu.memory_space<vmem>>, vector<25x64xf32>
    tpu.vector_store %arg17[%c544, %c0_235], %412 {strides = array<i32>} : memref<800x64xf32, #tpu.memory_space<vmem>>, vector<25x64xf32>,
    %c18 = arith.constant 18 : index
    %c0_236 = arith.constant 0 : index
    %c0_237 = arith.constant 0 : index
    %414 = vector.load %arg11[%c18, %c0_236, %c0_237] : memref<25x64x64xf32, #tpu.memory_space<vmem>>, vector<1x64x64xf32>
    %415 = vector.shape_cast %414 : vector<1x64x64xf32> to vector<64x64xf32>
    %cst_238 = arith.constant dense<0.000000e+00> : vector<25x64xf32>
    %416 = tpu.matmul %341, %415, %cst_238 {dimension_numbers = #tpu.dot_dimension_numbers<[1], [0], [0], [1], [0, 0, 1, 1], [], []>} : vector<25x64xf32>, vector<64x64xf32>, vector<25x64xf32> -> vector<25x64xf32>
    %c576 = arith.constant 576 : index
    %c0_239 = arith.constant 0 : index
    %417 = vector.load %arg17[%c576, %c0_239] : memref<800x64xf32, #tpu.memory_space<vmem>>, vector<25x64xf32>
    tpu.vector_store %arg17[%c576, %c0_239], %416 {strides = array<i32>} : memref<800x64xf32, #tpu.memory_space<vmem>>, vector<25x64xf32>,
    %c19 = arith.constant 19 : index
    %c0_240 = arith.constant 0 : index
    %c0_241 = arith.constant 0 : index
    %418 = vector.load %arg11[%c19, %c0_240, %c0_241] : memref<25x64x64xf32, #tpu.memory_space<vmem>>, vector<1x64x64xf32>
    %419 = vector.shape_cast %418 : vector<1x64x64xf32> to vector<64x64xf32>
    %cst_242 = arith.constant dense<0.000000e+00> : vector<25x64xf32>
    %420 = tpu.matmul %341, %419, %cst_242 {dimension_numbers = #tpu.dot_dimension_numbers<[1], [0], [0], [1], [0, 0, 1, 1], [], []>} : vector<25x64xf32>, vector<64x64xf32>, vector<25x64xf32> -> vector<25x64xf32>
    %c608 = arith.constant 608 : index
    %c0_243 = arith.constant 0 : index
    %421 = vector.load %arg17[%c608, %c0_243] : memref<800x64xf32, #tpu.memory_space<vmem>>, vector<25x64xf32>
    tpu.vector_store %arg17[%c608, %c0_243], %420 {strides = array<i32>} : memref<800x64xf32, #tpu.memory_space<vmem>>, vector<25x64xf32>,
    %c20 = arith.constant 20 : index
    %c0_244 = arith.constant 0 : index
    %c0_245 = arith.constant 0 : index
    %422 = vector.load %arg11[%c20, %c0_244, %c0_245] : memref<25x64x64xf32, #tpu.memory_space<vmem>>, vector<1x64x64xf32>
    %423 = vector.shape_cast %422 : vector<1x64x64xf32> to vector<64x64xf32>
    %cst_246 = arith.constant dense<0.000000e+00> : vector<25x64xf32>
    %424 = tpu.matmul %341, %423, %cst_246 {dimension_numbers = #tpu.dot_dimension_numbers<[1], [0], [0], [1], [0, 0, 1, 1], [], []>} : vector<25x64xf32>, vector<64x64xf32>, vector<25x64xf32> -> vector<25x64xf32>
    %c640 = arith.constant 640 : index
    %c0_247 = arith.constant 0 : index
    %425 = vector.load %arg17[%c640, %c0_247] : memref<800x64xf32, #tpu.memory_space<vmem>>, vector<25x64xf32>
    tpu.vector_store %arg17[%c640, %c0_247], %424 {strides = array<i32>} : memref<800x64xf32, #tpu.memory_space<vmem>>, vector<25x64xf32>,
    %c21 = arith.constant 21 : index
    %c0_248 = arith.constant 0 : index
    %c0_249 = arith.constant 0 : index
    %426 = vector.load %arg11[%c21, %c0_248, %c0_249] : memref<25x64x64xf32, #tpu.memory_space<vmem>>, vector<1x64x64xf32>
    %427 = vector.shape_cast %426 : vector<1x64x64xf32> to vector<64x64xf32>
    %cst_250 = arith.constant dense<0.000000e+00> : vector<25x64xf32>
    %428 = tpu.matmul %341, %427, %cst_250 {dimension_numbers = #tpu.dot_dimension_numbers<[1], [0], [0], [1], [0, 0, 1, 1], [], []>} : vector<25x64xf32>, vector<64x64xf32>, vector<25x64xf32> -> vector<25x64xf32>
    %c672 = arith.constant 672 : index
    %c0_251 = arith.constant 0 : index
    %429 = vector.load %arg17[%c672, %c0_251] : memref<800x64xf32, #tpu.memory_space<vmem>>, vector<25x64xf32>
    tpu.vector_store %arg17[%c672, %c0_251], %428 {strides = array<i32>} : memref<800x64xf32, #tpu.memory_space<vmem>>, vector<25x64xf32>,
    %c22 = arith.constant 22 : index
    %c0_252 = arith.constant 0 : index
    %c0_253 = arith.constant 0 : index
    %430 = vector.load %arg11[%c22, %c0_252, %c0_253] : memref<25x64x64xf32, #tpu.memory_space<vmem>>, vector<1x64x64xf32>
    %431 = vector.shape_cast %430 : vector<1x64x64xf32> to vector<64x64xf32>
    %cst_254 = arith.constant dense<0.000000e+00> : vector<25x64xf32>
    %432 = tpu.matmul %341, %431, %cst_254 {dimension_numbers = #tpu.dot_dimension_numbers<[1], [0], [0], [1], [0, 0, 1, 1], [], []>} : vector<25x64xf32>, vector<64x64xf32>, vector<25x64xf32> -> vector<25x64xf32>
    %c704 = arith.constant 704 : index
    %c0_255 = arith.constant 0 : index
    %433 = vector.load %arg17[%c704, %c0_255] : memref<800x64xf32, #tpu.memory_space<vmem>>, vector<25x64xf32>
    tpu.vector_store %arg17[%c704, %c0_255], %432 {strides = array<i32>} : memref<800x64xf32, #tpu.memory_space<vmem>>, vector<25x64xf32>,
    %c23 = arith.constant 23 : index
    %c0_256 = arith.constant 0 : index
    %c0_257 = arith.constant 0 : index
    %434 = vector.load %arg11[%c23, %c0_256, %c0_257] : memref<25x64x64xf32, #tpu.memory_space<vmem>>, vector<1x64x64xf32>
    %435 = vector.shape_cast %434 : vector<1x64x64xf32> to vector<64x64xf32>
    %cst_258 = arith.constant dense<0.000000e+00> : vector<25x64xf32>
    %436 = tpu.matmul %341, %435, %cst_258 {dimension_numbers = #tpu.dot_dimension_numbers<[1], [0], [0], [1], [0, 0, 1, 1], [], []>} : vector<25x64xf32>, vector<64x64xf32>, vector<25x64xf32> -> vector<25x64xf32>
    %c736 = arith.constant 736 : index
    %c0_259 = arith.constant 0 : index
    %437 = vector.load %arg17[%c736, %c0_259] : memref<800x64xf32, #tpu.memory_space<vmem>>, vector<25x64xf32>
    tpu.vector_store %arg17[%c736, %c0_259], %436 {strides = array<i32>} : memref<800x64xf32, #tpu.memory_space<vmem>>, vector<25x64xf32>,
    %c24_260 = arith.constant 24 : index
    %c0_261 = arith.constant 0 : index
    %c0_262 = arith.constant 0 : index
    %438 = vector.load %arg11[%c24_260, %c0_261, %c0_262] : memref<25x64x64xf32, #tpu.memory_space<vmem>>, vector<1x64x64xf32>
    %439 = vector.shape_cast %438 : vector<1x64x64xf32> to vector<64x64xf32>
    %cst_263 = arith.constant dense<0.000000e+00> : vector<25x64xf32>
    %440 = tpu.matmul %341, %439, %cst_263 {dimension_numbers = #tpu.dot_dimension_numbers<[1], [0], [0], [1], [0, 0, 1, 1], [], []>} : vector<25x64xf32>, vector<64x64xf32>, vector<25x64xf32> -> vector<25x64xf32>
    %c768 = arith.constant 768 : index
    %c0_264 = arith.constant 0 : index
    %441 = vector.load %arg17[%c768, %c0_264] : memref<800x64xf32, #tpu.memory_space<vmem>>, vector<25x64xf32>
    tpu.vector_store %arg17[%c768, %c0_264], %440 {strides = array<i32>} : memref<800x64xf32, #tpu.memory_space<vmem>>, vector<25x64xf32>,
    %c0_265 = arith.constant 0 : index
    %c0_266 = arith.constant 0 : index
    %442 = vector.load %arg13[%c0_265, %c0_266] : memref<225x800xf32, #tpu.memory_space<vmem>>, vector<225x800xf32>
    %c0_267 = arith.constant 0 : index
    %c0_268 = arith.constant 0 : index
    %443 = vector.load %arg17[%c0_267, %c0_268] : memref<800x64xf32, #tpu.memory_space<vmem>>, vector<800x64xf32>
    %cst_269 = arith.constant dense<0.000000e+00> : vector<225x64xf32>
    %444 = tpu.matmul %442, %443, %cst_269 {dimension_numbers = #tpu.dot_dimension_numbers<[1], [0], [0], [1], [0, 0, 1, 1], [], []>} : vector<225x800xf32>, vector<800x64xf32>, vector<225x64xf32> -> vector<225x64xf32>
    %c0_270 = arith.constant 0 : index
    %c0_271 = arith.constant 0 : index
    %445 = vector.load %arg12[%c0_270, %c0_271] : memref<1x64xf32, #tpu.memory_space<vmem>>, vector<1x64xf32>
    %446 = vector.broadcast %445 : vector<1x64xf32> to vector<225x64xf32>
    %447 = arith.addf %444, %446 : vector<225x64xf32>
    %cst_272 = arith.constant 0.000000e+00 : f32
    %448 = vector.broadcast %cst_272 : f32 to vector<225x64xf32>
    %449 = arith.maximumf %447, %448 : vector<225x64xf32>
    %c0_273 = arith.constant 0 : index
    %c0_274 = arith.constant 0 : index
    %450 = vector.load %arg14[%c0_273, %c0_274] : memref<64x4xf32, #tpu.memory_space<vmem>>, vector<64x4xf32>
    %cst_275 = arith.constant dense<0.000000e+00> : vector<225x4xf32>
    %451 = tpu.matmul %449, %450, %cst_275 {dimension_numbers = #tpu.dot_dimension_numbers<[1], [0], [0], [1], [0, 0, 1, 1], [], []>} : vector<225x64xf32>, vector<64x4xf32>, vector<225x4xf32> -> vector<225x4xf32>
    %c0_276 = arith.constant 0 : index
    %c0_277 = arith.constant 0 : index
    %452 = vector.load %arg15[%c0_276, %c0_277] : memref<1x1xf32, #tpu.memory_space<vmem>>, vector<1x1xf32>
    %453 = vector.broadcast %452 : vector<1x1xf32> to vector<225x4xf32>
    %454 = arith.addf %451, %453 : vector<225x4xf32>
    %455 = arith.negf %454 : vector<225x4xf32>
    %456 = math.exp %455 : vector<225x4xf32>
    %cst_278 = arith.constant 1.000000e+00 : f32
    %457 = vector.broadcast %cst_278 : f32 to vector<225x4xf32>
    %458 = arith.addf %457, %456 : vector<225x4xf32>
    %459 = arith.divf %457, %458 : vector<225x4xf32>
    %c0_279 = arith.constant 0 : index
    %c0_280 = arith.constant 0 : index
    %c0_281 = arith.constant 0 : index
    %460 = vector.load %arg16[%c0_279, %c0_280, %c0_281] : memref<1x225x4xf32, #tpu.memory_space<vmem>>, vector<1x225x4xf32>
    %461 = vector.shape_cast %460 : vector<1x225x4xf32> to vector<225x4xf32>
    %462 = vector.shape_cast %459 : vector<225x4xf32> to vector<1x225x4xf32>
    tpu.vector_store %arg16[%c0_279, %c0_280, %c0_281], %462 {strides = array<i32>} : memref<1x225x4xf32, #tpu.memory_space<vmem>>, vector<1x225x4xf32>,
    return
  }
  func.func @transform_0(%arg0: i32) -> (i32, i32, i32, i32) {
    %c0_i32 = arith.constant 0 : i32
    %c0_i32_0 = arith.constant 0 : i32
    %c0_i32_1 = arith.constant 0 : i32
    %c0_i32_2 = arith.constant 0 : i32
    return %arg0, %c0_i32, %c0_i32_0, %c0_i32_1 : i32, i32, i32, i32
  }
  func.func @transform_1(%arg0: i32) -> (i32, i32) {
    %c0_i32 = arith.constant 0 : i32
    %c0_i32_0 = arith.constant 0 : i32
    %c0_i32_1 = arith.constant 0 : i32
    return %c0_i32, %c0_i32_0 : i32, i32
  }
  func.func @transform_2(%arg0: i32) -> (i32, i32) {
    %c0_i32 = arith.constant 0 : i32
    %c0_i32_0 = arith.constant 0 : i32
    %c0_i32_1 = arith.constant 0 : i32
    return %c0_i32, %c0_i32_0 : i32, i32
  }
  func.func @transform_3(%arg0: i32) -> (i32, i32, i32) {
    %c0_i32 = arith.constant 0 : i32
    %c0_i32_0 = arith.constant 0 : i32
    %c0_i32_1 = arith.constant 0 : i32
    %c0_i32_2 = arith.constant 0 : i32
    return %c0_i32, %c0_i32_0, %c0_i32_1 : i32, i32, i32
  }
  func.func @transform_4(%arg0: i32) -> (i32, i32) {
    %c0_i32 = arith.constant 0 : i32
    %c0_i32_0 = arith.constant 0 : i32
    %c0_i32_1 = arith.constant 0 : i32
    return %c0_i32, %c0_i32_0 : i32, i32
  }
  func.func @transform_5(%arg0: i32) -> (i32, i32) {
    %c0_i32 = arith.constant 0 : i32
    %c0_i32_0 = arith.constant 0 : i32
    %c0_i32_1 = arith.constant 0 : i32
    return %c0_i32, %c0_i32_0 : i32, i32
  }
  func.func @transform_6(%arg0: i32) -> (i32, i32, i32) {
    %c0_i32 = arith.constant 0 : i32
    %c0_i32_0 = arith.constant 0 : i32
    %c0_i32_1 = arith.constant 0 : i32
    %c0_i32_2 = arith.constant 0 : i32
    return %c0_i32, %c0_i32_0, %c0_i32_1 : i32, i32, i32
  }
  func.func @transform_7(%arg0: i32) -> (i32, i32, i32) {
    %c0_i32 = arith.constant 0 : i32
    %c0_i32_0 = arith.constant 0 : i32
    %c0_i32_1 = arith.constant 0 : i32
    %c0_i32_2 = arith.constant 0 : i32
    return %c0_i32, %c0_i32_0, %c0_i32_1 : i32, i32, i32
  }
  func.func @transform_8(%arg0: i32) -> (i32, i32) {
    %c0_i32 = arith.constant 0 : i32
    %c0_i32_0 = arith.constant 0 : i32
    %c0_i32_1 = arith.constant 0 : i32
    return %c0_i32, %c0_i32_0 : i32, i32
  }
  func.func @transform_9(%arg0: i32) -> (i32, i32) {
    %c0_i32 = arith.constant 0 : i32
    %c0_i32_0 = arith.constant 0 : i32
    %c0_i32_1 = arith.constant 0 : i32
    return %c0_i32, %c0_i32_0 : i32, i32
  }
  func.func @transform_10(%arg0: i32) -> (i32, i32, i32) {
    %c0_i32 = arith.constant 0 : i32
    %c0_i32_0 = arith.constant 0 : i32
    %c0_i32_1 = arith.constant 0 : i32
    %c0_i32_2 = arith.constant 0 : i32
    return %c0_i32, %c0_i32_0, %c0_i32_1 : i32, i32, i32
  }
  func.func @transform_11(%arg0: i32) -> (i32, i32) {
    %c0_i32 = arith.constant 0 : i32
    %c0_i32_0 = arith.constant 0 : i32
    %c0_i32_1 = arith.constant 0 : i32
    return %c0_i32, %c0_i32_0 : i32, i32
  }
  func.func @transform_12(%arg0: i32) -> (i32, i32) {
    %c0_i32 = arith.constant 0 : i32
    %c0_i32_0 = arith.constant 0 : i32
    %c0_i32_1 = arith.constant 0 : i32
    return %c0_i32, %c0_i32_0 : i32, i32
  }
  func.func @transform_13(%arg0: i32) -> (i32, i32) {
    %c0_i32 = arith.constant 0 : i32
    %c0_i32_0 = arith.constant 0 : i32
    %c0_i32_1 = arith.constant 0 : i32
    return %c0_i32, %c0_i32_0 : i32, i32
  }
  func.func @transform_14(%arg0: i32) -> (i32, i32) {
    %c0_i32 = arith.constant 0 : i32
    %c0_i32_0 = arith.constant 0 : i32
    %c0_i32_1 = arith.constant 0 : i32
    return %c0_i32, %c0_i32_0 : i32, i32
  }
  func.func @transform_15(%arg0: i32) -> (i32, i32, i32) {
    %c0_i32 = arith.constant 0 : i32
    %c0_i32_0 = arith.constant 0 : i32
    %c0_i32_1 = arith.constant 0 : i32
    return %arg0, %c0_i32, %c0_i32_0 : i32, i32, i32
  }
}

</mosaic_0001>

<llo_original>
// kernel: model_forward.1
$region0: #{model_forward.1}
  #allocation0 [shape = 'u32[]', space=smem, size = 0x4, offset = 0x4, fixed_abs, tag = 'smem constant byte address 0x4 - core index']
  #allocation1 [shape = 'u32[144,128]{1,0:T(1,128)}', space=vmem, size = 0x12000, scoped, tag = 'internal scratch']
  #allocation2 [shape = 'f32[800,64]{1,0:T(8,128)}', space=vmem, size = 0x64000, scoped, tag = 'scratch operand']
  #allocation3 [shape = 'f32[1,1]{1,0:T(1,128)S(1)}', space=vmem, size = 0x200, scoped, tag = 'scoped memory for model_forward.1']
  %s0 = inlined_call_operand.vmem [shape: f32[2,4,25,9], index: 0, kind: input, shape index: {}]
  %s1 = inlined_call_operand.vmem [shape: f32[9,64], index: 1, kind: input, shape index: {}]
  %s2 = inlined_call_operand.vmem [shape: f32[1,64], index: 2, kind: input, shape index: {}]
  %s3 = inlined_call_operand.vmem [shape: f32[9,64,64], index: 3, kind: input, shape index: {}]
  %s4 = inlined_call_operand.vmem [shape: f32[1,64], index: 4, kind: input, shape index: {}]
  %s5 = inlined_call_operand.vmem [shape: f32[9,288], index: 5, kind: input, shape index: {}]
  %s6 = inlined_call_operand.vmem [shape: f32[4,4,9], index: 6, kind: input, shape index: {}]
  %s7 = inlined_call_operand.hbm [shape: f32[9,64,64], index: 7, kind: input, shape index: {}]
  %s8 = inlined_call_operand.vmem [shape: f32[1,64], index: 8, kind: input, shape index: {}]
  %s9 = inlined_call_operand.vmem [shape: f32[25,72], index: 9, kind: input, shape index: {}]
  %s10 = inlined_call_operand.vmem [shape: f32[25,64,64], index: 10, kind: input, shape index: {}]
  %s11 = inlined_call_operand.vmem [shape: f32[1,64], index: 11, kind: input, shape index: {}]
  %s12 = inlined_call_operand.vmem [shape: f32[225,800], index: 12, kind: input, shape index: {}]
  %s13 = inlined_call_operand.vmem [shape: f32[64,4], index: 13, kind: input, shape index: {}]
  %s14 = inlined_call_operand.<no memory space> [shape: f32[1,1], index: 14, kind: input, shape index: {}]
  %s15 = inlined_call_operand.vmem [shape: f32[2,225,4], index: 15, kind: output, shape index: {}]
  %s16 = sld [smem:[#allocation0]]
  $region97: #{model_forward.1} parent=0
    _
  %s18 = ssub.s32 1, %s16
  %s19 = scalar_select 0, %s18, %s16
  %v20 = vstv %s14
  %21 = vst [vmem:[#allocation3] sm:$0x1] %v20
  $region1: #{model_forward.1} parent=0
    #allocation4 [shape = 'u8[294912]{0}', space=vmem, size = 0x48000, scoped, tag = 'input window, operand 7, single buffered']
    #allocation5 [shape = 's32[2]{0}', space=sflag, size = 0x8, scoped, tag = 'scoped memory for model_forward.1']
    %22 = vsyncpa [#allocation5], 0
    loop: start=0, step=1, limit=4
    $region2: #{model_forward.1} parent=1 // loop_pre_header
      _
    $region3: #{model_forward.1} parent=1 // loop_header
      %s24 = sphi 0, %s28
      %p25 = scmp.ge.s32.totalorder %s24, 4
      %s34 = sphi 0, %s36
      %s37 = sphi 0, %s34
      %s38 = sphi 0, %s37
      %s54 = sphi 0, %s38
      %s58 = sphi 0, %s58
      %s60 = sphi 0, %s58
      %s61 = sphi 0, %s60
      %s75 = sphi 0, %s61
      %s79 = sphi 0, %s79
      %s81 = sphi 0, %s79
      %s82 = sphi 0, %s81
      %s96 = sphi 0, %s82
      %s100 = sphi 0, %s100
      %s102 = sphi 0, %s100
      %s103 = sphi 0, %s102
      %s117 = sphi 0, %s103
      %s121 = sphi 0, %s121
      %s123 = sphi 0, %s121
      %s124 = sphi 0, %s123
      %s138 = sphi 0, %s124
      %s142 = sphi 0, %s142
      %s144 = sphi 0, %s142
      %s145 = sphi 0, %s144
      %s159 = sphi 0, %s145
      %s163 = sphi 0, %s163
      %s165 = sphi 0, %s163
      %s166 = sphi 0, %s165
      %s180 = sphi 0, %s166
      %s184 = sphi 0, %s184
      %s186 = sphi 0, %s184
      %s187 = sphi 0, %s186
      %s201 = sphi 0, %s187
      %s205 = sphi 0, %s205
      %s207 = sphi 0, %s205
      %s208 = sphi 0, %s207
      %s222 = sphi 0, %s208
      %s226 = sphi 0, %s226
      %s228 = sphi 0, %s226
      %s229 = sphi 0, %s228
      %s243 = sphi 0, %s229
      %s247 = sphi 0, %s247
      %s249 = sphi 0, %s247
      %s250 = sphi 0, %s249
      %s264 = sphi 0, %s250
      %s268 = sphi 0, %s268
      %s270 = sphi 0, %s268
      %s271 = sphi 0, %s270
      %s285 = sphi 0, %s271
      %s289 = sphi 0, %s289
      %s291 = sphi 0, %s289
      %s292 = sphi 0, %s291
      %s306 = sphi 0, %s292
      %s310 = sphi 0, %s310
      %s312 = sphi 0, %s310
      %s313 = sphi 0, %s312
      %s327 = sphi 0, %s313
      %s331 = sphi 0, %s331
      %s333 = sphi 0, %s331
      %s334 = sphi 0, %s333
      %s348 = sphi 0, %s334
      %s354 = sphi 0, %s356
      %s357 = sphi 0, %s354
      %s358 = sphi 0, %s357
      %s374 = sphi 0, %s358
    $region4: #{model_forward.1} parent=1 // loop_header_branch
      %27 = sbr.rel (%p25) target = $region8
    $region5: #{model_forward.1} parent=1 // loop_body
      %s29 = ssub.s32 %s24, 1
      %s30 = ssub.s32 %s24, 2
      %s31 = sadd.s32 %s24, 1
      %s32 = ssub.s32 %s24, %s31
      %p33 = scmp.eq.s32.totalorder %s32, 0
      %s35 = sadd.s32 %s34, 1
      %s36 = scalar_select %p33, %s34, %s35
      %p39 = pneg %p33
      %p40 = scmp.eq.s32.totalorder %s24, 1
      %p41 = por %p39, %p40
      %p42 = scmp.ne.s32.totalorder %s34, %s37
      %p43 = scmp.eq.s32.totalorder %s24, 0
      %p44 = por %p42, %p43
      %p45 = scmp.ne.s32.totalorder %s34, %s37
      %p46 = scmp.eq.s32.totalorder %s29, 1
      %p47 = por %p45, %p46
      %p48 = scmp.ne.s32.totalorder %s37, %s38
      %p49 = scmp.eq.s32.totalorder %s29, 0
      %p50 = por %p48, %p49
      %p51 = scmp.ne.s32.totalorder %s37, %s38
      %p52 = scmp.eq.s32.totalorder %s30, 1
      %p53 = por %p51, %p52
      %p55 = scmp.ne.s32.totalorder %s38, %s54
      %p56 = scmp.eq.s32.totalorder %s30, 0
      %p57 = por %p55, %p56
      %s59 = sadd.s32 %s58, 1
      %p62 = scmp.eq.s32.totalorder %s24, 1
      %p63 = scmp.ne.s32.totalorder %s58, %s60
      %p64 = scmp.eq.s32.totalorder %s24, 0
      %p65 = por %p63, %p64
      %p66 = scmp.ne.s32.totalorder %s58, %s60
      %p67 = scmp.eq.s32.totalorder %s29, 1
      %p68 = por %p66, %p67
      %p69 = scmp.ne.s32.totalorder %s60, %s61
      %p70 = scmp.eq.s32.totalorder %s29, 0
      %p71 = por %p69, %p70
      %p72 = scmp.ne.s32.totalorder %s60, %s61
      %p73 = scmp.eq.s32.totalorder %s30, 1
      %p74 = por %p72, %p73
      %p76 = scmp.ne.s32.totalorder %s61, %s75
      %p77 = scmp.eq.s32.totalorder %s30, 0
      %p78 = por %p76, %p77
      %s80 = sadd.s32 %s79, 1
      %p83 = scmp.eq.s32.totalorder %s24, 1
      %p84 = scmp.ne.s32.totalorder %s79, %s81
      %p85 = scmp.eq.s32.totalorder %s24, 0
      %p86 = por %p84, %p85
      %p87 = scmp.ne.s32.totalorder %s79, %s81
      %p88 = scmp.eq.s32.totalorder %s29, 1
      %p89 = por %p87, %p88
      %p90 = scmp.ne.s32.totalorder %s81, %s82
      %p91 = scmp.eq.s32.totalorder %s29, 0
      %p92 = por %p90, %p91
      %p93 = scmp.ne.s32.totalorder %s81, %s82
      %p94 = scmp.eq.s32.totalorder %s30, 1
      %p95 = por %p93, %p94
      %p97 = scmp.ne.s32.totalorder %s82, %s96
      %p98 = scmp.eq.s32.totalorder %s30, 0
      %p99 = por %p97, %p98
      %s101 = sadd.s32 %s100, 1
      %p104 = scmp.eq.s32.totalorder %s24, 1
      %p105 = scmp.ne.s32.totalorder %s100, %s102
      %p106 = scmp.eq.s32.totalorder %s24, 0
      %p107 = por %p105, %p106
      %p108 = scmp.ne.s32.totalorder %s100, %s102
      %p109 = scmp.eq.s32.totalorder %s29, 1
      %p110 = por %p108, %p109
      %p111 = scmp.ne.s32.totalorder %s102, %s103
      %p112 = scmp.eq.s32.totalorder %s29, 0
      %p113 = por %p111, %p112
      %p114 = scmp.ne.s32.totalorder %s102, %s103
      %p115 = scmp.eq.s32.totalorder %s30, 1
      %p116 = por %p114, %p115
      %p118 = scmp.ne.s32.totalorder %s103, %s117
      %p119 = scmp.eq.s32.totalorder %s30, 0
      %p120 = por %p118, %p119
      %s122 = sadd.s32 %s121, 1
      %p125 = scmp.eq.s32.totalorder %s24, 1
      %p126 = scmp.ne.s32.totalorder %s121, %s123
      %p127 = scmp.eq.s32.totalorder %s24, 0
      %p128 = por %p126, %p127
      %p129 = scmp.ne.s32.totalorder %s121, %s123
      %p130 = scmp.eq.s32.totalorder %s29, 1
      %p131 = por %p129, %p130
      %p132 = scmp.ne.s32.totalorder %s123, %s124
      %p133 = scmp.eq.s32.totalorder %s29, 0
      %p134 = por %p132, %p133
      %p135 = scmp.ne.s32.totalorder %s123, %s124
      %p136 = scmp.eq.s32.totalorder %s30, 1
      %p137 = por %p135, %p136
      %p139 = scmp.ne.s32.totalorder %s124, %s138
      %p140 = scmp.eq.s32.totalorder %s30, 0
      %p141 = por %p139, %p140
      %s143 = sadd.s32 %s142, 1
      %p146 = scmp.eq.s32.totalorder %s24, 1
      %p147 = scmp.ne.s32.totalorder %s142, %s144
      %p148 = scmp.eq.s32.totalorder %s24, 0
      %p149 = por %p147, %p148
      %p150 = scmp.ne.s32.totalorder %s142, %s144
      %p151 = scmp.eq.s32.totalorder %s29, 1
      %p152 = por %p150, %p151
      %p153 = scmp.ne.s32.totalorder %s144, %s145
      %p154 = scmp.eq.s32.totalorder %s29, 0
      %p155 = por %p153, %p154
      %p156 = scmp.ne.s32.totalorder %s144, %s145
      %p157 = scmp.eq.s32.totalorder %s30, 1
      %p158 = por %p156, %p157
      %p160 = scmp.ne.s32.totalorder %s145, %s159
      %p161 = scmp.eq.s32.totalorder %s30, 0
      %p162 = por %p160, %p161
      %s164 = sadd.s32 %s163, 1
      %p167 = scmp.eq.s32.totalorder %s24, 1
      %p168 = scmp.ne.s32.totalorder %s163, %s165
      %p169 = scmp.eq.s32.totalorder %s24, 0
      %p170 = por %p168, %p169
      %p171 = scmp.ne.s32.totalorder %s163, %s165
      %p172 = scmp.eq.s32.totalorder %s29, 1
      %p173 = por %p171, %p172
      %p174 = scmp.ne.s32.totalorder %s165, %s166
      %p175 = scmp.eq.s32.totalorder %s29, 0
      %p176 = por %p174, %p175
      %p177 = scmp.ne.s32.totalorder %s165, %s166
      %p178 = scmp.eq.s32.totalorder %s30, 1
      %p179 = por %p177, %p178
      %p181 = scmp.ne.s32.totalorder %s166, %s180
      %p182 = scmp.eq.s32.totalorder %s30, 0
      %p183 = por %p181, %p182
      %s185 = sadd.s32 %s184, 1
      %p188 = scmp.eq.s32.totalorder %s24, 1
      %p189 = scmp.ne.s32.totalorder %s184, %s186
      %p190 = scmp.eq.s32.totalorder %s24, 0
      %p191 = por %p189, %p190
      %p192 = scmp.ne.s32.totalorder %s184, %s186
      %p193 = scmp.eq.s32.totalorder %s29, 1
      %p194 = por %p192, %p193
      %p195 = scmp.ne.s32.totalorder %s186, %s187
      %p196 = scmp.eq.s32.totalorder %s29, 0
      %p197 = por %p195, %p196
      %p198 = scmp.ne.s32.totalorder %s186, %s187
      %p199 = scmp.eq.s32.totalorder %s30, 1
      %p200 = por %p198, %p199
      %p202 = scmp.ne.s32.totalorder %s187, %s201
      %p203 = scmp.eq.s32.totalorder %s30, 0
      %p204 = por %p202, %p203
      %s206 = sadd.s32 %s205, 1
      %p209 = scmp.eq.s32.totalorder %s24, 1
      %p210 = scmp.ne.s32.totalorder %s205, %s207
      %p211 = scmp.eq.s32.totalorder %s24, 0
      %p212 = por %p210, %p211
      %p213 = scmp.ne.s32.totalorder %s205, %s207
      %p214 = scmp.eq.s32.totalorder %s29, 1
      %p215 = por %p213, %p214
      %p216 = scmp.ne.s32.totalorder %s207, %s208
      %p217 = scmp.eq.s32.totalorder %s29, 0
      %p218 = por %p216, %p217
      %p219 = scmp.ne.s32.totalorder %s207, %s208
      %p220 = scmp.eq.s32.totalorder %s30, 1
      %p221 = por %p219, %p220
      %p223 = scmp.ne.s32.totalorder %s208, %s222
      %p224 = scmp.eq.s32.totalorder %s30, 0
      %p225 = por %p223, %p224
      %s227 = sadd.s32 %s226, 1
      %p230 = scmp.eq.s32.totalorder %s24, 1
      %p231 = scmp.ne.s32.totalorder %s226, %s228
      %p232 = scmp.eq.s32.totalorder %s24, 0
      %p233 = por %p231, %p232
      %p234 = scmp.ne.s32.totalorder %s226, %s228
      %p235 = scmp.eq.s32.totalorder %s29, 1
      %p236 = por %p234, %p235
      %p237 = scmp.ne.s32.totalorder %s228, %s229
      %p238 = scmp.eq.s32.totalorder %s29, 0
      %p239 = por %p237, %p238
      %p240 = scmp.ne.s32.totalorder %s228, %s229
      %p241 = scmp.eq.s32.totalorder %s30, 1
      %p242 = por %p240, %p241
      %p244 = scmp.ne.s32.totalorder %s229, %s243
      %p245 = scmp.eq.s32.totalorder %s30, 0
      %p246 = por %p244, %p245
      %s248 = sadd.s32 %s247, 1
      %p251 = scmp.eq.s32.totalorder %s24, 1
      %p252 = scmp.ne.s32.totalorder %s247, %s249
      %p253 = scmp.eq.s32.totalorder %s24, 0
      %p254 = por %p252, %p253
      %p255 = scmp.ne.s32.totalorder %s247, %s249
      %p256 = scmp.eq.s32.totalorder %s29, 1
      %p257 = por %p255, %p256
      %p258 = scmp.ne.s32.totalorder %s249, %s250
      %p259 = scmp.eq.s32.totalorder %s29, 0
      %p260 = por %p258, %p259
      %p261 = scmp.ne.s32.totalorder %s249, %s250
      %p262 = scmp.eq.s32.totalorder %s30, 1
      %p263 = por %p261, %p262
      %p265 = scmp.ne.s32.totalorder %s250, %s264
      %p266 = scmp.eq.s32.totalorder %s30, 0
      %p267 = por %p265, %p266
      %s269 = sadd.s32 %s268, 1
      %p272 = scmp.eq.s32.totalorder %s24, 1
      %p273 = scmp.ne.s32.totalorder %s268, %s270
      %p274 = scmp.eq.s32.totalorder %s24, 0
      %p275 = por %p273, %p274
      %p276 = scmp.ne.s32.totalorder %s268, %s270
      %p277 = scmp.eq.s32.totalorder %s29, 1
      %p278 = por %p276, %p277
      %p279 = scmp.ne.s32.totalorder %s270, %s271
      %p280 = scmp.eq.s32.totalorder %s29, 0
      %p281 = por %p279, %p280
      %p282 = scmp.ne.s32.totalorder %s270, %s271
      %p283 = scmp.eq.s32.totalorder %s30, 1
      %p284 = por %p282, %p283
      %p286 = scmp.ne.s32.totalorder %s271, %s285
      %p287 = scmp.eq.s32.totalorder %s30, 0
      %p288 = por %p286, %p287
      %s290 = sadd.s32 %s289, 1
      %p293 = scmp.eq.s32.totalorder %s24, 1
      %p294 = scmp.ne.s32.totalorder %s289, %s291
      %p295 = scmp.eq.s32.totalorder %s24, 0
      %p296 = por %p294, %p295
      %p297 = scmp.ne.s32.totalorder %s289, %s291
      %p298 = scmp.eq.s32.totalorder %s29, 1
      %p299 = por %p297, %p298
      %p300 = scmp.ne.s32.totalorder %s291, %s292
      %p301 = scmp.eq.s32.totalorder %s29, 0
      %p302 = por %p300, %p301
      %p303 = scmp.ne.s32.totalorder %s291, %s292
      %p304 = scmp.eq.s32.totalorder %s30, 1
      %p305 = por %p303, %p304
      %p307 = scmp.ne.s32.totalorder %s292, %s306
      %p308 = scmp.eq.s32.totalorder %s30, 0
      %p309 = por %p307, %p308
      %s311 = sadd.s32 %s310, 1
      %p314 = scmp.eq.s32.totalorder %s24, 1
      %p315 = scmp.ne.s32.totalorder %s310, %s312
      %p316 = scmp.eq.s32.totalorder %s24, 0
      %p317 = por %p315, %p316
      %p318 = scmp.ne.s32.totalorder %s310, %s312
      %p319 = scmp.eq.s32.totalorder %s29, 1
      %p320 = por %p318, %p319
      %p321 = scmp.ne.s32.totalorder %s312, %s313
      %p322 = scmp.eq.s32.totalorder %s29, 0
      %p323 = por %p321, %p322
      %p324 = scmp.ne.s32.totalorder %s312, %s313
      %p325 = scmp.eq.s32.totalorder %s30, 1
      %p326 = por %p324, %p325
      %p328 = scmp.ne.s32.totalorder %s313, %s327
      %p329 = scmp.eq.s32.totalorder %s30, 0
      %p330 = por %p328, %p329
      %s332 = sadd.s32 %s331, 1
      %p335 = scmp.eq.s32.totalorder %s24, 1
      %p336 = scmp.ne.s32.totalorder %s331, %s333
      %p337 = scmp.eq.s32.totalorder %s24, 0
      %p338 = por %p336, %p337
      %p339 = scmp.ne.s32.totalorder %s331, %s333
      %p340 = scmp.eq.s32.totalorder %s29, 1
      %p341 = por %p339, %p340
      %p342 = scmp.ne.s32.totalorder %s333, %s334
      %p343 = scmp.eq.s32.totalorder %s29, 0
      %p344 = por %p342, %p343
      %p345 = scmp.ne.s32.totalorder %s333, %s334
      %p346 = scmp.eq.s32.totalorder %s30, 1
      %p347 = por %p345, %p346
      %p349 = scmp.ne.s32.totalorder %s334, %s348
      %p350 = scmp.eq.s32.totalorder %s30, 0
      %p351 = por %p349, %p350
      %s352 = ssub.s32 %s24, %s31
      %p353 = scmp.eq.s32.totalorder %s352, 0
      %s355 = sadd.s32 %s354, 1
      %s356 = scalar_select %p353, %s354, %s355
      %p359 = pneg %p353
      %p360 = scmp.eq.s32.totalorder %s24, 1
      %p361 = por %p359, %p360
      %p362 = scmp.ne.s32.totalorder %s354, %s357
      %p363 = scmp.eq.s32.totalorder %s24, 0
      %p364 = por %p362, %p363
      %p365 = scmp.ne.s32.totalorder %s354, %s357
      %p366 = scmp.eq.s32.totalorder %s29, 1
      %p367 = por %p365, %p366
      %p368 = scmp.ne.s32.totalorder %s357, %s358
      %p369 = scmp.eq.s32.totalorder %s29, 0
      %p370 = por %p368, %p369
      %p371 = scmp.ne.s32.totalorder %s357, %s358
      %p372 = scmp.eq.s32.totalorder %s30, 1
      %p373 = por %p371, %p372
      %p375 = scmp.ne.s32.totalorder %s358, %s374
      %p376 = scmp.eq.s32.totalorder %s30, 0
      %p377 = por %p375, %p376
      %p378 = scmp.le.s32.totalorder 1, %s24
      %p379 = scmp.lt.s32.totalorder %s24, 3
      %p380 = pnand %p378, %p379
      %p381 = pneg %p380
      // Predicated region
      $region9: #{model_forward.1} parent=5 // pred_check
        _
      $region10: #{model_forward.1} parent=5 // pred_check_branch
        %383 = sbr.rel (%p380) target = $region12
      $region11: #{model_forward.1} parent=5 // pred_region
        %s384 = ssub.s32 %s24, 1
        // Predicated region
        $region13: #{model_forward.1} parent=11 // pred_check
          %p385 = pneg %p71
        $region14: #{model_forward.1} parent=11 // pred_check_branch
          %387 = sbr.rel (%p385) target = $region16
        $region15: #{model_forward.1} parent=11 // pred_region
          _
        $region16: #{model_forward.1} parent=11 // pred_fallthru
          _
        // Predicated region
        $region17: #{model_forward.1} parent=11 // pred_check
          %p388 = pneg %p92
        $region18: #{model_forward.1} parent=11 // pred_check_branch
          %390 = sbr.rel (%p388) target = $region20
        $region19: #{model_forward.1} parent=11 // pred_region
          _
        $region20: #{model_forward.1} parent=11 // pred_fallthru
          _
        // Predicated region
        $region21: #{model_forward.1} parent=11 // pred_check
          %p391 = pneg %p113
        $region22: #{model_forward.1} parent=11 // pred_check_branch
          %393 = sbr.rel (%p391) target = $region24
        $region23: #{model_forward.1} parent=11 // pred_region
          _
        $region24: #{model_forward.1} parent=11 // pred_fallthru
          _
        // Predicated region
        $region25: #{model_forward.1} parent=11 // pred_check
          %p394 = pneg %p134
        $region26: #{model_forward.1} parent=11 // pred_check_branch
          %396 = sbr.rel (%p394) target = $region28
        $region27: #{model_forward.1} parent=11 // pred_region
          _
        $region28: #{model_forward.1} parent=11 // pred_fallthru
          _
        // Predicated region
        $region29: #{model_forward.1} parent=11 // pred_check
          %p397 = pneg %p155
        $region30: #{model_forward.1} parent=11 // pred_check_branch
          %399 = sbr.rel (%p397) target = $region32
        $region31: #{model_forward.1} parent=11 // pred_region
          _
        $region32: #{model_forward.1} parent=11 // pred_fallthru
          _
        // Predicated region
        $region33: #{model_forward.1} parent=11 // pred_check
          %p400 = pneg %p176
        $region34: #{model_forward.1} parent=11 // pred_check_branch
          %402 = sbr.rel (%p400) target = $region36
        $region35: #{model_forward.1} parent=11 // pred_region
          _
        $region36: #{model_forward.1} parent=11 // pred_fallthru
          _
        // Predicated region
        $region37: #{model_forward.1} parent=11 // pred_check
          %p403 = pneg %p197
        $region38: #{model_forward.1} parent=11 // pred_check_branch
          %405 = sbr.rel (%p403) target = $region40
        $region39: #{model_forward.1} parent=11 // pred_region
          %s407 = ssub.s32 9216, 9216
          %408 = vsyncadd [#allocation5], %s407
          %s409 = sshll.u32 [#allocation4], 4
          %s410 = int_to_ptr.vmem [resolvable:$true] %s409
          %415 = dma.hbm_to_vmem [thread:$0]  %s7, 9216, %s410, [#allocation5], 128, 128, 8
        $region40: #{model_forward.1} parent=11 // pred_fallthru
          _
        // Predicated region
        $region41: #{model_forward.1} parent=11 // pred_check
          %p416 = pneg %p218
        $region42: #{model_forward.1} parent=11 // pred_check_branch
          %418 = sbr.rel (%p416) target = $region44
        $region43: #{model_forward.1} parent=11 // pred_region
          _
        $region44: #{model_forward.1} parent=11 // pred_fallthru
          _
        // Predicated region
        $region45: #{model_forward.1} parent=11 // pred_check
          %p419 = pneg %p239
        $region46: #{model_forward.1} parent=11 // pred_check_branch
          %421 = sbr.rel (%p419) target = $region48
        $region47: #{model_forward.1} parent=11 // pred_region
          _
        $region48: #{model_forward.1} parent=11 // pred_fallthru
          _
        // Predicated region
        $region49: #{model_forward.1} parent=11 // pred_check
          %p422 = pneg %p260
        $region50: #{model_forward.1} parent=11 // pred_check_branch
          %424 = sbr.rel (%p422) target = $region52
        $region51: #{model_forward.1} parent=11 // pred_region
          _
        $region52: #{model_forward.1} parent=11 // pred_fallthru
          _
        // Predicated region
        $region53: #{model_forward.1} parent=11 // pred_check
          %p425 = pneg %p281
        $region54: #{model_forward.1} parent=11 // pred_check_branch
          %427 = sbr.rel (%p425) target = $region56
        $region55: #{model_forward.1} parent=11 // pred_region
          _
        $region56: #{model_forward.1} parent=11 // pred_fallthru
          _
        // Predicated region
        $region57: #{model_forward.1} parent=11 // pred_check
          %p428 = pneg %p302
        $region58: #{model_forward.1} parent=11 // pred_check_branch
          %430 = sbr.rel (%p428) target = $region60
        $region59: #{model_forward.1} parent=11 // pred_region
          _
        $region60: #{model_forward.1} parent=11 // pred_fallthru
          _
        // Predicated region
        $region61: #{model_forward.1} parent=11 // pred_check
          %p431 = pneg %p323
        $region62: #{model_forward.1} parent=11 // pred_check_branch
          %433 = sbr.rel (%p431) target = $region64
        $region63: #{model_forward.1} parent=11 // pred_region
          _
        $region64: #{model_forward.1} parent=11 // pred_fallthru
          _
        // Predicated region
        $region65: #{model_forward.1} parent=11 // pred_check
          %p434 = pneg %p344
        $region66: #{model_forward.1} parent=11 // pred_check_branch
          %436 = sbr.rel (%p434) target = $region68
        $region67: #{model_forward.1} parent=11 // pred_region
          _
        $region68: #{model_forward.1} parent=11 // pred_fallthru
          _
      $region12: #{model_forward.1} parent=5 // pred_fallthru
        _
      %p437 = scmp.lt.s32.totalorder %s24, 2
      // Predicated region
      $region69: #{model_forward.1} parent=5 // pred_check
        %p438 = pneg %p437
      $region70: #{model_forward.1} parent=5 // pred_check_branch
        %440 = sbr.rel (%p438) target = $region72
      $region71: #{model_forward.1} parent=5 // pred_region
        // Predicated region
        $region73: #{model_forward.1} parent=71 // pred_check
          %p441 = pneg %p44
        $region74: #{model_forward.1} parent=71 // pred_check_branch
          %443 = sbr.rel (%p441) target = $region76
        $region75: #{model_forward.1} parent=71 // pred_region
          %p444 = scmp.lt.s32.totalorder %s24, 1
          %s445 = scalar_select %p444, %s24, 1
          %s446 = smul.addr %s445, 16
          %s447 = smul.addr %s446, 8
          %s448 = scalar_lea.vmem %s0, %s447
        $region76: #{model_forward.1} parent=71 // pred_fallthru
          _
      $region72: #{model_forward.1} parent=5 // pred_fallthru
        _
      %p449 = scmp.le.s32.totalorder 1, %s24
      %p450 = scmp.lt.s32.totalorder %s24, 3
      %p451 = pnand %p449, %p450
      %p452 = pneg %p451
      // Predicated region
      $region77: #{model_forward.1} parent=5 // pred_check
        _
      $region78: #{model_forward.1} parent=5 // pred_check_branch
        %454 = sbr.rel (%p451) target = $region80
      $region79: #{model_forward.1} parent=5 // pred_region
        %s455 = ssub.s32 %s24, 1
        // Predicated region
        $region81: #{model_forward.1} parent=79 // pred_check
          %p456 = pneg %p197
        $region82: #{model_forward.1} parent=79 // pred_check_branch
          %458 = sbr.rel (%p456) target = $region84
        $region83: #{model_forward.1} parent=79 // pred_region
          %459 = dma.done [#allocation5], 9216
        $region84: #{model_forward.1} parent=79 // pred_fallthru
          _
        %p460 = scmp.lt.s32.totalorder %s29, 1
        %s461 = scalar_select %p460, %s29, 1
        %s462 = smul.addr %s461, 16
        %s463 = smul.addr %s462, 8
        %s464 = scalar_lea.vmem %s0, %s463
        %p465 = pneg %p50
        %p466 = pneg %p47
        %p467 = pneg %p71
        %p468 = pneg %p68
        %p469 = pneg %p92
        %p470 = pneg %p89
        %p471 = pneg %p113
        %p472 = pneg %p110
        %p473 = pneg %p134
        %p474 = pneg %p131
        %p475 = pneg %p155
        %p476 = pneg %p152
        %p477 = pneg %p176
        %p478 = pneg %p173
        %p479 = pneg %p197
        %p480 = pneg %p194
        %p481 = pneg %p218
        %p482 = pneg %p215
        %p483 = pneg %p239
        %p484 = pneg %p236
        %p485 = pneg %p260
        %p486 = pneg %p257
        %p487 = pneg %p281
        %p488 = pneg %p278
        %p489 = pneg %p302
        %p490 = pneg %p299
        %p491 = pneg %p323
        %p492 = pneg %p320
        %p493 = pneg %p344
        %p494 = pneg %p341
        %p495 = pneg %p370
        %p496 = pneg %p367
        %p497 = scmp.lt.s32.totalorder %s29, 1
        %s498 = scalar_select %p497, %s29, 1
        %s499 = smul.addr %s498, 29
        %s500 = smul.addr %s499, 8
        %s501 = scalar_lea.vmem %s15, %s500
        %p502 = scmp.lt.s32.totalorder %s29, 1
        %s503 = scalar_select %p502, %s29, 1
        %s504 = smul.addr %s503, 16
        %s505 = smul.addr %s504, 8
        %s506 = scalar_lea.vmem %s0, %s505
        %p507 = scmp.lt.s32.totalorder %s29, 1
        %s508 = scalar_select %p507, %s29, 1
        %s509 = smul.addr %s508, 29
        %s510 = smul.addr %s509, 8
        %s511 = scalar_lea.vmem %s15, %s510
        %vm512 = vcmask 523264
        %513 = vst.msk [vmem:[#allocation2] sm:$0xff] %vm512, 0.0
        %514 = vst.msk [vmem:[#allocation2 + $0x8] sm:$0xff] %vm512, 0.0
        %515 = vst.msk [vmem:[#allocation2 + $0x10] sm:$0xff] %vm512, 0.0
        %516 = vst.msk [vmem:[#allocation2 + $0x18] sm:$0xff] %vm512, 0.0
        %517 = vst.msk [vmem:[#allocation2 + $0x20] sm:$0xff] %vm512, 0.0
        %518 = vst.msk [vmem:[#allocation2 + $0x28] sm:$0xff] %vm512, 0.0
        %519 = vst.msk [vmem:[#allocation2 + $0x30] sm:$0xff] %vm512, 0.0
        %520 = vst.msk [vmem:[#allocation2 + $0x38] sm:$0xff] %vm512, 0.0
        %521 = vst.msk [vmem:[#allocation2 + $0x40] sm:$0xff] %vm512, 0.0
        %522 = vst.msk [vmem:[#allocation2 + $0x48] sm:$0xff] %vm512, 0.0
        %523 = vst.msk [vmem:[#allocation2 + $0x50] sm:$0xff] %vm512, 0.0
        %524 = vst.msk [vmem:[#allocation2 + $0x58] sm:$0xff] %vm512, 0.0
        %525 = vst.msk [vmem:[#allocation2 + $0x60] sm:$0xff] %vm512, 0.0
        %526 = vst.msk [vmem:[#allocation2 + $0x68] sm:$0xff] %vm512, 0.0
        %527 = vst.msk [vmem:[#allocation2 + $0x70] sm:$0xff] %vm512, 0.0
        %528 = vst.msk [vmem:[#allocation2 + $0x78] sm:$0xff] %vm512, 0.0
        %529 = vst.msk [vmem:[#allocation2 + $0x80] sm:$0xff] %vm512, 0.0
        %530 = vst.msk [vmem:[#allocation2 + $0x88] sm:$0xff] %vm512, 0.0
        %531 = vst.msk [vmem:[#allocation2 + $0x90] sm:$0xff] %vm512, 0.0
        %532 = vst.msk [vmem:[#allocation2 + $0x98] sm:$0xff] %vm512, 0.0
        %533 = vst.msk [vmem:[#allocation2 + $0xa0] sm:$0xff] %vm512, 0.0
        %534 = vst.msk [vmem:[#allocation2 + $0xa8] sm:$0xff] %vm512, 0.0
        %535 = vst.msk [vmem:[#allocation2 + $0xb0] sm:$0xff] %vm512, 0.0
        %536 = vst.msk [vmem:[#allocation2 + $0xb8] sm:$0xff] %vm512, 0.0
        %537 = vst.msk [vmem:[#allocation2 + $0xc0] sm:$0xff] %vm512, 0.0
        %538 = vst.msk [vmem:[#allocation2 + $0xc8] sm:$0xff] %vm512, 0.0
        %539 = vst.msk [vmem:[#allocation2 + $0xd0] sm:$0xff] %vm512, 0.0
        %540 = vst.msk [vmem:[#allocation2 + $0xd8] sm:$0xff] %vm512, 0.0
        %541 = vst.msk [vmem:[#allocation2 + $0xe0] sm:$0xff] %vm512, 0.0
        %542 = vst.msk [vmem:[#allocation2 + $0xe8] sm:$0xff] %vm512, 0.0
        %543 = vst.msk [vmem:[#allocation2 + $0xf0] sm:$0xff] %vm512, 0.0
        %544 = vst.msk [vmem:[#allocation2 + $0xf8] sm:$0xff] %vm512, 0.0
        %545 = vst.msk [vmem:[#allocation2 + $0x100] sm:$0xff] %vm512, 0.0
        %546 = vst.msk [vmem:[#allocation2 + $0x108] sm:$0xff] %vm512, 0.0
        %547 = vst.msk [vmem:[#allocation2 + $0x110] sm:$0xff] %vm512, 0.0
        %548 = vst.msk [vmem:[#allocation2 + $0x118] sm:$0xff] %vm512, 0.0
        %549 = vst.msk [vmem:[#allocation2 + $0x120] sm:$0xff] %vm512, 0.0
        %550 = vst.msk [vmem:[#allocation2 + $0x128] sm:$0xff] %vm512, 0.0
        %551 = vst.msk [vmem:[#allocation2 + $0x130] sm:$0xff] %vm512, 0.0
        %552 = vst.msk [vmem:[#allocation2 + $0x138] sm:$0xff] %vm512, 0.0
        %553 = vst.msk [vmem:[#allocation2 + $0x140] sm:$0xff] %vm512, 0.0
        %554 = vst.msk [vmem:[#allocation2 + $0x148] sm:$0xff] %vm512, 0.0
        %555 = vst.msk [vmem:[#allocation2 + $0x150] sm:$0xff] %vm512, 0.0
        %556 = vst.msk [vmem:[#allocation2 + $0x158] sm:$0xff] %vm512, 0.0
        %557 = vst.msk [vmem:[#allocation2 + $0x160] sm:$0xff] %vm512, 0.0
        %558 = vst.msk [vmem:[#allocation2 + $0x168] sm:$0xff] %vm512, 0.0
        %559 = vst.msk [vmem:[#allocation2 + $0x170] sm:$0xff] %vm512, 0.0
        %560 = vst.msk [vmem:[#allocation2 + $0x178] sm:$0xff] %vm512, 0.0
        %561 = vst.msk [vmem:[#allocation2 + $0x180] sm:$0xff] %vm512, 0.0
        %562 = vst.msk [vmem:[#allocation2 + $0x188] sm:$0xff] %vm512, 0.0
        %563 = vst.msk [vmem:[#allocation2 + $0x190] sm:$0xff] %vm512, 0.0
        %564 = vst.msk [vmem:[#allocation2 + $0x198] sm:$0xff] %vm512, 0.0
        %565 = vst.msk [vmem:[#allocation2 + $0x1a0] sm:$0xff] %vm512, 0.0
        %566 = vst.msk [vmem:[#allocation2 + $0x1a8] sm:$0xff] %vm512, 0.0
        %567 = vst.msk [vmem:[#allocation2 + $0x1b0] sm:$0xff] %vm512, 0.0
        %568 = vst.msk [vmem:[#allocation2 + $0x1b8] sm:$0xff] %vm512, 0.0
        %569 = vst.msk [vmem:[#allocation2 + $0x1c0] sm:$0xff] %vm512, 0.0
        %570 = vst.msk [vmem:[#allocation2 + $0x1c8] sm:$0xff] %vm512, 0.0
        %571 = vst.msk [vmem:[#allocation2 + $0x1d0] sm:$0xff] %vm512, 0.0
        %572 = vst.msk [vmem:[#allocation2 + $0x1d8] sm:$0xff] %vm512, 0.0
        %573 = vst.msk [vmem:[#allocation2 + $0x1e0] sm:$0xff] %vm512, 0.0
        %574 = vst.msk [vmem:[#allocation2 + $0x1e8] sm:$0xff] %vm512, 0.0
        %575 = vst.msk [vmem:[#allocation2 + $0x1f0] sm:$0xff] %vm512, 0.0
        %576 = vst.msk [vmem:[#allocation2 + $0x1f8] sm:$0xff] %vm512, 0.0
        %577 = vst.msk [vmem:[#allocation2 + $0x200] sm:$0xff] %vm512, 0.0
        %578 = vst.msk [vmem:[#allocation2 + $0x208] sm:$0xff] %vm512, 0.0
        %579 = vst.msk [vmem:[#allocation2 + $0x210] sm:$0xff] %vm512, 0.0
        %580 = vst.msk [vmem:[#allocation2 + $0x218] sm:$0xff] %vm512, 0.0
        %581 = vst.msk [vmem:[#allocation2 + $0x220] sm:$0xff] %vm512, 0.0
        %582 = vst.msk [vmem:[#allocation2 + $0x228] sm:$0xff] %vm512, 0.0
        %583 = vst.msk [vmem:[#allocation2 + $0x230] sm:$0xff] %vm512, 0.0
        %584 = vst.msk [vmem:[#allocation2 + $0x238] sm:$0xff] %vm512, 0.0
        %585 = vst.msk [vmem:[#allocation2 + $0x240] sm:$0xff] %vm512, 0.0
        %586 = vst.msk [vmem:[#allocation2 + $0x248] sm:$0xff] %vm512, 0.0
        %587 = vst.msk [vmem:[#allocation2 + $0x250] sm:$0xff] %vm512, 0.0
        %588 = vst.msk [vmem:[#allocation2 + $0x258] sm:$0xff] %vm512, 0.0
        %589 = vst.msk [vmem:[#allocation2 + $0x260] sm:$0xff] %vm512, 0.0
        %590 = vst.msk [vmem:[#allocation2 + $0x268] sm:$0xff] %vm512, 0.0
        %591 = vst.msk [vmem:[#allocation2 + $0x270] sm:$0xff] %vm512, 0.0
        %592 = vst.msk [vmem:[#allocation2 + $0x278] sm:$0xff] %vm512, 0.0
        %593 = vst.msk [vmem:[#allocation2 + $0x280] sm:$0xff] %vm512, 0.0
        %594 = vst.msk [vmem:[#allocation2 + $0x288] sm:$0xff] %vm512, 0.0
        %595 = vst.msk [vmem:[#allocation2 + $0x290] sm:$0xff] %vm512, 0.0
        %596 = vst.msk [vmem:[#allocation2 + $0x298] sm:$0xff] %vm512, 0.0
        %597 = vst.msk [vmem:[#allocation2 + $0x2a0] sm:$0xff] %vm512, 0.0
        %598 = vst.msk [vmem:[#allocation2 + $0x2a8] sm:$0xff] %vm512, 0.0
        %599 = vst.msk [vmem:[#allocation2 + $0x2b0] sm:$0xff] %vm512, 0.0
        %600 = vst.msk [vmem:[#allocation2 + $0x2b8] sm:$0xff] %vm512, 0.0
        %601 = vst.msk [vmem:[#allocation2 + $0x2c0] sm:$0xff] %vm512, 0.0
        %602 = vst.msk [vmem:[#allocation2 + $0x2c8] sm:$0xff] %vm512, 0.0
        %603 = vst.msk [vmem:[#allocation2 + $0x2d0] sm:$0xff] %vm512, 0.0
        %604 = vst.msk [vmem:[#allocation2 + $0x2d8] sm:$0xff] %vm512, 0.0
        %605 = vst.msk [vmem:[#allocation2 + $0x2e0] sm:$0xff] %vm512, 0.0
        %606 = vst.msk [vmem:[#allocation2 + $0x2e8] sm:$0xff] %vm512, 0.0
        %607 = vst.msk [vmem:[#allocation2 + $0x2f0] sm:$0xff] %vm512, 0.0
        %608 = vst.msk [vmem:[#allocation2 + $0x2f8] sm:$0xff] %vm512, 0.0
        %609 = vst.msk [vmem:[#allocation2 + $0x300] sm:$0xff] %vm512, 0.0
        %610 = vst.msk [vmem:[#allocation2 + $0x308] sm:$0xff] %vm512, 0.0
        %611 = vst.msk [vmem:[#allocation2 + $0x310] sm:$0xff] %vm512, 0.0
        %612 = vst.msk [vmem:[#allocation2 + $0x318] sm:$0xff] %vm512, 0.0
        %v613 = vld [vmem:[%s1] sm:$0xff]
        %v614 = vld [vmem:[%s1 + $0x8] sm:$0x1]
        %v615 = vld [vmem:[%s506] sm:$0xff]
        %v616 = vld [vmem:[%s506 + $0x8] sm:$0xff]
        %v617 = vld [vmem:[%s506 + $0x10] sm:$0xff]
        %v618 = vld [vmem:[%s506 + $0x18] sm:$0x1]
        %620 = vset.pattern.permute.xlu0 0
        %621 = vperm.xlu0 %620, %v615
        %v622 = vpop.permute.xlu0 %621
        %625 = vset.pattern.permute.xlu0 0
        %626 = vperm.xlu0 %625, %v616
        %v627 = vpop.permute.xlu0 %626
        %630 = vset.pattern.permute.xlu0 0
        %631 = vperm.xlu0 %630, %v617
        %v632 = vpop.permute.xlu0 %631
        %635 = vset.pattern.permute.xlu0 0
        %636 = vperm.xlu0 %635, %v618
        %v637 = vpop.permute.xlu0 %636
        %v639 = vlaneseq
        %v640 = vshrl.u32 %v639, 7
        %v641 = vsub.s32 0, %v640
        %v642 = vrot.slane %v613, %v641
        %v643 = vmul.f32 %v622, %v642
        %v644 = vmul.f32 %v627, %v642
        %v645 = vmul.f32 %v632, %v642
        %v646 = vmul.f32 %v637, %v642
        %v647 = vadd.f32 %v643, 0.0
        %v648 = vadd.f32 %v644, 0.0
        %v649 = vadd.f32 %v645, 0.0
        %v650 = vadd.f32 %v646, 0.0
        %651 = vset.pattern.permute.xlu0 1
        %652 = vperm.xlu0 %651, %v615
        %v653 = vpop.permute.xlu0 %652
        %655 = vset.pattern.permute.xlu0 1
        %656 = vperm.xlu0 %655, %v616
        %v657 = vpop.permute.xlu0 %656
        %659 = vset.pattern.permute.xlu0 1
        %660 = vperm.xlu0 %659, %v617
        %v661 = vpop.permute.xlu0 %660
        %663 = vset.pattern.permute.xlu0 1
        %664 = vperm.xlu0 %663, %v618
        %v665 = vpop.permute.xlu0 %664
        %v667 = vlaneseq
        %v668 = vshrl.u32 %v667, 7
        %v669 = vsub.s32 1, %v668
        %v670 = vrot.slane %v613, %v669
        %v671 = vmul.f32 %v653, %v670
        %v672 = vmul.f32 %v657, %v670
        %v673 = vmul.f32 %v661, %v670
        %v674 = vmul.f32 %v665, %v670
        %v675 = vadd.f32 %v647, %v671
        %v676 = vadd.f32 %v648, %v672
        %v677 = vadd.f32 %v649, %v673
        %v678 = vadd.f32 %v650, %v674
        %679 = vset.pattern.permute.xlu0 2
        %680 = vperm.xlu0 %679, %v615
        %v681 = vpop.permute.xlu0 %680
        %683 = vset.pattern.permute.xlu0 2
        %684 = vperm.xlu0 %683, %v616
        %v685 = vpop.permute.xlu0 %684
        %687 = vset.pattern.permute.xlu0 2
        %688 = vperm.xlu0 %687, %v617
        %v689 = vpop.permute.xlu0 %688
        %691 = vset.pattern.permute.xlu0 2
        %692 = vperm.xlu0 %691, %v618
        %v693 = vpop.permute.xlu0 %692
        %v695 = vlaneseq
        %v696 = vshrl.u32 %v695, 7
        %v697 = vsub.s32 2, %v696
        %v698 = vrot.slane %v613, %v697
        %v699 = vmul.f32 %v681, %v698
        %v700 = vmul.f32 %v685, %v698
        %v701 = vmul.f32 %v689, %v698
        %v702 = vmul.f32 %v693, %v698
        %v703 = vadd.f32 %v675, %v699
        %v704 = vadd.f32 %v676, %v700
        %v705 = vadd.f32 %v677, %v701
        %v706 = vadd.f32 %v678, %v702
        %707 = vset.pattern.permute.xlu0 3
        %708 = vperm.xlu0 %707, %v615
        %v709 = vpop.permute.xlu0 %708
        %711 = vset.pattern.permute.xlu0 3
        %712 = vperm.xlu0 %711, %v616
        %v713 = vpop.permute.xlu0 %712
        %715 = vset.pattern.permute.xlu0 3
        %716 = vperm.xlu0 %715, %v617
        %v717 = vpop.permute.xlu0 %716
        %719 = vset.pattern.permute.xlu0 3
        %720 = vperm.xlu0 %719, %v618
        %v721 = vpop.permute.xlu0 %720
        %v723 = vlaneseq
        %v724 = vshrl.u32 %v723, 7
        %v725 = vsub.s32 3, %v724
        %v726 = vrot.slane %v613, %v725
        %v727 = vmul.f32 %v709, %v726
        %v728 = vmul.f32 %v713, %v726
        %v729 = vmul.f32 %v717, %v726
        %v730 = vmul.f32 %v721, %v726
        %v731 = vadd.f32 %v703, %v727
        %v732 = vadd.f32 %v704, %v728
        %v733 = vadd.f32 %v705, %v729
        %v734 = vadd.f32 %v706, %v730
        %735 = vset.pattern.permute.xlu0 4
        %736 = vperm.xlu0 %735, %v615
        %v737 = vpop.permute.xlu0 %736
        %739 = vset.pattern.permute.xlu0 4
        %740 = vperm.xlu0 %739, %v616
        %v741 = vpop.permute.xlu0 %740
        %743 = vset.pattern.permute.xlu0 4
        %744 = vperm.xlu0 %743, %v617
        %v745 = vpop.permute.xlu0 %744
        %747 = vset.pattern.permute.xlu0 4
        %748 = vperm.xlu0 %747, %v618
        %v749 = vpop.permute.xlu0 %748
        %v751 = vlaneseq
        %v752 = vshrl.u32 %v751, 7
        %v753 = vsub.s32 4, %v752
        %v754 = vrot.slane %v613, %v753
        %v755 = vmul.f32 %v737, %v754
        %v756 = vmul.f32 %v741, %v754
        %v757 = vmul.f32 %v745, %v754
        %v758 = vmul.f32 %v749, %v754
        %v759 = vadd.f32 %v731, %v755
        %v760 = vadd.f32 %v732, %v756
        %v761 = vadd.f32 %v733, %v757
        %v762 = vadd.f32 %v734, %v758
        %763 = vset.pattern.permute.xlu0 5
        %764 = vperm.xlu0 %763, %v615
        %v765 = vpop.permute.xlu0 %764
        %767 = vset.pattern.permute.xlu0 5
        %768 = vperm.xlu0 %767, %v616
        %v769 = vpop.permute.xlu0 %768
        %771 = vset.pattern.permute.xlu0 5
        %772 = vperm.xlu0 %771, %v617
        %v773 = vpop.permute.xlu0 %772
        %775 = vset.pattern.permute.xlu0 5
        %776 = vperm.xlu0 %775, %v618
        %v777 = vpop.permute.xlu0 %776
        %v779 = vlaneseq
        %v780 = vshrl.u32 %v779, 7
        %v781 = vsub.s32 5, %v780
        %v782 = vrot.slane %v613, %v781
        %v783 = vmul.f32 %v765, %v782
        %v784 = vmul.f32 %v769, %v782
        %v785 = vmul.f32 %v773, %v782
        %v786 = vmul.f32 %v777, %v782
        %v787 = vadd.f32 %v759, %v783
        %v788 = vadd.f32 %v760, %v784
        %v789 = vadd.f32 %v761, %v785
        %v790 = vadd.f32 %v762, %v786
        %791 = vset.pattern.permute.xlu0 6
        %792 = vperm.xlu0 %791, %v615
        %v793 = vpop.permute.xlu0 %792
        %795 = vset.pattern.permute.xlu0 6
        %796 = vperm.xlu0 %795, %v616
        %v797 = vpop.permute.xlu0 %796
        %799 = vset.pattern.permute.xlu0 6
        %800 = vperm.xlu0 %799, %v617
        %v801 = vpop.permute.xlu0 %800
        %803 = vset.pattern.permute.xlu0 6
        %804 = vperm.xlu0 %803, %v618
        %v805 = vpop.permute.xlu0 %804
        %v807 = vlaneseq
        %v808 = vshrl.u32 %v807, 7
        %v809 = vsub.s32 6, %v808
        %v810 = vrot.slane %v613, %v809
        %v811 = vmul.f32 %v793, %v810
        %v812 = vmul.f32 %v797, %v810
        %v813 = vmul.f32 %v801, %v810
        %v814 = vmul.f32 %v805, %v810
        %v815 = vadd.f32 %v787, %v811
        %v816 = vadd.f32 %v788, %v812
        %v817 = vadd.f32 %v789, %v813
        %v818 = vadd.f32 %v790, %v814
        %819 = vset.pattern.permute.xlu0 7
        %820 = vperm.xlu0 %819, %v615
        %v821 = vpop.permute.xlu0 %820
        %823 = vset.pattern.permute.xlu0 7
        %824 = vperm.xlu0 %823, %v616
        %v825 = vpop.permute.xlu0 %824
        %827 = vset.pattern.permute.xlu0 7
        %828 = vperm.xlu0 %827, %v617
        %v829 = vpop.permute.xlu0 %828
        %831 = vset.pattern.permute.xlu0 7
        %832 = vperm.xlu0 %831, %v618
        %v833 = vpop.permute.xlu0 %832
        %v835 = vlaneseq
        %v836 = vshrl.u32 %v835, 7
        %v837 = vsub.s32 7, %v836
        %v838 = vrot.slane %v613, %v837
        %v839 = vmul.f32 %v821, %v838
        %v840 = vmul.f32 %v825, %v838
        %v841 = vmul.f32 %v829, %v838
        %v842 = vmul.f32 %v833, %v838
        %v843 = vadd.f32 %v815, %v839
        %v844 = vadd.f32 %v816, %v840
        %v845 = vadd.f32 %v817, %v841
        %v846 = vadd.f32 %v818, %v842
        %847 = vset.pattern.permute.xlu0 8
        %848 = vperm.xlu0 %847, %v615
        %v849 = vpop.permute.xlu0 %848
        %851 = vset.pattern.permute.xlu0 8
        %852 = vperm.xlu0 %851, %v616
        %v853 = vpop.permute.xlu0 %852
        %855 = vset.pattern.permute.xlu0 8
        %856 = vperm.xlu0 %855, %v617
        %v857 = vpop.permute.xlu0 %856
        %859 = vset.pattern.permute.xlu0 8
        %860 = vperm.xlu0 %859, %v618
        %v861 = vpop.permute.xlu0 %860
        %v863 = vlaneseq
        %v864 = vshrl.u32 %v863, 7
        %v865 = vsub.s32 0, %v864
        %v866 = vrot.slane %v614, %v865
        %v867 = vmul.f32 %v849, %v866
        %v868 = vmul.f32 %v853, %v866
        %v869 = vmul.f32 %v857, %v866
        %v870 = vmul.f32 %v861, %v866
        %v871 = vadd.f32 %v843, %v867
        %v872 = vadd.f32 %v844, %v868
        %v873 = vadd.f32 %v845, %v869
        %v874 = vadd.f32 %v846, %v870
        %s875 = scalar_lea.vmem %s506, 32
        %v876 = vld [vmem:[%s875] sm:$0xff]
        %v877 = vld [vmem:[%s875 + $0x8] sm:$0xff]
        %v878 = vld [vmem:[%s875 + $0x10] sm:$0xff]
        %v879 = vld [vmem:[%s875 + $0x18] sm:$0x1]
        %881 = vset.pattern.permute.xlu0 0
        %882 = vperm.xlu0 %881, %v876
        %v883 = vpop.permute.xlu0 %882
        %886 = vset.pattern.permute.xlu0 0
        %887 = vperm.xlu0 %886, %v877
        %v888 = vpop.permute.xlu0 %887
        %891 = vset.pattern.permute.xlu0 0
        %892 = vperm.xlu0 %891, %v878
        %v893 = vpop.permute.xlu0 %892
        %896 = vset.pattern.permute.xlu0 0
        %897 = vperm.xlu0 %896, %v879
        %v898 = vpop.permute.xlu0 %897
        %v900 = vmul.f32 %v883, %v642
        %v901 = vmul.f32 %v888, %v642
        %v902 = vmul.f32 %v893, %v642
        %v903 = vmul.f32 %v898, %v642
        %v904 = vadd.f32 %v900, 0.0
        %v905 = vadd.f32 %v901, 0.0
        %v906 = vadd.f32 %v902, 0.0
        %v907 = vadd.f32 %v903, 0.0
        %908 = vset.pattern.permute.xlu0 1
        %909 = vperm.xlu0 %908, %v876
        %v910 = vpop.permute.xlu0 %909
        %912 = vset.pattern.permute.xlu0 1
        %913 = vperm.xlu0 %912, %v877
        %v914 = vpop.permute.xlu0 %913
        %916 = vset.pattern.permute.xlu0 1
        %917 = vperm.xlu0 %916, %v878
        %v918 = vpop.permute.xlu0 %917
        %920 = vset.pattern.permute.xlu0 1
        %921 = vperm.xlu0 %920, %v879
        %v922 = vpop.permute.xlu0 %921
        %v924 = vmul.f32 %v910, %v670
        %v925 = vmul.f32 %v914, %v670
        %v926 = vmul.f32 %v918, %v670
        %v927 = vmul.f32 %v922, %v670
        %v928 = vadd.f32 %v904, %v924
        %v929 = vadd.f32 %v905, %v925
        %v930 = vadd.f32 %v906, %v926
        %v931 = vadd.f32 %v907, %v927
        %932 = vset.pattern.permute.xlu0 2
        %933 = vperm.xlu0 %932, %v876
        %v934 = vpop.permute.xlu0 %933
        %936 = vset.pattern.permute.xlu0 2
        %937 = vperm.xlu0 %936, %v877
        %v938 = vpop.permute.xlu0 %937
        %940 = vset.pattern.permute.xlu0 2
        %941 = vperm.xlu0 %940, %v878
        %v942 = vpop.permute.xlu0 %941
        %944 = vset.pattern.permute.xlu0 2
        %945 = vperm.xlu0 %944, %v879
        %v946 = vpop.permute.xlu0 %945
        %v948 = vmul.f32 %v934, %v698
        %v949 = vmul.f32 %v938, %v698
        %v950 = vmul.f32 %v942, %v698
        %v951 = vmul.f32 %v946, %v698
        %v952 = vadd.f32 %v928, %v948
        %v953 = vadd.f32 %v929, %v949
        %v954 = vadd.f32 %v930, %v950
        %v955 = vadd.f32 %v931, %v951
        %956 = vset.pattern.permute.xlu0 3
        %957 = vperm.xlu0 %956, %v876
        %v958 = vpop.permute.xlu0 %957
        %960 = vset.pattern.permute.xlu0 3
        %961 = vperm.xlu0 %960, %v877
        %v962 = vpop.permute.xlu0 %961
        %964 = vset.pattern.permute.xlu0 3
        %965 = vperm.xlu0 %964, %v878
        %v966 = vpop.permute.xlu0 %965
        %968 = vset.pattern.permute.xlu0 3
        %969 = vperm.xlu0 %968, %v879
        %v970 = vpop.permute.xlu0 %969
        %v972 = vmul.f32 %v958, %v726
        %v973 = vmul.f32 %v962, %v726
        %v974 = vmul.f32 %v966, %v726
        %v975 = vmul.f32 %v970, %v726
        %v976 = vadd.f32 %v952, %v972
        %v977 = vadd.f32 %v953, %v973
        %v978 = vadd.f32 %v954, %v974
        %v979 = vadd.f32 %v955, %v975
        %980 = vset.pattern.permute.xlu0 4
        %981 = vperm.xlu0 %980, %v876
        %v982 = vpop.permute.xlu0 %981
        %984 = vset.pattern.permute.xlu0 4
        %985 = vperm.xlu0 %984, %v877
        %v986 = vpop.permute.xlu0 %985
        %988 = vset.pattern.permute.xlu0 4
        %989 = vperm.xlu0 %988, %v878
        %v990 = vpop.permute.xlu0 %989
        %992 = vset.pattern.permute.xlu0 4
        %993 = vperm.xlu0 %992, %v879
        %v994 = vpop.permute.xlu0 %993
        %v996 = vmul.f32 %v982, %v754
        %v997 = vmul.f32 %v986, %v754
        %v998 = vmul.f32 %v990, %v754
        %v999 = vmul.f32 %v994, %v754
        %v1000 = vadd.f32 %v976, %v996
        %v1001 = vadd.f32 %v977, %v997
        %v1002 = vadd.f32 %v978, %v998
        %v1003 = vadd.f32 %v979, %v999
        %1004 = vset.pattern.permute.xlu0 5
        %1005 = vperm.xlu0 %1004, %v876
        %v1006 = vpop.permute.xlu0 %1005
        %1008 = vset.pattern.permute.xlu0 5
        %1009 = vperm.xlu0 %1008, %v877
        %v1010 = vpop.permute.xlu0 %1009
        %1012 = vset.pattern.permute.xlu0 5
        %1013 = vperm.xlu0 %1012, %v878
        %v1014 = vpop.permute.xlu0 %1013
        %1016 = vset.pattern.permute.xlu0 5
        %1017 = vperm.xlu0 %1016, %v879
        %v1018 = vpop.permute.xlu0 %1017
        %v1020 = vmul.f32 %v1006, %v782
        %v1021 = vmul.f32 %v1010, %v782
        %v1022 = vmul.f32 %v1014, %v782
        %v1023 = vmul.f32 %v1018, %v782
        %v1024 = vadd.f32 %v1000, %v1020
        %v1025 = vadd.f32 %v1001, %v1021
        %v1026 = vadd.f32 %v1002, %v1022
        %v1027 = vadd.f32 %v1003, %v1023
        %1028 = vset.pattern.permute.xlu0 6
        %1029 = vperm.xlu0 %1028, %v876
        %v1030 = vpop.permute.xlu0 %1029
        %1032 = vset.pattern.permute.xlu0 6
        %1033 = vperm.xlu0 %1032, %v877
        %v1034 = vpop.permute.xlu0 %1033
        %1036 = vset.pattern.permute.xlu0 6
        %1037 = vperm.xlu0 %1036, %v878
        %v1038 = vpop.permute.xlu0 %1037
        %1040 = vset.pattern.permute.xlu0 6
        %1041 = vperm.xlu0 %1040, %v879
        %v1042 = vpop.permute.xlu0 %1041
        %v1044 = vmul.f32 %v1030, %v810
        %v1045 = vmul.f32 %v1034, %v810
        %v1046 = vmul.f32 %v1038, %v810
        %v1047 = vmul.f32 %v1042, %v810
        %v1048 = vadd.f32 %v1024, %v1044
        %v1049 = vadd.f32 %v1025, %v1045
        %v1050 = vadd.f32 %v1026, %v1046
        %v1051 = vadd.f32 %v1027, %v1047
        %1052 = vset.pattern.permute.xlu0 7
        %1053 = vperm.xlu0 %1052, %v876
        %v1054 = vpop.permute.xlu0 %1053
        %1056 = vset.pattern.permute.xlu0 7
        %1057 = vperm.xlu0 %1056, %v877
        %v1058 = vpop.permute.xlu0 %1057
        %1060 = vset.pattern.permute.xlu0 7
        %1061 = vperm.xlu0 %1060, %v878
        %v1062 = vpop.permute.xlu0 %1061
        %1064 = vset.pattern.permute.xlu0 7
        %1065 = vperm.xlu0 %1064, %v879
        %v1066 = vpop.permute.xlu0 %1065
        %v1068 = vmul.f32 %v1054, %v838
        %v1069 = vmul.f32 %v1058, %v838
        %v1070 = vmul.f32 %v1062, %v838
        %v1071 = vmul.f32 %v1066, %v838
        %v1072 = vadd.f32 %v1048, %v1068
        %v1073 = vadd.f32 %v1049, %v1069
        %v1074 = vadd.f32 %v1050, %v1070
        %v1075 = vadd.f32 %v1051, %v1071
        %1076 = vset.pattern.permute.xlu0 8
        %1077 = vperm.xlu0 %1076, %v876
        %v1078 = vpop.permute.xlu0 %1077
        %1080 = vset.pattern.permute.xlu0 8
        %1081 = vperm.xlu0 %1080, %v877
        %v1082 = vpop.permute.xlu0 %1081
        %1084 = vset.pattern.permute.xlu0 8
        %1085 = vperm.xlu0 %1084, %v878
        %v1086 = vpop.permute.xlu0 %1085
        %1088 = vset.pattern.permute.xlu0 8
        %1089 = vperm.xlu0 %1088, %v879
        %v1090 = vpop.permute.xlu0 %1089
        %v1092 = vmul.f32 %v1078, %v866
        %v1093 = vmul.f32 %v1082, %v866
        %v1094 = vmul.f32 %v1086, %v866
        %v1095 = vmul.f32 %v1090, %v866
        %v1096 = vadd.f32 %v1072, %v1092
        %v1097 = vadd.f32 %v1073, %v1093
        %v1098 = vadd.f32 %v1074, %v1094
        %v1099 = vadd.f32 %v1075, %v1095
        %v1100 = vmax.f32 %v871, %v1096
        %v1101 = vmax.f32 %v872, %v1097
        %v1102 = vmax.f32 %v873, %v1098
        %v1103 = vmax.f32 %v874, %v1099
        %s1104 = scalar_lea.vmem %s506, 64
        %v1105 = vld [vmem:[%s1104] sm:$0xff]
        %v1106 = vld [vmem:[%s1104 + $0x8] sm:$0xff]
        %v1107 = vld [vmem:[%s1104 + $0x10] sm:$0xff]
        %v1108 = vld [vmem:[%s1104 + $0x18] sm:$0x1]
        %1110 = vset.pattern.permute.xlu0 0
        %1111 = vperm.xlu0 %1110, %v1105
        %v1112 = vpop.permute.xlu0 %1111
        %1115 = vset.pattern.permute.xlu0 0
        %1116 = vperm.xlu0 %1115, %v1106
        %v1117 = vpop.permute.xlu0 %1116
        %1120 = vset.pattern.permute.xlu0 0
        %1121 = vperm.xlu0 %1120, %v1107
        %v1122 = vpop.permute.xlu0 %1121
        %1125 = vset.pattern.permute.xlu0 0
        %1126 = vperm.xlu0 %1125, %v1108
        %v1127 = vpop.permute.xlu0 %1126
        %v1129 = vmul.f32 %v1112, %v642
        %v1130 = vmul.f32 %v1117, %v642
        %v1131 = vmul.f32 %v1122, %v642
        %v1132 = vmul.f32 %v1127, %v642
        %v1133 = vadd.f32 %v1129, 0.0
        %v1134 = vadd.f32 %v1130, 0.0
        %v1135 = vadd.f32 %v1131, 0.0
        %v1136 = vadd.f32 %v1132, 0.0
        %1137 = vset.pattern.permute.xlu0 1
        %1138 = vperm.xlu0 %1137, %v1105
        %v1139 = vpop.permute.xlu0 %1138
        %1141 = vset.pattern.permute.xlu0 1
        %1142 = vperm.xlu0 %1141, %v1106
        %v1143 = vpop.permute.xlu0 %1142
        %1145 = vset.pattern.permute.xlu0 1
        %1146 = vperm.xlu0 %1145, %v1107
        %v1147 = vpop.permute.xlu0 %1146
        %1149 = vset.pattern.permute.xlu0 1
        %1150 = vperm.xlu0 %1149, %v1108
        %v1151 = vpop.permute.xlu0 %1150
        %v1153 = vmul.f32 %v1139, %v670
        %v1154 = vmul.f32 %v1143, %v670
        %v1155 = vmul.f32 %v1147, %v670
        %v1156 = vmul.f32 %v1151, %v670
        %v1157 = vadd.f32 %v1133, %v1153
        %v1158 = vadd.f32 %v1134, %v1154
        %v1159 = vadd.f32 %v1135, %v1155
        %v1160 = vadd.f32 %v1136, %v1156
        %1161 = vset.pattern.permute.xlu0 2
        %1162 = vperm.xlu0 %1161, %v1105
        %v1163 = vpop.permute.xlu0 %1162
        %1165 = vset.pattern.permute.xlu0 2
        %1166 = vperm.xlu0 %1165, %v1106
        %v1167 = vpop.permute.xlu0 %1166
        %1169 = vset.pattern.permute.xlu0 2
        %1170 = vperm.xlu0 %1169, %v1107
        %v1171 = vpop.permute.xlu0 %1170
        %1173 = vset.pattern.permute.xlu0 2
        %1174 = vperm.xlu0 %1173, %v1108
        %v1175 = vpop.permute.xlu0 %1174
        %v1177 = vmul.f32 %v1163, %v698
        %v1178 = vmul.f32 %v1167, %v698
        %v1179 = vmul.f32 %v1171, %v698
        %v1180 = vmul.f32 %v1175, %v698
        %v1181 = vadd.f32 %v1157, %v1177
        %v1182 = vadd.f32 %v1158, %v1178
        %v1183 = vadd.f32 %v1159, %v1179
        %v1184 = vadd.f32 %v1160, %v1180
        %1185 = vset.pattern.permute.xlu0 3
        %1186 = vperm.xlu0 %1185, %v1105
        %v1187 = vpop.permute.xlu0 %1186
        %1189 = vset.pattern.permute.xlu0 3
        %1190 = vperm.xlu0 %1189, %v1106
        %v1191 = vpop.permute.xlu0 %1190
        %1193 = vset.pattern.permute.xlu0 3
        %1194 = vperm.xlu0 %1193, %v1107
        %v1195 = vpop.permute.xlu0 %1194
        %1197 = vset.pattern.permute.xlu0 3
        %1198 = vperm.xlu0 %1197, %v1108
        %v1199 = vpop.permute.xlu0 %1198
        %v1201 = vmul.f32 %v1187, %v726
        %v1202 = vmul.f32 %v1191, %v726
        %v1203 = vmul.f32 %v1195, %v726
        %v1204 = vmul.f32 %v1199, %v726
        %v1205 = vadd.f32 %v1181, %v1201
        %v1206 = vadd.f32 %v1182, %v1202
        %v1207 = vadd.f32 %v1183, %v1203
        %v1208 = vadd.f32 %v1184, %v1204
        %1209 = vset.pattern.permute.xlu0 4
        %1210 = vperm.xlu0 %1209, %v1105
        %v1211 = vpop.permute.xlu0 %1210
        %1213 = vset.pattern.permute.xlu0 4
        %1214 = vperm.xlu0 %1213, %v1106
        %v1215 = vpop.permute.xlu0 %1214
        %1217 = vset.pattern.permute.xlu0 4
        %1218 = vperm.xlu0 %1217, %v1107
        %v1219 = vpop.permute.xlu0 %1218
        %1221 = vset.pattern.permute.xlu0 4
        %1222 = vperm.xlu0 %1221, %v1108
        %v1223 = vpop.permute.xlu0 %1222
        %v1225 = vmul.f32 %v1211, %v754
        %v1226 = vmul.f32 %v1215, %v754
        %v1227 = vmul.f32 %v1219, %v754
        %v1228 = vmul.f32 %v1223, %v754
        %v1229 = vadd.f32 %v1205, %v1225
        %v1230 = vadd.f32 %v1206, %v1226
        %v1231 = vadd.f32 %v1207, %v1227
        %v1232 = vadd.f32 %v1208, %v1228
        %1233 = vset.pattern.permute.xlu0 5
        %1234 = vperm.xlu0 %1233, %v1105
        %v1235 = vpop.permute.xlu0 %1234
        %1237 = vset.pattern.permute.xlu0 5
        %1238 = vperm.xlu0 %1237, %v1106
        %v1239 = vpop.permute.xlu0 %1238
        %1241 = vset.pattern.permute.xlu0 5
        %1242 = vperm.xlu0 %1241, %v1107
        %v1243 = vpop.permute.xlu0 %1242
        %1245 = vset.pattern.permute.xlu0 5
        %1246 = vperm.xlu0 %1245, %v1108
        %v1247 = vpop.permute.xlu0 %1246
        %v1249 = vmul.f32 %v1235, %v782
        %v1250 = vmul.f32 %v1239, %v782
        %v1251 = vmul.f32 %v1243, %v782
        %v1252 = vmul.f32 %v1247, %v782
        %v1253 = vadd.f32 %v1229, %v1249
        %v1254 = vadd.f32 %v1230, %v1250
        %v1255 = vadd.f32 %v1231, %v1251
        %v1256 = vadd.f32 %v1232, %v1252
        %1257 = vset.pattern.permute.xlu0 6
        %1258 = vperm.xlu0 %1257, %v1105
        %v1259 = vpop.permute.xlu0 %1258
        %1261 = vset.pattern.permute.xlu0 6
        %1262 = vperm.xlu0 %1261, %v1106
        %v1263 = vpop.permute.xlu0 %1262
        %1265 = vset.pattern.permute.xlu0 6
        %1266 = vperm.xlu0 %1265, %v1107
        %v1267 = vpop.permute.xlu0 %1266
        %1269 = vset.pattern.permute.xlu0 6
        %1270 = vperm.xlu0 %1269, %v1108
        %v1271 = vpop.permute.xlu0 %1270
        %v1273 = vmul.f32 %v1259, %v810
        %v1274 = vmul.f32 %v1263, %v810
        %v1275 = vmul.f32 %v1267, %v810
        %v1276 = vmul.f32 %v1271, %v810
        %v1277 = vadd.f32 %v1253, %v1273
        %v1278 = vadd.f32 %v1254, %v1274
        %v1279 = vadd.f32 %v1255, %v1275
        %v1280 = vadd.f32 %v1256, %v1276
        %1281 = vset.pattern.permute.xlu0 7
        %1282 = vperm.xlu0 %1281, %v1105
        %v1283 = vpop.permute.xlu0 %1282
        %1285 = vset.pattern.permute.xlu0 7
        %1286 = vperm.xlu0 %1285, %v1106
        %v1287 = vpop.permute.xlu0 %1286
        %1289 = vset.pattern.permute.xlu0 7
        %1290 = vperm.xlu0 %1289, %v1107
        %v1291 = vpop.permute.xlu0 %1290
        %1293 = vset.pattern.permute.xlu0 7
        %1294 = vperm.xlu0 %1293, %v1108
        %v1295 = vpop.permute.xlu0 %1294
        %v1297 = vmul.f32 %v1283, %v838
        %v1298 = vmul.f32 %v1287, %v838
        %v1299 = vmul.f32 %v1291, %v838
        %v1300 = vmul.f32 %v1295, %v838
        %v1301 = vadd.f32 %v1277, %v1297
        %v1302 = vadd.f32 %v1278, %v1298
        %v1303 = vadd.f32 %v1279, %v1299
        %v1304 = vadd.f32 %v1280, %v1300
        %1305 = vset.pattern.permute.xlu0 8
        %1306 = vperm.xlu0 %1305, %v1105
        %v1307 = vpop.permute.xlu0 %1306
        %1309 = vset.pattern.permute.xlu0 8
        %1310 = vperm.xlu0 %1309, %v1106
        %v1311 = vpop.permute.xlu0 %1310
        %1313 = vset.pattern.permute.xlu0 8
        %1314 = vperm.xlu0 %1313, %v1107
        %v1315 = vpop.permute.xlu0 %1314
        %1317 = vset.pattern.permute.xlu0 8
        %1318 = vperm.xlu0 %1317, %v1108
        %v1319 = vpop.permute.xlu0 %1318
        %v1321 = vmul.f32 %v1307, %v866
        %v1322 = vmul.f32 %v1311, %v866
        %v1323 = vmul.f32 %v1315, %v866
        %v1324 = vmul.f32 %v1319, %v866
        %v1325 = vadd.f32 %v1301, %v1321
        %v1326 = vadd.f32 %v1302, %v1322
        %v1327 = vadd.f32 %v1303, %v1323
        %v1328 = vadd.f32 %v1304, %v1324
        %v1329 = vmax.f32 %v1100, %v1325
        %v1330 = vmax.f32 %v1101, %v1326
        %v1331 = vmax.f32 %v1102, %v1327
        %v1332 = vmax.f32 %v1103, %v1328
        %s1333 = scalar_lea.vmem %s506, 96
        %v1334 = vld [vmem:[%s1333] sm:$0xff]
        %v1335 = vld [vmem:[%s1333 + $0x8] sm:$0xff]
        %v1336 = vld [vmem:[%s1333 + $0x10] sm:$0xff]
        %v1337 = vld [vmem:[%s1333 + $0x18] sm:$0x1]
        %1339 = vset.pattern.permute.xlu0 0
        %1340 = vperm.xlu0 %1339, %v1334
        %v1341 = vpop.permute.xlu0 %1340
        %1344 = vset.pattern.permute.xlu0 0
        %1345 = vperm.xlu0 %1344, %v1335
        %v1346 = vpop.permute.xlu0 %1345
        %1349 = vset.pattern.permute.xlu0 0
        %1350 = vperm.xlu0 %1349, %v1336
        %v1351 = vpop.permute.xlu0 %1350
        %1354 = vset.pattern.permute.xlu0 0
        %1355 = vperm.xlu0 %1354, %v1337
        %v1356 = vpop.permute.xlu0 %1355
        %v1358 = vmul.f32 %v1341, %v642
        %v1359 = vmul.f32 %v1346, %v642
        %v1360 = vmul.f32 %v1351, %v642
        %v1361 = vmul.f32 %v1356, %v642
        %v1362 = vadd.f32 %v1358, 0.0
        %v1363 = vadd.f32 %v1359, 0.0
        %v1364 = vadd.f32 %v1360, 0.0
        %v1365 = vadd.f32 %v1361, 0.0
        %1366 = vset.pattern.permute.xlu0 1
        %1367 = vperm.xlu0 %1366, %v1334
        %v1368 = vpop.permute.xlu0 %1367
        %1370 = vset.pattern.permute.xlu0 1
        %1371 = vperm.xlu0 %1370, %v1335
        %v1372 = vpop.permute.xlu0 %1371
        %1374 = vset.pattern.permute.xlu0 1
        %1375 = vperm.xlu0 %1374, %v1336
        %v1376 = vpop.permute.xlu0 %1375
        %1378 = vset.pattern.permute.xlu0 1
        %1379 = vperm.xlu0 %1378, %v1337
        %v1380 = vpop.permute.xlu0 %1379
        %v1382 = vmul.f32 %v1368, %v670
        %v1383 = vmul.f32 %v1372, %v670
        %v1384 = vmul.f32 %v1376, %v670
        %v1385 = vmul.f32 %v1380, %v670
        %v1386 = vadd.f32 %v1362, %v1382
        %v1387 = vadd.f32 %v1363, %v1383
        %v1388 = vadd.f32 %v1364, %v1384
        %v1389 = vadd.f32 %v1365, %v1385
        %1390 = vset.pattern.permute.xlu0 2
        %1391 = vperm.xlu0 %1390, %v1334
        %v1392 = vpop.permute.xlu0 %1391
        %1394 = vset.pattern.permute.xlu0 2
        %1395 = vperm.xlu0 %1394, %v1335
        %v1396 = vpop.permute.xlu0 %1395
        %1398 = vset.pattern.permute.xlu0 2
        %1399 = vperm.xlu0 %1398, %v1336
        %v1400 = vpop.permute.xlu0 %1399
        %1402 = vset.pattern.permute.xlu0 2
        %1403 = vperm.xlu0 %1402, %v1337
        %v1404 = vpop.permute.xlu0 %1403
        %v1406 = vmul.f32 %v1392, %v698
        %v1407 = vmul.f32 %v1396, %v698
        %v1408 = vmul.f32 %v1400, %v698
        %v1409 = vmul.f32 %v1404, %v698
        %v1410 = vadd.f32 %v1386, %v1406
        %v1411 = vadd.f32 %v1387, %v1407
        %v1412 = vadd.f32 %v1388, %v1408
        %v1413 = vadd.f32 %v1389, %v1409
        %1414 = vset.pattern.permute.xlu0 3
        %1415 = vperm.xlu0 %1414, %v1334
        %v1416 = vpop.permute.xlu0 %1415
        %1418 = vset.pattern.permute.xlu0 3
        %1419 = vperm.xlu0 %1418, %v1335
        %v1420 = vpop.permute.xlu0 %1419
        %1422 = vset.pattern.permute.xlu0 3
        %1423 = vperm.xlu0 %1422, %v1336
        %v1424 = vpop.permute.xlu0 %1423
        %1426 = vset.pattern.permute.xlu0 3
        %1427 = vperm.xlu0 %1426, %v1337
        %v1428 = vpop.permute.xlu0 %1427
        %v1430 = vmul.f32 %v1416, %v726
        %v1431 = vmul.f32 %v1420, %v726
        %v1432 = vmul.f32 %v1424, %v726
        %v1433 = vmul.f32 %v1428, %v726
        %v1434 = vadd.f32 %v1410, %v1430
        %v1435 = vadd.f32 %v1411, %v1431
        %v1436 = vadd.f32 %v1412, %v1432
        %v1437 = vadd.f32 %v1413, %v1433
        %1438 = vset.pattern.permute.xlu0 4
        %1439 = vperm.xlu0 %1438, %v1334
        %v1440 = vpop.permute.xlu0 %1439
        %1442 = vset.pattern.permute.xlu0 4
        %1443 = vperm.xlu0 %1442, %v1335
        %v1444 = vpop.permute.xlu0 %1443
        %1446 = vset.pattern.permute.xlu0 4
        %1447 = vperm.xlu0 %1446, %v1336
        %v1448 = vpop.permute.xlu0 %1447
        %1450 = vset.pattern.permute.xlu0 4
        %1451 = vperm.xlu0 %1450, %v1337
        %v1452 = vpop.permute.xlu0 %1451
        %v1454 = vmul.f32 %v1440, %v754
        %v1455 = vmul.f32 %v1444, %v754
        %v1456 = vmul.f32 %v1448, %v754
        %v1457 = vmul.f32 %v1452, %v754
        %v1458 = vadd.f32 %v1434, %v1454
        %v1459 = vadd.f32 %v1435, %v1455
        %v1460 = vadd.f32 %v1436, %v1456
        %v1461 = vadd.f32 %v1437, %v1457
        %1462 = vset.pattern.permute.xlu0 5
        %1463 = vperm.xlu0 %1462, %v1334
        %v1464 = vpop.permute.xlu0 %1463
        %1466 = vset.pattern.permute.xlu0 5
        %1467 = vperm.xlu0 %1466, %v1335
        %v1468 = vpop.permute.xlu0 %1467
        %1470 = vset.pattern.permute.xlu0 5
        %1471 = vperm.xlu0 %1470, %v1336
        %v1472 = vpop.permute.xlu0 %1471
        %1474 = vset.pattern.permute.xlu0 5
        %1475 = vperm.xlu0 %1474, %v1337
        %v1476 = vpop.permute.xlu0 %1475
        %v1478 = vmul.f32 %v1464, %v782
        %v1479 = vmul.f32 %v1468, %v782
        %v1480 = vmul.f32 %v1472, %v782
        %v1481 = vmul.f32 %v1476, %v782
        %v1482 = vadd.f32 %v1458, %v1478
        %v1483 = vadd.f32 %v1459, %v1479
        %v1484 = vadd.f32 %v1460, %v1480
        %v1485 = vadd.f32 %v1461, %v1481
        %1486 = vset.pattern.permute.xlu0 6
        %1487 = vperm.xlu0 %1486, %v1334
        %v1488 = vpop.permute.xlu0 %1487
        %1490 = vset.pattern.permute.xlu0 6
        %1491 = vperm.xlu0 %1490, %v1335
        %v1492 = vpop.permute.xlu0 %1491
        %1494 = vset.pattern.permute.xlu0 6
        %1495 = vperm.xlu0 %1494, %v1336
        %v1496 = vpop.permute.xlu0 %1495
        %1498 = vset.pattern.permute.xlu0 6
        %1499 = vperm.xlu0 %1498, %v1337
        %v1500 = vpop.permute.xlu0 %1499
        %v1502 = vmul.f32 %v1488, %v810
        %v1503 = vmul.f32 %v1492, %v810
        %v1504 = vmul.f32 %v1496, %v810
        %v1505 = vmul.f32 %v1500, %v810
        %v1506 = vadd.f32 %v1482, %v1502
        %v1507 = vadd.f32 %v1483, %v1503
        %v1508 = vadd.f32 %v1484, %v1504
        %v1509 = vadd.f32 %v1485, %v1505
        %1510 = vset.pattern.permute.xlu0 7
        %1511 = vperm.xlu0 %1510, %v1334
        %v1512 = vpop.permute.xlu0 %1511
        %1514 = vset.pattern.permute.xlu0 7
        %1515 = vperm.xlu0 %1514, %v1335
        %v1516 = vpop.permute.xlu0 %1515
        %1518 = vset.pattern.permute.xlu0 7
        %1519 = vperm.xlu0 %1518, %v1336
        %v1520 = vpop.permute.xlu0 %1519
        %1522 = vset.pattern.permute.xlu0 7
        %1523 = vperm.xlu0 %1522, %v1337
        %v1524 = vpop.permute.xlu0 %1523
        %v1526 = vmul.f32 %v1512, %v838
        %v1527 = vmul.f32 %v1516, %v838
        %v1528 = vmul.f32 %v1520, %v838
        %v1529 = vmul.f32 %v1524, %v838
        %v1530 = vadd.f32 %v1506, %v1526
        %v1531 = vadd.f32 %v1507, %v1527
        %v1532 = vadd.f32 %v1508, %v1528
        %v1533 = vadd.f32 %v1509, %v1529
        %1534 = vset.pattern.permute.xlu0 8
        %1535 = vperm.xlu0 %1534, %v1334
        %v1536 = vpop.permute.xlu0 %1535
        %1538 = vset.pattern.permute.xlu0 8
        %1539 = vperm.xlu0 %1538, %v1335
        %v1540 = vpop.permute.xlu0 %1539
        %1542 = vset.pattern.permute.xlu0 8
        %1543 = vperm.xlu0 %1542, %v1336
        %v1544 = vpop.permute.xlu0 %1543
        %1546 = vset.pattern.permute.xlu0 8
        %1547 = vperm.xlu0 %1546, %v1337
        %v1548 = vpop.permute.xlu0 %1547
        %v1550 = vmul.f32 %v1536, %v866
        %v1551 = vmul.f32 %v1540, %v866
        %v1552 = vmul.f32 %v1544, %v866
        %v1553 = vmul.f32 %v1548, %v866
        %v1554 = vadd.f32 %v1530, %v1550
        %v1555 = vadd.f32 %v1531, %v1551
        %v1556 = vadd.f32 %v1532, %v1552
        %v1557 = vadd.f32 %v1533, %v1553
        %v1558 = vmax.f32 %v1329, %v1554
        %v1559 = vmax.f32 %v1330, %v1555
        %v1560 = vmax.f32 %v1331, %v1556
        %v1561 = vmax.f32 %v1332, %v1557
        %v1562 = vld [vmem:[%s2] sm:$0x1]
        %v1564 = vlaneseq
        %v1565 = vshrl.u32 %v1564, 7
        %v1566 = vsub.s32 0, %v1565
        %v1567 = vrot.slane %v1562, %v1566
        %v1569 = vadd.f32 %v1558, %v1567
        %v1570 = vadd.f32 %v1559, %v1567
        %v1571 = vadd.f32 %v1560, %v1567
        %v1572 = vadd.f32 %v1561, %v1567
        %v1573 = vmax.f32 %v1569, 0.0
        %v1574 = vmax.f32 %v1570, 0.0
        %v1575 = vmax.f32 %v1571, 0.0
        %v1576 = vmax.f32 %v1572, 0.0
        %v1577 = vld [vmem:[%s3] sm:$0xff]
        %v1578 = vld [vmem:[%s3 + $0x8] sm:$0xff]
        %v1579 = vld [vmem:[%s3 + $0x10] sm:$0xff]
        %v1580 = vld [vmem:[%s3 + $0x18] sm:$0xff]
        %v1581 = vld [vmem:[%s3 + $0x20] sm:$0xff]
        %v1582 = vld [vmem:[%s3 + $0x28] sm:$0xff]
        %v1583 = vld [vmem:[%s3 + $0x30] sm:$0xff]
        %v1584 = vld [vmem:[%s3 + $0x38] sm:$0xff]
        %v1586 = vsel %vm512, %v1573, 0
        %v1589 = vsel %vm512, %v1574, 0
        %v1592 = vsel %vm512, %v1575, 0
        %v1595 = vsel %vm512, %v1576, 0
        %1597 = vmatprep.subr.mxu0 0.0
        %1598 = vmatpush1.msra.mxu0 0.0
        %1599 = vmatprep.subr.mxu0 0.0
        %1600 = vmatpush1.msra.mxu0 0.0
        %1601 = vmatprep.subr.mxu0 0.0
        %1602 = vmatpush1.msra.mxu0 0.0
        %1603 = vmatprep.subr.mxu0 0.0
        %1604 = vmatpush1.msra.mxu0 0.0
        %1605 = vmatprep.subr.mxu0 0.0
        %1606 = vmatpush1.msra.mxu0 0.0
        %1607 = vmatprep.subr.mxu0 0.0
        %1608 = vmatpush1.msra.mxu0 0.0
        %1609 = vmatprep.subr.mxu0 0.0
        %1610 = vmatpush1.msra.mxu0 0.0
        %1611 = vmatprep.subr.mxu0 0.0
        %1612 = vmatpush1.msra.mxu0 0.0
        %1613 = vmatprep.subr.mxu0 0.0
        %1614 = vmatpush1.msra.mxu0 %v1584
        %1615 = vmatprep.subr.mxu0 0.0
        %1616 = vmatpush1.msra.mxu0 %v1583
        %1617 = vmatprep.subr.mxu0 0.0
        %1618 = vmatpush1.msra.mxu0 %v1582
        %1619 = vmatprep.subr.mxu0 0.0
        %1620 = vmatpush1.msra.mxu0 %v1581
        %1621 = vmatprep.subr.mxu0 0.0
        %1622 = vmatpush1.msra.mxu0 %v1580
        %1623 = vmatprep.subr.mxu0 0.0
        %1624 = vmatpush1.msra.mxu0 %v1579
        %1625 = vmatprep.subr.mxu0 0.0
        %1626 = vmatpush1.msra.mxu0 %v1578
        %1627 = vmatprep.subr.mxu0 0.0
        %1628 = vmatpush1.msra.mxu0 %v1577
        %1629 = vmatprep.subr.mxu0 0.0
        %1630 = vmatpush2.msra.mxu0 0.0
        %1631 = vmatprep.subr.mxu0 0.0
        %1632 = vmatpush2.msra.mxu0 0.0
        %1633 = vmatprep.subr.mxu0 0.0
        %1634 = vmatpush2.msra.mxu0 0.0
        %1635 = vmatprep.subr.mxu0 0.0
        %1636 = vmatpush2.msra.mxu0 0.0
        %1637 = vmatprep.subr.mxu0 0.0
        %1638 = vmatpush2.msra.mxu0 0.0
        %1639 = vmatprep.subr.mxu0 0.0
        %1640 = vmatpush2.msra.mxu0 0.0
        %1641 = vmatprep.subr.mxu0 0.0
        %1642 = vmatpush2.msra.mxu0 0.0
        %1643 = vmatprep.subr.mxu0 0.0
        %1644 = vmatpush2.msra.mxu0 0.0
        %1645 = vmatprep.subr.mxu0 0.0
        %1646 = vmatpush2.msra.mxu0 0.0
        %1647 = vmatprep.subr.mxu0 0.0
        %1648 = vmatpush2.msra.mxu0 0.0
        %1649 = vmatprep.subr.mxu0 0.0
        %1650 = vmatpush2.msra.mxu0 0.0
        %1651 = vmatprep.subr.mxu0 0.0
        %1652 = vmatpush2.msra.mxu0 0.0
        %1653 = vmatprep.subr.mxu0 0.0
        %1654 = vmatpush2.msra.mxu0 0.0
        %1655 = vmatprep.subr.mxu0 0.0
        %1656 = vmatpush2.msra.mxu0 0.0
        %1657 = vmatprep.subr.mxu0 0.0
        %1658 = vmatpush2.msra.mxu0 0.0
        %1659 = vmatprep.subr.mxu0 0.0
        %1660 = vmatpush2.msra.mxu0 0.0
        %1661 = vmatprep.mubr.f32.mxu0 0.0
        %1662 = vmatmul.mubr.f32.gmra.mxu0 %v1586
        %v1663 = vpop.f32.mrf.mxu0
        %v1664 = vadd.f32 0.0, %v1663
        %v1665 = vpop.f32.mrf.mxu0
        %1666 = vmatprep.mubr.f32.mxu0 0.0
        %1667 = vmatmul.mubr.f32.gmra.mxu0 %v1589
        %v1668 = vpop.f32.mrf.mxu0
        %v1669 = vadd.f32 0.0, %v1668
        %v1670 = vpop.f32.mrf.mxu0
        %1671 = vmatprep.mubr.f32.mxu0 0.0
        %1672 = vmatmul.mubr.f32.gmra.mxu0 %v1592
        %v1673 = vpop.f32.mrf.mxu0
        %v1674 = vadd.f32 0.0, %v1673
        %v1675 = vpop.f32.mrf.mxu0
        %1676 = vmatprep.mubr.f32.mxu0 0.0
        %1677 = vmatmul.mubr.f32.gmra.mxu0 %v1595
        %v1678 = vpop.f32.mrf.mxu0
        %v1679 = vadd.f32 0.0, %v1678
        %v1680 = vpop.f32.mrf.mxu0
        %1681 = vdwg.mxu0
        %1682 = vst.msk [vmem:[#allocation2] sm:$0xff] %vm512, %v1664
        %1683 = vst.msk [vmem:[#allocation2 + $0x8] sm:$0xff] %vm512, %v1669
        %1684 = vst.msk [vmem:[#allocation2 + $0x10] sm:$0xff] %vm512, %v1674
        %vm1685 = vcmask 516096
        %1686 = vst.msk [vmem:[#allocation2 + $0x18] sm:$0x1] %vm1685, %v1679
        %s1687 = scalar_lea.vmem %s3, 64
        %v1688 = vld [vmem:[%s1687] sm:$0xff]
        %v1689 = vld [vmem:[%s1687 + $0x8] sm:$0xff]
        %v1690 = vld [vmem:[%s1687 + $0x10] sm:$0xff]
        %v1691 = vld [vmem:[%s1687 + $0x18] sm:$0xff]
        %v1692 = vld [vmem:[%s1687 + $0x20] sm:$0xff]
        %v1693 = vld [vmem:[%s1687 + $0x28] sm:$0xff]
        %v1694 = vld [vmem:[%s1687 + $0x30] sm:$0xff]
        %v1695 = vld [vmem:[%s1687 + $0x38] sm:$0xff]
        %1696 = vmatprep.subr.mxu0 0.0
        %1697 = vmatpush1.msra.mxu0 0.0
        %1698 = vmatprep.subr.mxu0 0.0
        %1699 = vmatpush1.msra.mxu0 0.0
        %1700 = vmatprep.subr.mxu0 0.0
        %1701 = vmatpush1.msra.mxu0 0.0
        %1702 = vmatprep.subr.mxu0 0.0
        %1703 = vmatpush1.msra.mxu0 0.0
        %1704 = vmatprep.subr.mxu0 0.0
        %1705 = vmatpush1.msra.mxu0 0.0
        %1706 = vmatprep.subr.mxu0 0.0
        %1707 = vmatpush1.msra.mxu0 0.0
        %1708 = vmatprep.subr.mxu0 0.0
        %1709 = vmatpush1.msra.mxu0 0.0
        %1710 = vmatprep.subr.mxu0 0.0
        %1711 = vmatpush1.msra.mxu0 0.0
        %1712 = vmatprep.subr.mxu0 0.0
        %1713 = vmatpush1.msra.mxu0 %v1695
        %1714 = vmatprep.subr.mxu0 0.0
        %1715 = vmatpush1.msra.mxu0 %v1694
        %1716 = vmatprep.subr.mxu0 0.0
        %1717 = vmatpush1.msra.mxu0 %v1693
        %1718 = vmatprep.subr.mxu0 0.0
        %1719 = vmatpush1.msra.mxu0 %v1692
        %1720 = vmatprep.subr.mxu0 0.0
        %1721 = vmatpush1.msra.mxu0 %v1691
        %1722 = vmatprep.subr.mxu0 0.0
        %1723 = vmatpush1.msra.mxu0 %v1690
        %1724 = vmatprep.subr.mxu0 0.0
        %1725 = vmatpush1.msra.mxu0 %v1689
        %1726 = vmatprep.subr.mxu0 0.0
        %1727 = vmatpush1.msra.mxu0 %v1688
        %1728 = vmatprep.subr.mxu0 0.0
        %1729 = vmatpush2.msra.mxu0 0.0
        %1730 = vmatprep.subr.mxu0 0.0
        %1731 = vmatpush2.msra.mxu0 0.0
        %1732 = vmatprep.subr.mxu0 0.0
        %1733 = vmatpush2.msra.mxu0 0.0
        %1734 = vmatprep.subr.mxu0 0.0
        %1735 = vmatpush2.msra.mxu0 0.0
        %1736 = vmatprep.subr.mxu0 0.0
        %1737 = vmatpush2.msra.mxu0 0.0
        %1738 = vmatprep.subr.mxu0 0.0
        %1739 = vmatpush2.msra.mxu0 0.0
        %1740 = vmatprep.subr.mxu0 0.0
        %1741 = vmatpush2.msra.mxu0 0.0
        %1742 = vmatprep.subr.mxu0 0.0
        %1743 = vmatpush2.msra.mxu0 0.0
        %1744 = vmatprep.subr.mxu0 0.0
        %1745 = vmatpush2.msra.mxu0 0.0
        %1746 = vmatprep.subr.mxu0 0.0
        %1747 = vmatpush2.msra.mxu0 0.0
        %1748 = vmatprep.subr.mxu0 0.0
        %1749 = vmatpush2.msra.mxu0 0.0
        %1750 = vmatprep.subr.mxu0 0.0
        %1751 = vmatpush2.msra.mxu0 0.0
        %1752 = vmatprep.subr.mxu0 0.0
        %1753 = vmatpush2.msra.mxu0 0.0
        %1754 = vmatprep.subr.mxu0 0.0
        %1755 = vmatpush2.msra.mxu0 0.0
        %1756 = vmatprep.subr.mxu0 0.0
        %1757 = vmatpush2.msra.mxu0 0.0
        %1758 = vmatprep.subr.mxu0 0.0
        %1759 = vmatpush2.msra.mxu0 0.0
        %1760 = vmatprep.mubr.f32.mxu0 0.0
        %1761 = vmatmul.mubr.f32.gmra.mxu0 %v1586
        %v1762 = vpop.f32.mrf.mxu0
        %v1763 = vadd.f32 0.0, %v1762
        %v1764 = vpop.f32.mrf.mxu0
        %1765 = vmatprep.mubr.f32.mxu0 0.0
        %1766 = vmatmul.mubr.f32.gmra.mxu0 %v1589
        %v1767 = vpop.f32.mrf.mxu0
        %v1768 = vadd.f32 0.0, %v1767
        %v1769 = vpop.f32.mrf.mxu0
        %1770 = vmatprep.mubr.f32.mxu0 0.0
        %1771 = vmatmul.mubr.f32.gmra.mxu0 %v1592
        %v1772 = vpop.f32.mrf.mxu0
        %v1773 = vadd.f32 0.0, %v1772
        %v1774 = vpop.f32.mrf.mxu0
        %1775 = vmatprep.mubr.f32.mxu0 0.0
        %1776 = vmatmul.mubr.f32.gmra.mxu0 %v1595
        %v1777 = vpop.f32.mrf.mxu0
        %v1778 = vadd.f32 0.0, %v1777
        %v1779 = vpop.f32.mrf.mxu0
        %1780 = vdwg.mxu0
        %1781 = vst.msk [vmem:[#allocation2 + $0x20] sm:$0xff] %vm512, %v1763
        %1782 = vst.msk [vmem:[#allocation2 + $0x28] sm:$0xff] %vm512, %v1768
        %1783 = vst.msk [vmem:[#allocation2 + $0x30] sm:$0xff] %vm512, %v1773
        %1784 = vst.msk [vmem:[#allocation2 + $0x38] sm:$0x1] %vm1685, %v1778
        %s1785 = scalar_lea.vmem %s3, 128
        %v1786 = vld [vmem:[%s1785] sm:$0xff]
        %v1787 = vld [vmem:[%s1785 + $0x8] sm:$0xff]
        %v1788 = vld [vmem:[%s1785 + $0x10] sm:$0xff]
        %v1789 = vld [vmem:[%s1785 + $0x18] sm:$0xff]
        %v1790 = vld [vmem:[%s1785 + $0x20] sm:$0xff]
        %v1791 = vld [vmem:[%s1785 + $0x28] sm:$0xff]
        %v1792 = vld [vmem:[%s1785 + $0x30] sm:$0xff]
        %v1793 = vld [vmem:[%s1785 + $0x38] sm:$0xff]
        %1794 = vmatprep.subr.mxu0 0.0
        %1795 = vmatpush1.msra.mxu0 0.0
        %1796 = vmatprep.subr.mxu0 0.0
        %1797 = vmatpush1.msra.mxu0 0.0
        %1798 = vmatprep.subr.mxu0 0.0
        %1799 = vmatpush1.msra.mxu0 0.0
        %1800 = vmatprep.subr.mxu0 0.0
        %1801 = vmatpush1.msra.mxu0 0.0
        %1802 = vmatprep.subr.mxu0 0.0
        %1803 = vmatpush1.msra.mxu0 0.0
        %1804 = vmatprep.subr.mxu0 0.0
        %1805 = vmatpush1.msra.mxu0 0.0
        %1806 = vmatprep.subr.mxu0 0.0
        %1807 = vmatpush1.msra.mxu0 0.0
        %1808 = vmatprep.subr.mxu0 0.0
        %1809 = vmatpush1.msra.mxu0 0.0
        %1810 = vmatprep.subr.mxu0 0.0
        %1811 = vmatpush1.msra.mxu0 %v1793
        %1812 = vmatprep.subr.mxu0 0.0
        %1813 = vmatpush1.msra.mxu0 %v1792
        %1814 = vmatprep.subr.mxu0 0.0
        %1815 = vmatpush1.msra.mxu0 %v1791
        %1816 = vmatprep.subr.mxu0 0.0
        %1817 = vmatpush1.msra.mxu0 %v1790
        %1818 = vmatprep.subr.mxu0 0.0
        %1819 = vmatpush1.msra.mxu0 %v1789
        %1820 = vmatprep.subr.mxu0 0.0
        %1821 = vmatpush1.msra.mxu0 %v1788
        %1822 = vmatprep.subr.mxu0 0.0
        %1823 = vmatpush1.msra.mxu0 %v1787
        %1824 = vmatprep.subr.mxu0 0.0
        %1825 = vmatpush1.msra.mxu0 %v1786
        %1826 = vmatprep.subr.mxu0 0.0
        %1827 = vmatpush2.msra.mxu0 0.0
        %1828 = vmatprep.subr.mxu0 0.0
        %1829 = vmatpush2.msra.mxu0 0.0
        %1830 = vmatprep.subr.mxu0 0.0
        %1831 = vmatpush2.msra.mxu0 0.0
        %1832 = vmatprep.subr.mxu0 0.0
        %1833 = vmatpush2.msra.mxu0 0.0
        %1834 = vmatprep.subr.mxu0 0.0
        %1835 = vmatpush2.msra.mxu0 0.0
        %1836 = vmatprep.subr.mxu0 0.0
        %1837 = vmatpush2.msra.mxu0 0.0
        %1838 = vmatprep.subr.mxu0 0.0
        %1839 = vmatpush2.msra.mxu0 0.0
        %1840 = vmatprep.subr.mxu0 0.0
        %1841 = vmatpush2.msra.mxu0 0.0
        %1842 = vmatprep.subr.mxu0 0.0
        %1843 = vmatpush2.msra.mxu0 0.0
        %1844 = vmatprep.subr.mxu0 0.0
        %1845 = vmatpush2.msra.mxu0 0.0
        %1846 = vmatprep.subr.mxu0 0.0
        %1847 = vmatpush2.msra.mxu0 0.0
        %1848 = vmatprep.subr.mxu0 0.0
        %1849 = vmatpush2.msra.mxu0 0.0
        %1850 = vmatprep.subr.mxu0 0.0
        %1851 = vmatpush2.msra.mxu0 0.0
        %1852 = vmatprep.subr.mxu0 0.0
        %1853 = vmatpush2.msra.mxu0 0.0
        %1854 = vmatprep.subr.mxu0 0.0
        %1855 = vmatpush2.msra.mxu0 0.0
        %1856 = vmatprep.subr.mxu0 0.0
        %1857 = vmatpush2.msra.mxu0 0.0
        %1858 = vmatprep.mubr.f32.mxu0 0.0
        %1859 = vmatmul.mubr.f32.gmra.mxu0 %v1586
        %v1860 = vpop.f32.mrf.mxu0
        %v1861 = vadd.f32 0.0, %v1860
        %v1862 = vpop.f32.mrf.mxu0
        %1863 = vmatprep.mubr.f32.mxu0 0.0
        %1864 = vmatmul.mubr.f32.gmra.mxu0 %v1589
        %v1865 = vpop.f32.mrf.mxu0
        %v1866 = vadd.f32 0.0, %v1865
        %v1867 = vpop.f32.mrf.mxu0
        %1868 = vmatprep.mubr.f32.mxu0 0.0
        %1869 = vmatmul.mubr.f32.gmra.mxu0 %v1592
        %v1870 = vpop.f32.mrf.mxu0
        %v1871 = vadd.f32 0.0, %v1870
        %v1872 = vpop.f32.mrf.mxu0
        %1873 = vmatprep.mubr.f32.mxu0 0.0
        %1874 = vmatmul.mubr.f32.gmra.mxu0 %v1595
        %v1875 = vpop.f32.mrf.mxu0
        %v1876 = vadd.f32 0.0, %v1875
        %v1877 = vpop.f32.mrf.mxu0
        %1878 = vdwg.mxu0
        %1879 = vst.msk [vmem:[#allocation2 + $0x40] sm:$0xff] %vm512, %v1861
        %1880 = vst.msk [vmem:[#allocation2 + $0x48] sm:$0xff] %vm512, %v1866
        %1881 = vst.msk [vmem:[#allocation2 + $0x50] sm:$0xff] %vm512, %v1871
        %1882 = vst.msk [vmem:[#allocation2 + $0x58] sm:$0x1] %vm1685, %v1876
        %s1883 = scalar_lea.vmem %s3, 192
        %v1884 = vld [vmem:[%s1883] sm:$0xff]
        %v1885 = vld [vmem:[%s1883 + $0x8] sm:$0xff]
        %v1886 = vld [vmem:[%s1883 + $0x10] sm:$0xff]
        %v1887 = vld [vmem:[%s1883 + $0x18] sm:$0xff]
        %v1888 = vld [vmem:[%s1883 + $0x20] sm:$0xff]
        %v1889 = vld [vmem:[%s1883 + $0x28] sm:$0xff]
        %v1890 = vld [vmem:[%s1883 + $0x30] sm:$0xff]
        %v1891 = vld [vmem:[%s1883 + $0x38] sm:$0xff]
        %1892 = vmatprep.subr.mxu0 0.0
        %1893 = vmatpush1.msra.mxu0 0.0
        %1894 = vmatprep.subr.mxu0 0.0
        %1895 = vmatpush1.msra.mxu0 0.0
        %1896 = vmatprep.subr.mxu0 0.0
        %1897 = vmatpush1.msra.mxu0 0.0
        %1898 = vmatprep.subr.mxu0 0.0
        %1899 = vmatpush1.msra.mxu0 0.0
        %1900 = vmatprep.subr.mxu0 0.0
        %1901 = vmatpush1.msra.mxu0 0.0
        %1902 = vmatprep.subr.mxu0 0.0
        %1903 = vmatpush1.msra.mxu0 0.0
        %1904 = vmatprep.subr.mxu0 0.0
        %1905 = vmatpush1.msra.mxu0 0.0
        %1906 = vmatprep.subr.mxu0 0.0
        %1907 = vmatpush1.msra.mxu0 0.0
        %1908 = vmatprep.subr.mxu0 0.0
        %1909 = vmatpush1.msra.mxu0 %v1891
        %1910 = vmatprep.subr.mxu0 0.0
        %1911 = vmatpush1.msra.mxu0 %v1890
        %1912 = vmatprep.subr.mxu0 0.0
        %1913 = vmatpush1.msra.mxu0 %v1889
        %1914 = vmatprep.subr.mxu0 0.0
        %1915 = vmatpush1.msra.mxu0 %v1888
        %1916 = vmatprep.subr.mxu0 0.0
        %1917 = vmatpush1.msra.mxu0 %v1887
        %1918 = vmatprep.subr.mxu0 0.0
        %1919 = vmatpush1.msra.mxu0 %v1886
        %1920 = vmatprep.subr.mxu0 0.0
        %1921 = vmatpush1.msra.mxu0 %v1885
        %1922 = vmatprep.subr.mxu0 0.0
        %1923 = vmatpush1.msra.mxu0 %v1884
        %1924 = vmatprep.subr.mxu0 0.0
        %1925 = vmatpush2.msra.mxu0 0.0
        %1926 = vmatprep.subr.mxu0 0.0
        %1927 = vmatpush2.msra.mxu0 0.0
        %1928 = vmatprep.subr.mxu0 0.0
        %1929 = vmatpush2.msra.mxu0 0.0
        %1930 = vmatprep.subr.mxu0 0.0
        %1931 = vmatpush2.msra.mxu0 0.0
        %1932 = vmatprep.subr.mxu0 0.0
        %1933 = vmatpush2.msra.mxu0 0.0
        %1934 = vmatprep.subr.mxu0 0.0
        %1935 = vmatpush2.msra.mxu0 0.0
        %1936 = vmatprep.subr.mxu0 0.0
        %1937 = vmatpush2.msra.mxu0 0.0
        %1938 = vmatprep.subr.mxu0 0.0
        %1939 = vmatpush2.msra.mxu0 0.0
        %1940 = vmatprep.subr.mxu0 0.0
        %1941 = vmatpush2.msra.mxu0 0.0
        %1942 = vmatprep.subr.mxu0 0.0
        %1943 = vmatpush2.msra.mxu0 0.0
        %1944 = vmatprep.subr.mxu0 0.0
        %1945 = vmatpush2.msra.mxu0 0.0
        %1946 = vmatprep.subr.mxu0 0.0
        %1947 = vmatpush2.msra.mxu0 0.0
        %1948 = vmatprep.subr.mxu0 0.0
        %1949 = vmatpush2.msra.mxu0 0.0
        %1950 = vmatprep.subr.mxu0 0.0
        %1951 = vmatpush2.msra.mxu0 0.0
        %1952 = vmatprep.subr.mxu0 0.0
        %1953 = vmatpush2.msra.mxu0 0.0
        %1954 = vmatprep.subr.mxu0 0.0
        %1955 = vmatpush2.msra.mxu0 0.0
        %1956 = vmatprep.mubr.f32.mxu0 0.0
        %1957 = vmatmul.mubr.f32.gmra.mxu0 %v1586
        %v1958 = vpop.f32.mrf.mxu0
        %v1959 = vadd.f32 0.0, %v1958
        %v1960 = vpop.f32.mrf.mxu0
        %1961 = vmatprep.mubr.f32.mxu0 0.0
        %1962 = vmatmul.mubr.f32.gmra.mxu0 %v1589
        %v1963 = vpop.f32.mrf.mxu0
        %v1964 = vadd.f32 0.0, %v1963
        %v1965 = vpop.f32.mrf.mxu0
        %1966 = vmatprep.mubr.f32.mxu0 0.0
        %1967 = vmatmul.mubr.f32.gmra.mxu0 %v1592
        %v1968 = vpop.f32.mrf.mxu0
        %v1969 = vadd.f32 0.0, %v1968
        %v1970 = vpop.f32.mrf.mxu0
        %1971 = vmatprep.mubr.f32.mxu0 0.0
        %1972 = vmatmul.mubr.f32.gmra.mxu0 %v1595
        %v1973 = vpop.f32.mrf.mxu0
        %v1974 = vadd.f32 0.0, %v1973
        %v1975 = vpop.f32.mrf.mxu0
        %1976 = vdwg.mxu0
        %1977 = vst.msk [vmem:[#allocation2 + $0x60] sm:$0xff] %vm512, %v1959
        %1978 = vst.msk [vmem:[#allocation2 + $0x68] sm:$0xff] %vm512, %v1964
        %1979 = vst.msk [vmem:[#allocation2 + $0x70] sm:$0xff] %vm512, %v1969
        %1980 = vst.msk [vmem:[#allocation2 + $0x78] sm:$0x1] %vm1685, %v1974
        %s1981 = scalar_lea.vmem %s3, 256
        %v1982 = vld [vmem:[%s1981] sm:$0xff]
        %v1983 = vld [vmem:[%s1981 + $0x8] sm:$0xff]
        %v1984 = vld [vmem:[%s1981 + $0x10] sm:$0xff]
        %v1985 = vld [vmem:[%s1981 + $0x18] sm:$0xff]
        %v1986 = vld [vmem:[%s1981 + $0x20] sm:$0xff]
        %v1987 = vld [vmem:[%s1981 + $0x28] sm:$0xff]
        %v1988 = vld [vmem:[%s1981 + $0x30] sm:$0xff]
        %v1989 = vld [vmem:[%s1981 + $0x38] sm:$0xff]
        %1990 = vmatprep.subr.mxu0 0.0
        %1991 = vmatpush1.msra.mxu0 0.0
        %1992 = vmatprep.subr.mxu0 0.0
        %1993 = vmatpush1.msra.mxu0 0.0
        %1994 = vmatprep.subr.mxu0 0.0
        %1995 = vmatpush1.msra.mxu0 0.0
        %1996 = vmatprep.subr.mxu0 0.0
        %1997 = vmatpush1.msra.mxu0 0.0
        %1998 = vmatprep.subr.mxu0 0.0
        %1999 = vmatpush1.msra.mxu0 0.0
        %2000 = vmatprep.subr.mxu0 0.0
        %2001 = vmatpush1.msra.mxu0 0.0
        %2002 = vmatprep.subr.mxu0 0.0
        %2003 = vmatpush1.msra.mxu0 0.0
        %2004 = vmatprep.subr.mxu0 0.0
        %2005 = vmatpush1.msra.mxu0 0.0
        %2006 = vmatprep.subr.mxu0 0.0
        %2007 = vmatpush1.msra.mxu0 %v1989
        %2008 = vmatprep.subr.mxu0 0.0
        %2009 = vmatpush1.msra.mxu0 %v1988
        %2010 = vmatprep.subr.mxu0 0.0
        %2011 = vmatpush1.msra.mxu0 %v1987
        %2012 = vmatprep.subr.mxu0 0.0
        %2013 = vmatpush1.msra.mxu0 %v1986
        %2014 = vmatprep.subr.mxu0 0.0
        %2015 = vmatpush1.msra.mxu0 %v1985
        %2016 = vmatprep.subr.mxu0 0.0
        %2017 = vmatpush1.msra.mxu0 %v1984
        %2018 = vmatprep.subr.mxu0 0.0
        %2019 = vmatpush1.msra.mxu0 %v1983
        %2020 = vmatprep.subr.mxu0 0.0
        %2021 = vmatpush1.msra.mxu0 %v1982
        %2022 = vmatprep.subr.mxu0 0.0
        %2023 = vmatpush2.msra.mxu0 0.0
        %2024 = vmatprep.subr.mxu0 0.0
        %2025 = vmatpush2.msra.mxu0 0.0
        %2026 = vmatprep.subr.mxu0 0.0
        %2027 = vmatpush2.msra.mxu0 0.0
        %2028 = vmatprep.subr.mxu0 0.0
        %2029 = vmatpush2.msra.mxu0 0.0
        %2030 = vmatprep.subr.mxu0 0.0
        %2031 = vmatpush2.msra.mxu0 0.0
        %2032 = vmatprep.subr.mxu0 0.0
        %2033 = vmatpush2.msra.mxu0 0.0
        %2034 = vmatprep.subr.mxu0 0.0
        %2035 = vmatpush2.msra.mxu0 0.0
        %2036 = vmatprep.subr.mxu0 0.0
        %2037 = vmatpush2.msra.mxu0 0.0
        %2038 = vmatprep.subr.mxu0 0.0
        %2039 = vmatpush2.msra.mxu0 0.0
        %2040 = vmatprep.subr.mxu0 0.0
        %2041 = vmatpush2.msra.mxu0 0.0
        %2042 = vmatprep.subr.mxu0 0.0
        %2043 = vmatpush2.msra.mxu0 0.0
        %2044 = vmatprep.subr.mxu0 0.0
        %2045 = vmatpush2.msra.mxu0 0.0
        %2046 = vmatprep.subr.mxu0 0.0
        %2047 = vmatpush2.msra.mxu0 0.0
        %2048 = vmatprep.subr.mxu0 0.0
        %2049 = vmatpush2.msra.mxu0 0.0
        %2050 = vmatprep.subr.mxu0 0.0
        %2051 = vmatpush2.msra.mxu0 0.0
        %2052 = vmatprep.subr.mxu0 0.0
        %2053 = vmatpush2.msra.mxu0 0.0
        %2054 = vmatprep.mubr.f32.mxu0 0.0
        %2055 = vmatmul.mubr.f32.gmra.mxu0 %v1586
        %v2056 = vpop.f32.mrf.mxu0
        %v2057 = vadd.f32 0.0, %v2056
        %v2058 = vpop.f32.mrf.mxu0
        %2059 = vmatprep.mubr.f32.mxu0 0.0
        %2060 = vmatmul.mubr.f32.gmra.mxu0 %v1589
        %v2061 = vpop.f32.mrf.mxu0
        %v2062 = vadd.f32 0.0, %v2061
        %v2063 = vpop.f32.mrf.mxu0
        %2064 = vmatprep.mubr.f32.mxu0 0.0
        %2065 = vmatmul.mubr.f32.gmra.mxu0 %v1592
        %v2066 = vpop.f32.mrf.mxu0
        %v2067 = vadd.f32 0.0, %v2066
        %v2068 = vpop.f32.mrf.mxu0
        %2069 = vmatprep.mubr.f32.mxu0 0.0
        %2070 = vmatmul.mubr.f32.gmra.mxu0 %v1595
        %v2071 = vpop.f32.mrf.mxu0
        %v2072 = vadd.f32 0.0, %v2071
        %v2073 = vpop.f32.mrf.mxu0
        %2074 = vdwg.mxu0
        %2075 = vst.msk [vmem:[#allocation2 + $0x80] sm:$0xff] %vm512, %v2057
        %2076 = vst.msk [vmem:[#allocation2 + $0x88] sm:$0xff] %vm512, %v2062
        %2077 = vst.msk [vmem:[#allocation2 + $0x90] sm:$0xff] %vm512, %v2067
        %2078 = vst.msk [vmem:[#allocation2 + $0x98] sm:$0x1] %vm1685, %v2072
        %s2079 = scalar_lea.vmem %s3, 320
        %v2080 = vld [vmem:[%s2079] sm:$0xff]
        %v2081 = vld [vmem:[%s2079 + $0x8] sm:$0xff]
        %v2082 = vld [vmem:[%s2079 + $0x10] sm:$0xff]
        %v2083 = vld [vmem:[%s2079 + $0x18] sm:$0xff]
        %v2084 = vld [vmem:[%s2079 + $0x20] sm:$0xff]
        %v2085 = vld [vmem:[%s2079 + $0x28] sm:$0xff]
        %v2086 = vld [vmem:[%s2079 + $0x30] sm:$0xff]
        %v2087 = vld [vmem:[%s2079 + $0x38] sm:$0xff]
        %2088 = vmatprep.subr.mxu0 0.0
        %2089 = vmatpush1.msra.mxu0 0.0
        %2090 = vmatprep.subr.mxu0 0.0
        %2091 = vmatpush1.msra.mxu0 0.0
        %2092 = vmatprep.subr.mxu0 0.0
        %2093 = vmatpush1.msra.mxu0 0.0
        %2094 = vmatprep.subr.mxu0 0.0
        %2095 = vmatpush1.msra.mxu0 0.0
        %2096 = vmatprep.subr.mxu0 0.0
        %2097 = vmatpush1.msra.mxu0 0.0
        %2098 = vmatprep.subr.mxu0 0.0
        %2099 = vmatpush1.msra.mxu0 0.0
        %2100 = vmatprep.subr.mxu0 0.0
        %2101 = vmatpush1.msra.mxu0 0.0
        %2102 = vmatprep.subr.mxu0 0.0
        %2103 = vmatpush1.msra.mxu0 0.0
        %2104 = vmatprep.subr.mxu0 0.0
        %2105 = vmatpush1.msra.mxu0 %v2087
        %2106 = vmatprep.subr.mxu0 0.0
        %2107 = vmatpush1.msra.mxu0 %v2086
        %2108 = vmatprep.subr.mxu0 0.0
        %2109 = vmatpush1.msra.mxu0 %v2085
        %2110 = vmatprep.subr.mxu0 0.0
        %2111 = vmatpush1.msra.mxu0 %v2084
        %2112 = vmatprep.subr.mxu0 0.0
        %2113 = vmatpush1.msra.mxu0 %v2083
        %2114 = vmatprep.subr.mxu0 0.0
        %2115 = vmatpush1.msra.mxu0 %v2082
        %2116 = vmatprep.subr.mxu0 0.0
        %2117 = vmatpush1.msra.mxu0 %v2081
        %2118 = vmatprep.subr.mxu0 0.0
        %2119 = vmatpush1.msra.mxu0 %v2080
        %2120 = vmatprep.subr.mxu0 0.0
        %2121 = vmatpush2.msra.mxu0 0.0
        %2122 = vmatprep.subr.mxu0 0.0
        %2123 = vmatpush2.msra.mxu0 0.0
        %2124 = vmatprep.subr.mxu0 0.0
        %2125 = vmatpush2.msra.mxu0 0.0
        %2126 = vmatprep.subr.mxu0 0.0
        %2127 = vmatpush2.msra.mxu0 0.0
        %2128 = vmatprep.subr.mxu0 0.0
        %2129 = vmatpush2.msra.mxu0 0.0
        %2130 = vmatprep.subr.mxu0 0.0
        %2131 = vmatpush2.msra.mxu0 0.0
        %2132 = vmatprep.subr.mxu0 0.0
        %2133 = vmatpush2.msra.mxu0 0.0
        %2134 = vmatprep.subr.mxu0 0.0
        %2135 = vmatpush2.msra.mxu0 0.0
        %2136 = vmatprep.subr.mxu0 0.0
        %2137 = vmatpush2.msra.mxu0 0.0
        %2138 = vmatprep.subr.mxu0 0.0
        %2139 = vmatpush2.msra.mxu0 0.0
        %2140 = vmatprep.subr.mxu0 0.0
        %2141 = vmatpush2.msra.mxu0 0.0
        %2142 = vmatprep.subr.mxu0 0.0
        %2143 = vmatpush2.msra.mxu0 0.0
        %2144 = vmatprep.subr.mxu0 0.0
        %2145 = vmatpush2.msra.mxu0 0.0
        %2146 = vmatprep.subr.mxu0 0.0
        %2147 = vmatpush2.msra.mxu0 0.0
        %2148 = vmatprep.subr.mxu0 0.0
        %2149 = vmatpush2.msra.mxu0 0.0
        %2150 = vmatprep.subr.mxu0 0.0
        %2151 = vmatpush2.msra.mxu0 0.0
        %2152 = vmatprep.mubr.f32.mxu0 0.0
        %2153 = vmatmul.mubr.f32.gmra.mxu0 %v1586
        %v2154 = vpop.f32.mrf.mxu0
        %v2155 = vadd.f32 0.0, %v2154
        %v2156 = vpop.f32.mrf.mxu0
        %2157 = vmatprep.mubr.f32.mxu0 0.0
        %2158 = vmatmul.mubr.f32.gmra.mxu0 %v1589
        %v2159 = vpop.f32.mrf.mxu0
        %v2160 = vadd.f32 0.0, %v2159
        %v2161 = vpop.f32.mrf.mxu0
        %2162 = vmatprep.mubr.f32.mxu0 0.0
        %2163 = vmatmul.mubr.f32.gmra.mxu0 %v1592
        %v2164 = vpop.f32.mrf.mxu0
        %v2165 = vadd.f32 0.0, %v2164
        %v2166 = vpop.f32.mrf.mxu0
        %2167 = vmatprep.mubr.f32.mxu0 0.0
        %2168 = vmatmul.mubr.f32.gmra.mxu0 %v1595
        %v2169 = vpop.f32.mrf.mxu0
        %v2170 = vadd.f32 0.0, %v2169
        %v2171 = vpop.f32.mrf.mxu0
        %2172 = vdwg.mxu0
        %2173 = vst.msk [vmem:[#allocation2 + $0xa0] sm:$0xff] %vm512, %v2155
        %2174 = vst.msk [vmem:[#allocation2 + $0xa8] sm:$0xff] %vm512, %v2160
        %2175 = vst.msk [vmem:[#allocation2 + $0xb0] sm:$0xff] %vm512, %v2165
        %2176 = vst.msk [vmem:[#allocation2 + $0xb8] sm:$0x1] %vm1685, %v2170
        %s2177 = scalar_lea.vmem %s3, 384
        %v2178 = vld [vmem:[%s2177] sm:$0xff]
        %v2179 = vld [vmem:[%s2177 + $0x8] sm:$0xff]
        %v2180 = vld [vmem:[%s2177 + $0x10] sm:$0xff]
        %v2181 = vld [vmem:[%s2177 + $0x18] sm:$0xff]
        %v2182 = vld [vmem:[%s2177 + $0x20] sm:$0xff]
        %v2183 = vld [vmem:[%s2177 + $0x28] sm:$0xff]
        %v2184 = vld [vmem:[%s2177 + $0x30] sm:$0xff]
        %v2185 = vld [vmem:[%s2177 + $0x38] sm:$0xff]
        %2186 = vmatprep.subr.mxu0 0.0
        %2187 = vmatpush1.msra.mxu0 0.0
        %2188 = vmatprep.subr.mxu0 0.0
        %2189 = vmatpush1.msra.mxu0 0.0
        %2190 = vmatprep.subr.mxu0 0.0
        %2191 = vmatpush1.msra.mxu0 0.0
        %2192 = vmatprep.subr.mxu0 0.0
        %2193 = vmatpush1.msra.mxu0 0.0
        %2194 = vmatprep.subr.mxu0 0.0
        %2195 = vmatpush1.msra.mxu0 0.0
        %2196 = vmatprep.subr.mxu0 0.0
        %2197 = vmatpush1.msra.mxu0 0.0
        %2198 = vmatprep.subr.mxu0 0.0
        %2199 = vmatpush1.msra.mxu0 0.0
        %2200 = vmatprep.subr.mxu0 0.0
        %2201 = vmatpush1.msra.mxu0 0.0
        %2202 = vmatprep.subr.mxu0 0.0
        %2203 = vmatpush1.msra.mxu0 %v2185
        %2204 = vmatprep.subr.mxu0 0.0
        %2205 = vmatpush1.msra.mxu0 %v2184
        %2206 = vmatprep.subr.mxu0 0.0
        %2207 = vmatpush1.msra.mxu0 %v2183
        %2208 = vmatprep.subr.mxu0 0.0
        %2209 = vmatpush1.msra.mxu0 %v2182
        %2210 = vmatprep.subr.mxu0 0.0
        %2211 = vmatpush1.msra.mxu0 %v2181
        %2212 = vmatprep.subr.mxu0 0.0
        %2213 = vmatpush1.msra.mxu0 %v2180
        %2214 = vmatprep.subr.mxu0 0.0
        %2215 = vmatpush1.msra.mxu0 %v2179
        %2216 = vmatprep.subr.mxu0 0.0
        %2217 = vmatpush1.msra.mxu0 %v2178
        %2218 = vmatprep.subr.mxu0 0.0
        %2219 = vmatpush2.msra.mxu0 0.0
        %2220 = vmatprep.subr.mxu0 0.0
        %2221 = vmatpush2.msra.mxu0 0.0
        %2222 = vmatprep.subr.mxu0 0.0
        %2223 = vmatpush2.msra.mxu0 0.0
        %2224 = vmatprep.subr.mxu0 0.0
        %2225 = vmatpush2.msra.mxu0 0.0
        %2226 = vmatprep.subr.mxu0 0.0
        %2227 = vmatpush2.msra.mxu0 0.0
        %2228 = vmatprep.subr.mxu0 0.0
        %2229 = vmatpush2.msra.mxu0 0.0
        %2230 = vmatprep.subr.mxu0 0.0
        %2231 = vmatpush2.msra.mxu0 0.0
        %2232 = vmatprep.subr.mxu0 0.0
        %2233 = vmatpush2.msra.mxu0 0.0
        %2234 = vmatprep.subr.mxu0 0.0
        %2235 = vmatpush2.msra.mxu0 0.0
        %2236 = vmatprep.subr.mxu0 0.0
        %2237 = vmatpush2.msra.mxu0 0.0
        %2238 = vmatprep.subr.mxu0 0.0
        %2239 = vmatpush2.msra.mxu0 0.0
        %2240 = vmatprep.subr.mxu0 0.0
        %2241 = vmatpush2.msra.mxu0 0.0
        %2242 = vmatprep.subr.mxu0 0.0
        %2243 = vmatpush2.msra.mxu0 0.0
        %2244 = vmatprep.subr.mxu0 0.0
        %2245 = vmatpush2.msra.mxu0 0.0
        %2246 = vmatprep.subr.mxu0 0.0
        %2247 = vmatpush2.msra.mxu0 0.0
        %2248 = vmatprep.subr.mxu0 0.0
        %2249 = vmatpush2.msra.mxu0 0.0
        %2250 = vmatprep.mubr.f32.mxu0 0.0
        %2251 = vmatmul.mubr.f32.gmra.mxu0 %v1586
        %v2252 = vpop.f32.mrf.mxu0
        %v2253 = vadd.f32 0.0, %v2252
        %v2254 = vpop.f32.mrf.mxu0
        %2255 = vmatprep.mubr.f32.mxu0 0.0
        %2256 = vmatmul.mubr.f32.gmra.mxu0 %v1589
        %v2257 = vpop.f32.mrf.mxu0
        %v2258 = vadd.f32 0.0, %v2257
        %v2259 = vpop.f32.mrf.mxu0
        %2260 = vmatprep.mubr.f32.mxu0 0.0
        %2261 = vmatmul.mubr.f32.gmra.mxu0 %v1592
        %v2262 = vpop.f32.mrf.mxu0
        %v2263 = vadd.f32 0.0, %v2262
        %v2264 = vpop.f32.mrf.mxu0
        %2265 = vmatprep.mubr.f32.mxu0 0.0
        %2266 = vmatmul.mubr.f32.gmra.mxu0 %v1595
        %v2267 = vpop.f32.mrf.mxu0
        %v2268 = vadd.f32 0.0, %v2267
        %v2269 = vpop.f32.mrf.mxu0
        %2270 = vdwg.mxu0
        %2271 = vst.msk [vmem:[#allocation2 + $0xc0] sm:$0xff] %vm512, %v2253
        %2272 = vst.msk [vmem:[#allocation2 + $0xc8] sm:$0xff] %vm512, %v2258
        %2273 = vst.msk [vmem:[#allocation2 + $0xd0] sm:$0xff] %vm512, %v2263
        %2274 = vst.msk [vmem:[#allocation2 + $0xd8] sm:$0x1] %vm1685, %v2268
        %s2275 = scalar_lea.vmem %s3, 448
        %v2276 = vld [vmem:[%s2275] sm:$0xff]
        %v2277 = vld [vmem:[%s2275 + $0x8] sm:$0xff]
        %v2278 = vld [vmem:[%s2275 + $0x10] sm:$0xff]
        %v2279 = vld [vmem:[%s2275 + $0x18] sm:$0xff]
        %v2280 = vld [vmem:[%s2275 + $0x20] sm:$0xff]
        %v2281 = vld [vmem:[%s2275 + $0x28] sm:$0xff]
        %v2282 = vld [vmem:[%s2275 + $0x30] sm:$0xff]
        %v2283 = vld [vmem:[%s2275 + $0x38] sm:$0xff]
        %2284 = vmatprep.subr.mxu0 0.0
        %2285 = vmatpush1.msra.mxu0 0.0
        %2286 = vmatprep.subr.mxu0 0.0
        %2287 = vmatpush1.msra.mxu0 0.0
        %2288 = vmatprep.subr.mxu0 0.0
        %2289 = vmatpush1.msra.mxu0 0.0
        %2290 = vmatprep.subr.mxu0 0.0
        %2291 = vmatpush1.msra.mxu0 0.0
        %2292 = vmatprep.subr.mxu0 0.0
        %2293 = vmatpush1.msra.mxu0 0.0
        %2294 = vmatprep.subr.mxu0 0.0
        %2295 = vmatpush1.msra.mxu0 0.0
        %2296 = vmatprep.subr.mxu0 0.0
        %2297 = vmatpush1.msra.mxu0 0.0
        %2298 = vmatprep.subr.mxu0 0.0
        %2299 = vmatpush1.msra.mxu0 0.0
        %2300 = vmatprep.subr.mxu0 0.0
        %2301 = vmatpush1.msra.mxu0 %v2283
        %2302 = vmatprep.subr.mxu0 0.0
        %2303 = vmatpush1.msra.mxu0 %v2282
        %2304 = vmatprep.subr.mxu0 0.0
        %2305 = vmatpush1.msra.mxu0 %v2281
        %2306 = vmatprep.subr.mxu0 0.0
        %2307 = vmatpush1.msra.mxu0 %v2280
        %2308 = vmatprep.subr.mxu0 0.0
        %2309 = vmatpush1.msra.mxu0 %v2279
        %2310 = vmatprep.subr.mxu0 0.0
        %2311 = vmatpush1.msra.mxu0 %v2278
        %2312 = vmatprep.subr.mxu0 0.0
        %2313 = vmatpush1.msra.mxu0 %v2277
        %2314 = vmatprep.subr.mxu0 0.0
        %2315 = vmatpush1.msra.mxu0 %v2276
        %2316 = vmatprep.subr.mxu0 0.0
        %2317 = vmatpush2.msra.mxu0 0.0
        %2318 = vmatprep.subr.mxu0 0.0
        %2319 = vmatpush2.msra.mxu0 0.0
        %2320 = vmatprep.subr.mxu0 0.0
        %2321 = vmatpush2.msra.mxu0 0.0
        %2322 = vmatprep.subr.mxu0 0.0
        %2323 = vmatpush2.msra.mxu0 0.0
        %2324 = vmatprep.subr.mxu0 0.0
        %2325 = vmatpush2.msra.mxu0 0.0
        %2326 = vmatprep.subr.mxu0 0.0
        %2327 = vmatpush2.msra.mxu0 0.0
        %2328 = vmatprep.subr.mxu0 0.0
        %2329 = vmatpush2.msra.mxu0 0.0
        %2330 = vmatprep.subr.mxu0 0.0
        %2331 = vmatpush2.msra.mxu0 0.0
        %2332 = vmatprep.subr.mxu0 0.0
        %2333 = vmatpush2.msra.mxu0 0.0
        %2334 = vmatprep.subr.mxu0 0.0
        %2335 = vmatpush2.msra.mxu0 0.0
        %2336 = vmatprep.subr.mxu0 0.0
        %2337 = vmatpush2.msra.mxu0 0.0
        %2338 = vmatprep.subr.mxu0 0.0
        %2339 = vmatpush2.msra.mxu0 0.0
        %2340 = vmatprep.subr.mxu0 0.0
        %2341 = vmatpush2.msra.mxu0 0.0
        %2342 = vmatprep.subr.mxu0 0.0
        %2343 = vmatpush2.msra.mxu0 0.0
        %2344 = vmatprep.subr.mxu0 0.0
        %2345 = vmatpush2.msra.mxu0 0.0
        %2346 = vmatprep.subr.mxu0 0.0
        %2347 = vmatpush2.msra.mxu0 0.0
        %2348 = vmatprep.mubr.f32.mxu0 0.0
        %2349 = vmatmul.mubr.f32.gmra.mxu0 %v1586
        %v2350 = vpop.f32.mrf.mxu0
        %v2351 = vadd.f32 0.0, %v2350
        %v2352 = vpop.f32.mrf.mxu0
        %2353 = vmatprep.mubr.f32.mxu0 0.0
        %2354 = vmatmul.mubr.f32.gmra.mxu0 %v1589
        %v2355 = vpop.f32.mrf.mxu0
        %v2356 = vadd.f32 0.0, %v2355
        %v2357 = vpop.f32.mrf.mxu0
        %2358 = vmatprep.mubr.f32.mxu0 0.0
        %2359 = vmatmul.mubr.f32.gmra.mxu0 %v1592
        %v2360 = vpop.f32.mrf.mxu0
        %v2361 = vadd.f32 0.0, %v2360
        %v2362 = vpop.f32.mrf.mxu0
        %2363 = vmatprep.mubr.f32.mxu0 0.0
        %2364 = vmatmul.mubr.f32.gmra.mxu0 %v1595
        %v2365 = vpop.f32.mrf.mxu0
        %v2366 = vadd.f32 0.0, %v2365
        %v2367 = vpop.f32.mrf.mxu0
        %2368 = vdwg.mxu0
        %2369 = vst.msk [vmem:[#allocation2 + $0xe0] sm:$0xff] %vm512, %v2351
        %2370 = vst.msk [vmem:[#allocation2 + $0xe8] sm:$0xff] %vm512, %v2356
        %2371 = vst.msk [vmem:[#allocation2 + $0xf0] sm:$0xff] %vm512, %v2361
        %2372 = vst.msk [vmem:[#allocation2 + $0xf8] sm:$0x1] %vm1685, %v2366
        %s2373 = scalar_lea.vmem %s3, 512
        %v2374 = vld [vmem:[%s2373] sm:$0xff]
        %v2375 = vld [vmem:[%s2373 + $0x8] sm:$0xff]
        %v2376 = vld [vmem:[%s2373 + $0x10] sm:$0xff]
        %v2377 = vld [vmem:[%s2373 + $0x18] sm:$0xff]
        %v2378 = vld [vmem:[%s2373 + $0x20] sm:$0xff]
        %v2379 = vld [vmem:[%s2373 + $0x28] sm:$0xff]
        %v2380 = vld [vmem:[%s2373 + $0x30] sm:$0xff]
        %v2381 = vld [vmem:[%s2373 + $0x38] sm:$0xff]
        %2382 = vmatprep.subr.mxu0 0.0
        %2383 = vmatpush1.msra.mxu0 0.0
        %2384 = vmatprep.subr.mxu0 0.0
        %2385 = vmatpush1.msra.mxu0 0.0
        %2386 = vmatprep.subr.mxu0 0.0
        %2387 = vmatpush1.msra.mxu0 0.0
        %2388 = vmatprep.subr.mxu0 0.0
        %2389 = vmatpush1.msra.mxu0 0.0
        %2390 = vmatprep.subr.mxu0 0.0
        %2391 = vmatpush1.msra.mxu0 0.0
        %2392 = vmatprep.subr.mxu0 0.0
        %2393 = vmatpush1.msra.mxu0 0.0
        %2394 = vmatprep.subr.mxu0 0.0
        %2395 = vmatpush1.msra.mxu0 0.0
        %2396 = vmatprep.subr.mxu0 0.0
        %2397 = vmatpush1.msra.mxu0 0.0
        %2398 = vmatprep.subr.mxu0 0.0
        %2399 = vmatpush1.msra.mxu0 %v2381
        %2400 = vmatprep.subr.mxu0 0.0
        %2401 = vmatpush1.msra.mxu0 %v2380
        %2402 = vmatprep.subr.mxu0 0.0
        %2403 = vmatpush1.msra.mxu0 %v2379
        %2404 = vmatprep.subr.mxu0 0.0
        %2405 = vmatpush1.msra.mxu0 %v2378
        %2406 = vmatprep.subr.mxu0 0.0
        %2407 = vmatpush1.msra.mxu0 %v2377
        %2408 = vmatprep.subr.mxu0 0.0
        %2409 = vmatpush1.msra.mxu0 %v2376
        %2410 = vmatprep.subr.mxu0 0.0
        %2411 = vmatpush1.msra.mxu0 %v2375
        %2412 = vmatprep.subr.mxu0 0.0
        %2413 = vmatpush1.msra.mxu0 %v2374
        %2414 = vmatprep.subr.mxu0 0.0
        %2415 = vmatpush2.msra.mxu0 0.0
        %2416 = vmatprep.subr.mxu0 0.0
        %2417 = vmatpush2.msra.mxu0 0.0
        %2418 = vmatprep.subr.mxu0 0.0
        %2419 = vmatpush2.msra.mxu0 0.0
        %2420 = vmatprep.subr.mxu0 0.0
        %2421 = vmatpush2.msra.mxu0 0.0
        %2422 = vmatprep.subr.mxu0 0.0
        %2423 = vmatpush2.msra.mxu0 0.0
        %2424 = vmatprep.subr.mxu0 0.0
        %2425 = vmatpush2.msra.mxu0 0.0
        %2426 = vmatprep.subr.mxu0 0.0
        %2427 = vmatpush2.msra.mxu0 0.0
        %2428 = vmatprep.subr.mxu0 0.0
        %2429 = vmatpush2.msra.mxu0 0.0
        %2430 = vmatprep.subr.mxu0 0.0
        %2431 = vmatpush2.msra.mxu0 0.0
        %2432 = vmatprep.subr.mxu0 0.0
        %2433 = vmatpush2.msra.mxu0 0.0
        %2434 = vmatprep.subr.mxu0 0.0
        %2435 = vmatpush2.msra.mxu0 0.0
        %2436 = vmatprep.subr.mxu0 0.0
        %2437 = vmatpush2.msra.mxu0 0.0
        %2438 = vmatprep.subr.mxu0 0.0
        %2439 = vmatpush2.msra.mxu0 0.0
        %2440 = vmatprep.subr.mxu0 0.0
        %2441 = vmatpush2.msra.mxu0 0.0
        %2442 = vmatprep.subr.mxu0 0.0
        %2443 = vmatpush2.msra.mxu0 0.0
        %2444 = vmatprep.subr.mxu0 0.0
        %2445 = vmatpush2.msra.mxu0 0.0
        %2446 = vmatprep.mubr.f32.mxu0 0.0
        %2447 = vmatmul.mubr.f32.gmra.mxu0 %v1586
        %v2448 = vpop.f32.mrf.mxu0
        %v2449 = vadd.f32 0.0, %v2448
        %v2450 = vpop.f32.mrf.mxu0
        %2451 = vmatprep.mubr.f32.mxu0 0.0
        %2452 = vmatmul.mubr.f32.gmra.mxu0 %v1589
        %v2453 = vpop.f32.mrf.mxu0
        %v2454 = vadd.f32 0.0, %v2453
        %v2455 = vpop.f32.mrf.mxu0
        %2456 = vmatprep.mubr.f32.mxu0 0.0
        %2457 = vmatmul.mubr.f32.gmra.mxu0 %v1592
        %v2458 = vpop.f32.mrf.mxu0
        %v2459 = vadd.f32 0.0, %v2458
        %v2460 = vpop.f32.mrf.mxu0
        %2461 = vmatprep.mubr.f32.mxu0 0.0
        %2462 = vmatmul.mubr.f32.gmra.mxu0 %v1595
        %v2463 = vpop.f32.mrf.mxu0
        %v2464 = vadd.f32 0.0, %v2463
        %v2465 = vpop.f32.mrf.mxu0
        %2466 = vdwg.mxu0
        %2467 = vst.msk [vmem:[#allocation2 + $0x100] sm:$0xff] %vm512, %v2449
        %2468 = vst.msk [vmem:[#allocation2 + $0x108] sm:$0xff] %vm512, %v2454
        %2469 = vst.msk [vmem:[#allocation2 + $0x110] sm:$0xff] %vm512, %v2459
        %2470 = vst.msk [vmem:[#allocation2 + $0x118] sm:$0x1] %vm1685, %v2464
        %v2471 = vld [vmem:[%s5] sm:$0xff]
        %v2472 = vld [vmem:[%s5 + $0x8] sm:$0xff]
        %v2473 = vld [vmem:[%s5 + $0x10] sm:$0xff]
        %v2474 = vld [vmem:[%s5 + $0x18] sm:$0x1]
        %v2475 = vld [vmem:[%s5 + $0x20] sm:$0x1]
        %v2476 = vld [vmem:[%s5 + $0x28] sm:$0x1]
        %v2477 = vld [vmem:[#allocation2] sm:$0xff]
        %v2478 = vld [vmem:[#allocation2 + $0x8] sm:$0xff]
        %v2479 = vld [vmem:[#allocation2 + $0x10] sm:$0xff]
        %v2480 = vld [vmem:[#allocation2 + $0x18] sm:$0xff]
        %v2481 = vld [vmem:[#allocation2 + $0x20] sm:$0xff]
        %v2482 = vld [vmem:[#allocation2 + $0x28] sm:$0xff]
        %v2483 = vld [vmem:[#allocation2 + $0x30] sm:$0xff]
        %v2484 = vld [vmem:[#allocation2 + $0x38] sm:$0xff]
        %v2485 = vld [vmem:[#allocation2 + $0x40] sm:$0xff]
        %v2486 = vld [vmem:[#allocation2 + $0x48] sm:$0xff]
        %v2487 = vld [vmem:[#allocation2 + $0x50] sm:$0xff]
        %v2488 = vld [vmem:[#allocation2 + $0x58] sm:$0xff]
        %v2489 = vld [vmem:[#allocation2 + $0x60] sm:$0xff]
        %v2490 = vld [vmem:[#allocation2 + $0x68] sm:$0xff]
        %v2491 = vld [vmem:[#allocation2 + $0x70] sm:$0xff]
        %v2492 = vld [vmem:[#allocation2 + $0x78] sm:$0xff]
        %v2493 = vld [vmem:[#allocation2 + $0x80] sm:$0xff]
        %v2494 = vld [vmem:[#allocation2 + $0x88] sm:$0xff]
        %v2495 = vld [vmem:[#allocation2 + $0x90] sm:$0xff]
        %v2496 = vld [vmem:[#allocation2 + $0x98] sm:$0xff]
        %v2497 = vld [vmem:[#allocation2 + $0xa0] sm:$0xff]
        %v2498 = vld [vmem:[#allocation2 + $0xa8] sm:$0xff]
        %v2499 = vld [vmem:[#allocation2 + $0xb0] sm:$0xff]
        %v2500 = vld [vmem:[#allocation2 + $0xb8] sm:$0xff]
        %v2501 = vld [vmem:[#allocation2 + $0xc0] sm:$0xff]
        %v2502 = vld [vmem:[#allocation2 + $0xc8] sm:$0xff]
        %v2503 = vld [vmem:[#allocation2 + $0xd0] sm:$0xff]
        %v2504 = vld [vmem:[#allocation2 + $0xd8] sm:$0xff]
        %v2505 = vld [vmem:[#allocation2 + $0xe0] sm:$0xff]
        %v2506 = vld [vmem:[#allocation2 + $0xe8] sm:$0xff]
        %v2507 = vld [vmem:[#allocation2 + $0xf0] sm:$0xff]
        %v2508 = vld [vmem:[#allocation2 + $0xf8] sm:$0xff]
        %v2509 = vld [vmem:[#allocation2 + $0x100] sm:$0xff]
        %v2510 = vld [vmem:[#allocation2 + $0x108] sm:$0xff]
        %v2511 = vld [vmem:[#allocation2 + $0x110] sm:$0xff]
        %v2512 = vld [vmem:[#allocation2 + $0x118] sm:$0xff]
        %v2513 = vld [vmem:[%s4] sm:$0x1]
        %v2515 = vlaneseq
        %v2516 = vshrl.u32 %v2515, 7
        %v2517 = vsub.s32 0, %v2516
        %v2518 = vrot.slane %v2513, %v2517
        %vm2520 = vcmask 261120
        %v2522 = vsel %vm2520, %v2473, 0
        %v2525 = vsel %vm2520, %v2476, 0
        %2527 = vmatprep.subr.mxu0 0.0
        %2528 = vmatpush1.msra.mxu0 %v2492
        %2529 = vmatprep.subr.mxu0 0.0
        %2530 = vmatpush1.msra.mxu0 %v2491
        %2531 = vmatprep.subr.mxu0 0.0
        %2532 = vmatpush1.msra.mxu0 %v2490
        %2533 = vmatprep.subr.mxu0 0.0
        %2534 = vmatpush1.msra.mxu0 %v2489
        %2535 = vmatprep.subr.mxu0 0.0
        %2536 = vmatpush1.msra.mxu0 %v2488
        %2537 = vmatprep.subr.mxu0 0.0
        %2538 = vmatpush1.msra.mxu0 %v2487
        %2539 = vmatprep.subr.mxu0 0.0
        %2540 = vmatpush1.msra.mxu0 %v2486
        %2541 = vmatprep.subr.mxu0 0.0
        %2542 = vmatpush1.msra.mxu0 %v2485
        %2543 = vmatprep.subr.mxu0 0.0
        %2544 = vmatpush1.msra.mxu0 %v2484
        %2545 = vmatprep.subr.mxu0 0.0
        %2546 = vmatpush1.msra.mxu0 %v2483
        %2547 = vmatprep.subr.mxu0 0.0
        %2548 = vmatpush1.msra.mxu0 %v2482
        %2549 = vmatprep.subr.mxu0 0.0
        %2550 = vmatpush1.msra.mxu0 %v2481
        %2551 = vmatprep.subr.mxu0 0.0
        %2552 = vmatpush1.msra.mxu0 %v2480
        %2553 = vmatprep.subr.mxu0 0.0
        %2554 = vmatpush1.msra.mxu0 %v2479
        %2555 = vmatprep.subr.mxu0 0.0
        %2556 = vmatpush1.msra.mxu0 %v2478
        %2557 = vmatprep.subr.mxu0 0.0
        %2558 = vmatpush1.msra.mxu0 %v2477
        %2559 = vmatprep.subr.mxu0 0.0
        %2560 = vmatpush2.msra.mxu0 %v2508
        %2561 = vmatprep.subr.mxu0 0.0
        %2562 = vmatpush2.msra.mxu0 %v2507
        %2563 = vmatprep.subr.mxu0 0.0
        %2564 = vmatpush2.msra.mxu0 %v2506
        %2565 = vmatprep.subr.mxu0 0.0
        %2566 = vmatpush2.msra.mxu0 %v2505
        %2567 = vmatprep.subr.mxu0 0.0
        %2568 = vmatpush2.msra.mxu0 %v2504
        %2569 = vmatprep.subr.mxu0 0.0
        %2570 = vmatpush2.msra.mxu0 %v2503
        %2571 = vmatprep.subr.mxu0 0.0
        %2572 = vmatpush2.msra.mxu0 %v2502
        %2573 = vmatprep.subr.mxu0 0.0
        %2574 = vmatpush2.msra.mxu0 %v2501
        %2575 = vmatprep.subr.mxu0 0.0
        %2576 = vmatpush2.msra.mxu0 %v2500
        %2577 = vmatprep.subr.mxu0 0.0
        %2578 = vmatpush2.msra.mxu0 %v2499
        %2579 = vmatprep.subr.mxu0 0.0
        %2580 = vmatpush2.msra.mxu0 %v2498
        %2581 = vmatprep.subr.mxu0 0.0
        %2582 = vmatpush2.msra.mxu0 %v2497
        %2583 = vmatprep.subr.mxu0 0.0
        %2584 = vmatpush2.msra.mxu0 %v2496
        %2585 = vmatprep.subr.mxu0 0.0
        %2586 = vmatpush2.msra.mxu0 %v2495
        %2587 = vmatprep.subr.mxu0 0.0
        %2588 = vmatpush2.msra.mxu0 %v2494
        %2589 = vmatprep.subr.mxu0 0.0
        %2590 = vmatpush2.msra.mxu0 %v2493
        %2591 = vmatprep.mubr.f32.mxu0 %v2472
        %2592 = vmatmul.mubr.f32.gmra.mxu0 %v2471
        %v2593 = vpop.f32.mrf.mxu0
        %v2594 = vadd.f32 %v2518, %v2593
        %v2595 = vpop.f32.mrf.mxu0
        %2596 = vmatprep.mubr.f32.mxu0 %v2475
        %2597 = vmatmul.mubr.f32.gmra.mxu0 %v2474
        %v2598 = vpop.f32.mrf.mxu0
        %v2599 = vadd.f32 %v2518, %v2598
        %v2600 = vpop.f32.mrf.mxu0
        %2601 = vdwg.mxu0
        %2602 = vmatprep.subr.mxu0 0.0
        %2603 = vmatpush1.msra.mxu0 0.0
        %2604 = vmatprep.subr.mxu0 0.0
        %2605 = vmatpush1.msra.mxu0 0.0
        %2606 = vmatprep.subr.mxu0 0.0
        %2607 = vmatpush1.msra.mxu0 0.0
        %2608 = vmatprep.subr.mxu0 0.0
        %2609 = vmatpush1.msra.mxu0 0.0
        %2610 = vmatprep.subr.mxu0 0.0
        %2611 = vmatpush1.msra.mxu0 0.0
        %2612 = vmatprep.subr.mxu0 0.0
        %2613 = vmatpush1.msra.mxu0 0.0
        %2614 = vmatprep.subr.mxu0 0.0
        %2615 = vmatpush1.msra.mxu0 0.0
        %2616 = vmatprep.subr.mxu0 0.0
        %2617 = vmatpush1.msra.mxu0 0.0
        %2618 = vmatprep.subr.mxu0 0.0
        %2619 = vmatpush1.msra.mxu0 0.0
        %2620 = vmatprep.subr.mxu0 0.0
        %2621 = vmatpush1.msra.mxu0 0.0
        %2622 = vmatprep.subr.mxu0 0.0
        %2623 = vmatpush1.msra.mxu0 0.0
        %2624 = vmatprep.subr.mxu0 0.0
        %2625 = vmatpush1.msra.mxu0 0.0
        %2626 = vmatprep.subr.mxu0 0.0
        %2627 = vmatpush1.msra.mxu0 %v2512
        %2628 = vmatprep.subr.mxu0 0.0
        %2629 = vmatpush1.msra.mxu0 %v2511
        %2630 = vmatprep.subr.mxu0 0.0
        %2631 = vmatpush1.msra.mxu0 %v2510
        %2632 = vmatprep.subr.mxu0 0.0
        %2633 = vmatpush1.msra.mxu0 %v2509
        %2634 = vmatprep.subr.mxu0 0.0
        %2635 = vmatpush2.msra.mxu0 0.0
        %2636 = vmatprep.subr.mxu0 0.0
        %2637 = vmatpush2.msra.mxu0 0.0
        %2638 = vmatprep.subr.mxu0 0.0
        %2639 = vmatpush2.msra.mxu0 0.0
        %2640 = vmatprep.subr.mxu0 0.0
        %2641 = vmatpush2.msra.mxu0 0.0
        %2642 = vmatprep.subr.mxu0 0.0
        %2643 = vmatpush2.msra.mxu0 0.0
        %2644 = vmatprep.subr.mxu0 0.0
        %2645 = vmatpush2.msra.mxu0 0.0
        %2646 = vmatprep.subr.mxu0 0.0
        %2647 = vmatpush2.msra.mxu0 0.0
        %2648 = vmatprep.subr.mxu0 0.0
        %2649 = vmatpush2.msra.mxu0 0.0
        %2650 = vmatprep.subr.mxu0 0.0
        %2651 = vmatpush2.msra.mxu0 0.0
        %2652 = vmatprep.subr.mxu0 0.0
        %2653 = vmatpush2.msra.mxu0 0.0
        %2654 = vmatprep.subr.mxu0 0.0
        %2655 = vmatpush2.msra.mxu0 0.0
        %2656 = vmatprep.subr.mxu0 0.0
        %2657 = vmatpush2.msra.mxu0 0.0
        %2658 = vmatprep.subr.mxu0 0.0
        %2659 = vmatpush2.msra.mxu0 0.0
        %2660 = vmatprep.subr.mxu0 0.0
        %2661 = vmatpush2.msra.mxu0 0.0
        %2662 = vmatprep.subr.mxu0 0.0
        %2663 = vmatpush2.msra.mxu0 0.0
        %2664 = vmatprep.subr.mxu0 0.0
        %2665 = vmatpush2.msra.mxu0 0.0
        %2666 = vmatprep.mubr.f32.mxu0 0.0
        %2667 = vmatmul.mubr.f32.gmra.mxu0 %v2522
        %v2668 = vpop.f32.mrf.mxu0
        %v2669 = vadd.f32 %v2594, %v2668
        %v2670 = vpop.f32.mrf.mxu0
        %2671 = vmatprep.mubr.f32.mxu0 0.0
        %2672 = vmatmul.mubr.f32.gmra.mxu0 %v2525
        %v2673 = vpop.f32.mrf.mxu0
        %v2674 = vadd.f32 %v2599, %v2673
        %v2675 = vpop.f32.mrf.mxu0
        %2676 = vdwg.mxu0
        %v2677 = vmax.f32 %v2669, 0.0
        %v2678 = vmax.f32 %v2674, 0.0
        %v2679 = vld [vmem:[%s6] sm:$0xf]
        %vm2680 = vcmask 72704
        %v2682 = vsel %vm2680, %v2679, 0
        %vm2684 = vcmask 1040384
        %v2686 = vsel %vm2684, %v2678, 0
        %2688 = vmatprep.subr.mxu0 0.0
        %2689 = vmatpush1.msra.mxu0 0.0
        %2690 = vmatprep.subr.mxu0 0.0
        %2691 = vmatpush1.msra.mxu0 0.0
        %2692 = vmatprep.subr.mxu0 0.0
        %2693 = vmatpush1.msra.mxu0 0.0
        %2694 = vmatprep.subr.mxu0 0.0
        %2695 = vmatpush1.msra.mxu0 0.0
        %2696 = vmatprep.subr.mxu0 0.0
        %2697 = vmatpush1.msra.mxu0 0.0
        %2698 = vmatprep.subr.mxu0 0.0
        %2699 = vmatpush1.msra.mxu0 0.0
        %2700 = vmatprep.subr.mxu0 0.0
        %2701 = vmatpush1.msra.mxu0 0.0
        %2702 = vmatprep.subr.mxu0 0.0
        %2703 = vmatpush1.msra.mxu0 0.0
        %2704 = vmatprep.subr.mxu0 0.0
        %2705 = vmatpush1.msra.mxu0 0.0
        %2706 = vmatprep.subr.mxu0 0.0
        %2707 = vmatpush1.msra.mxu0 0.0
        %2708 = vmatprep.subr.mxu0 0.0
        %2709 = vmatpush1.msra.mxu0 0.0
        %2710 = vmatprep.subr.mxu0 0.0
        %2711 = vmatpush1.msra.mxu0 0.0
        %2712 = vmatprep.subr.mxu0 0.0
        %2713 = vmatpush1.msra.mxu0 0.0
        %2714 = vmatprep.subr.mxu0 0.0
        %2715 = vmatpush1.msra.mxu0 0.0
        %2716 = vmatprep.subr.mxu0 0.0
        %2717 = vmatpush1.msra.mxu0 %v2686
        %2718 = vmatprep.subr.mxu0 0.0
        %2719 = vmatpush1.msra.mxu0 %v2677
        %2720 = vmatprep.subr.mxu0 0.0
        %2721 = vmatpush2.msra.mxu0 0.0
        %2722 = vmatprep.subr.mxu0 0.0
        %2723 = vmatpush2.msra.mxu0 0.0
        %2724 = vmatprep.subr.mxu0 0.0
        %2725 = vmatpush2.msra.mxu0 0.0
        %2726 = vmatprep.subr.mxu0 0.0
        %2727 = vmatpush2.msra.mxu0 0.0
        %2728 = vmatprep.subr.mxu0 0.0
        %2729 = vmatpush2.msra.mxu0 0.0
        %2730 = vmatprep.subr.mxu0 0.0
        %2731 = vmatpush2.msra.mxu0 0.0
        %2732 = vmatprep.subr.mxu0 0.0
        %2733 = vmatpush2.msra.mxu0 0.0
        %2734 = vmatprep.subr.mxu0 0.0
        %2735 = vmatpush2.msra.mxu0 0.0
        %2736 = vmatprep.subr.mxu0 0.0
        %2737 = vmatpush2.msra.mxu0 0.0
        %2738 = vmatprep.subr.mxu0 0.0
        %2739 = vmatpush2.msra.mxu0 0.0
        %2740 = vmatprep.subr.mxu0 0.0
        %2741 = vmatpush2.msra.mxu0 0.0
        %2742 = vmatprep.subr.mxu0 0.0
        %2743 = vmatpush2.msra.mxu0 0.0
        %2744 = vmatprep.subr.mxu0 0.0
        %2745 = vmatpush2.msra.mxu0 0.0
        %2746 = vmatprep.subr.mxu0 0.0
        %2747 = vmatpush2.msra.mxu0 0.0
        %2748 = vmatprep.subr.mxu0 0.0
        %2749 = vmatpush2.msra.mxu0 0.0
        %2750 = vmatprep.subr.mxu0 0.0
        %2751 = vmatpush2.msra.mxu0 0.0
        %2752 = vmatprep.mubr.f32.mxu0 0.0
        %2753 = vmatmul.mubr.f32.gmra.mxu0 %v2682
        %v2754 = vpop.f32.mrf.mxu0
        %v2755 = vadd.f32 0.0, %v2754
        %v2756 = vpop.f32.mrf.mxu0
        %2757 = vdwg.mxu0
        %s2758 = scalar_lea.vmem %s6, 4
        %v2759 = vld [vmem:[%s2758] sm:$0xf]
        %v2761 = vsel %vm2680, %v2759, 0
        %2763 = vmatprep.subr.mxu0 0.0
        %2764 = vmatpush1.msra.mxu0 0.0
        %2765 = vmatprep.subr.mxu0 0.0
        %2766 = vmatpush1.msra.mxu0 0.0
        %2767 = vmatprep.subr.mxu0 0.0
        %2768 = vmatpush1.msra.mxu0 0.0
        %2769 = vmatprep.subr.mxu0 0.0
        %2770 = vmatpush1.msra.mxu0 0.0
        %2771 = vmatprep.subr.mxu0 0.0
        %2772 = vmatpush1.msra.mxu0 0.0
        %2773 = vmatprep.subr.mxu0 0.0
        %2774 = vmatpush1.msra.mxu0 0.0
        %2775 = vmatprep.subr.mxu0 0.0
        %2776 = vmatpush1.msra.mxu0 0.0
        %2777 = vmatprep.subr.mxu0 0.0
        %2778 = vmatpush1.msra.mxu0 0.0
        %2779 = vmatprep.subr.mxu0 0.0
        %2780 = vmatpush1.msra.mxu0 0.0
        %2781 = vmatprep.subr.mxu0 0.0
        %2782 = vmatpush1.msra.mxu0 0.0
        %2783 = vmatprep.subr.mxu0 0.0
        %2784 = vmatpush1.msra.mxu0 0.0
        %2785 = vmatprep.subr.mxu0 0.0
        %2786 = vmatpush1.msra.mxu0 0.0
        %2787 = vmatprep.subr.mxu0 0.0
        %2788 = vmatpush1.msra.mxu0 0.0
        %2789 = vmatprep.subr.mxu0 0.0
        %2790 = vmatpush1.msra.mxu0 0.0
        %2791 = vmatprep.subr.mxu0 0.0
        %2792 = vmatpush1.msra.mxu0 %v2686
        %2793 = vmatprep.subr.mxu0 0.0
        %2794 = vmatpush1.msra.mxu0 %v2677
        %2795 = vmatprep.subr.mxu0 0.0
        %2796 = vmatpush2.msra.mxu0 0.0
        %2797 = vmatprep.subr.mxu0 0.0
        %2798 = vmatpush2.msra.mxu0 0.0
        %2799 = vmatprep.subr.mxu0 0.0
        %2800 = vmatpush2.msra.mxu0 0.0
        %2801 = vmatprep.subr.mxu0 0.0
        %2802 = vmatpush2.msra.mxu0 0.0
        %2803 = vmatprep.subr.mxu0 0.0
        %2804 = vmatpush2.msra.mxu0 0.0
        %2805 = vmatprep.subr.mxu0 0.0
        %2806 = vmatpush2.msra.mxu0 0.0
        %2807 = vmatprep.subr.mxu0 0.0
        %2808 = vmatpush2.msra.mxu0 0.0
        %2809 = vmatprep.subr.mxu0 0.0
        %2810 = vmatpush2.msra.mxu0 0.0
        %2811 = vmatprep.subr.mxu0 0.0
        %2812 = vmatpush2.msra.mxu0 0.0
        %2813 = vmatprep.subr.mxu0 0.0
        %2814 = vmatpush2.msra.mxu0 0.0
        %2815 = vmatprep.subr.mxu0 0.0
        %2816 = vmatpush2.msra.mxu0 0.0
        %2817 = vmatprep.subr.mxu0 0.0
        %2818 = vmatpush2.msra.mxu0 0.0
        %2819 = vmatprep.subr.mxu0 0.0
        %2820 = vmatpush2.msra.mxu0 0.0
        %2821 = vmatprep.subr.mxu0 0.0
        %2822 = vmatpush2.msra.mxu0 0.0
        %2823 = vmatprep.subr.mxu0 0.0
        %2824 = vmatpush2.msra.mxu0 0.0
        %2825 = vmatprep.subr.mxu0 0.0
        %2826 = vmatpush2.msra.mxu0 0.0
        %2827 = vmatprep.mubr.f32.mxu0 0.0
        %2828 = vmatmul.mubr.f32.gmra.mxu0 %v2761
        %v2829 = vpop.f32.mrf.mxu0
        %v2830 = vadd.f32 0.0, %v2829
        %v2831 = vpop.f32.mrf.mxu0
        %2832 = vdwg.mxu0
        %v2833 = vmax.f32 %v2755, %v2830
        %s2834 = scalar_lea.vmem %s6, 8
        %v2835 = vld [vmem:[%s2834] sm:$0xf]
        %v2837 = vsel %vm2680, %v2835, 0
        %2839 = vmatprep.subr.mxu0 0.0
        %2840 = vmatpush1.msra.mxu0 0.0
        %2841 = vmatprep.subr.mxu0 0.0
        %2842 = vmatpush1.msra.mxu0 0.0
        %2843 = vmatprep.subr.mxu0 0.0
        %2844 = vmatpush1.msra.mxu0 0.0
        %2845 = vmatprep.subr.mxu0 0.0
        %2846 = vmatpush1.msra.mxu0 0.0
        %2847 = vmatprep.subr.mxu0 0.0
        %2848 = vmatpush1.msra.mxu0 0.0
        %2849 = vmatprep.subr.mxu0 0.0
        %2850 = vmatpush1.msra.mxu0 0.0
        %2851 = vmatprep.subr.mxu0 0.0
        %2852 = vmatpush1.msra.mxu0 0.0
        %2853 = vmatprep.subr.mxu0 0.0
        %2854 = vmatpush1.msra.mxu0 0.0
        %2855 = vmatprep.subr.mxu0 0.0
        %2856 = vmatpush1.msra.mxu0 0.0
        %2857 = vmatprep.subr.mxu0 0.0
        %2858 = vmatpush1.msra.mxu0 0.0
        %2859 = vmatprep.subr.mxu0 0.0
        %2860 = vmatpush1.msra.mxu0 0.0
        %2861 = vmatprep.subr.mxu0 0.0
        %2862 = vmatpush1.msra.mxu0 0.0
        %2863 = vmatprep.subr.mxu0 0.0
        %2864 = vmatpush1.msra.mxu0 0.0
        %2865 = vmatprep.subr.mxu0 0.0
        %2866 = vmatpush1.msra.mxu0 0.0
        %2867 = vmatprep.subr.mxu0 0.0
        %2868 = vmatpush1.msra.mxu0 %v2686
        %2869 = vmatprep.subr.mxu0 0.0
        %2870 = vmatpush1.msra.mxu0 %v2677
        %2871 = vmatprep.subr.mxu0 0.0
        %2872 = vmatpush2.msra.mxu0 0.0
        %2873 = vmatprep.subr.mxu0 0.0
        %2874 = vmatpush2.msra.mxu0 0.0
        %2875 = vmatprep.subr.mxu0 0.0
        %2876 = vmatpush2.msra.mxu0 0.0
        %2877 = vmatprep.subr.mxu0 0.0
        %2878 = vmatpush2.msra.mxu0 0.0
        %2879 = vmatprep.subr.mxu0 0.0
        %2880 = vmatpush2.msra.mxu0 0.0
        %2881 = vmatprep.subr.mxu0 0.0
        %2882 = vmatpush2.msra.mxu0 0.0
        %2883 = vmatprep.subr.mxu0 0.0
        %2884 = vmatpush2.msra.mxu0 0.0
        %2885 = vmatprep.subr.mxu0 0.0
        %2886 = vmatpush2.msra.mxu0 0.0
        %2887 = vmatprep.subr.mxu0 0.0
        %2888 = vmatpush2.msra.mxu0 0.0
        %2889 = vmatprep.subr.mxu0 0.0
        %2890 = vmatpush2.msra.mxu0 0.0
        %2891 = vmatprep.subr.mxu0 0.0
        %2892 = vmatpush2.msra.mxu0 0.0
        %2893 = vmatprep.subr.mxu0 0.0
        %2894 = vmatpush2.msra.mxu0 0.0
        %2895 = vmatprep.subr.mxu0 0.0
        %2896 = vmatpush2.msra.mxu0 0.0
        %2897 = vmatprep.subr.mxu0 0.0
        %2898 = vmatpush2.msra.mxu0 0.0
        %2899 = vmatprep.subr.mxu0 0.0
        %2900 = vmatpush2.msra.mxu0 0.0
        %2901 = vmatprep.subr.mxu0 0.0
        %2902 = vmatpush2.msra.mxu0 0.0
        %2903 = vmatprep.mubr.f32.mxu0 0.0
        %2904 = vmatmul.mubr.f32.gmra.mxu0 %v2837
        %v2905 = vpop.f32.mrf.mxu0
        %v2906 = vadd.f32 0.0, %v2905
        %v2907 = vpop.f32.mrf.mxu0
        %2908 = vdwg.mxu0
        %v2909 = vmax.f32 %v2833, %v2906
        %s2910 = scalar_lea.vmem %s6, 12
        %v2911 = vld [vmem:[%s2910] sm:$0xf]
        %v2913 = vsel %vm2680, %v2911, 0
        %2915 = vmatprep.subr.mxu0 0.0
        %2916 = vmatpush1.msra.mxu0 0.0
        %2917 = vmatprep.subr.mxu0 0.0
        %2918 = vmatpush1.msra.mxu0 0.0
        %2919 = vmatprep.subr.mxu0 0.0
        %2920 = vmatpush1.msra.mxu0 0.0
        %2921 = vmatprep.subr.mxu0 0.0
        %2922 = vmatpush1.msra.mxu0 0.0
        %2923 = vmatprep.subr.mxu0 0.0
        %2924 = vmatpush1.msra.mxu0 0.0
        %2925 = vmatprep.subr.mxu0 0.0
        %2926 = vmatpush1.msra.mxu0 0.0
        %2927 = vmatprep.subr.mxu0 0.0
        %2928 = vmatpush1.msra.mxu0 0.0
        %2929 = vmatprep.subr.mxu0 0.0
        %2930 = vmatpush1.msra.mxu0 0.0
        %2931 = vmatprep.subr.mxu0 0.0
        %2932 = vmatpush1.msra.mxu0 0.0
        %2933 = vmatprep.subr.mxu0 0.0
        %2934 = vmatpush1.msra.mxu0 0.0
        %2935 = vmatprep.subr.mxu0 0.0
        %2936 = vmatpush1.msra.mxu0 0.0
        %2937 = vmatprep.subr.mxu0 0.0
        %2938 = vmatpush1.msra.mxu0 0.0
        %2939 = vmatprep.subr.mxu0 0.0
        %2940 = vmatpush1.msra.mxu0 0.0
        %2941 = vmatprep.subr.mxu0 0.0
        %2942 = vmatpush1.msra.mxu0 0.0
        %2943 = vmatprep.subr.mxu0 0.0
        %2944 = vmatpush1.msra.mxu0 %v2686
        %2945 = vmatprep.subr.mxu0 0.0
        %2946 = vmatpush1.msra.mxu0 %v2677
        %2947 = vmatprep.subr.mxu0 0.0
        %2948 = vmatpush2.msra.mxu0 0.0
        %2949 = vmatprep.subr.mxu0 0.0
        %2950 = vmatpush2.msra.mxu0 0.0
        %2951 = vmatprep.subr.mxu0 0.0
        %2952 = vmatpush2.msra.mxu0 0.0
        %2953 = vmatprep.subr.mxu0 0.0
        %2954 = vmatpush2.msra.mxu0 0.0
        %2955 = vmatprep.subr.mxu0 0.0
        %2956 = vmatpush2.msra.mxu0 0.0
        %2957 = vmatprep.subr.mxu0 0.0
        %2958 = vmatpush2.msra.mxu0 0.0
        %2959 = vmatprep.subr.mxu0 0.0
        %2960 = vmatpush2.msra.mxu0 0.0
        %2961 = vmatprep.subr.mxu0 0.0
        %2962 = vmatpush2.msra.mxu0 0.0
        %2963 = vmatprep.subr.mxu0 0.0
        %2964 = vmatpush2.msra.mxu0 0.0
        %2965 = vmatprep.subr.mxu0 0.0
        %2966 = vmatpush2.msra.mxu0 0.0
        %2967 = vmatprep.subr.mxu0 0.0
        %2968 = vmatpush2.msra.mxu0 0.0
        %2969 = vmatprep.subr.mxu0 0.0
        %2970 = vmatpush2.msra.mxu0 0.0
        %2971 = vmatprep.subr.mxu0 0.0
        %2972 = vmatpush2.msra.mxu0 0.0
        %2973 = vmatprep.subr.mxu0 0.0
        %2974 = vmatpush2.msra.mxu0 0.0
        %2975 = vmatprep.subr.mxu0 0.0
        %2976 = vmatpush2.msra.mxu0 0.0
        %2977 = vmatprep.subr.mxu0 0.0
        %2978 = vmatpush2.msra.mxu0 0.0
        %2979 = vmatprep.mubr.f32.mxu0 0.0
        %2980 = vmatmul.mubr.f32.gmra.mxu0 %v2913
        %v2981 = vpop.f32.mrf.mxu0
        %v2982 = vadd.f32 0.0, %v2981
        %v2983 = vpop.f32.mrf.mxu0
        %2984 = vdwg.mxu0
        %v2985 = vmax.f32 %v2909, %v2982
        %v2986 = vld [vmem:[#allocation4] sm:$0xff]
        %v2987 = vld [vmem:[#allocation4 + $0x8] sm:$0xff]
        %v2988 = vld [vmem:[#allocation4 + $0x10] sm:$0xff]
        %v2989 = vld [vmem:[#allocation4 + $0x18] sm:$0xff]
        %v2990 = vld [vmem:[#allocation4 + $0x20] sm:$0xff]
        %v2991 = vld [vmem:[#allocation4 + $0x28] sm:$0xff]
        %v2992 = vld [vmem:[#allocation4 + $0x30] sm:$0xff]
        %v2993 = vld [vmem:[#allocation4 + $0x38] sm:$0xff]
        %v2995 = vsel %vm512, %v2985, 0
        %2997 = vmatprep.subr.mxu0 0.0
        %2998 = vmatpush1.msra.mxu0 0.0
        %2999 = vmatprep.subr.mxu0 0.0
        %3000 = vmatpush1.msra.mxu0 0.0
        %3001 = vmatprep.subr.mxu0 0.0
        %3002 = vmatpush1.msra.mxu0 0.0
        %3003 = vmatprep.subr.mxu0 0.0
        %3004 = vmatpush1.msra.mxu0 0.0
        %3005 = vmatprep.subr.mxu0 0.0
        %3006 = vmatpush1.msra.mxu0 0.0
        %3007 = vmatprep.subr.mxu0 0.0
        %3008 = vmatpush1.msra.mxu0 0.0
        %3009 = vmatprep.subr.mxu0 0.0
        %3010 = vmatpush1.msra.mxu0 0.0
        %3011 = vmatprep.subr.mxu0 0.0
        %3012 = vmatpush1.msra.mxu0 0.0
        %3013 = vmatprep.subr.mxu0 0.0
        %3014 = vmatpush1.msra.mxu0 %v2993
        %3015 = vmatprep.subr.mxu0 0.0
        %3016 = vmatpush1.msra.mxu0 %v2992
        %3017 = vmatprep.subr.mxu0 0.0
        %3018 = vmatpush1.msra.mxu0 %v2991
        %3019 = vmatprep.subr.mxu0 0.0
        %3020 = vmatpush1.msra.mxu0 %v2990
        %3021 = vmatprep.subr.mxu0 0.0
        %3022 = vmatpush1.msra.mxu0 %v2989
        %3023 = vmatprep.subr.mxu0 0.0
        %3024 = vmatpush1.msra.mxu0 %v2988
        %3025 = vmatprep.subr.mxu0 0.0
        %3026 = vmatpush1.msra.mxu0 %v2987
        %3027 = vmatprep.subr.mxu0 0.0
        %3028 = vmatpush1.msra.mxu0 %v2986
        %3029 = vmatprep.subr.mxu0 0.0
        %3030 = vmatpush2.msra.mxu0 0.0
        %3031 = vmatprep.subr.mxu0 0.0
        %3032 = vmatpush2.msra.mxu0 0.0
        %3033 = vmatprep.subr.mxu0 0.0
        %3034 = vmatpush2.msra.mxu0 0.0
        %3035 = vmatprep.subr.mxu0 0.0
        %3036 = vmatpush2.msra.mxu0 0.0
        %3037 = vmatprep.subr.mxu0 0.0
        %3038 = vmatpush2.msra.mxu0 0.0
        %3039 = vmatprep.subr.mxu0 0.0
        %3040 = vmatpush2.msra.mxu0 0.0
        %3041 = vmatprep.subr.mxu0 0.0
        %3042 = vmatpush2.msra.mxu0 0.0
        %3043 = vmatprep.subr.mxu0 0.0
        %3044 = vmatpush2.msra.mxu0 0.0
        %3045 = vmatprep.subr.mxu0 0.0
        %3046 = vmatpush2.msra.mxu0 0.0
        %3047 = vmatprep.subr.mxu0 0.0
        %3048 = vmatpush2.msra.mxu0 0.0
        %3049 = vmatprep.subr.mxu0 0.0
        %3050 = vmatpush2.msra.mxu0 0.0
        %3051 = vmatprep.subr.mxu0 0.0
        %3052 = vmatpush2.msra.mxu0 0.0
        %3053 = vmatprep.subr.mxu0 0.0
        %3054 = vmatpush2.msra.mxu0 0.0
        %3055 = vmatprep.subr.mxu0 0.0
        %3056 = vmatpush2.msra.mxu0 0.0
        %3057 = vmatprep.subr.mxu0 0.0
        %3058 = vmatpush2.msra.mxu0 0.0
        %3059 = vmatprep.subr.mxu0 0.0
        %3060 = vmatpush2.msra.mxu0 0.0
        %3061 = vmatprep.mubr.f32.mxu0 0.0
        %3062 = vmatmul.mubr.f32.gmra.mxu0 %v2995
        %v3063 = vpop.f32.mrf.mxu0
        %v3064 = vadd.f32 0.0, %v3063
        %v3065 = vpop.f32.mrf.mxu0
        %3066 = vdwg.mxu0
        %vm3067 = vcmask 519168
        %3068 = vst.msk [vmem:[#allocation2] sm:$0xf] %vm3067, %v3064
        %s3069 = scalar_lea.vmem [#allocation4], 64
        %v3070 = vld [vmem:[%s3069] sm:$0xff]
        %v3071 = vld [vmem:[%s3069 + $0x8] sm:$0xff]
        %v3072 = vld [vmem:[%s3069 + $0x10] sm:$0xff]
        %v3073 = vld [vmem:[%s3069 + $0x18] sm:$0xff]
        %v3074 = vld [vmem:[%s3069 + $0x20] sm:$0xff]
        %v3075 = vld [vmem:[%s3069 + $0x28] sm:$0xff]
        %v3076 = vld [vmem:[%s3069 + $0x30] sm:$0xff]
        %v3077 = vld [vmem:[%s3069 + $0x38] sm:$0xff]
        %3078 = vmatprep.subr.mxu0 0.0
        %3079 = vmatpush1.msra.mxu0 0.0
        %3080 = vmatprep.subr.mxu0 0.0
        %3081 = vmatpush1.msra.mxu0 0.0
        %3082 = vmatprep.subr.mxu0 0.0
        %3083 = vmatpush1.msra.mxu0 0.0
        %3084 = vmatprep.subr.mxu0 0.0
        %3085 = vmatpush1.msra.mxu0 0.0
        %3086 = vmatprep.subr.mxu0 0.0
        %3087 = vmatpush1.msra.mxu0 0.0
        %3088 = vmatprep.subr.mxu0 0.0
        %3089 = vmatpush1.msra.mxu0 0.0
        %3090 = vmatprep.subr.mxu0 0.0
        %3091 = vmatpush1.msra.mxu0 0.0
        %3092 = vmatprep.subr.mxu0 0.0
        %3093 = vmatpush1.msra.mxu0 0.0
        %3094 = vmatprep.subr.mxu0 0.0
        %3095 = vmatpush1.msra.mxu0 %v3077
        %3096 = vmatprep.subr.mxu0 0.0
        %3097 = vmatpush1.msra.mxu0 %v3076
        %3098 = vmatprep.subr.mxu0 0.0
        %3099 = vmatpush1.msra.mxu0 %v3075
        %3100 = vmatprep.subr.mxu0 0.0
        %3101 = vmatpush1.msra.mxu0 %v3074
        %3102 = vmatprep.subr.mxu0 0.0
        %3103 = vmatpush1.msra.mxu0 %v3073
        %3104 = vmatprep.subr.mxu0 0.0
        %3105 = vmatpush1.msra.mxu0 %v3072
        %3106 = vmatprep.subr.mxu0 0.0
        %3107 = vmatpush1.msra.mxu0 %v3071
        %3108 = vmatprep.subr.mxu0 0.0
        %3109 = vmatpush1.msra.mxu0 %v3070
        %3110 = vmatprep.subr.mxu0 0.0
        %3111 = vmatpush2.msra.mxu0 0.0
        %3112 = vmatprep.subr.mxu0 0.0
        %3113 = vmatpush2.msra.mxu0 0.0
        %3114 = vmatprep.subr.mxu0 0.0
        %3115 = vmatpush2.msra.mxu0 0.0
        %3116 = vmatprep.subr.mxu0 0.0
        %3117 = vmatpush2.msra.mxu0 0.0
        %3118 = vmatprep.subr.mxu0 0.0
        %3119 = vmatpush2.msra.mxu0 0.0
        %3120 = vmatprep.subr.mxu0 0.0
        %3121 = vmatpush2.msra.mxu0 0.0
        %3122 = vmatprep.subr.mxu0 0.0
        %3123 = vmatpush2.msra.mxu0 0.0
        %3124 = vmatprep.subr.mxu0 0.0
        %3125 = vmatpush2.msra.mxu0 0.0
        %3126 = vmatprep.subr.mxu0 0.0
        %3127 = vmatpush2.msra.mxu0 0.0
        %3128 = vmatprep.subr.mxu0 0.0
        %3129 = vmatpush2.msra.mxu0 0.0
        %3130 = vmatprep.subr.mxu0 0.0
        %3131 = vmatpush2.msra.mxu0 0.0
        %3132 = vmatprep.subr.mxu0 0.0
        %3133 = vmatpush2.msra.mxu0 0.0
        %3134 = vmatprep.subr.mxu0 0.0
        %3135 = vmatpush2.msra.mxu0 0.0
        %3136 = vmatprep.subr.mxu0 0.0
        %3137 = vmatpush2.msra.mxu0 0.0
        %3138 = vmatprep.subr.mxu0 0.0
        %3139 = vmatpush2.msra.mxu0 0.0
        %3140 = vmatprep.subr.mxu0 0.0
        %3141 = vmatpush2.msra.mxu0 0.0
        %3142 = vmatprep.mubr.f32.mxu0 0.0
        %3143 = vmatmul.mubr.f32.gmra.mxu0 %v2995
        %v3144 = vpop.f32.mrf.mxu0
        %v3145 = vadd.f32 0.0, %v3144
        %v3146 = vpop.f32.mrf.mxu0
        %3147 = vdwg.mxu0
        %3148 = vst.msk [vmem:[#allocation2 + $0x8] sm:$0xf] %vm3067, %v3145
        %s3149 = scalar_lea.vmem [#allocation4], 128
        %v3150 = vld [vmem:[%s3149] sm:$0xff]
        %v3151 = vld [vmem:[%s3149 + $0x8] sm:$0xff]
        %v3152 = vld [vmem:[%s3149 + $0x10] sm:$0xff]
        %v3153 = vld [vmem:[%s3149 + $0x18] sm:$0xff]
        %v3154 = vld [vmem:[%s3149 + $0x20] sm:$0xff]
        %v3155 = vld [vmem:[%s3149 + $0x28] sm:$0xff]
        %v3156 = vld [vmem:[%s3149 + $0x30] sm:$0xff]
        %v3157 = vld [vmem:[%s3149 + $0x38] sm:$0xff]
        %3158 = vmatprep.subr.mxu0 0.0
        %3159 = vmatpush1.msra.mxu0 0.0
        %3160 = vmatprep.subr.mxu0 0.0
        %3161 = vmatpush1.msra.mxu0 0.0
        %3162 = vmatprep.subr.mxu0 0.0
        %3163 = vmatpush1.msra.mxu0 0.0
        %3164 = vmatprep.subr.mxu0 0.0
        %3165 = vmatpush1.msra.mxu0 0.0
        %3166 = vmatprep.subr.mxu0 0.0
        %3167 = vmatpush1.msra.mxu0 0.0
        %3168 = vmatprep.subr.mxu0 0.0
        %3169 = vmatpush1.msra.mxu0 0.0
        %3170 = vmatprep.subr.mxu0 0.0
        %3171 = vmatpush1.msra.mxu0 0.0
        %3172 = vmatprep.subr.mxu0 0.0
        %3173 = vmatpush1.msra.mxu0 0.0
        %3174 = vmatprep.subr.mxu0 0.0
        %3175 = vmatpush1.msra.mxu0 %v3157
        %3176 = vmatprep.subr.mxu0 0.0
        %3177 = vmatpush1.msra.mxu0 %v3156
        %3178 = vmatprep.subr.mxu0 0.0
        %3179 = vmatpush1.msra.mxu0 %v3155
        %3180 = vmatprep.subr.mxu0 0.0
        %3181 = vmatpush1.msra.mxu0 %v3154
        %3182 = vmatprep.subr.mxu0 0.0
        %3183 = vmatpush1.msra.mxu0 %v3153
        %3184 = vmatprep.subr.mxu0 0.0
        %3185 = vmatpush1.msra.mxu0 %v3152
        %3186 = vmatprep.subr.mxu0 0.0
        %3187 = vmatpush1.msra.mxu0 %v3151
        %3188 = vmatprep.subr.mxu0 0.0
        %3189 = vmatpush1.msra.mxu0 %v3150
        %3190 = vmatprep.subr.mxu0 0.0
        %3191 = vmatpush2.msra.mxu0 0.0
        %3192 = vmatprep.subr.mxu0 0.0
        %3193 = vmatpush2.msra.mxu0 0.0
        %3194 = vmatprep.subr.mxu0 0.0
        %3195 = vmatpush2.msra.mxu0 0.0
        %3196 = vmatprep.subr.mxu0 0.0
        %3197 = vmatpush2.msra.mxu0 0.0
        %3198 = vmatprep.subr.mxu0 0.0
        %3199 = vmatpush2.msra.mxu0 0.0
        %3200 = vmatprep.subr.mxu0 0.0
        %3201 = vmatpush2.msra.mxu0 0.0
        %3202 = vmatprep.subr.mxu0 0.0
        %3203 = vmatpush2.msra.mxu0 0.0
        %3204 = vmatprep.subr.mxu0 0.0
        %3205 = vmatpush2.msra.mxu0 0.0
        %3206 = vmatprep.subr.mxu0 0.0
        %3207 = vmatpush2.msra.mxu0 0.0
        %3208 = vmatprep.subr.mxu0 0.0
        %3209 = vmatpush2.msra.mxu0 0.0
        %3210 = vmatprep.subr.mxu0 0.0
        %3211 = vmatpush2.msra.mxu0 0.0
        %3212 = vmatprep.subr.mxu0 0.0
        %3213 = vmatpush2.msra.mxu0 0.0
        %3214 = vmatprep.subr.mxu0 0.0
        %3215 = vmatpush2.msra.mxu0 0.0
        %3216 = vmatprep.subr.mxu0 0.0
        %3217 = vmatpush2.msra.mxu0 0.0
        %3218 = vmatprep.subr.mxu0 0.0
        %3219 = vmatpush2.msra.mxu0 0.0
        %3220 = vmatprep.subr.mxu0 0.0
        %3221 = vmatpush2.msra.mxu0 0.0
        %3222 = vmatprep.mubr.f32.mxu0 0.0
        %3223 = vmatmul.mubr.f32.gmra.mxu0 %v2995
        %v3224 = vpop.f32.mrf.mxu0
        %v3225 = vadd.f32 0.0, %v3224
        %v3226 = vpop.f32.mrf.mxu0
        %3227 = vdwg.mxu0
        %3228 = vst.msk [vmem:[#allocation2 + $0x10] sm:$0xf] %vm3067, %v3225
        %s3229 = scalar_lea.vmem [#allocation4], 192
        %v3230 = vld [vmem:[%s3229] sm:$0xff]
        %v3231 = vld [vmem:[%s3229 + $0x8] sm:$0xff]
        %v3232 = vld [vmem:[%s3229 + $0x10] sm:$0xff]
        %v3233 = vld [vmem:[%s3229 + $0x18] sm:$0xff]
        %v3234 = vld [vmem:[%s3229 + $0x20] sm:$0xff]
        %v3235 = vld [vmem:[%s3229 + $0x28] sm:$0xff]
        %v3236 = vld [vmem:[%s3229 + $0x30] sm:$0xff]
        %v3237 = vld [vmem:[%s3229 + $0x38] sm:$0xff]
        %3238 = vmatprep.subr.mxu0 0.0
        %3239 = vmatpush1.msra.mxu0 0.0
        %3240 = vmatprep.subr.mxu0 0.0
        %3241 = vmatpush1.msra.mxu0 0.0
        %3242 = vmatprep.subr.mxu0 0.0
        %3243 = vmatpush1.msra.mxu0 0.0
        %3244 = vmatprep.subr.mxu0 0.0
        %3245 = vmatpush1.msra.mxu0 0.0
        %3246 = vmatprep.subr.mxu0 0.0
        %3247 = vmatpush1.msra.mxu0 0.0
        %3248 = vmatprep.subr.mxu0 0.0
        %3249 = vmatpush1.msra.mxu0 0.0
        %3250 = vmatprep.subr.mxu0 0.0
        %3251 = vmatpush1.msra.mxu0 0.0
        %3252 = vmatprep.subr.mxu0 0.0
        %3253 = vmatpush1.msra.mxu0 0.0
        %3254 = vmatprep.subr.mxu0 0.0
        %3255 = vmatpush1.msra.mxu0 %v3237
        %3256 = vmatprep.subr.mxu0 0.0
        %3257 = vmatpush1.msra.mxu0 %v3236
        %3258 = vmatprep.subr.mxu0 0.0
        %3259 = vmatpush1.msra.mxu0 %v3235
        %3260 = vmatprep.subr.mxu0 0.0
        %3261 = vmatpush1.msra.mxu0 %v3234
        %3262 = vmatprep.subr.mxu0 0.0
        %3263 = vmatpush1.msra.mxu0 %v3233
        %3264 = vmatprep.subr.mxu0 0.0
        %3265 = vmatpush1.msra.mxu0 %v3232
        %3266 = vmatprep.subr.mxu0 0.0
        %3267 = vmatpush1.msra.mxu0 %v3231
        %3268 = vmatprep.subr.mxu0 0.0
        %3269 = vmatpush1.msra.mxu0 %v3230
        %3270 = vmatprep.subr.mxu0 0.0
        %3271 = vmatpush2.msra.mxu0 0.0
        %3272 = vmatprep.subr.mxu0 0.0
        %3273 = vmatpush2.msra.mxu0 0.0
        %3274 = vmatprep.subr.mxu0 0.0
        %3275 = vmatpush2.msra.mxu0 0.0
        %3276 = vmatprep.subr.mxu0 0.0
        %3277 = vmatpush2.msra.mxu0 0.0
        %3278 = vmatprep.subr.mxu0 0.0
        %3279 = vmatpush2.msra.mxu0 0.0
        %3280 = vmatprep.subr.mxu0 0.0
        %3281 = vmatpush2.msra.mxu0 0.0
        %3282 = vmatprep.subr.mxu0 0.0
        %3283 = vmatpush2.msra.mxu0 0.0
        %3284 = vmatprep.subr.mxu0 0.0
        %3285 = vmatpush2.msra.mxu0 0.0
        %3286 = vmatprep.subr.mxu0 0.0
        %3287 = vmatpush2.msra.mxu0 0.0
        %3288 = vmatprep.subr.mxu0 0.0
        %3289 = vmatpush2.msra.mxu0 0.0
        %3290 = vmatprep.subr.mxu0 0.0
        %3291 = vmatpush2.msra.mxu0 0.0
        %3292 = vmatprep.subr.mxu0 0.0
        %3293 = vmatpush2.msra.mxu0 0.0
        %3294 = vmatprep.subr.mxu0 0.0
        %3295 = vmatpush2.msra.mxu0 0.0
        %3296 = vmatprep.subr.mxu0 0.0
        %3297 = vmatpush2.msra.mxu0 0.0
        %3298 = vmatprep.subr.mxu0 0.0
        %3299 = vmatpush2.msra.mxu0 0.0
        %3300 = vmatprep.subr.mxu0 0.0
        %3301 = vmatpush2.msra.mxu0 0.0
        %3302 = vmatprep.mubr.f32.mxu0 0.0
        %3303 = vmatmul.mubr.f32.gmra.mxu0 %v2995
        %v3304 = vpop.f32.mrf.mxu0
        %v3305 = vadd.f32 0.0, %v3304
        %v3306 = vpop.f32.mrf.mxu0
        %3307 = vdwg.mxu0
        %3308 = vst.msk [vmem:[#allocation2 + $0x18] sm:$0xf] %vm3067, %v3305
        %s3309 = scalar_lea.vmem [#allocation4], 256
        %v3310 = vld [vmem:[%s3309] sm:$0xff]
        %v3311 = vld [vmem:[%s3309 + $0x8] sm:$0xff]
        %v3312 = vld [vmem:[%s3309 + $0x10] sm:$0xff]
        %v3313 = vld [vmem:[%s3309 + $0x18] sm:$0xff]
        %v3314 = vld [vmem:[%s3309 + $0x20] sm:$0xff]
        %v3315 = vld [vmem:[%s3309 + $0x28] sm:$0xff]
        %v3316 = vld [vmem:[%s3309 + $0x30] sm:$0xff]
        %v3317 = vld [vmem:[%s3309 + $0x38] sm:$0xff]
        %3318 = vmatprep.subr.mxu0 0.0
        %3319 = vmatpush1.msra.mxu0 0.0
        %3320 = vmatprep.subr.mxu0 0.0
        %3321 = vmatpush1.msra.mxu0 0.0
        %3322 = vmatprep.subr.mxu0 0.0
        %3323 = vmatpush1.msra.mxu0 0.0
        %3324 = vmatprep.subr.mxu0 0.0
        %3325 = vmatpush1.msra.mxu0 0.0
        %3326 = vmatprep.subr.mxu0 0.0
        %3327 = vmatpush1.msra.mxu0 0.0
        %3328 = vmatprep.subr.mxu0 0.0
        %3329 = vmatpush1.msra.mxu0 0.0
        %3330 = vmatprep.subr.mxu0 0.0
        %3331 = vmatpush1.msra.mxu0 0.0
        %3332 = vmatprep.subr.mxu0 0.0
        %3333 = vmatpush1.msra.mxu0 0.0
        %3334 = vmatprep.subr.mxu0 0.0
        %3335 = vmatpush1.msra.mxu0 %v3317
        %3336 = vmatprep.subr.mxu0 0.0
        %3337 = vmatpush1.msra.mxu0 %v3316
        %3338 = vmatprep.subr.mxu0 0.0
        %3339 = vmatpush1.msra.mxu0 %v3315
        %3340 = vmatprep.subr.mxu0 0.0
        %3341 = vmatpush1.msra.mxu0 %v3314
        %3342 = vmatprep.subr.mxu0 0.0
        %3343 = vmatpush1.msra.mxu0 %v3313
        %3344 = vmatprep.subr.mxu0 0.0
        %3345 = vmatpush1.msra.mxu0 %v3312
        %3346 = vmatprep.subr.mxu0 0.0
        %3347 = vmatpush1.msra.mxu0 %v3311
        %3348 = vmatprep.subr.mxu0 0.0
        %3349 = vmatpush1.msra.mxu0 %v3310
        %3350 = vmatprep.subr.mxu0 0.0
        %3351 = vmatpush2.msra.mxu0 0.0
        %3352 = vmatprep.subr.mxu0 0.0
        %3353 = vmatpush2.msra.mxu0 0.0
        %3354 = vmatprep.subr.mxu0 0.0
        %3355 = vmatpush2.msra.mxu0 0.0
        %3356 = vmatprep.subr.mxu0 0.0
        %3357 = vmatpush2.msra.mxu0 0.0
        %3358 = vmatprep.subr.mxu0 0.0
        %3359 = vmatpush2.msra.mxu0 0.0
        %3360 = vmatprep.subr.mxu0 0.0
        %3361 = vmatpush2.msra.mxu0 0.0
        %3362 = vmatprep.subr.mxu0 0.0
        %3363 = vmatpush2.msra.mxu0 0.0
        %3364 = vmatprep.subr.mxu0 0.0
        %3365 = vmatpush2.msra.mxu0 0.0
        %3366 = vmatprep.subr.mxu0 0.0
        %3367 = vmatpush2.msra.mxu0 0.0
        %3368 = vmatprep.subr.mxu0 0.0
        %3369 = vmatpush2.msra.mxu0 0.0
        %3370 = vmatprep.subr.mxu0 0.0
        %3371 = vmatpush2.msra.mxu0 0.0
        %3372 = vmatprep.subr.mxu0 0.0
        %3373 = vmatpush2.msra.mxu0 0.0
        %3374 = vmatprep.subr.mxu0 0.0
        %3375 = vmatpush2.msra.mxu0 0.0
        %3376 = vmatprep.subr.mxu0 0.0
        %3377 = vmatpush2.msra.mxu0 0.0
        %3378 = vmatprep.subr.mxu0 0.0
        %3379 = vmatpush2.msra.mxu0 0.0
        %3380 = vmatprep.subr.mxu0 0.0
        %3381 = vmatpush2.msra.mxu0 0.0
        %3382 = vmatprep.mubr.f32.mxu0 0.0
        %3383 = vmatmul.mubr.f32.gmra.mxu0 %v2995
        %v3384 = vpop.f32.mrf.mxu0
        %v3385 = vadd.f32 0.0, %v3384
        %v3386 = vpop.f32.mrf.mxu0
        %3387 = vdwg.mxu0
        %3388 = vst.msk [vmem:[#allocation2 + $0x20] sm:$0xf] %vm3067, %v3385
        %s3389 = scalar_lea.vmem [#allocation4], 320
        %v3390 = vld [vmem:[%s3389] sm:$0xff]
        %v3391 = vld [vmem:[%s3389 + $0x8] sm:$0xff]
        %v3392 = vld [vmem:[%s3389 + $0x10] sm:$0xff]
        %v3393 = vld [vmem:[%s3389 + $0x18] sm:$0xff]
        %v3394 = vld [vmem:[%s3389 + $0x20] sm:$0xff]
        %v3395 = vld [vmem:[%s3389 + $0x28] sm:$0xff]
        %v3396 = vld [vmem:[%s3389 + $0x30] sm:$0xff]
        %v3397 = vld [vmem:[%s3389 + $0x38] sm:$0xff]
        %3398 = vmatprep.subr.mxu0 0.0
        %3399 = vmatpush1.msra.mxu0 0.0
        %3400 = vmatprep.subr.mxu0 0.0
        %3401 = vmatpush1.msra.mxu0 0.0
        %3402 = vmatprep.subr.mxu0 0.0
        %3403 = vmatpush1.msra.mxu0 0.0
        %3404 = vmatprep.subr.mxu0 0.0
        %3405 = vmatpush1.msra.mxu0 0.0
        %3406 = vmatprep.subr.mxu0 0.0
        %3407 = vmatpush1.msra.mxu0 0.0
        %3408 = vmatprep.subr.mxu0 0.0
        %3409 = vmatpush1.msra.mxu0 0.0
        %3410 = vmatprep.subr.mxu0 0.0
        %3411 = vmatpush1.msra.mxu0 0.0
        %3412 = vmatprep.subr.mxu0 0.0
        %3413 = vmatpush1.msra.mxu0 0.0
        %3414 = vmatprep.subr.mxu0 0.0
        %3415 = vmatpush1.msra.mxu0 %v3397
        %3416 = vmatprep.subr.mxu0 0.0
        %3417 = vmatpush1.msra.mxu0 %v3396
        %3418 = vmatprep.subr.mxu0 0.0
        %3419 = vmatpush1.msra.mxu0 %v3395
        %3420 = vmatprep.subr.mxu0 0.0
        %3421 = vmatpush1.msra.mxu0 %v3394
        %3422 = vmatprep.subr.mxu0 0.0
        %3423 = vmatpush1.msra.mxu0 %v3393
        %3424 = vmatprep.subr.mxu0 0.0
        %3425 = vmatpush1.msra.mxu0 %v3392
        %3426 = vmatprep.subr.mxu0 0.0
        %3427 = vmatpush1.msra.mxu0 %v3391
        %3428 = vmatprep.subr.mxu0 0.0
        %3429 = vmatpush1.msra.mxu0 %v3390
        %3430 = vmatprep.subr.mxu0 0.0
        %3431 = vmatpush2.msra.mxu0 0.0
        %3432 = vmatprep.subr.mxu0 0.0
        %3433 = vmatpush2.msra.mxu0 0.0
        %3434 = vmatprep.subr.mxu0 0.0
        %3435 = vmatpush2.msra.mxu0 0.0
        %3436 = vmatprep.subr.mxu0 0.0
        %3437 = vmatpush2.msra.mxu0 0.0
        %3438 = vmatprep.subr.mxu0 0.0
        %3439 = vmatpush2.msra.mxu0 0.0
        %3440 = vmatprep.subr.mxu0 0.0
        %3441 = vmatpush2.msra.mxu0 0.0
        %3442 = vmatprep.subr.mxu0 0.0
        %3443 = vmatpush2.msra.mxu0 0.0
        %3444 = vmatprep.subr.mxu0 0.0
        %3445 = vmatpush2.msra.mxu0 0.0
        %3446 = vmatprep.subr.mxu0 0.0
        %3447 = vmatpush2.msra.mxu0 0.0
        %3448 = vmatprep.subr.mxu0 0.0
        %3449 = vmatpush2.msra.mxu0 0.0
        %3450 = vmatprep.subr.mxu0 0.0
        %3451 = vmatpush2.msra.mxu0 0.0
        %3452 = vmatprep.subr.mxu0 0.0
        %3453 = vmatpush2.msra.mxu0 0.0
        %3454 = vmatprep.subr.mxu0 0.0
        %3455 = vmatpush2.msra.mxu0 0.0
        %3456 = vmatprep.subr.mxu0 0.0
        %3457 = vmatpush2.msra.mxu0 0.0
        %3458 = vmatprep.subr.mxu0 0.0
        %3459 = vmatpush2.msra.mxu0 0.0
        %3460 = vmatprep.subr.mxu0 0.0
        %3461 = vmatpush2.msra.mxu0 0.0
        %3462 = vmatprep.mubr.f32.mxu0 0.0
        %3463 = vmatmul.mubr.f32.gmra.mxu0 %v2995
        %v3464 = vpop.f32.mrf.mxu0
        %v3465 = vadd.f32 0.0, %v3464
        %v3466 = vpop.f32.mrf.mxu0
        %3467 = vdwg.mxu0
        %3468 = vst.msk [vmem:[#allocation2 + $0x28] sm:$0xf] %vm3067, %v3465
        %s3469 = scalar_lea.vmem [#allocation4], 384
        %v3470 = vld [vmem:[%s3469] sm:$0xff]
        %v3471 = vld [vmem:[%s3469 + $0x8] sm:$0xff]
        %v3472 = vld [vmem:[%s3469 + $0x10] sm:$0xff]
        %v3473 = vld [vmem:[%s3469 + $0x18] sm:$0xff]
        %v3474 = vld [vmem:[%s3469 + $0x20] sm:$0xff]
        %v3475 = vld [vmem:[%s3469 + $0x28] sm:$0xff]
        %v3476 = vld [vmem:[%s3469 + $0x30] sm:$0xff]
        %v3477 = vld [vmem:[%s3469 + $0x38] sm:$0xff]
        %3478 = vmatprep.subr.mxu0 0.0
        %3479 = vmatpush1.msra.mxu0 0.0
        %3480 = vmatprep.subr.mxu0 0.0
        %3481 = vmatpush1.msra.mxu0 0.0
        %3482 = vmatprep.subr.mxu0 0.0
        %3483 = vmatpush1.msra.mxu0 0.0
        %3484 = vmatprep.subr.mxu0 0.0
        %3485 = vmatpush1.msra.mxu0 0.0
        %3486 = vmatprep.subr.mxu0 0.0
        %3487 = vmatpush1.msra.mxu0 0.0
        %3488 = vmatprep.subr.mxu0 0.0
        %3489 = vmatpush1.msra.mxu0 0.0
        %3490 = vmatprep.subr.mxu0 0.0
        %3491 = vmatpush1.msra.mxu0 0.0
        %3492 = vmatprep.subr.mxu0 0.0
        %3493 = vmatpush1.msra.mxu0 0.0
        %3494 = vmatprep.subr.mxu0 0.0
        %3495 = vmatpush1.msra.mxu0 %v3477
        %3496 = vmatprep.subr.mxu0 0.0
        %3497 = vmatpush1.msra.mxu0 %v3476
        %3498 = vmatprep.subr.mxu0 0.0
        %3499 = vmatpush1.msra.mxu0 %v3475
        %3500 = vmatprep.subr.mxu0 0.0
        %3501 = vmatpush1.msra.mxu0 %v3474
        %3502 = vmatprep.subr.mxu0 0.0
        %3503 = vmatpush1.msra.mxu0 %v3473
        %3504 = vmatprep.subr.mxu0 0.0
        %3505 = vmatpush1.msra.mxu0 %v3472
        %3506 = vmatprep.subr.mxu0 0.0
        %3507 = vmatpush1.msra.mxu0 %v3471
        %3508 = vmatprep.subr.mxu0 0.0
        %3509 = vmatpush1.msra.mxu0 %v3470
        %3510 = vmatprep.subr.mxu0 0.0
        %3511 = vmatpush2.msra.mxu0 0.0
        %3512 = vmatprep.subr.mxu0 0.0
        %3513 = vmatpush2.msra.mxu0 0.0
        %3514 = vmatprep.subr.mxu0 0.0
        %3515 = vmatpush2.msra.mxu0 0.0
        %3516 = vmatprep.subr.mxu0 0.0
        %3517 = vmatpush2.msra.mxu0 0.0
        %3518 = vmatprep.subr.mxu0 0.0
        %3519 = vmatpush2.msra.mxu0 0.0
        %3520 = vmatprep.subr.mxu0 0.0
        %3521 = vmatpush2.msra.mxu0 0.0
        %3522 = vmatprep.subr.mxu0 0.0
        %3523 = vmatpush2.msra.mxu0 0.0
        %3524 = vmatprep.subr.mxu0 0.0
        %3525 = vmatpush2.msra.mxu0 0.0
        %3526 = vmatprep.subr.mxu0 0.0
        %3527 = vmatpush2.msra.mxu0 0.0
        %3528 = vmatprep.subr.mxu0 0.0
        %3529 = vmatpush2.msra.mxu0 0.0
        %3530 = vmatprep.subr.mxu0 0.0
        %3531 = vmatpush2.msra.mxu0 0.0
        %3532 = vmatprep.subr.mxu0 0.0
        %3533 = vmatpush2.msra.mxu0 0.0
        %3534 = vmatprep.subr.mxu0 0.0
        %3535 = vmatpush2.msra.mxu0 0.0
        %3536 = vmatprep.subr.mxu0 0.0
        %3537 = vmatpush2.msra.mxu0 0.0
        %3538 = vmatprep.subr.mxu0 0.0
        %3539 = vmatpush2.msra.mxu0 0.0
        %3540 = vmatprep.subr.mxu0 0.0
        %3541 = vmatpush2.msra.mxu0 0.0
        %3542 = vmatprep.mubr.f32.mxu0 0.0
        %3543 = vmatmul.mubr.f32.gmra.mxu0 %v2995
        %v3544 = vpop.f32.mrf.mxu0
        %v3545 = vadd.f32 0.0, %v3544
        %v3546 = vpop.f32.mrf.mxu0
        %3547 = vdwg.mxu0
        %3548 = vst.msk [vmem:[#allocation2 + $0x30] sm:$0xf] %vm3067, %v3545
        %s3549 = scalar_lea.vmem [#allocation4], 448
        %v3550 = vld [vmem:[%s3549] sm:$0xff]
        %v3551 = vld [vmem:[%s3549 + $0x8] sm:$0xff]
        %v3552 = vld [vmem:[%s3549 + $0x10] sm:$0xff]
        %v3553 = vld [vmem:[%s3549 + $0x18] sm:$0xff]
        %v3554 = vld [vmem:[%s3549 + $0x20] sm:$0xff]
        %v3555 = vld [vmem:[%s3549 + $0x28] sm:$0xff]
        %v3556 = vld [vmem:[%s3549 + $0x30] sm:$0xff]
        %v3557 = vld [vmem:[%s3549 + $0x38] sm:$0xff]
        %3558 = vmatprep.subr.mxu0 0.0
        %3559 = vmatpush1.msra.mxu0 0.0
        %3560 = vmatprep.subr.mxu0 0.0
        %3561 = vmatpush1.msra.mxu0 0.0
        %3562 = vmatprep.subr.mxu0 0.0
        %3563 = vmatpush1.msra.mxu0 0.0
        %3564 = vmatprep.subr.mxu0 0.0
        %3565 = vmatpush1.msra.mxu0 0.0
        %3566 = vmatprep.subr.mxu0 0.0
        %3567 = vmatpush1.msra.mxu0 0.0
        %3568 = vmatprep.subr.mxu0 0.0
        %3569 = vmatpush1.msra.mxu0 0.0
        %3570 = vmatprep.subr.mxu0 0.0
        %3571 = vmatpush1.msra.mxu0 0.0
        %3572 = vmatprep.subr.mxu0 0.0
        %3573 = vmatpush1.msra.mxu0 0.0
        %3574 = vmatprep.subr.mxu0 0.0
        %3575 = vmatpush1.msra.mxu0 %v3557
        %3576 = vmatprep.subr.mxu0 0.0
        %3577 = vmatpush1.msra.mxu0 %v3556
        %3578 = vmatprep.subr.mxu0 0.0
        %3579 = vmatpush1.msra.mxu0 %v3555
        %3580 = vmatprep.subr.mxu0 0.0
        %3581 = vmatpush1.msra.mxu0 %v3554
        %3582 = vmatprep.subr.mxu0 0.0
        %3583 = vmatpush1.msra.mxu0 %v3553
        %3584 = vmatprep.subr.mxu0 0.0
        %3585 = vmatpush1.msra.mxu0 %v3552
        %3586 = vmatprep.subr.mxu0 0.0
        %3587 = vmatpush1.msra.mxu0 %v3551
        %3588 = vmatprep.subr.mxu0 0.0
        %3589 = vmatpush1.msra.mxu0 %v3550
        %3590 = vmatprep.subr.mxu0 0.0
        %3591 = vmatpush2.msra.mxu0 0.0
        %3592 = vmatprep.subr.mxu0 0.0
        %3593 = vmatpush2.msra.mxu0 0.0
        %3594 = vmatprep.subr.mxu0 0.0
        %3595 = vmatpush2.msra.mxu0 0.0
        %3596 = vmatprep.subr.mxu0 0.0
        %3597 = vmatpush2.msra.mxu0 0.0
        %3598 = vmatprep.subr.mxu0 0.0
        %3599 = vmatpush2.msra.mxu0 0.0
        %3600 = vmatprep.subr.mxu0 0.0
        %3601 = vmatpush2.msra.mxu0 0.0
        %3602 = vmatprep.subr.mxu0 0.0
        %3603 = vmatpush2.msra.mxu0 0.0
        %3604 = vmatprep.subr.mxu0 0.0
        %3605 = vmatpush2.msra.mxu0 0.0
        %3606 = vmatprep.subr.mxu0 0.0
        %3607 = vmatpush2.msra.mxu0 0.0
        %3608 = vmatprep.subr.mxu0 0.0
        %3609 = vmatpush2.msra.mxu0 0.0
        %3610 = vmatprep.subr.mxu0 0.0
        %3611 = vmatpush2.msra.mxu0 0.0
        %3612 = vmatprep.subr.mxu0 0.0
        %3613 = vmatpush2.msra.mxu0 0.0
        %3614 = vmatprep.subr.mxu0 0.0
        %3615 = vmatpush2.msra.mxu0 0.0
        %3616 = vmatprep.subr.mxu0 0.0
        %3617 = vmatpush2.msra.mxu0 0.0
        %3618 = vmatprep.subr.mxu0 0.0
        %3619 = vmatpush2.msra.mxu0 0.0
        %3620 = vmatprep.subr.mxu0 0.0
        %3621 = vmatpush2.msra.mxu0 0.0
        %3622 = vmatprep.mubr.f32.mxu0 0.0
        %3623 = vmatmul.mubr.f32.gmra.mxu0 %v2995
        %v3624 = vpop.f32.mrf.mxu0
        %v3625 = vadd.f32 0.0, %v3624
        %v3626 = vpop.f32.mrf.mxu0
        %3627 = vdwg.mxu0
        %3628 = vst.msk [vmem:[#allocation2 + $0x38] sm:$0xf] %vm3067, %v3625
        %s3629 = scalar_lea.vmem [#allocation4], 512
        %v3630 = vld [vmem:[%s3629] sm:$0xff]
        %v3631 = vld [vmem:[%s3629 + $0x8] sm:$0xff]
        %v3632 = vld [vmem:[%s3629 + $0x10] sm:$0xff]
        %v3633 = vld [vmem:[%s3629 + $0x18] sm:$0xff]
        %v3634 = vld [vmem:[%s3629 + $0x20] sm:$0xff]
        %v3635 = vld [vmem:[%s3629 + $0x28] sm:$0xff]
        %v3636 = vld [vmem:[%s3629 + $0x30] sm:$0xff]
        %v3637 = vld [vmem:[%s3629 + $0x38] sm:$0xff]
        %3638 = vmatprep.subr.mxu0 0.0
        %3639 = vmatpush1.msra.mxu0 0.0
        %3640 = vmatprep.subr.mxu0 0.0
        %3641 = vmatpush1.msra.mxu0 0.0
        %3642 = vmatprep.subr.mxu0 0.0
        %3643 = vmatpush1.msra.mxu0 0.0
        %3644 = vmatprep.subr.mxu0 0.0
        %3645 = vmatpush1.msra.mxu0 0.0
        %3646 = vmatprep.subr.mxu0 0.0
        %3647 = vmatpush1.msra.mxu0 0.0
        %3648 = vmatprep.subr.mxu0 0.0
        %3649 = vmatpush1.msra.mxu0 0.0
        %3650 = vmatprep.subr.mxu0 0.0
        %3651 = vmatpush1.msra.mxu0 0.0
        %3652 = vmatprep.subr.mxu0 0.0
        %3653 = vmatpush1.msra.mxu0 0.0
        %3654 = vmatprep.subr.mxu0 0.0
        %3655 = vmatpush1.msra.mxu0 %v3637
        %3656 = vmatprep.subr.mxu0 0.0
        %3657 = vmatpush1.msra.mxu0 %v3636
        %3658 = vmatprep.subr.mxu0 0.0
        %3659 = vmatpush1.msra.mxu0 %v3635
        %3660 = vmatprep.subr.mxu0 0.0
        %3661 = vmatpush1.msra.mxu0 %v3634
        %3662 = vmatprep.subr.mxu0 0.0
        %3663 = vmatpush1.msra.mxu0 %v3633
        %3664 = vmatprep.subr.mxu0 0.0
        %3665 = vmatpush1.msra.mxu0 %v3632
        %3666 = vmatprep.subr.mxu0 0.0
        %3667 = vmatpush1.msra.mxu0 %v3631
        %3668 = vmatprep.subr.mxu0 0.0
        %3669 = vmatpush1.msra.mxu0 %v3630
        %3670 = vmatprep.subr.mxu0 0.0
        %3671 = vmatpush2.msra.mxu0 0.0
        %3672 = vmatprep.subr.mxu0 0.0
        %3673 = vmatpush2.msra.mxu0 0.0
        %3674 = vmatprep.subr.mxu0 0.0
        %3675 = vmatpush2.msra.mxu0 0.0
        %3676 = vmatprep.subr.mxu0 0.0
        %3677 = vmatpush2.msra.mxu0 0.0
        %3678 = vmatprep.subr.mxu0 0.0
        %3679 = vmatpush2.msra.mxu0 0.0
        %3680 = vmatprep.subr.mxu0 0.0
        %3681 = vmatpush2.msra.mxu0 0.0
        %3682 = vmatprep.subr.mxu0 0.0
        %3683 = vmatpush2.msra.mxu0 0.0
        %3684 = vmatprep.subr.mxu0 0.0
        %3685 = vmatpush2.msra.mxu0 0.0
        %3686 = vmatprep.subr.mxu0 0.0
        %3687 = vmatpush2.msra.mxu0 0.0
        %3688 = vmatprep.subr.mxu0 0.0
        %3689 = vmatpush2.msra.mxu0 0.0
        %3690 = vmatprep.subr.mxu0 0.0
        %3691 = vmatpush2.msra.mxu0 0.0
        %3692 = vmatprep.subr.mxu0 0.0
        %3693 = vmatpush2.msra.mxu0 0.0
        %3694 = vmatprep.subr.mxu0 0.0
        %3695 = vmatpush2.msra.mxu0 0.0
        %3696 = vmatprep.subr.mxu0 0.0
        %3697 = vmatpush2.msra.mxu0 0.0
        %3698 = vmatprep.subr.mxu0 0.0
        %3699 = vmatpush2.msra.mxu0 0.0
        %3700 = vmatprep.subr.mxu0 0.0
        %3701 = vmatpush2.msra.mxu0 0.0
        %3702 = vmatprep.mubr.f32.mxu0 0.0
        %3703 = vmatmul.mubr.f32.gmra.mxu0 %v2995
        %v3704 = vpop.f32.mrf.mxu0
        %v3705 = vadd.f32 0.0, %v3704
        %v3706 = vpop.f32.mrf.mxu0
        %3707 = vdwg.mxu0
        %3708 = vst.msk [vmem:[#allocation2 + $0x40] sm:$0xf] %vm3067, %v3705
        %v3709 = vld [vmem:[%s9] sm:$0xff]
        %v3710 = vld [vmem:[%s9 + $0x8] sm:$0xff]
        %v3711 = vld [vmem:[%s9 + $0x10] sm:$0xff]
        %v3712 = vld [vmem:[%s9 + $0x18] sm:$0x1]
        %v3713 = vld [vmem:[#allocation2] sm:$0xff]
        %v3714 = vld [vmem:[#allocation2 + $0x8] sm:$0xff]
        %v3715 = vld [vmem:[#allocation2 + $0x10] sm:$0xff]
        %v3716 = vld [vmem:[#allocation2 + $0x18] sm:$0xff]
        %v3717 = vld [vmem:[#allocation2 + $0x20] sm:$0xff]
        %v3718 = vld [vmem:[#allocation2 + $0x28] sm:$0xff]
        %v3719 = vld [vmem:[#allocation2 + $0x30] sm:$0xff]
        %v3720 = vld [vmem:[#allocation2 + $0x38] sm:$0xff]
        %v3721 = vld [vmem:[#allocation2 + $0x40] sm:$0xff]
        %v3722 = vld [vmem:[%s8] sm:$0x1]
        %v3724 = vlaneseq
        %v3725 = vshrl.u32 %v3724, 7
        %v3726 = vsub.s32 0, %v3725
        %v3727 = vrot.slane %v3722, %v3726
        %vm3729 = vcmask 588800
        %v3731 = vsel %vm3729, %v3709, 0
        %v3734 = vsel %vm3729, %v3710, 0
        %v3737 = vsel %vm3729, %v3711, 0
        %v3740 = vsel %vm3729, %v3712, 0
        %3742 = vmatprep.subr.mxu0 0.0
        %3743 = vmatpush1.msra.mxu0 0.0
        %3744 = vmatprep.subr.mxu0 0.0
        %3745 = vmatpush1.msra.mxu0 0.0
        %3746 = vmatprep.subr.mxu0 0.0
        %3747 = vmatpush1.msra.mxu0 0.0
        %3748 = vmatprep.subr.mxu0 0.0
        %3749 = vmatpush1.msra.mxu0 0.0
        %3750 = vmatprep.subr.mxu0 0.0
        %3751 = vmatpush1.msra.mxu0 0.0
        %3752 = vmatprep.subr.mxu0 0.0
        %3753 = vmatpush1.msra.mxu0 0.0
        %3754 = vmatprep.subr.mxu0 0.0
        %3755 = vmatpush1.msra.mxu0 0.0
        %3756 = vmatprep.subr.mxu0 0.0
        %3757 = vmatpush1.msra.mxu0 %v3721
        %3758 = vmatprep.subr.mxu0 0.0
        %3759 = vmatpush1.msra.mxu0 %v3720
        %3760 = vmatprep.subr.mxu0 0.0
        %3761 = vmatpush1.msra.mxu0 %v3719
        %3762 = vmatprep.subr.mxu0 0.0
        %3763 = vmatpush1.msra.mxu0 %v3718
        %3764 = vmatprep.subr.mxu0 0.0
        %3765 = vmatpush1.msra.mxu0 %v3717
        %3766 = vmatprep.subr.mxu0 0.0
        %3767 = vmatpush1.msra.mxu0 %v3716
        %3768 = vmatprep.subr.mxu0 0.0
        %3769 = vmatpush1.msra.mxu0 %v3715
        %3770 = vmatprep.subr.mxu0 0.0
        %3771 = vmatpush1.msra.mxu0 %v3714
        %3772 = vmatprep.subr.mxu0 0.0
        %3773 = vmatpush1.msra.mxu0 %v3713
        %3774 = vmatprep.subr.mxu0 0.0
        %3775 = vmatpush2.msra.mxu0 0.0
        %3776 = vmatprep.subr.mxu0 0.0
        %3777 = vmatpush2.msra.mxu0 0.0
        %3778 = vmatprep.subr.mxu0 0.0
        %3779 = vmatpush2.msra.mxu0 0.0
        %3780 = vmatprep.subr.mxu0 0.0
        %3781 = vmatpush2.msra.mxu0 0.0
        %3782 = vmatprep.subr.mxu0 0.0
        %3783 = vmatpush2.msra.mxu0 0.0
        %3784 = vmatprep.subr.mxu0 0.0
        %3785 = vmatpush2.msra.mxu0 0.0
        %3786 = vmatprep.subr.mxu0 0.0
        %3787 = vmatpush2.msra.mxu0 0.0
        %3788 = vmatprep.subr.mxu0 0.0
        %3789 = vmatpush2.msra.mxu0 0.0
        %3790 = vmatprep.subr.mxu0 0.0
        %3791 = vmatpush2.msra.mxu0 0.0
        %3792 = vmatprep.subr.mxu0 0.0
        %3793 = vmatpush2.msra.mxu0 0.0
        %3794 = vmatprep.subr.mxu0 0.0
        %3795 = vmatpush2.msra.mxu0 0.0
        %3796 = vmatprep.subr.mxu0 0.0
        %3797 = vmatpush2.msra.mxu0 0.0
        %3798 = vmatprep.subr.mxu0 0.0
        %3799 = vmatpush2.msra.mxu0 0.0
        %3800 = vmatprep.subr.mxu0 0.0
        %3801 = vmatpush2.msra.mxu0 0.0
        %3802 = vmatprep.subr.mxu0 0.0
        %3803 = vmatpush2.msra.mxu0 0.0
        %3804 = vmatprep.subr.mxu0 0.0
        %3805 = vmatpush2.msra.mxu0 0.0
        %3806 = vmatprep.mubr.f32.mxu0 0.0
        %3807 = vmatmul.mubr.f32.gmra.mxu0 %v3731
        %v3808 = vpop.f32.mrf.mxu0
        %v3809 = vadd.f32 %v3727, %v3808
        %v3810 = vpop.f32.mrf.mxu0
        %3811 = vmatprep.mubr.f32.mxu0 0.0
        %3812 = vmatmul.mubr.f32.gmra.mxu0 %v3734
        %v3813 = vpop.f32.mrf.mxu0
        %v3814 = vadd.f32 %v3727, %v3813
        %v3815 = vpop.f32.mrf.mxu0
        %3816 = vmatprep.mubr.f32.mxu0 0.0
        %3817 = vmatmul.mubr.f32.gmra.mxu0 %v3737
        %v3818 = vpop.f32.mrf.mxu0
        %v3819 = vadd.f32 %v3727, %v3818
        %v3820 = vpop.f32.mrf.mxu0
        %3821 = vmatprep.mubr.f32.mxu0 0.0
        %3822 = vmatmul.mubr.f32.gmra.mxu0 %v3740
        %v3823 = vpop.f32.mrf.mxu0
        %v3824 = vadd.f32 %v3727, %v3823
        %v3825 = vpop.f32.mrf.mxu0
        %3826 = vdwg.mxu0
        %v3827 = vmax.f32 %v3809, 0.0
        %v3828 = vmax.f32 %v3814, 0.0
        %v3829 = vmax.f32 %v3819, 0.0
        %v3830 = vmax.f32 %v3824, 0.0
        %v3831 = vld [vmem:[%s10] sm:$0xff]
        %v3832 = vld [vmem:[%s10 + $0x8] sm:$0xff]
        %v3833 = vld [vmem:[%s10 + $0x10] sm:$0xff]
        %v3834 = vld [vmem:[%s10 + $0x18] sm:$0xff]
        %v3835 = vld [vmem:[%s10 + $0x20] sm:$0xff]
        %v3836 = vld [vmem:[%s10 + $0x28] sm:$0xff]
        %v3837 = vld [vmem:[%s10 + $0x30] sm:$0xff]
        %v3838 = vld [vmem:[%s10 + $0x38] sm:$0xff]
        %v3840 = vsel %vm512, %v3827, 0
        %v3843 = vsel %vm512, %v3828, 0
        %v3846 = vsel %vm512, %v3829, 0
        %v3849 = vsel %vm512, %v3830, 0
        %3851 = vmatprep.subr.mxu0 0.0
        %3852 = vmatpush1.msra.mxu0 0.0
        %3853 = vmatprep.subr.mxu0 0.0
        %3854 = vmatpush1.msra.mxu0 0.0
        %3855 = vmatprep.subr.mxu0 0.0
        %3856 = vmatpush1.msra.mxu0 0.0
        %3857 = vmatprep.subr.mxu0 0.0
        %3858 = vmatpush1.msra.mxu0 0.0
        %3859 = vmatprep.subr.mxu0 0.0
        %3860 = vmatpush1.msra.mxu0 0.0
        %3861 = vmatprep.subr.mxu0 0.0
        %3862 = vmatpush1.msra.mxu0 0.0
        %3863 = vmatprep.subr.mxu0 0.0
        %3864 = vmatpush1.msra.mxu0 0.0
        %3865 = vmatprep.subr.mxu0 0.0
        %3866 = vmatpush1.msra.mxu0 0.0
        %3867 = vmatprep.subr.mxu0 0.0
        %3868 = vmatpush1.msra.mxu0 %v3838
        %3869 = vmatprep.subr.mxu0 0.0
        %3870 = vmatpush1.msra.mxu0 %v3837
        %3871 = vmatprep.subr.mxu0 0.0
        %3872 = vmatpush1.msra.mxu0 %v3836
        %3873 = vmatprep.subr.mxu0 0.0
        %3874 = vmatpush1.msra.mxu0 %v3835
        %3875 = vmatprep.subr.mxu0 0.0
        %3876 = vmatpush1.msra.mxu0 %v3834
        %3877 = vmatprep.subr.mxu0 0.0
        %3878 = vmatpush1.msra.mxu0 %v3833
        %3879 = vmatprep.subr.mxu0 0.0
        %3880 = vmatpush1.msra.mxu0 %v3832
        %3881 = vmatprep.subr.mxu0 0.0
        %3882 = vmatpush1.msra.mxu0 %v3831
        %3883 = vmatprep.subr.mxu0 0.0
        %3884 = vmatpush2.msra.mxu0 0.0
        %3885 = vmatprep.subr.mxu0 0.0
        %3886 = vmatpush2.msra.mxu0 0.0
        %3887 = vmatprep.subr.mxu0 0.0
        %3888 = vmatpush2.msra.mxu0 0.0
        %3889 = vmatprep.subr.mxu0 0.0
        %3890 = vmatpush2.msra.mxu0 0.0
        %3891 = vmatprep.subr.mxu0 0.0
        %3892 = vmatpush2.msra.mxu0 0.0
        %3893 = vmatprep.subr.mxu0 0.0
        %3894 = vmatpush2.msra.mxu0 0.0
        %3895 = vmatprep.subr.mxu0 0.0
        %3896 = vmatpush2.msra.mxu0 0.0
        %3897 = vmatprep.subr.mxu0 0.0
        %3898 = vmatpush2.msra.mxu0 0.0
        %3899 = vmatprep.subr.mxu0 0.0
        %3900 = vmatpush2.msra.mxu0 0.0
        %3901 = vmatprep.subr.mxu0 0.0
        %3902 = vmatpush2.msra.mxu0 0.0
        %3903 = vmatprep.subr.mxu0 0.0
        %3904 = vmatpush2.msra.mxu0 0.0
        %3905 = vmatprep.subr.mxu0 0.0
        %3906 = vmatpush2.msra.mxu0 0.0
        %3907 = vmatprep.subr.mxu0 0.0
        %3908 = vmatpush2.msra.mxu0 0.0
        %3909 = vmatprep.subr.mxu0 0.0
        %3910 = vmatpush2.msra.mxu0 0.0
        %3911 = vmatprep.subr.mxu0 0.0
        %3912 = vmatpush2.msra.mxu0 0.0
        %3913 = vmatprep.subr.mxu0 0.0
        %3914 = vmatpush2.msra.mxu0 0.0
        %3915 = vmatprep.mubr.f32.mxu0 0.0
        %3916 = vmatmul.mubr.f32.gmra.mxu0 %v3840
        %v3917 = vpop.f32.mrf.mxu0
        %v3918 = vadd.f32 0.0, %v3917
        %v3919 = vpop.f32.mrf.mxu0
        %3920 = vmatprep.mubr.f32.mxu0 0.0
        %3921 = vmatmul.mubr.f32.gmra.mxu0 %v3843
        %v3922 = vpop.f32.mrf.mxu0
        %v3923 = vadd.f32 0.0, %v3922
        %v3924 = vpop.f32.mrf.mxu0
        %3925 = vmatprep.mubr.f32.mxu0 0.0
        %3926 = vmatmul.mubr.f32.gmra.mxu0 %v3846
        %v3927 = vpop.f32.mrf.mxu0
        %v3928 = vadd.f32 0.0, %v3927
        %v3929 = vpop.f32.mrf.mxu0
        %3930 = vmatprep.mubr.f32.mxu0 0.0
        %3931 = vmatmul.mubr.f32.gmra.mxu0 %v3849
        %v3932 = vpop.f32.mrf.mxu0
        %v3933 = vadd.f32 0.0, %v3932
        %v3934 = vpop.f32.mrf.mxu0
        %3935 = vdwg.mxu0
        %3936 = vst.msk [vmem:[#allocation2] sm:$0xff] %vm512, %v3918
        %3937 = vst.msk [vmem:[#allocation2 + $0x8] sm:$0xff] %vm512, %v3923
        %3938 = vst.msk [vmem:[#allocation2 + $0x10] sm:$0xff] %vm512, %v3928
        %3939 = vst.msk [vmem:[#allocation2 + $0x18] sm:$0x1] %vm1685, %v3933
        %s3940 = scalar_lea.vmem %s10, 64
        %v3941 = vld [vmem:[%s3940] sm:$0xff]
        %v3942 = vld [vmem:[%s3940 + $0x8] sm:$0xff]
        %v3943 = vld [vmem:[%s3940 + $0x10] sm:$0xff]
        %v3944 = vld [vmem:[%s3940 + $0x18] sm:$0xff]
        %v3945 = vld [vmem:[%s3940 + $0x20] sm:$0xff]
        %v3946 = vld [vmem:[%s3940 + $0x28] sm:$0xff]
        %v3947 = vld [vmem:[%s3940 + $0x30] sm:$0xff]
        %v3948 = vld [vmem:[%s3940 + $0x38] sm:$0xff]
        %3949 = vmatprep.subr.mxu0 0.0
        %3950 = vmatpush1.msra.mxu0 0.0
        %3951 = vmatprep.subr.mxu0 0.0
        %3952 = vmatpush1.msra.mxu0 0.0
        %3953 = vmatprep.subr.mxu0 0.0
        %3954 = vmatpush1.msra.mxu0 0.0
        %3955 = vmatprep.subr.mxu0 0.0
        %3956 = vmatpush1.msra.mxu0 0.0
        %3957 = vmatprep.subr.mxu0 0.0
        %3958 = vmatpush1.msra.mxu0 0.0
        %3959 = vmatprep.subr.mxu0 0.0
        %3960 = vmatpush1.msra.mxu0 0.0
        %3961 = vmatprep.subr.mxu0 0.0
        %3962 = vmatpush1.msra.mxu0 0.0
        %3963 = vmatprep.subr.mxu0 0.0
        %3964 = vmatpush1.msra.mxu0 0.0
        %3965 = vmatprep.subr.mxu0 0.0
        %3966 = vmatpush1.msra.mxu0 %v3948
        %3967 = vmatprep.subr.mxu0 0.0
        %3968 = vmatpush1.msra.mxu0 %v3947
        %3969 = vmatprep.subr.mxu0 0.0
        %3970 = vmatpush1.msra.mxu0 %v3946
        %3971 = vmatprep.subr.mxu0 0.0
        %3972 = vmatpush1.msra.mxu0 %v3945
        %3973 = vmatprep.subr.mxu0 0.0
        %3974 = vmatpush1.msra.mxu0 %v3944
        %3975 = vmatprep.subr.mxu0 0.0
        %3976 = vmatpush1.msra.mxu0 %v3943
        %3977 = vmatprep.subr.mxu0 0.0
        %3978 = vmatpush1.msra.mxu0 %v3942
        %3979 = vmatprep.subr.mxu0 0.0
        %3980 = vmatpush1.msra.mxu0 %v3941
        %3981 = vmatprep.subr.mxu0 0.0
        %3982 = vmatpush2.msra.mxu0 0.0
        %3983 = vmatprep.subr.mxu0 0.0
        %3984 = vmatpush2.msra.mxu0 0.0
        %3985 = vmatprep.subr.mxu0 0.0
        %3986 = vmatpush2.msra.mxu0 0.0
        %3987 = vmatprep.subr.mxu0 0.0
        %3988 = vmatpush2.msra.mxu0 0.0
        %3989 = vmatprep.subr.mxu0 0.0
        %3990 = vmatpush2.msra.mxu0 0.0
        %3991 = vmatprep.subr.mxu0 0.0
        %3992 = vmatpush2.msra.mxu0 0.0
        %3993 = vmatprep.subr.mxu0 0.0
        %3994 = vmatpush2.msra.mxu0 0.0
        %3995 = vmatprep.subr.mxu0 0.0
        %3996 = vmatpush2.msra.mxu0 0.0
        %3997 = vmatprep.subr.mxu0 0.0
        %3998 = vmatpush2.msra.mxu0 0.0
        %3999 = vmatprep.subr.mxu0 0.0
        %4000 = vmatpush2.msra.mxu0 0.0
        %4001 = vmatprep.subr.mxu0 0.0
        %4002 = vmatpush2.msra.mxu0 0.0
        %4003 = vmatprep.subr.mxu0 0.0
        %4004 = vmatpush2.msra.mxu0 0.0
        %4005 = vmatprep.subr.mxu0 0.0
        %4006 = vmatpush2.msra.mxu0 0.0
        %4007 = vmatprep.subr.mxu0 0.0
        %4008 = vmatpush2.msra.mxu0 0.0
        %4009 = vmatprep.subr.mxu0 0.0
        %4010 = vmatpush2.msra.mxu0 0.0
        %4011 = vmatprep.subr.mxu0 0.0
        %4012 = vmatpush2.msra.mxu0 0.0
        %4013 = vmatprep.mubr.f32.mxu0 0.0
        %4014 = vmatmul.mubr.f32.gmra.mxu0 %v3840
        %v4015 = vpop.f32.mrf.mxu0
        %v4016 = vadd.f32 0.0, %v4015
        %v4017 = vpop.f32.mrf.mxu0
        %4018 = vmatprep.mubr.f32.mxu0 0.0
        %4019 = vmatmul.mubr.f32.gmra.mxu0 %v3843
        %v4020 = vpop.f32.mrf.mxu0
        %v4021 = vadd.f32 0.0, %v4020
        %v4022 = vpop.f32.mrf.mxu0
        %4023 = vmatprep.mubr.f32.mxu0 0.0
        %4024 = vmatmul.mubr.f32.gmra.mxu0 %v3846
        %v4025 = vpop.f32.mrf.mxu0
        %v4026 = vadd.f32 0.0, %v4025
        %v4027 = vpop.f32.mrf.mxu0
        %4028 = vmatprep.mubr.f32.mxu0 0.0
        %4029 = vmatmul.mubr.f32.gmra.mxu0 %v3849
        %v4030 = vpop.f32.mrf.mxu0
        %v4031 = vadd.f32 0.0, %v4030
        %v4032 = vpop.f32.mrf.mxu0
        %4033 = vdwg.mxu0
        %4034 = vst.msk [vmem:[#allocation2 + $0x20] sm:$0xff] %vm512, %v4016
        %4035 = vst.msk [vmem:[#allocation2 + $0x28] sm:$0xff] %vm512, %v4021
        %4036 = vst.msk [vmem:[#allocation2 + $0x30] sm:$0xff] %vm512, %v4026
        %4037 = vst.msk [vmem:[#allocation2 + $0x38] sm:$0x1] %vm1685, %v4031
        %s4038 = scalar_lea.vmem %s10, 128
        %v4039 = vld [vmem:[%s4038] sm:$0xff]
        %v4040 = vld [vmem:[%s4038 + $0x8] sm:$0xff]
        %v4041 = vld [vmem:[%s4038 + $0x10] sm:$0xff]
        %v4042 = vld [vmem:[%s4038 + $0x18] sm:$0xff]
        %v4043 = vld [vmem:[%s4038 + $0x20] sm:$0xff]
        %v4044 = vld [vmem:[%s4038 + $0x28] sm:$0xff]
        %v4045 = vld [vmem:[%s4038 + $0x30] sm:$0xff]
        %v4046 = vld [vmem:[%s4038 + $0x38] sm:$0xff]
        %4047 = vmatprep.subr.mxu0 0.0
        %4048 = vmatpush1.msra.mxu0 0.0
        %4049 = vmatprep.subr.mxu0 0.0
        %4050 = vmatpush1.msra.mxu0 0.0
        %4051 = vmatprep.subr.mxu0 0.0
        %4052 = vmatpush1.msra.mxu0 0.0
        %4053 = vmatprep.subr.mxu0 0.0
        %4054 = vmatpush1.msra.mxu0 0.0
        %4055 = vmatprep.subr.mxu0 0.0
        %4056 = vmatpush1.msra.mxu0 0.0
        %4057 = vmatprep.subr.mxu0 0.0
        %4058 = vmatpush1.msra.mxu0 0.0
        %4059 = vmatprep.subr.mxu0 0.0
        %4060 = vmatpush1.msra.mxu0 0.0
        %4061 = vmatprep.subr.mxu0 0.0
        %4062 = vmatpush1.msra.mxu0 0.0
        %4063 = vmatprep.subr.mxu0 0.0
        %4064 = vmatpush1.msra.mxu0 %v4046
        %4065 = vmatprep.subr.mxu0 0.0
        %4066 = vmatpush1.msra.mxu0 %v4045
        %4067 = vmatprep.subr.mxu0 0.0
        %4068 = vmatpush1.msra.mxu0 %v4044
        %4069 = vmatprep.subr.mxu0 0.0
        %4070 = vmatpush1.msra.mxu0 %v4043
        %4071 = vmatprep.subr.mxu0 0.0
        %4072 = vmatpush1.msra.mxu0 %v4042
        %4073 = vmatprep.subr.mxu0 0.0
        %4074 = vmatpush1.msra.mxu0 %v4041
        %4075 = vmatprep.subr.mxu0 0.0
        %4076 = vmatpush1.msra.mxu0 %v4040
        %4077 = vmatprep.subr.mxu0 0.0
        %4078 = vmatpush1.msra.mxu0 %v4039
        %4079 = vmatprep.subr.mxu0 0.0
        %4080 = vmatpush2.msra.mxu0 0.0
        %4081 = vmatprep.subr.mxu0 0.0
        %4082 = vmatpush2.msra.mxu0 0.0
        %4083 = vmatprep.subr.mxu0 0.0
        %4084 = vmatpush2.msra.mxu0 0.0
        %4085 = vmatprep.subr.mxu0 0.0
        %4086 = vmatpush2.msra.mxu0 0.0
        %4087 = vmatprep.subr.mxu0 0.0
        %4088 = vmatpush2.msra.mxu0 0.0
        %4089 = vmatprep.subr.mxu0 0.0
        %4090 = vmatpush2.msra.mxu0 0.0
        %4091 = vmatprep.subr.mxu0 0.0
        %4092 = vmatpush2.msra.mxu0 0.0
        %4093 = vmatprep.subr.mxu0 0.0
        %4094 = vmatpush2.msra.mxu0 0.0
        %4095 = vmatprep.subr.mxu0 0.0
        %4096 = vmatpush2.msra.mxu0 0.0
        %4097 = vmatprep.subr.mxu0 0.0
        %4098 = vmatpush2.msra.mxu0 0.0
        %4099 = vmatprep.subr.mxu0 0.0
        %4100 = vmatpush2.msra.mxu0 0.0
        %4101 = vmatprep.subr.mxu0 0.0
        %4102 = vmatpush2.msra.mxu0 0.0
        %4103 = vmatprep.subr.mxu0 0.0
        %4104 = vmatpush2.msra.mxu0 0.0
        %4105 = vmatprep.subr.mxu0 0.0
        %4106 = vmatpush2.msra.mxu0 0.0
        %4107 = vmatprep.subr.mxu0 0.0
        %4108 = vmatpush2.msra.mxu0 0.0
        %4109 = vmatprep.subr.mxu0 0.0
        %4110 = vmatpush2.msra.mxu0 0.0
        %4111 = vmatprep.mubr.f32.mxu0 0.0
        %4112 = vmatmul.mubr.f32.gmra.mxu0 %v3840
        %v4113 = vpop.f32.mrf.mxu0
        %v4114 = vadd.f32 0.0, %v4113
        %v4115 = vpop.f32.mrf.mxu0
        %4116 = vmatprep.mubr.f32.mxu0 0.0
        %4117 = vmatmul.mubr.f32.gmra.mxu0 %v3843
        %v4118 = vpop.f32.mrf.mxu0
        %v4119 = vadd.f32 0.0, %v4118
        %v4120 = vpop.f32.mrf.mxu0
        %4121 = vmatprep.mubr.f32.mxu0 0.0
        %4122 = vmatmul.mubr.f32.gmra.mxu0 %v3846
        %v4123 = vpop.f32.mrf.mxu0
        %v4124 = vadd.f32 0.0, %v4123
        %v4125 = vpop.f32.mrf.mxu0
        %4126 = vmatprep.mubr.f32.mxu0 0.0
        %4127 = vmatmul.mubr.f32.gmra.mxu0 %v3849
        %v4128 = vpop.f32.mrf.mxu0
        %v4129 = vadd.f32 0.0, %v4128
        %v4130 = vpop.f32.mrf.mxu0
        %4131 = vdwg.mxu0
        %4132 = vst.msk [vmem:[#allocation2 + $0x40] sm:$0xff] %vm512, %v4114
        %4133 = vst.msk [vmem:[#allocation2 + $0x48] sm:$0xff] %vm512, %v4119
        %4134 = vst.msk [vmem:[#allocation2 + $0x50] sm:$0xff] %vm512, %v4124
        %4135 = vst.msk [vmem:[#allocation2 + $0x58] sm:$0x1] %vm1685, %v4129
        %s4136 = scalar_lea.vmem %s10, 192
        %v4137 = vld [vmem:[%s4136] sm:$0xff]
        %v4138 = vld [vmem:[%s4136 + $0x8] sm:$0xff]
        %v4139 = vld [vmem:[%s4136 + $0x10] sm:$0xff]
        %v4140 = vld [vmem:[%s4136 + $0x18] sm:$0xff]
        %v4141 = vld [vmem:[%s4136 + $0x20] sm:$0xff]
        %v4142 = vld [vmem:[%s4136 + $0x28] sm:$0xff]
        %v4143 = vld [vmem:[%s4136 + $0x30] sm:$0xff]
        %v4144 = vld [vmem:[%s4136 + $0x38] sm:$0xff]
        %4145 = vmatprep.subr.mxu0 0.0
        %4146 = vmatpush1.msra.mxu0 0.0
        %4147 = vmatprep.subr.mxu0 0.0
        %4148 = vmatpush1.msra.mxu0 0.0
        %4149 = vmatprep.subr.mxu0 0.0
        %4150 = vmatpush1.msra.mxu0 0.0
        %4151 = vmatprep.subr.mxu0 0.0
        %4152 = vmatpush1.msra.mxu0 0.0
        %4153 = vmatprep.subr.mxu0 0.0
        %4154 = vmatpush1.msra.mxu0 0.0
        %4155 = vmatprep.subr.mxu0 0.0
        %4156 = vmatpush1.msra.mxu0 0.0
        %4157 = vmatprep.subr.mxu0 0.0
        %4158 = vmatpush1.msra.mxu0 0.0
        %4159 = vmatprep.subr.mxu0 0.0
        %4160 = vmatpush1.msra.mxu0 0.0
        %4161 = vmatprep.subr.mxu0 0.0
        %4162 = vmatpush1.msra.mxu0 %v4144
        %4163 = vmatprep.subr.mxu0 0.0
        %4164 = vmatpush1.msra.mxu0 %v4143
        %4165 = vmatprep.subr.mxu0 0.0
        %4166 = vmatpush1.msra.mxu0 %v4142
        %4167 = vmatprep.subr.mxu0 0.0
        %4168 = vmatpush1.msra.mxu0 %v4141
        %4169 = vmatprep.subr.mxu0 0.0
        %4170 = vmatpush1.msra.mxu0 %v4140
        %4171 = vmatprep.subr.mxu0 0.0
        %4172 = vmatpush1.msra.mxu0 %v4139
        %4173 = vmatprep.subr.mxu0 0.0
        %4174 = vmatpush1.msra.mxu0 %v4138
        %4175 = vmatprep.subr.mxu0 0.0
        %4176 = vmatpush1.msra.mxu0 %v4137
        %4177 = vmatprep.subr.mxu0 0.0
        %4178 = vmatpush2.msra.mxu0 0.0
        %4179 = vmatprep.subr.mxu0 0.0
        %4180 = vmatpush2.msra.mxu0 0.0
        %4181 = vmatprep.subr.mxu0 0.0
        %4182 = vmatpush2.msra.mxu0 0.0
        %4183 = vmatprep.subr.mxu0 0.0
        %4184 = vmatpush2.msra.mxu0 0.0
        %4185 = vmatprep.subr.mxu0 0.0
        %4186 = vmatpush2.msra.mxu0 0.0
        %4187 = vmatprep.subr.mxu0 0.0
        %4188 = vmatpush2.msra.mxu0 0.0
        %4189 = vmatprep.subr.mxu0 0.0
        %4190 = vmatpush2.msra.mxu0 0.0
        %4191 = vmatprep.subr.mxu0 0.0
        %4192 = vmatpush2.msra.mxu0 0.0
        %4193 = vmatprep.subr.mxu0 0.0
        %4194 = vmatpush2.msra.mxu0 0.0
        %4195 = vmatprep.subr.mxu0 0.0
        %4196 = vmatpush2.msra.mxu0 0.0
        %4197 = vmatprep.subr.mxu0 0.0
        %4198 = vmatpush2.msra.mxu0 0.0
        %4199 = vmatprep.subr.mxu0 0.0
        %4200 = vmatpush2.msra.mxu0 0.0
        %4201 = vmatprep.subr.mxu0 0.0
        %4202 = vmatpush2.msra.mxu0 0.0
        %4203 = vmatprep.subr.mxu0 0.0
        %4204 = vmatpush2.msra.mxu0 0.0
        %4205 = vmatprep.subr.mxu0 0.0
        %4206 = vmatpush2.msra.mxu0 0.0
        %4207 = vmatprep.subr.mxu0 0.0
        %4208 = vmatpush2.msra.mxu0 0.0
        %4209 = vmatprep.mubr.f32.mxu0 0.0
        %4210 = vmatmul.mubr.f32.gmra.mxu0 %v3840
        %v4211 = vpop.f32.mrf.mxu0
        %v4212 = vadd.f32 0.0, %v4211
        %v4213 = vpop.f32.mrf.mxu0
        %4214 = vmatprep.mubr.f32.mxu0 0.0
        %4215 = vmatmul.mubr.f32.gmra.mxu0 %v3843
        %v4216 = vpop.f32.mrf.mxu0
        %v4217 = vadd.f32 0.0, %v4216
        %v4218 = vpop.f32.mrf.mxu0
        %4219 = vmatprep.mubr.f32.mxu0 0.0
        %4220 = vmatmul.mubr.f32.gmra.mxu0 %v3846
        %v4221 = vpop.f32.mrf.mxu0
        %v4222 = vadd.f32 0.0, %v4221
        %v4223 = vpop.f32.mrf.mxu0
        %4224 = vmatprep.mubr.f32.mxu0 0.0
        %4225 = vmatmul.mubr.f32.gmra.mxu0 %v3849
        %v4226 = vpop.f32.mrf.mxu0
        %v4227 = vadd.f32 0.0, %v4226
        %v4228 = vpop.f32.mrf.mxu0
        %4229 = vdwg.mxu0
        %4230 = vst.msk [vmem:[#allocation2 + $0x60] sm:$0xff] %vm512, %v4212
        %4231 = vst.msk [vmem:[#allocation2 + $0x68] sm:$0xff] %vm512, %v4217
        %4232 = vst.msk [vmem:[#allocation2 + $0x70] sm:$0xff] %vm512, %v4222
        %4233 = vst.msk [vmem:[#allocation2 + $0x78] sm:$0x1] %vm1685, %v4227
        %s4234 = scalar_lea.vmem %s10, 256
        %v4235 = vld [vmem:[%s4234] sm:$0xff]
        %v4236 = vld [vmem:[%s4234 + $0x8] sm:$0xff]
        %v4237 = vld [vmem:[%s4234 + $0x10] sm:$0xff]
        %v4238 = vld [vmem:[%s4234 + $0x18] sm:$0xff]
        %v4239 = vld [vmem:[%s4234 + $0x20] sm:$0xff]
        %v4240 = vld [vmem:[%s4234 + $0x28] sm:$0xff]
        %v4241 = vld [vmem:[%s4234 + $0x30] sm:$0xff]
        %v4242 = vld [vmem:[%s4234 + $0x38] sm:$0xff]
        %4243 = vmatprep.subr.mxu0 0.0
        %4244 = vmatpush1.msra.mxu0 0.0
        %4245 = vmatprep.subr.mxu0 0.0
        %4246 = vmatpush1.msra.mxu0 0.0
        %4247 = vmatprep.subr.mxu0 0.0
        %4248 = vmatpush1.msra.mxu0 0.0
        %4249 = vmatprep.subr.mxu0 0.0
        %4250 = vmatpush1.msra.mxu0 0.0
        %4251 = vmatprep.subr.mxu0 0.0
        %4252 = vmatpush1.msra.mxu0 0.0
        %4253 = vmatprep.subr.mxu0 0.0
        %4254 = vmatpush1.msra.mxu0 0.0
        %4255 = vmatprep.subr.mxu0 0.0
        %4256 = vmatpush1.msra.mxu0 0.0
        %4257 = vmatprep.subr.mxu0 0.0
        %4258 = vmatpush1.msra.mxu0 0.0
        %4259 = vmatprep.subr.mxu0 0.0
        %4260 = vmatpush1.msra.mxu0 %v4242
        %4261 = vmatprep.subr.mxu0 0.0
        %4262 = vmatpush1.msra.mxu0 %v4241
        %4263 = vmatprep.subr.mxu0 0.0
        %4264 = vmatpush1.msra.mxu0 %v4240
        %4265 = vmatprep.subr.mxu0 0.0
        %4266 = vmatpush1.msra.mxu0 %v4239
        %4267 = vmatprep.subr.mxu0 0.0
        %4268 = vmatpush1.msra.mxu0 %v4238
        %4269 = vmatprep.subr.mxu0 0.0
        %4270 = vmatpush1.msra.mxu0 %v4237
        %4271 = vmatprep.subr.mxu0 0.0
        %4272 = vmatpush1.msra.mxu0 %v4236
        %4273 = vmatprep.subr.mxu0 0.0
        %4274 = vmatpush1.msra.mxu0 %v4235
        %4275 = vmatprep.subr.mxu0 0.0
        %4276 = vmatpush2.msra.mxu0 0.0
        %4277 = vmatprep.subr.mxu0 0.0
        %4278 = vmatpush2.msra.mxu0 0.0
        %4279 = vmatprep.subr.mxu0 0.0
        %4280 = vmatpush2.msra.mxu0 0.0
        %4281 = vmatprep.subr.mxu0 0.0
        %4282 = vmatpush2.msra.mxu0 0.0
        %4283 = vmatprep.subr.mxu0 0.0
        %4284 = vmatpush2.msra.mxu0 0.0
        %4285 = vmatprep.subr.mxu0 0.0
        %4286 = vmatpush2.msra.mxu0 0.0
        %4287 = vmatprep.subr.mxu0 0.0
        %4288 = vmatpush2.msra.mxu0 0.0
        %4289 = vmatprep.subr.mxu0 0.0
        %4290 = vmatpush2.msra.mxu0 0.0
        %4291 = vmatprep.subr.mxu0 0.0
        %4292 = vmatpush2.msra.mxu0 0.0
        %4293 = vmatprep.subr.mxu0 0.0
        %4294 = vmatpush2.msra.mxu0 0.0
        %4295 = vmatprep.subr.mxu0 0.0
        %4296 = vmatpush2.msra.mxu0 0.0
        %4297 = vmatprep.subr.mxu0 0.0
        %4298 = vmatpush2.msra.mxu0 0.0
        %4299 = vmatprep.subr.mxu0 0.0
        %4300 = vmatpush2.msra.mxu0 0.0
        %4301 = vmatprep.subr.mxu0 0.0
        %4302 = vmatpush2.msra.mxu0 0.0
        %4303 = vmatprep.subr.mxu0 0.0
        %4304 = vmatpush2.msra.mxu0 0.0
        %4305 = vmatprep.subr.mxu0 0.0
        %4306 = vmatpush2.msra.mxu0 0.0
        %4307 = vmatprep.mubr.f32.mxu0 0.0
        %4308 = vmatmul.mubr.f32.gmra.mxu0 %v3840
        %v4309 = vpop.f32.mrf.mxu0
        %v4310 = vadd.f32 0.0, %v4309
        %v4311 = vpop.f32.mrf.mxu0
        %4312 = vmatprep.mubr.f32.mxu0 0.0
        %4313 = vmatmul.mubr.f32.gmra.mxu0 %v3843
        %v4314 = vpop.f32.mrf.mxu0
        %v4315 = vadd.f32 0.0, %v4314
        %v4316 = vpop.f32.mrf.mxu0
        %4317 = vmatprep.mubr.f32.mxu0 0.0
        %4318 = vmatmul.mubr.f32.gmra.mxu0 %v3846
        %v4319 = vpop.f32.mrf.mxu0
        %v4320 = vadd.f32 0.0, %v4319
        %v4321 = vpop.f32.mrf.mxu0
        %4322 = vmatprep.mubr.f32.mxu0 0.0
        %4323 = vmatmul.mubr.f32.gmra.mxu0 %v3849
        %v4324 = vpop.f32.mrf.mxu0
        %v4325 = vadd.f32 0.0, %v4324
        %v4326 = vpop.f32.mrf.mxu0
        %4327 = vdwg.mxu0
        %4328 = vst.msk [vmem:[#allocation2 + $0x80] sm:$0xff] %vm512, %v4310
        %4329 = vst.msk [vmem:[#allocation2 + $0x88] sm:$0xff] %vm512, %v4315
        %4330 = vst.msk [vmem:[#allocation2 + $0x90] sm:$0xff] %vm512, %v4320
        %4331 = vst.msk [vmem:[#allocation2 + $0x98] sm:$0x1] %vm1685, %v4325
        %s4332 = scalar_lea.vmem %s10, 320
        %v4333 = vld [vmem:[%s4332] sm:$0xff]
        %v4334 = vld [vmem:[%s4332 + $0x8] sm:$0xff]
        %v4335 = vld [vmem:[%s4332 + $0x10] sm:$0xff]
        %v4336 = vld [vmem:[%s4332 + $0x18] sm:$0xff]
        %v4337 = vld [vmem:[%s4332 + $0x20] sm:$0xff]
        %v4338 = vld [vmem:[%s4332 + $0x28] sm:$0xff]
        %v4339 = vld [vmem:[%s4332 + $0x30] sm:$0xff]
        %v4340 = vld [vmem:[%s4332 + $0x38] sm:$0xff]
        %4341 = vmatprep.subr.mxu0 0.0
        %4342 = vmatpush1.msra.mxu0 0.0
        %4343 = vmatprep.subr.mxu0 0.0
        %4344 = vmatpush1.msra.mxu0 0.0
        %4345 = vmatprep.subr.mxu0 0.0
        %4346 = vmatpush1.msra.mxu0 0.0
        %4347 = vmatprep.subr.mxu0 0.0
        %4348 = vmatpush1.msra.mxu0 0.0
        %4349 = vmatprep.subr.mxu0 0.0
        %4350 = vmatpush1.msra.mxu0 0.0
        %4351 = vmatprep.subr.mxu0 0.0
        %4352 = vmatpush1.msra.mxu0 0.0
        %4353 = vmatprep.subr.mxu0 0.0
        %4354 = vmatpush1.msra.mxu0 0.0
        %4355 = vmatprep.subr.mxu0 0.0
        %4356 = vmatpush1.msra.mxu0 0.0
        %4357 = vmatprep.subr.mxu0 0.0
        %4358 = vmatpush1.msra.mxu0 %v4340
        %4359 = vmatprep.subr.mxu0 0.0
        %4360 = vmatpush1.msra.mxu0 %v4339
        %4361 = vmatprep.subr.mxu0 0.0
        %4362 = vmatpush1.msra.mxu0 %v4338
        %4363 = vmatprep.subr.mxu0 0.0
        %4364 = vmatpush1.msra.mxu0 %v4337
        %4365 = vmatprep.subr.mxu0 0.0
        %4366 = vmatpush1.msra.mxu0 %v4336
        %4367 = vmatprep.subr.mxu0 0.0
        %4368 = vmatpush1.msra.mxu0 %v4335
        %4369 = vmatprep.subr.mxu0 0.0
        %4370 = vmatpush1.msra.mxu0 %v4334
        %4371 = vmatprep.subr.mxu0 0.0
        %4372 = vmatpush1.msra.mxu0 %v4333
        %4373 = vmatprep.subr.mxu0 0.0
        %4374 = vmatpush2.msra.mxu0 0.0
        %4375 = vmatprep.subr.mxu0 0.0
        %4376 = vmatpush2.msra.mxu0 0.0
        %4377 = vmatprep.subr.mxu0 0.0
        %4378 = vmatpush2.msra.mxu0 0.0
        %4379 = vmatprep.subr.mxu0 0.0
        %4380 = vmatpush2.msra.mxu0 0.0
        %4381 = vmatprep.subr.mxu0 0.0
        %4382 = vmatpush2.msra.mxu0 0.0
        %4383 = vmatprep.subr.mxu0 0.0
        %4384 = vmatpush2.msra.mxu0 0.0
        %4385 = vmatprep.subr.mxu0 0.0
        %4386 = vmatpush2.msra.mxu0 0.0
        %4387 = vmatprep.subr.mxu0 0.0
        %4388 = vmatpush2.msra.mxu0 0.0
        %4389 = vmatprep.subr.mxu0 0.0
        %4390 = vmatpush2.msra.mxu0 0.0
        %4391 = vmatprep.subr.mxu0 0.0
        %4392 = vmatpush2.msra.mxu0 0.0
        %4393 = vmatprep.subr.mxu0 0.0
        %4394 = vmatpush2.msra.mxu0 0.0
        %4395 = vmatprep.subr.mxu0 0.0
        %4396 = vmatpush2.msra.mxu0 0.0
        %4397 = vmatprep.subr.mxu0 0.0
        %4398 = vmatpush2.msra.mxu0 0.0
        %4399 = vmatprep.subr.mxu0 0.0
        %4400 = vmatpush2.msra.mxu0 0.0
        %4401 = vmatprep.subr.mxu0 0.0
        %4402 = vmatpush2.msra.mxu0 0.0
        %4403 = vmatprep.subr.mxu0 0.0
        %4404 = vmatpush2.msra.mxu0 0.0
        %4405 = vmatprep.mubr.f32.mxu0 0.0
        %4406 = vmatmul.mubr.f32.gmra.mxu0 %v3840
        %v4407 = vpop.f32.mrf.mxu0
        %v4408 = vadd.f32 0.0, %v4407
        %v4409 = vpop.f32.mrf.mxu0
        %4410 = vmatprep.mubr.f32.mxu0 0.0
        %4411 = vmatmul.mubr.f32.gmra.mxu0 %v3843
        %v4412 = vpop.f32.mrf.mxu0
        %v4413 = vadd.f32 0.0, %v4412
        %v4414 = vpop.f32.mrf.mxu0
        %4415 = vmatprep.mubr.f32.mxu0 0.0
        %4416 = vmatmul.mubr.f32.gmra.mxu0 %v3846
        %v4417 = vpop.f32.mrf.mxu0
        %v4418 = vadd.f32 0.0, %v4417
        %v4419 = vpop.f32.mrf.mxu0
        %4420 = vmatprep.mubr.f32.mxu0 0.0
        %4421 = vmatmul.mubr.f32.gmra.mxu0 %v3849
        %v4422 = vpop.f32.mrf.mxu0
        %v4423 = vadd.f32 0.0, %v4422
        %v4424 = vpop.f32.mrf.mxu0
        %4425 = vdwg.mxu0
        %4426 = vst.msk [vmem:[#allocation2 + $0xa0] sm:$0xff] %vm512, %v4408
        %4427 = vst.msk [vmem:[#allocation2 + $0xa8] sm:$0xff] %vm512, %v4413
        %4428 = vst.msk [vmem:[#allocation2 + $0xb0] sm:$0xff] %vm512, %v4418
        %4429 = vst.msk [vmem:[#allocation2 + $0xb8] sm:$0x1] %vm1685, %v4423
        %s4430 = scalar_lea.vmem %s10, 384
        %v4431 = vld [vmem:[%s4430] sm:$0xff]
        %v4432 = vld [vmem:[%s4430 + $0x8] sm:$0xff]
        %v4433 = vld [vmem:[%s4430 + $0x10] sm:$0xff]
        %v4434 = vld [vmem:[%s4430 + $0x18] sm:$0xff]
        %v4435 = vld [vmem:[%s4430 + $0x20] sm:$0xff]
        %v4436 = vld [vmem:[%s4430 + $0x28] sm:$0xff]
        %v4437 = vld [vmem:[%s4430 + $0x30] sm:$0xff]
        %v4438 = vld [vmem:[%s4430 + $0x38] sm:$0xff]
        %4439 = vmatprep.subr.mxu0 0.0
        %4440 = vmatpush1.msra.mxu0 0.0
        %4441 = vmatprep.subr.mxu0 0.0
        %4442 = vmatpush1.msra.mxu0 0.0
        %4443 = vmatprep.subr.mxu0 0.0
        %4444 = vmatpush1.msra.mxu0 0.0
        %4445 = vmatprep.subr.mxu0 0.0
        %4446 = vmatpush1.msra.mxu0 0.0
        %4447 = vmatprep.subr.mxu0 0.0
        %4448 = vmatpush1.msra.mxu0 0.0
        %4449 = vmatprep.subr.mxu0 0.0
        %4450 = vmatpush1.msra.mxu0 0.0
        %4451 = vmatprep.subr.mxu0 0.0
        %4452 = vmatpush1.msra.mxu0 0.0
        %4453 = vmatprep.subr.mxu0 0.0
        %4454 = vmatpush1.msra.mxu0 0.0
        %4455 = vmatprep.subr.mxu0 0.0
        %4456 = vmatpush1.msra.mxu0 %v4438
        %4457 = vmatprep.subr.mxu0 0.0
        %4458 = vmatpush1.msra.mxu0 %v4437
        %4459 = vmatprep.subr.mxu0 0.0
        %4460 = vmatpush1.msra.mxu0 %v4436
        %4461 = vmatprep.subr.mxu0 0.0
        %4462 = vmatpush1.msra.mxu0 %v4435
        %4463 = vmatprep.subr.mxu0 0.0
        %4464 = vmatpush1.msra.mxu0 %v4434
        %4465 = vmatprep.subr.mxu0 0.0
        %4466 = vmatpush1.msra.mxu0 %v4433
        %4467 = vmatprep.subr.mxu0 0.0
        %4468 = vmatpush1.msra.mxu0 %v4432
        %4469 = vmatprep.subr.mxu0 0.0
        %4470 = vmatpush1.msra.mxu0 %v4431
        %4471 = vmatprep.subr.mxu0 0.0
        %4472 = vmatpush2.msra.mxu0 0.0
        %4473 = vmatprep.subr.mxu0 0.0
        %4474 = vmatpush2.msra.mxu0 0.0
        %4475 = vmatprep.subr.mxu0 0.0
        %4476 = vmatpush2.msra.mxu0 0.0
        %4477 = vmatprep.subr.mxu0 0.0
        %4478 = vmatpush2.msra.mxu0 0.0
        %4479 = vmatprep.subr.mxu0 0.0
        %4480 = vmatpush2.msra.mxu0 0.0
        %4481 = vmatprep.subr.mxu0 0.0
        %4482 = vmatpush2.msra.mxu0 0.0
        %4483 = vmatprep.subr.mxu0 0.0
        %4484 = vmatpush2.msra.mxu0 0.0
        %4485 = vmatprep.subr.mxu0 0.0
        %4486 = vmatpush2.msra.mxu0 0.0
        %4487 = vmatprep.subr.mxu0 0.0
        %4488 = vmatpush2.msra.mxu0 0.0
        %4489 = vmatprep.subr.mxu0 0.0
        %4490 = vmatpush2.msra.mxu0 0.0
        %4491 = vmatprep.subr.mxu0 0.0
        %4492 = vmatpush2.msra.mxu0 0.0
        %4493 = vmatprep.subr.mxu0 0.0
        %4494 = vmatpush2.msra.mxu0 0.0
        %4495 = vmatprep.subr.mxu0 0.0
        %4496 = vmatpush2.msra.mxu0 0.0
        %4497 = vmatprep.subr.mxu0 0.0
        %4498 = vmatpush2.msra.mxu0 0.0
        %4499 = vmatprep.subr.mxu0 0.0
        %4500 = vmatpush2.msra.mxu0 0.0
        %4501 = vmatprep.subr.mxu0 0.0
        %4502 = vmatpush2.msra.mxu0 0.0
        %4503 = vmatprep.mubr.f32.mxu0 0.0
        %4504 = vmatmul.mubr.f32.gmra.mxu0 %v3840
        %v4505 = vpop.f32.mrf.mxu0
        %v4506 = vadd.f32 0.0, %v4505
        %v4507 = vpop.f32.mrf.mxu0
        %4508 = vmatprep.mubr.f32.mxu0 0.0
        %4509 = vmatmul.mubr.f32.gmra.mxu0 %v3843
        %v4510 = vpop.f32.mrf.mxu0
        %v4511 = vadd.f32 0.0, %v4510
        %v4512 = vpop.f32.mrf.mxu0
        %4513 = vmatprep.mubr.f32.mxu0 0.0
        %4514 = vmatmul.mubr.f32.gmra.mxu0 %v3846
        %v4515 = vpop.f32.mrf.mxu0
        %v4516 = vadd.f32 0.0, %v4515
        %v4517 = vpop.f32.mrf.mxu0
        %4518 = vmatprep.mubr.f32.mxu0 0.0
        %4519 = vmatmul.mubr.f32.gmra.mxu0 %v3849
        %v4520 = vpop.f32.mrf.mxu0
        %v4521 = vadd.f32 0.0, %v4520
        %v4522 = vpop.f32.mrf.mxu0
        %4523 = vdwg.mxu0
        %4524 = vst.msk [vmem:[#allocation2 + $0xc0] sm:$0xff] %vm512, %v4506
        %4525 = vst.msk [vmem:[#allocation2 + $0xc8] sm:$0xff] %vm512, %v4511
        %4526 = vst.msk [vmem:[#allocation2 + $0xd0] sm:$0xff] %vm512, %v4516
        %4527 = vst.msk [vmem:[#allocation2 + $0xd8] sm:$0x1] %vm1685, %v4521
        %s4528 = scalar_lea.vmem %s10, 448
        %v4529 = vld [vmem:[%s4528] sm:$0xff]
        %v4530 = vld [vmem:[%s4528 + $0x8] sm:$0xff]
        %v4531 = vld [vmem:[%s4528 + $0x10] sm:$0xff]
        %v4532 = vld [vmem:[%s4528 + $0x18] sm:$0xff]
        %v4533 = vld [vmem:[%s4528 + $0x20] sm:$0xff]
        %v4534 = vld [vmem:[%s4528 + $0x28] sm:$0xff]
        %v4535 = vld [vmem:[%s4528 + $0x30] sm:$0xff]
        %v4536 = vld [vmem:[%s4528 + $0x38] sm:$0xff]
        %4537 = vmatprep.subr.mxu0 0.0
        %4538 = vmatpush1.msra.mxu0 0.0
        %4539 = vmatprep.subr.mxu0 0.0
        %4540 = vmatpush1.msra.mxu0 0.0
        %4541 = vmatprep.subr.mxu0 0.0
        %4542 = vmatpush1.msra.mxu0 0.0
        %4543 = vmatprep.subr.mxu0 0.0
        %4544 = vmatpush1.msra.mxu0 0.0
        %4545 = vmatprep.subr.mxu0 0.0
        %4546 = vmatpush1.msra.mxu0 0.0
        %4547 = vmatprep.subr.mxu0 0.0
        %4548 = vmatpush1.msra.mxu0 0.0
        %4549 = vmatprep.subr.mxu0 0.0
        %4550 = vmatpush1.msra.mxu0 0.0
        %4551 = vmatprep.subr.mxu0 0.0
        %4552 = vmatpush1.msra.mxu0 0.0
        %4553 = vmatprep.subr.mxu0 0.0
        %4554 = vmatpush1.msra.mxu0 %v4536
        %4555 = vmatprep.subr.mxu0 0.0
        %4556 = vmatpush1.msra.mxu0 %v4535
        %4557 = vmatprep.subr.mxu0 0.0
        %4558 = vmatpush1.msra.mxu0 %v4534
        %4559 = vmatprep.subr.mxu0 0.0
        %4560 = vmatpush1.msra.mxu0 %v4533
        %4561 = vmatprep.subr.mxu0 0.0
        %4562 = vmatpush1.msra.mxu0 %v4532
        %4563 = vmatprep.subr.mxu0 0.0
        %4564 = vmatpush1.msra.mxu0 %v4531
        %4565 = vmatprep.subr.mxu0 0.0
        %4566 = vmatpush1.msra.mxu0 %v4530
        %4567 = vmatprep.subr.mxu0 0.0
        %4568 = vmatpush1.msra.mxu0 %v4529
        %4569 = vmatprep.subr.mxu0 0.0
        %4570 = vmatpush2.msra.mxu0 0.0
        %4571 = vmatprep.subr.mxu0 0.0
        %4572 = vmatpush2.msra.mxu0 0.0
        %4573 = vmatprep.subr.mxu0 0.0
        %4574 = vmatpush2.msra.mxu0 0.0
        %4575 = vmatprep.subr.mxu0 0.0
        %4576 = vmatpush2.msra.mxu0 0.0
        %4577 = vmatprep.subr.mxu0 0.0
        %4578 = vmatpush2.msra.mxu0 0.0
        %4579 = vmatprep.subr.mxu0 0.0
        %4580 = vmatpush2.msra.mxu0 0.0
        %4581 = vmatprep.subr.mxu0 0.0
        %4582 = vmatpush2.msra.mxu0 0.0
        %4583 = vmatprep.subr.mxu0 0.0
        %4584 = vmatpush2.msra.mxu0 0.0
        %4585 = vmatprep.subr.mxu0 0.0
        %4586 = vmatpush2.msra.mxu0 0.0
        %4587 = vmatprep.subr.mxu0 0.0
        %4588 = vmatpush2.msra.mxu0 0.0
        %4589 = vmatprep.subr.mxu0 0.0
        %4590 = vmatpush2.msra.mxu0 0.0
        %4591 = vmatprep.subr.mxu0 0.0
        %4592 = vmatpush2.msra.mxu0 0.0
        %4593 = vmatprep.subr.mxu0 0.0
        %4594 = vmatpush2.msra.mxu0 0.0
        %4595 = vmatprep.subr.mxu0 0.0
        %4596 = vmatpush2.msra.mxu0 0.0
        %4597 = vmatprep.subr.mxu0 0.0
        %4598 = vmatpush2.msra.mxu0 0.0
        %4599 = vmatprep.subr.mxu0 0.0
        %4600 = vmatpush2.msra.mxu0 0.0
        %4601 = vmatprep.mubr.f32.mxu0 0.0
        %4602 = vmatmul.mubr.f32.gmra.mxu0 %v3840
        %v4603 = vpop.f32.mrf.mxu0
        %v4604 = vadd.f32 0.0, %v4603
        %v4605 = vpop.f32.mrf.mxu0
        %4606 = vmatprep.mubr.f32.mxu0 0.0
        %4607 = vmatmul.mubr.f32.gmra.mxu0 %v3843
        %v4608 = vpop.f32.mrf.mxu0
        %v4609 = vadd.f32 0.0, %v4608
        %v4610 = vpop.f32.mrf.mxu0
        %4611 = vmatprep.mubr.f32.mxu0 0.0
        %4612 = vmatmul.mubr.f32.gmra.mxu0 %v3846
        %v4613 = vpop.f32.mrf.mxu0
        %v4614 = vadd.f32 0.0, %v4613
        %v4615 = vpop.f32.mrf.mxu0
        %4616 = vmatprep.mubr.f32.mxu0 0.0
        %4617 = vmatmul.mubr.f32.gmra.mxu0 %v3849
        %v4618 = vpop.f32.mrf.mxu0
        %v4619 = vadd.f32 0.0, %v4618
        %v4620 = vpop.f32.mrf.mxu0
        %4621 = vdwg.mxu0
        %4622 = vst.msk [vmem:[#allocation2 + $0xe0] sm:$0xff] %vm512, %v4604
        %4623 = vst.msk [vmem:[#allocation2 + $0xe8] sm:$0xff] %vm512, %v4609
        %4624 = vst.msk [vmem:[#allocation2 + $0xf0] sm:$0xff] %vm512, %v4614
        %4625 = vst.msk [vmem:[#allocation2 + $0xf8] sm:$0x1] %vm1685, %v4619
        %s4626 = scalar_lea.vmem %s10, 512
        %v4627 = vld [vmem:[%s4626] sm:$0xff]
        %v4628 = vld [vmem:[%s4626 + $0x8] sm:$0xff]
        %v4629 = vld [vmem:[%s4626 + $0x10] sm:$0xff]
        %v4630 = vld [vmem:[%s4626 + $0x18] sm:$0xff]
        %v4631 = vld [vmem:[%s4626 + $0x20] sm:$0xff]
        %v4632 = vld [vmem:[%s4626 + $0x28] sm:$0xff]
        %v4633 = vld [vmem:[%s4626 + $0x30] sm:$0xff]
        %v4634 = vld [vmem:[%s4626 + $0x38] sm:$0xff]
        %4635 = vmatprep.subr.mxu0 0.0
        %4636 = vmatpush1.msra.mxu0 0.0
        %4637 = vmatprep.subr.mxu0 0.0
        %4638 = vmatpush1.msra.mxu0 0.0
        %4639 = vmatprep.subr.mxu0 0.0
        %4640 = vmatpush1.msra.mxu0 0.0
        %4641 = vmatprep.subr.mxu0 0.0
        %4642 = vmatpush1.msra.mxu0 0.0
        %4643 = vmatprep.subr.mxu0 0.0
        %4644 = vmatpush1.msra.mxu0 0.0
        %4645 = vmatprep.subr.mxu0 0.0
        %4646 = vmatpush1.msra.mxu0 0.0
        %4647 = vmatprep.subr.mxu0 0.0
        %4648 = vmatpush1.msra.mxu0 0.0
        %4649 = vmatprep.subr.mxu0 0.0
        %4650 = vmatpush1.msra.mxu0 0.0
        %4651 = vmatprep.subr.mxu0 0.0
        %4652 = vmatpush1.msra.mxu0 %v4634
        %4653 = vmatprep.subr.mxu0 0.0
        %4654 = vmatpush1.msra.mxu0 %v4633
        %4655 = vmatprep.subr.mxu0 0.0
        %4656 = vmatpush1.msra.mxu0 %v4632
        %4657 = vmatprep.subr.mxu0 0.0
        %4658 = vmatpush1.msra.mxu0 %v4631
        %4659 = vmatprep.subr.mxu0 0.0
        %4660 = vmatpush1.msra.mxu0 %v4630
        %4661 = vmatprep.subr.mxu0 0.0
        %4662 = vmatpush1.msra.mxu0 %v4629
        %4663 = vmatprep.subr.mxu0 0.0
        %4664 = vmatpush1.msra.mxu0 %v4628
        %4665 = vmatprep.subr.mxu0 0.0
        %4666 = vmatpush1.msra.mxu0 %v4627
        %4667 = vmatprep.subr.mxu0 0.0
        %4668 = vmatpush2.msra.mxu0 0.0
        %4669 = vmatprep.subr.mxu0 0.0
        %4670 = vmatpush2.msra.mxu0 0.0
        %4671 = vmatprep.subr.mxu0 0.0
        %4672 = vmatpush2.msra.mxu0 0.0
        %4673 = vmatprep.subr.mxu0 0.0
        %4674 = vmatpush2.msra.mxu0 0.0
        %4675 = vmatprep.subr.mxu0 0.0
        %4676 = vmatpush2.msra.mxu0 0.0
        %4677 = vmatprep.subr.mxu0 0.0
        %4678 = vmatpush2.msra.mxu0 0.0
        %4679 = vmatprep.subr.mxu0 0.0
        %4680 = vmatpush2.msra.mxu0 0.0
        %4681 = vmatprep.subr.mxu0 0.0
        %4682 = vmatpush2.msra.mxu0 0.0
        %4683 = vmatprep.subr.mxu0 0.0
        %4684 = vmatpush2.msra.mxu0 0.0
        %4685 = vmatprep.subr.mxu0 0.0
        %4686 = vmatpush2.msra.mxu0 0.0
        %4687 = vmatprep.subr.mxu0 0.0
        %4688 = vmatpush2.msra.mxu0 0.0
        %4689 = vmatprep.subr.mxu0 0.0
        %4690 = vmatpush2.msra.mxu0 0.0
        %4691 = vmatprep.subr.mxu0 0.0
        %4692 = vmatpush2.msra.mxu0 0.0
        %4693 = vmatprep.subr.mxu0 0.0
        %4694 = vmatpush2.msra.mxu0 0.0
        %4695 = vmatprep.subr.mxu0 0.0
        %4696 = vmatpush2.msra.mxu0 0.0
        %4697 = vmatprep.subr.mxu0 0.0
        %4698 = vmatpush2.msra.mxu0 0.0
        %4699 = vmatprep.mubr.f32.mxu0 0.0
        %4700 = vmatmul.mubr.f32.gmra.mxu0 %v3840
        %v4701 = vpop.f32.mrf.mxu0
        %v4702 = vadd.f32 0.0, %v4701
        %v4703 = vpop.f32.mrf.mxu0
        %4704 = vmatprep.mubr.f32.mxu0 0.0
        %4705 = vmatmul.mubr.f32.gmra.mxu0 %v3843
        %v4706 = vpop.f32.mrf.mxu0
        %v4707 = vadd.f32 0.0, %v4706
        %v4708 = vpop.f32.mrf.mxu0
        %4709 = vmatprep.mubr.f32.mxu0 0.0
        %4710 = vmatmul.mubr.f32.gmra.mxu0 %v3846
        %v4711 = vpop.f32.mrf.mxu0
        %v4712 = vadd.f32 0.0, %v4711
        %v4713 = vpop.f32.mrf.mxu0
        %4714 = vmatprep.mubr.f32.mxu0 0.0
        %4715 = vmatmul.mubr.f32.gmra.mxu0 %v3849
        %v4716 = vpop.f32.mrf.mxu0
        %v4717 = vadd.f32 0.0, %v4716
        %v4718 = vpop.f32.mrf.mxu0
        %4719 = vdwg.mxu0
        %4720 = vst.msk [vmem:[#allocation2 + $0x100] sm:$0xff] %vm512, %v4702
        %4721 = vst.msk [vmem:[#allocation2 + $0x108] sm:$0xff] %vm512, %v4707
        %4722 = vst.msk [vmem:[#allocation2 + $0x110] sm:$0xff] %vm512, %v4712
        %4723 = vst.msk [vmem:[#allocation2 + $0x118] sm:$0x1] %vm1685, %v4717
        %s4724 = scalar_lea.vmem %s10, 576
        %v4725 = vld [vmem:[%s4724] sm:$0xff]
        %v4726 = vld [vmem:[%s4724 + $0x8] sm:$0xff]
        %v4727 = vld [vmem:[%s4724 + $0x10] sm:$0xff]
        %v4728 = vld [vmem:[%s4724 + $0x18] sm:$0xff]
        %v4729 = vld [vmem:[%s4724 + $0x20] sm:$0xff]
        %v4730 = vld [vmem:[%s4724 + $0x28] sm:$0xff]
        %v4731 = vld [vmem:[%s4724 + $0x30] sm:$0xff]
        %v4732 = vld [vmem:[%s4724 + $0x38] sm:$0xff]
        %4733 = vmatprep.subr.mxu0 0.0
        %4734 = vmatpush1.msra.mxu0 0.0
        %4735 = vmatprep.subr.mxu0 0.0
        %4736 = vmatpush1.msra.mxu0 0.0
        %4737 = vmatprep.subr.mxu0 0.0
        %4738 = vmatpush1.msra.mxu0 0.0
        %4739 = vmatprep.subr.mxu0 0.0
        %4740 = vmatpush1.msra.mxu0 0.0
        %4741 = vmatprep.subr.mxu0 0.0
        %4742 = vmatpush1.msra.mxu0 0.0
        %4743 = vmatprep.subr.mxu0 0.0
        %4744 = vmatpush1.msra.mxu0 0.0
        %4745 = vmatprep.subr.mxu0 0.0
        %4746 = vmatpush1.msra.mxu0 0.0
        %4747 = vmatprep.subr.mxu0 0.0
        %4748 = vmatpush1.msra.mxu0 0.0
        %4749 = vmatprep.subr.mxu0 0.0
        %4750 = vmatpush1.msra.mxu0 %v4732
        %4751 = vmatprep.subr.mxu0 0.0
        %4752 = vmatpush1.msra.mxu0 %v4731
        %4753 = vmatprep.subr.mxu0 0.0
        %4754 = vmatpush1.msra.mxu0 %v4730
        %4755 = vmatprep.subr.mxu0 0.0
        %4756 = vmatpush1.msra.mxu0 %v4729
        %4757 = vmatprep.subr.mxu0 0.0
        %4758 = vmatpush1.msra.mxu0 %v4728
        %4759 = vmatprep.subr.mxu0 0.0
        %4760 = vmatpush1.msra.mxu0 %v4727
        %4761 = vmatprep.subr.mxu0 0.0
        %4762 = vmatpush1.msra.mxu0 %v4726
        %4763 = vmatprep.subr.mxu0 0.0
        %4764 = vmatpush1.msra.mxu0 %v4725
        %4765 = vmatprep.subr.mxu0 0.0
        %4766 = vmatpush2.msra.mxu0 0.0
        %4767 = vmatprep.subr.mxu0 0.0
        %4768 = vmatpush2.msra.mxu0 0.0
        %4769 = vmatprep.subr.mxu0 0.0
        %4770 = vmatpush2.msra.mxu0 0.0
        %4771 = vmatprep.subr.mxu0 0.0
        %4772 = vmatpush2.msra.mxu0 0.0
        %4773 = vmatprep.subr.mxu0 0.0
        %4774 = vmatpush2.msra.mxu0 0.0
        %4775 = vmatprep.subr.mxu0 0.0
        %4776 = vmatpush2.msra.mxu0 0.0
        %4777 = vmatprep.subr.mxu0 0.0
        %4778 = vmatpush2.msra.mxu0 0.0
        %4779 = vmatprep.subr.mxu0 0.0
        %4780 = vmatpush2.msra.mxu0 0.0
        %4781 = vmatprep.subr.mxu0 0.0
        %4782 = vmatpush2.msra.mxu0 0.0
        %4783 = vmatprep.subr.mxu0 0.0
        %4784 = vmatpush2.msra.mxu0 0.0
        %4785 = vmatprep.subr.mxu0 0.0
        %4786 = vmatpush2.msra.mxu0 0.0
        %4787 = vmatprep.subr.mxu0 0.0
        %4788 = vmatpush2.msra.mxu0 0.0
        %4789 = vmatprep.subr.mxu0 0.0
        %4790 = vmatpush2.msra.mxu0 0.0
        %4791 = vmatprep.subr.mxu0 0.0
        %4792 = vmatpush2.msra.mxu0 0.0
        %4793 = vmatprep.subr.mxu0 0.0
        %4794 = vmatpush2.msra.mxu0 0.0
        %4795 = vmatprep.subr.mxu0 0.0
        %4796 = vmatpush2.msra.mxu0 0.0
        %4797 = vmatprep.mubr.f32.mxu0 0.0
        %4798 = vmatmul.mubr.f32.gmra.mxu0 %v3840
        %v4799 = vpop.f32.mrf.mxu0
        %v4800 = vadd.f32 0.0, %v4799
        %v4801 = vpop.f32.mrf.mxu0
        %4802 = vmatprep.mubr.f32.mxu0 0.0
        %4803 = vmatmul.mubr.f32.gmra.mxu0 %v3843
        %v4804 = vpop.f32.mrf.mxu0
        %v4805 = vadd.f32 0.0, %v4804
        %v4806 = vpop.f32.mrf.mxu0
        %4807 = vmatprep.mubr.f32.mxu0 0.0
        %4808 = vmatmul.mubr.f32.gmra.mxu0 %v3846
        %v4809 = vpop.f32.mrf.mxu0
        %v4810 = vadd.f32 0.0, %v4809
        %v4811 = vpop.f32.mrf.mxu0
        %4812 = vmatprep.mubr.f32.mxu0 0.0
        %4813 = vmatmul.mubr.f32.gmra.mxu0 %v3849
        %v4814 = vpop.f32.mrf.mxu0
        %v4815 = vadd.f32 0.0, %v4814
        %v4816 = vpop.f32.mrf.mxu0
        %4817 = vdwg.mxu0
        %4818 = vst.msk [vmem:[#allocation2 + $0x120] sm:$0xff] %vm512, %v4800
        %4819 = vst.msk [vmem:[#allocation2 + $0x128] sm:$0xff] %vm512, %v4805
        %4820 = vst.msk [vmem:[#allocation2 + $0x130] sm:$0xff] %vm512, %v4810
        %4821 = vst.msk [vmem:[#allocation2 + $0x138] sm:$0x1] %vm1685, %v4815
        %s4822 = scalar_lea.vmem %s10, 640
        %v4823 = vld [vmem:[%s4822] sm:$0xff]
        %v4824 = vld [vmem:[%s4822 + $0x8] sm:$0xff]
        %v4825 = vld [vmem:[%s4822 + $0x10] sm:$0xff]
        %v4826 = vld [vmem:[%s4822 + $0x18] sm:$0xff]
        %v4827 = vld [vmem:[%s4822 + $0x20] sm:$0xff]
        %v4828 = vld [vmem:[%s4822 + $0x28] sm:$0xff]
        %v4829 = vld [vmem:[%s4822 + $0x30] sm:$0xff]
        %v4830 = vld [vmem:[%s4822 + $0x38] sm:$0xff]
        %4831 = vmatprep.subr.mxu0 0.0
        %4832 = vmatpush1.msra.mxu0 0.0
        %4833 = vmatprep.subr.mxu0 0.0
        %4834 = vmatpush1.msra.mxu0 0.0
        %4835 = vmatprep.subr.mxu0 0.0
        %4836 = vmatpush1.msra.mxu0 0.0
        %4837 = vmatprep.subr.mxu0 0.0
        %4838 = vmatpush1.msra.mxu0 0.0
        %4839 = vmatprep.subr.mxu0 0.0
        %4840 = vmatpush1.msra.mxu0 0.0
        %4841 = vmatprep.subr.mxu0 0.0
        %4842 = vmatpush1.msra.mxu0 0.0
        %4843 = vmatprep.subr.mxu0 0.0
        %4844 = vmatpush1.msra.mxu0 0.0
        %4845 = vmatprep.subr.mxu0 0.0
        %4846 = vmatpush1.msra.mxu0 0.0
        %4847 = vmatprep.subr.mxu0 0.0
        %4848 = vmatpush1.msra.mxu0 %v4830
        %4849 = vmatprep.subr.mxu0 0.0
        %4850 = vmatpush1.msra.mxu0 %v4829
        %4851 = vmatprep.subr.mxu0 0.0
        %4852 = vmatpush1.msra.mxu0 %v4828
        %4853 = vmatprep.subr.mxu0 0.0
        %4854 = vmatpush1.msra.mxu0 %v4827
        %4855 = vmatprep.subr.mxu0 0.0
        %4856 = vmatpush1.msra.mxu0 %v4826
        %4857 = vmatprep.subr.mxu0 0.0
        %4858 = vmatpush1.msra.mxu0 %v4825
        %4859 = vmatprep.subr.mxu0 0.0
        %4860 = vmatpush1.msra.mxu0 %v4824
        %4861 = vmatprep.subr.mxu0 0.0
        %4862 = vmatpush1.msra.mxu0 %v4823
        %4863 = vmatprep.subr.mxu0 0.0
        %4864 = vmatpush2.msra.mxu0 0.0
        %4865 = vmatprep.subr.mxu0 0.0
        %4866 = vmatpush2.msra.mxu0 0.0
        %4867 = vmatprep.subr.mxu0 0.0
        %4868 = vmatpush2.msra.mxu0 0.0
        %4869 = vmatprep.subr.mxu0 0.0
        %4870 = vmatpush2.msra.mxu0 0.0
        %4871 = vmatprep.subr.mxu0 0.0
        %4872 = vmatpush2.msra.mxu0 0.0
        %4873 = vmatprep.subr.mxu0 0.0
        %4874 = vmatpush2.msra.mxu0 0.0
        %4875 = vmatprep.subr.mxu0 0.0
        %4876 = vmatpush2.msra.mxu0 0.0
        %4877 = vmatprep.subr.mxu0 0.0
        %4878 = vmatpush2.msra.mxu0 0.0
        %4879 = vmatprep.subr.mxu0 0.0
        %4880 = vmatpush2.msra.mxu0 0.0
        %4881 = vmatprep.subr.mxu0 0.0
        %4882 = vmatpush2.msra.mxu0 0.0
        %4883 = vmatprep.subr.mxu0 0.0
        %4884 = vmatpush2.msra.mxu0 0.0
        %4885 = vmatprep.subr.mxu0 0.0
        %4886 = vmatpush2.msra.mxu0 0.0
        %4887 = vmatprep.subr.mxu0 0.0
        %4888 = vmatpush2.msra.mxu0 0.0
        %4889 = vmatprep.subr.mxu0 0.0
        %4890 = vmatpush2.msra.mxu0 0.0
        %4891 = vmatprep.subr.mxu0 0.0
        %4892 = vmatpush2.msra.mxu0 0.0
        %4893 = vmatprep.subr.mxu0 0.0
        %4894 = vmatpush2.msra.mxu0 0.0
        %4895 = vmatprep.mubr.f32.mxu0 0.0
        %4896 = vmatmul.mubr.f32.gmra.mxu0 %v3840
        %v4897 = vpop.f32.mrf.mxu0
        %v4898 = vadd.f32 0.0, %v4897
        %v4899 = vpop.f32.mrf.mxu0
        %4900 = vmatprep.mubr.f32.mxu0 0.0
        %4901 = vmatmul.mubr.f32.gmra.mxu0 %v3843
        %v4902 = vpop.f32.mrf.mxu0
        %v4903 = vadd.f32 0.0, %v4902
        %v4904 = vpop.f32.mrf.mxu0
        %4905 = vmatprep.mubr.f32.mxu0 0.0
        %4906 = vmatmul.mubr.f32.gmra.mxu0 %v3846
        %v4907 = vpop.f32.mrf.mxu0
        %v4908 = vadd.f32 0.0, %v4907
        %v4909 = vpop.f32.mrf.mxu0
        %4910 = vmatprep.mubr.f32.mxu0 0.0
        %4911 = vmatmul.mubr.f32.gmra.mxu0 %v3849
        %v4912 = vpop.f32.mrf.mxu0
        %v4913 = vadd.f32 0.0, %v4912
        %v4914 = vpop.f32.mrf.mxu0
        %4915 = vdwg.mxu0
        %4916 = vst.msk [vmem:[#allocation2 + $0x140] sm:$0xff] %vm512, %v4898
        %4917 = vst.msk [vmem:[#allocation2 + $0x148] sm:$0xff] %vm512, %v4903
        %4918 = vst.msk [vmem:[#allocation2 + $0x150] sm:$0xff] %vm512, %v4908
        %4919 = vst.msk [vmem:[#allocation2 + $0x158] sm:$0x1] %vm1685, %v4913
        %s4920 = scalar_lea.vmem %s10, 704
        %v4921 = vld [vmem:[%s4920] sm:$0xff]
        %v4922 = vld [vmem:[%s4920 + $0x8] sm:$0xff]
        %v4923 = vld [vmem:[%s4920 + $0x10] sm:$0xff]
        %v4924 = vld [vmem:[%s4920 + $0x18] sm:$0xff]
        %v4925 = vld [vmem:[%s4920 + $0x20] sm:$0xff]
        %v4926 = vld [vmem:[%s4920 + $0x28] sm:$0xff]
        %v4927 = vld [vmem:[%s4920 + $0x30] sm:$0xff]
        %v4928 = vld [vmem:[%s4920 + $0x38] sm:$0xff]
        %4929 = vmatprep.subr.mxu0 0.0
        %4930 = vmatpush1.msra.mxu0 0.0
        %4931 = vmatprep.subr.mxu0 0.0
        %4932 = vmatpush1.msra.mxu0 0.0
        %4933 = vmatprep.subr.mxu0 0.0
        %4934 = vmatpush1.msra.mxu0 0.0
        %4935 = vmatprep.subr.mxu0 0.0
        %4936 = vmatpush1.msra.mxu0 0.0
        %4937 = vmatprep.subr.mxu0 0.0
        %4938 = vmatpush1.msra.mxu0 0.0
        %4939 = vmatprep.subr.mxu0 0.0
        %4940 = vmatpush1.msra.mxu0 0.0
        %4941 = vmatprep.subr.mxu0 0.0
        %4942 = vmatpush1.msra.mxu0 0.0
        %4943 = vmatprep.subr.mxu0 0.0
        %4944 = vmatpush1.msra.mxu0 0.0
        %4945 = vmatprep.subr.mxu0 0.0
        %4946 = vmatpush1.msra.mxu0 %v4928
        %4947 = vmatprep.subr.mxu0 0.0
        %4948 = vmatpush1.msra.mxu0 %v4927
        %4949 = vmatprep.subr.mxu0 0.0
        %4950 = vmatpush1.msra.mxu0 %v4926
        %4951 = vmatprep.subr.mxu0 0.0
        %4952 = vmatpush1.msra.mxu0 %v4925
        %4953 = vmatprep.subr.mxu0 0.0
        %4954 = vmatpush1.msra.mxu0 %v4924
        %4955 = vmatprep.subr.mxu0 0.0
        %4956 = vmatpush1.msra.mxu0 %v4923
        %4957 = vmatprep.subr.mxu0 0.0
        %4958 = vmatpush1.msra.mxu0 %v4922
        %4959 = vmatprep.subr.mxu0 0.0
        %4960 = vmatpush1.msra.mxu0 %v4921
        %4961 = vmatprep.subr.mxu0 0.0
        %4962 = vmatpush2.msra.mxu0 0.0
        %4963 = vmatprep.subr.mxu0 0.0
        %4964 = vmatpush2.msra.mxu0 0.0
        %4965 = vmatprep.subr.mxu0 0.0
        %4966 = vmatpush2.msra.mxu0 0.0
        %4967 = vmatprep.subr.mxu0 0.0
        %4968 = vmatpush2.msra.mxu0 0.0
        %4969 = vmatprep.subr.mxu0 0.0
        %4970 = vmatpush2.msra.mxu0 0.0
        %4971 = vmatprep.subr.mxu0 0.0
        %4972 = vmatpush2.msra.mxu0 0.0
        %4973 = vmatprep.subr.mxu0 0.0
        %4974 = vmatpush2.msra.mxu0 0.0
        %4975 = vmatprep.subr.mxu0 0.0
        %4976 = vmatpush2.msra.mxu0 0.0
        %4977 = vmatprep.subr.mxu0 0.0
        %4978 = vmatpush2.msra.mxu0 0.0
        %4979 = vmatprep.subr.mxu0 0.0
        %4980 = vmatpush2.msra.mxu0 0.0
        %4981 = vmatprep.subr.mxu0 0.0
        %4982 = vmatpush2.msra.mxu0 0.0
        %4983 = vmatprep.subr.mxu0 0.0
        %4984 = vmatpush2.msra.mxu0 0.0
        %4985 = vmatprep.subr.mxu0 0.0
        %4986 = vmatpush2.msra.mxu0 0.0
        %4987 = vmatprep.subr.mxu0 0.0
        %4988 = vmatpush2.msra.mxu0 0.0
        %4989 = vmatprep.subr.mxu0 0.0
        %4990 = vmatpush2.msra.mxu0 0.0
        %4991 = vmatprep.subr.mxu0 0.0
        %4992 = vmatpush2.msra.mxu0 0.0
        %4993 = vmatprep.mubr.f32.mxu0 0.0
        %4994 = vmatmul.mubr.f32.gmra.mxu0 %v3840
        %v4995 = vpop.f32.mrf.mxu0
        %v4996 = vadd.f32 0.0, %v4995
        %v4997 = vpop.f32.mrf.mxu0
        %4998 = vmatprep.mubr.f32.mxu0 0.0
        %4999 = vmatmul.mubr.f32.gmra.mxu0 %v3843
        %v5000 = vpop.f32.mrf.mxu0
        %v5001 = vadd.f32 0.0, %v5000
        %v5002 = vpop.f32.mrf.mxu0
        %5003 = vmatprep.mubr.f32.mxu0 0.0
        %5004 = vmatmul.mubr.f32.gmra.mxu0 %v3846
        %v5005 = vpop.f32.mrf.mxu0
        %v5006 = vadd.f32 0.0, %v5005
        %v5007 = vpop.f32.mrf.mxu0
        %5008 = vmatprep.mubr.f32.mxu0 0.0
        %5009 = vmatmul.mubr.f32.gmra.mxu0 %v3849
        %v5010 = vpop.f32.mrf.mxu0
        %v5011 = vadd.f32 0.0, %v5010
        %v5012 = vpop.f32.mrf.mxu0
        %5013 = vdwg.mxu0
        %5014 = vst.msk [vmem:[#allocation2 + $0x160] sm:$0xff] %vm512, %v4996
        %5015 = vst.msk [vmem:[#allocation2 + $0x168] sm:$0xff] %vm512, %v5001
        %5016 = vst.msk [vmem:[#allocation2 + $0x170] sm:$0xff] %vm512, %v5006
        %5017 = vst.msk [vmem:[#allocation2 + $0x178] sm:$0x1] %vm1685, %v5011
        %s5018 = scalar_lea.vmem %s10, 768
        %v5019 = vld [vmem:[%s5018] sm:$0xff]
        %v5020 = vld [vmem:[%s5018 + $0x8] sm:$0xff]
        %v5021 = vld [vmem:[%s5018 + $0x10] sm:$0xff]
        %v5022 = vld [vmem:[%s5018 + $0x18] sm:$0xff]
        %v5023 = vld [vmem:[%s5018 + $0x20] sm:$0xff]
        %v5024 = vld [vmem:[%s5018 + $0x28] sm:$0xff]
        %v5025 = vld [vmem:[%s5018 + $0x30] sm:$0xff]
        %v5026 = vld [vmem:[%s5018 + $0x38] sm:$0xff]
        %5027 = vmatprep.subr.mxu0 0.0
        %5028 = vmatpush1.msra.mxu0 0.0
        %5029 = vmatprep.subr.mxu0 0.0
        %5030 = vmatpush1.msra.mxu0 0.0
        %5031 = vmatprep.subr.mxu0 0.0
        %5032 = vmatpush1.msra.mxu0 0.0
        %5033 = vmatprep.subr.mxu0 0.0
        %5034 = vmatpush1.msra.mxu0 0.0
        %5035 = vmatprep.subr.mxu0 0.0
        %5036 = vmatpush1.msra.mxu0 0.0
        %5037 = vmatprep.subr.mxu0 0.0
        %5038 = vmatpush1.msra.mxu0 0.0
        %5039 = vmatprep.subr.mxu0 0.0
        %5040 = vmatpush1.msra.mxu0 0.0
        %5041 = vmatprep.subr.mxu0 0.0
        %5042 = vmatpush1.msra.mxu0 0.0
        %5043 = vmatprep.subr.mxu0 0.0
        %5044 = vmatpush1.msra.mxu0 %v5026
        %5045 = vmatprep.subr.mxu0 0.0
        %5046 = vmatpush1.msra.mxu0 %v5025
        %5047 = vmatprep.subr.mxu0 0.0
        %5048 = vmatpush1.msra.mxu0 %v5024
        %5049 = vmatprep.subr.mxu0 0.0
        %5050 = vmatpush1.msra.mxu0 %v5023
        %5051 = vmatprep.subr.mxu0 0.0
        %5052 = vmatpush1.msra.mxu0 %v5022
        %5053 = vmatprep.subr.mxu0 0.0
        %5054 = vmatpush1.msra.mxu0 %v5021
        %5055 = vmatprep.subr.mxu0 0.0
        %5056 = vmatpush1.msra.mxu0 %v5020
        %5057 = vmatprep.subr.mxu0 0.0
        %5058 = vmatpush1.msra.mxu0 %v5019
        %5059 = vmatprep.subr.mxu0 0.0
        %5060 = vmatpush2.msra.mxu0 0.0
        %5061 = vmatprep.subr.mxu0 0.0
        %5062 = vmatpush2.msra.mxu0 0.0
        %5063 = vmatprep.subr.mxu0 0.0
        %5064 = vmatpush2.msra.mxu0 0.0
        %5065 = vmatprep.subr.mxu0 0.0
        %5066 = vmatpush2.msra.mxu0 0.0
        %5067 = vmatprep.subr.mxu0 0.0
        %5068 = vmatpush2.msra.mxu0 0.0
        %5069 = vmatprep.subr.mxu0 0.0
        %5070 = vmatpush2.msra.mxu0 0.0
        %5071 = vmatprep.subr.mxu0 0.0
        %5072 = vmatpush2.msra.mxu0 0.0
        %5073 = vmatprep.subr.mxu0 0.0
        %5074 = vmatpush2.msra.mxu0 0.0
        %5075 = vmatprep.subr.mxu0 0.0
        %5076 = vmatpush2.msra.mxu0 0.0
        %5077 = vmatprep.subr.mxu0 0.0
        %5078 = vmatpush2.msra.mxu0 0.0
        %5079 = vmatprep.subr.mxu0 0.0
        %5080 = vmatpush2.msra.mxu0 0.0
        %5081 = vmatprep.subr.mxu0 0.0
        %5082 = vmatpush2.msra.mxu0 0.0
        %5083 = vmatprep.subr.mxu0 0.0
        %5084 = vmatpush2.msra.mxu0 0.0
        %5085 = vmatprep.subr.mxu0 0.0
        %5086 = vmatpush2.msra.mxu0 0.0
        %5087 = vmatprep.subr.mxu0 0.0
        %5088 = vmatpush2.msra.mxu0 0.0
        %5089 = vmatprep.subr.mxu0 0.0
        %5090 = vmatpush2.msra.mxu0 0.0
        %5091 = vmatprep.mubr.f32.mxu0 0.0
        %5092 = vmatmul.mubr.f32.gmra.mxu0 %v3840
        %v5093 = vpop.f32.mrf.mxu0
        %v5094 = vadd.f32 0.0, %v5093
        %v5095 = vpop.f32.mrf.mxu0
        %5096 = vmatprep.mubr.f32.mxu0 0.0
        %5097 = vmatmul.mubr.f32.gmra.mxu0 %v3843
        %v5098 = vpop.f32.mrf.mxu0
        %v5099 = vadd.f32 0.0, %v5098
        %v5100 = vpop.f32.mrf.mxu0
        %5101 = vmatprep.mubr.f32.mxu0 0.0
        %5102 = vmatmul.mubr.f32.gmra.mxu0 %v3846
        %v5103 = vpop.f32.mrf.mxu0
        %v5104 = vadd.f32 0.0, %v5103
        %v5105 = vpop.f32.mrf.mxu0
        %5106 = vmatprep.mubr.f32.mxu0 0.0
        %5107 = vmatmul.mubr.f32.gmra.mxu0 %v3849
        %v5108 = vpop.f32.mrf.mxu0
        %v5109 = vadd.f32 0.0, %v5108
        %v5110 = vpop.f32.mrf.mxu0
        %5111 = vdwg.mxu0
        %5112 = vst.msk [vmem:[#allocation2 + $0x180] sm:$0xff] %vm512, %v5094
        %5113 = vst.msk [vmem:[#allocation2 + $0x188] sm:$0xff] %vm512, %v5099
        %5114 = vst.msk [vmem:[#allocation2 + $0x190] sm:$0xff] %vm512, %v5104
        %5115 = vst.msk [vmem:[#allocation2 + $0x198] sm:$0x1] %vm1685, %v5109
        %s5116 = scalar_lea.vmem %s10, 832
        %v5117 = vld [vmem:[%s5116] sm:$0xff]
        %v5118 = vld [vmem:[%s5116 + $0x8] sm:$0xff]
        %v5119 = vld [vmem:[%s5116 + $0x10] sm:$0xff]
        %v5120 = vld [vmem:[%s5116 + $0x18] sm:$0xff]
        %v5121 = vld [vmem:[%s5116 + $0x20] sm:$0xff]
        %v5122 = vld [vmem:[%s5116 + $0x28] sm:$0xff]
        %v5123 = vld [vmem:[%s5116 + $0x30] sm:$0xff]
        %v5124 = vld [vmem:[%s5116 + $0x38] sm:$0xff]
        %5125 = vmatprep.subr.mxu0 0.0
        %5126 = vmatpush1.msra.mxu0 0.0
        %5127 = vmatprep.subr.mxu0 0.0
        %5128 = vmatpush1.msra.mxu0 0.0
        %5129 = vmatprep.subr.mxu0 0.0
        %5130 = vmatpush1.msra.mxu0 0.0
        %5131 = vmatprep.subr.mxu0 0.0
        %5132 = vmatpush1.msra.mxu0 0.0
        %5133 = vmatprep.subr.mxu0 0.0
        %5134 = vmatpush1.msra.mxu0 0.0
        %5135 = vmatprep.subr.mxu0 0.0
        %5136 = vmatpush1.msra.mxu0 0.0
        %5137 = vmatprep.subr.mxu0 0.0
        %5138 = vmatpush1.msra.mxu0 0.0
        %5139 = vmatprep.subr.mxu0 0.0
        %5140 = vmatpush1.msra.mxu0 0.0
        %5141 = vmatprep.subr.mxu0 0.0
        %5142 = vmatpush1.msra.mxu0 %v5124
        %5143 = vmatprep.subr.mxu0 0.0
        %5144 = vmatpush1.msra.mxu0 %v5123
        %5145 = vmatprep.subr.mxu0 0.0
        %5146 = vmatpush1.msra.mxu0 %v5122
        %5147 = vmatprep.subr.mxu0 0.0
        %5148 = vmatpush1.msra.mxu0 %v5121
        %5149 = vmatprep.subr.mxu0 0.0
        %5150 = vmatpush1.msra.mxu0 %v5120
        %5151 = vmatprep.subr.mxu0 0.0
        %5152 = vmatpush1.msra.mxu0 %v5119
        %5153 = vmatprep.subr.mxu0 0.0
        %5154 = vmatpush1.msra.mxu0 %v5118
        %5155 = vmatprep.subr.mxu0 0.0
        %5156 = vmatpush1.msra.mxu0 %v5117
        %5157 = vmatprep.subr.mxu0 0.0
        %5158 = vmatpush2.msra.mxu0 0.0
        %5159 = vmatprep.subr.mxu0 0.0
        %5160 = vmatpush2.msra.mxu0 0.0
        %5161 = vmatprep.subr.mxu0 0.0
        %5162 = vmatpush2.msra.mxu0 0.0
        %5163 = vmatprep.subr.mxu0 0.0
        %5164 = vmatpush2.msra.mxu0 0.0
        %5165 = vmatprep.subr.mxu0 0.0
        %5166 = vmatpush2.msra.mxu0 0.0
        %5167 = vmatprep.subr.mxu0 0.0
        %5168 = vmatpush2.msra.mxu0 0.0
        %5169 = vmatprep.subr.mxu0 0.0
        %5170 = vmatpush2.msra.mxu0 0.0
        %5171 = vmatprep.subr.mxu0 0.0
        %5172 = vmatpush2.msra.mxu0 0.0
        %5173 = vmatprep.subr.mxu0 0.0
        %5174 = vmatpush2.msra.mxu0 0.0
        %5175 = vmatprep.subr.mxu0 0.0
        %5176 = vmatpush2.msra.mxu0 0.0
        %5177 = vmatprep.subr.mxu0 0.0
        %5178 = vmatpush2.msra.mxu0 0.0
        %5179 = vmatprep.subr.mxu0 0.0
        %5180 = vmatpush2.msra.mxu0 0.0
        %5181 = vmatprep.subr.mxu0 0.0
        %5182 = vmatpush2.msra.mxu0 0.0
        %5183 = vmatprep.subr.mxu0 0.0
        %5184 = vmatpush2.msra.mxu0 0.0
        %5185 = vmatprep.subr.mxu0 0.0
        %5186 = vmatpush2.msra.mxu0 0.0
        %5187 = vmatprep.subr.mxu0 0.0
        %5188 = vmatpush2.msra.mxu0 0.0
        %5189 = vmatprep.mubr.f32.mxu0 0.0
        %5190 = vmatmul.mubr.f32.gmra.mxu0 %v3840
        %v5191 = vpop.f32.mrf.mxu0
        %v5192 = vadd.f32 0.0, %v5191
        %v5193 = vpop.f32.mrf.mxu0
        %5194 = vmatprep.mubr.f32.mxu0 0.0
        %5195 = vmatmul.mubr.f32.gmra.mxu0 %v3843
        %v5196 = vpop.f32.mrf.mxu0
        %v5197 = vadd.f32 0.0, %v5196
        %v5198 = vpop.f32.mrf.mxu0
        %5199 = vmatprep.mubr.f32.mxu0 0.0
        %5200 = vmatmul.mubr.f32.gmra.mxu0 %v3846
        %v5201 = vpop.f32.mrf.mxu0
        %v5202 = vadd.f32 0.0, %v5201
        %v5203 = vpop.f32.mrf.mxu0
        %5204 = vmatprep.mubr.f32.mxu0 0.0
        %5205 = vmatmul.mubr.f32.gmra.mxu0 %v3849
        %v5206 = vpop.f32.mrf.mxu0
        %v5207 = vadd.f32 0.0, %v5206
        %v5208 = vpop.f32.mrf.mxu0
        %5209 = vdwg.mxu0
        %5210 = vst.msk [vmem:[#allocation2 + $0x1a0] sm:$0xff] %vm512, %v5192
        %5211 = vst.msk [vmem:[#allocation2 + $0x1a8] sm:$0xff] %vm512, %v5197
        %5212 = vst.msk [vmem:[#allocation2 + $0x1b0] sm:$0xff] %vm512, %v5202
        %5213 = vst.msk [vmem:[#allocation2 + $0x1b8] sm:$0x1] %vm1685, %v5207
        %s5214 = scalar_lea.vmem %s10, 896
        %v5215 = vld [vmem:[%s5214] sm:$0xff]
        %v5216 = vld [vmem:[%s5214 + $0x8] sm:$0xff]
        %v5217 = vld [vmem:[%s5214 + $0x10] sm:$0xff]
        %v5218 = vld [vmem:[%s5214 + $0x18] sm:$0xff]
        %v5219 = vld [vmem:[%s5214 + $0x20] sm:$0xff]
        %v5220 = vld [vmem:[%s5214 + $0x28] sm:$0xff]
        %v5221 = vld [vmem:[%s5214 + $0x30] sm:$0xff]
        %v5222 = vld [vmem:[%s5214 + $0x38] sm:$0xff]
        %5223 = vmatprep.subr.mxu0 0.0
        %5224 = vmatpush1.msra.mxu0 0.0
        %5225 = vmatprep.subr.mxu0 0.0
        %5226 = vmatpush1.msra.mxu0 0.0
        %5227 = vmatprep.subr.mxu0 0.0
        %5228 = vmatpush1.msra.mxu0 0.0
        %5229 = vmatprep.subr.mxu0 0.0
        %5230 = vmatpush1.msra.mxu0 0.0
        %5231 = vmatprep.subr.mxu0 0.0
        %5232 = vmatpush1.msra.mxu0 0.0
        %5233 = vmatprep.subr.mxu0 0.0
        %5234 = vmatpush1.msra.mxu0 0.0
        %5235 = vmatprep.subr.mxu0 0.0
        %5236 = vmatpush1.msra.mxu0 0.0
        %5237 = vmatprep.subr.mxu0 0.0
        %5238 = vmatpush1.msra.mxu0 0.0
        %5239 = vmatprep.subr.mxu0 0.0
        %5240 = vmatpush1.msra.mxu0 %v5222
        %5241 = vmatprep.subr.mxu0 0.0
        %5242 = vmatpush1.msra.mxu0 %v5221
        %5243 = vmatprep.subr.mxu0 0.0
        %5244 = vmatpush1.msra.mxu0 %v5220
        %5245 = vmatprep.subr.mxu0 0.0
        %5246 = vmatpush1.msra.mxu0 %v5219
        %5247 = vmatprep.subr.mxu0 0.0
        %5248 = vmatpush1.msra.mxu0 %v5218
        %5249 = vmatprep.subr.mxu0 0.0
        %5250 = vmatpush1.msra.mxu0 %v5217
        %5251 = vmatprep.subr.mxu0 0.0
        %5252 = vmatpush1.msra.mxu0 %v5216
        %5253 = vmatprep.subr.mxu0 0.0
        %5254 = vmatpush1.msra.mxu0 %v5215
        %5255 = vmatprep.subr.mxu0 0.0
        %5256 = vmatpush2.msra.mxu0 0.0
        %5257 = vmatprep.subr.mxu0 0.0
        %5258 = vmatpush2.msra.mxu0 0.0
        %5259 = vmatprep.subr.mxu0 0.0
        %5260 = vmatpush2.msra.mxu0 0.0
        %5261 = vmatprep.subr.mxu0 0.0
        %5262 = vmatpush2.msra.mxu0 0.0
        %5263 = vmatprep.subr.mxu0 0.0
        %5264 = vmatpush2.msra.mxu0 0.0
        %5265 = vmatprep.subr.mxu0 0.0
        %5266 = vmatpush2.msra.mxu0 0.0
        %5267 = vmatprep.subr.mxu0 0.0
        %5268 = vmatpush2.msra.mxu0 0.0
        %5269 = vmatprep.subr.mxu0 0.0
        %5270 = vmatpush2.msra.mxu0 0.0
        %5271 = vmatprep.subr.mxu0 0.0
        %5272 = vmatpush2.msra.mxu0 0.0
        %5273 = vmatprep.subr.mxu0 0.0
        %5274 = vmatpush2.msra.mxu0 0.0
        %5275 = vmatprep.subr.mxu0 0.0
        %5276 = vmatpush2.msra.mxu0 0.0
        %5277 = vmatprep.subr.mxu0 0.0
        %5278 = vmatpush2.msra.mxu0 0.0
        %5279 = vmatprep.subr.mxu0 0.0
        %5280 = vmatpush2.msra.mxu0 0.0
        %5281 = vmatprep.subr.mxu0 0.0
        %5282 = vmatpush2.msra.mxu0 0.0
        %5283 = vmatprep.subr.mxu0 0.0
        %5284 = vmatpush2.msra.mxu0 0.0
        %5285 = vmatprep.subr.mxu0 0.0
        %5286 = vmatpush2.msra.mxu0 0.0
        %5287 = vmatprep.mubr.f32.mxu0 0.0
        %5288 = vmatmul.mubr.f32.gmra.mxu0 %v3840
        %v5289 = vpop.f32.mrf.mxu0
        %v5290 = vadd.f32 0.0, %v5289
        %v5291 = vpop.f32.mrf.mxu0
        %5292 = vmatprep.mubr.f32.mxu0 0.0
        %5293 = vmatmul.mubr.f32.gmra.mxu0 %v3843
        %v5294 = vpop.f32.mrf.mxu0
        %v5295 = vadd.f32 0.0, %v5294
        %v5296 = vpop.f32.mrf.mxu0
        %5297 = vmatprep.mubr.f32.mxu0 0.0
        %5298 = vmatmul.mubr.f32.gmra.mxu0 %v3846
        %v5299 = vpop.f32.mrf.mxu0
        %v5300 = vadd.f32 0.0, %v5299
        %v5301 = vpop.f32.mrf.mxu0
        %5302 = vmatprep.mubr.f32.mxu0 0.0
        %5303 = vmatmul.mubr.f32.gmra.mxu0 %v3849
        %v5304 = vpop.f32.mrf.mxu0
        %v5305 = vadd.f32 0.0, %v5304
        %v5306 = vpop.f32.mrf.mxu0
        %5307 = vdwg.mxu0
        %5308 = vst.msk [vmem:[#allocation2 + $0x1c0] sm:$0xff] %vm512, %v5290
        %5309 = vst.msk [vmem:[#allocation2 + $0x1c8] sm:$0xff] %vm512, %v5295
        %5310 = vst.msk [vmem:[#allocation2 + $0x1d0] sm:$0xff] %vm512, %v5300
        %5311 = vst.msk [vmem:[#allocation2 + $0x1d8] sm:$0x1] %vm1685, %v5305
        %s5312 = scalar_lea.vmem %s10, 960
        %v5313 = vld [vmem:[%s5312] sm:$0xff]
        %v5314 = vld [vmem:[%s5312 + $0x8] sm:$0xff]
        %v5315 = vld [vmem:[%s5312 + $0x10] sm:$0xff]
        %v5316 = vld [vmem:[%s5312 + $0x18] sm:$0xff]
        %v5317 = vld [vmem:[%s5312 + $0x20] sm:$0xff]
        %v5318 = vld [vmem:[%s5312 + $0x28] sm:$0xff]
        %v5319 = vld [vmem:[%s5312 + $0x30] sm:$0xff]
        %v5320 = vld [vmem:[%s5312 + $0x38] sm:$0xff]
        %5321 = vmatprep.subr.mxu0 0.0
        %5322 = vmatpush1.msra.mxu0 0.0
        %5323 = vmatprep.subr.mxu0 0.0
        %5324 = vmatpush1.msra.mxu0 0.0
        %5325 = vmatprep.subr.mxu0 0.0
        %5326 = vmatpush1.msra.mxu0 0.0
        %5327 = vmatprep.subr.mxu0 0.0
        %5328 = vmatpush1.msra.mxu0 0.0
        %5329 = vmatprep.subr.mxu0 0.0
        %5330 = vmatpush1.msra.mxu0 0.0
        %5331 = vmatprep.subr.mxu0 0.0
        %5332 = vmatpush1.msra.mxu0 0.0
        %5333 = vmatprep.subr.mxu0 0.0
        %5334 = vmatpush1.msra.mxu0 0.0
        %5335 = vmatprep.subr.mxu0 0.0
        %5336 = vmatpush1.msra.mxu0 0.0
        %5337 = vmatprep.subr.mxu0 0.0
        %5338 = vmatpush1.msra.mxu0 %v5320
        %5339 = vmatprep.subr.mxu0 0.0
        %5340 = vmatpush1.msra.mxu0 %v5319
        %5341 = vmatprep.subr.mxu0 0.0
        %5342 = vmatpush1.msra.mxu0 %v5318
        %5343 = vmatprep.subr.mxu0 0.0
        %5344 = vmatpush1.msra.mxu0 %v5317
        %5345 = vmatprep.subr.mxu0 0.0
        %5346 = vmatpush1.msra.mxu0 %v5316
        %5347 = vmatprep.subr.mxu0 0.0
        %5348 = vmatpush1.msra.mxu0 %v5315
        %5349 = vmatprep.subr.mxu0 0.0
        %5350 = vmatpush1.msra.mxu0 %v5314
        %5351 = vmatprep.subr.mxu0 0.0
        %5352 = vmatpush1.msra.mxu0 %v5313
        %5353 = vmatprep.subr.mxu0 0.0
        %5354 = vmatpush2.msra.mxu0 0.0
        %5355 = vmatprep.subr.mxu0 0.0
        %5356 = vmatpush2.msra.mxu0 0.0
        %5357 = vmatprep.subr.mxu0 0.0
        %5358 = vmatpush2.msra.mxu0 0.0
        %5359 = vmatprep.subr.mxu0 0.0
        %5360 = vmatpush2.msra.mxu0 0.0
        %5361 = vmatprep.subr.mxu0 0.0
        %5362 = vmatpush2.msra.mxu0 0.0
        %5363 = vmatprep.subr.mxu0 0.0
        %5364 = vmatpush2.msra.mxu0 0.0
        %5365 = vmatprep.subr.mxu0 0.0
        %5366 = vmatpush2.msra.mxu0 0.0
        %5367 = vmatprep.subr.mxu0 0.0
        %5368 = vmatpush2.msra.mxu0 0.0
        %5369 = vmatprep.subr.mxu0 0.0
        %5370 = vmatpush2.msra.mxu0 0.0
        %5371 = vmatprep.subr.mxu0 0.0
        %5372 = vmatpush2.msra.mxu0 0.0
        %5373 = vmatprep.subr.mxu0 0.0
        %5374 = vmatpush2.msra.mxu0 0.0
        %5375 = vmatprep.subr.mxu0 0.0
        %5376 = vmatpush2.msra.mxu0 0.0
        %5377 = vmatprep.subr.mxu0 0.0
        %5378 = vmatpush2.msra.mxu0 0.0
        %5379 = vmatprep.subr.mxu0 0.0
        %5380 = vmatpush2.msra.mxu0 0.0
        %5381 = vmatprep.subr.mxu0 0.0
        %5382 = vmatpush2.msra.mxu0 0.0
        %5383 = vmatprep.subr.mxu0 0.0
        %5384 = vmatpush2.msra.mxu0 0.0
        %5385 = vmatprep.mubr.f32.mxu0 0.0
        %5386 = vmatmul.mubr.f32.gmra.mxu0 %v3840
        %v5387 = vpop.f32.mrf.mxu0
        %v5388 = vadd.f32 0.0, %v5387
        %v5389 = vpop.f32.mrf.mxu0
        %5390 = vmatprep.mubr.f32.mxu0 0.0
        %5391 = vmatmul.mubr.f32.gmra.mxu0 %v3843
        %v5392 = vpop.f32.mrf.mxu0
        %v5393 = vadd.f32 0.0, %v5392
        %v5394 = vpop.f32.mrf.mxu0
        %5395 = vmatprep.mubr.f32.mxu0 0.0
        %5396 = vmatmul.mubr.f32.gmra.mxu0 %v3846
        %v5397 = vpop.f32.mrf.mxu0
        %v5398 = vadd.f32 0.0, %v5397
        %v5399 = vpop.f32.mrf.mxu0
        %5400 = vmatprep.mubr.f32.mxu0 0.0
        %5401 = vmatmul.mubr.f32.gmra.mxu0 %v3849
        %v5402 = vpop.f32.mrf.mxu0
        %v5403 = vadd.f32 0.0, %v5402
        %v5404 = vpop.f32.mrf.mxu0
        %5405 = vdwg.mxu0
        %5406 = vst.msk [vmem:[#allocation2 + $0x1e0] sm:$0xff] %vm512, %v5388
        %5407 = vst.msk [vmem:[#allocation2 + $0x1e8] sm:$0xff] %vm512, %v5393
        %5408 = vst.msk [vmem:[#allocation2 + $0x1f0] sm:$0xff] %vm512, %v5398
        %5409 = vst.msk [vmem:[#allocation2 + $0x1f8] sm:$0x1] %vm1685, %v5403
        %s5410 = scalar_lea.vmem %s10, 1024
        %v5411 = vld [vmem:[%s5410] sm:$0xff]
        %v5412 = vld [vmem:[%s5410 + $0x8] sm:$0xff]
        %v5413 = vld [vmem:[%s5410 + $0x10] sm:$0xff]
        %v5414 = vld [vmem:[%s5410 + $0x18] sm:$0xff]
        %v5415 = vld [vmem:[%s5410 + $0x20] sm:$0xff]
        %v5416 = vld [vmem:[%s5410 + $0x28] sm:$0xff]
        %v5417 = vld [vmem:[%s5410 + $0x30] sm:$0xff]
        %v5418 = vld [vmem:[%s5410 + $0x38] sm:$0xff]
        %5419 = vmatprep.subr.mxu0 0.0
        %5420 = vmatpush1.msra.mxu0 0.0
        %5421 = vmatprep.subr.mxu0 0.0
        %5422 = vmatpush1.msra.mxu0 0.0
        %5423 = vmatprep.subr.mxu0 0.0
        %5424 = vmatpush1.msra.mxu0 0.0
        %5425 = vmatprep.subr.mxu0 0.0
        %5426 = vmatpush1.msra.mxu0 0.0
        %5427 = vmatprep.subr.mxu0 0.0
        %5428 = vmatpush1.msra.mxu0 0.0
        %5429 = vmatprep.subr.mxu0 0.0
        %5430 = vmatpush1.msra.mxu0 0.0
        %5431 = vmatprep.subr.mxu0 0.0
        %5432 = vmatpush1.msra.mxu0 0.0
        %5433 = vmatprep.subr.mxu0 0.0
        %5434 = vmatpush1.msra.mxu0 0.0
        %5435 = vmatprep.subr.mxu0 0.0
        %5436 = vmatpush1.msra.mxu0 %v5418
        %5437 = vmatprep.subr.mxu0 0.0
        %5438 = vmatpush1.msra.mxu0 %v5417
        %5439 = vmatprep.subr.mxu0 0.0
        %5440 = vmatpush1.msra.mxu0 %v5416
        %5441 = vmatprep.subr.mxu0 0.0
        %5442 = vmatpush1.msra.mxu0 %v5415
        %5443 = vmatprep.subr.mxu0 0.0
        %5444 = vmatpush1.msra.mxu0 %v5414
        %5445 = vmatprep.subr.mxu0 0.0
        %5446 = vmatpush1.msra.mxu0 %v5413
        %5447 = vmatprep.subr.mxu0 0.0
        %5448 = vmatpush1.msra.mxu0 %v5412
        %5449 = vmatprep.subr.mxu0 0.0
        %5450 = vmatpush1.msra.mxu0 %v5411
        %5451 = vmatprep.subr.mxu0 0.0
        %5452 = vmatpush2.msra.mxu0 0.0
        %5453 = vmatprep.subr.mxu0 0.0
        %5454 = vmatpush2.msra.mxu0 0.0
        %5455 = vmatprep.subr.mxu0 0.0
        %5456 = vmatpush2.msra.mxu0 0.0
        %5457 = vmatprep.subr.mxu0 0.0
        %5458 = vmatpush2.msra.mxu0 0.0
        %5459 = vmatprep.subr.mxu0 0.0
        %5460 = vmatpush2.msra.mxu0 0.0
        %5461 = vmatprep.subr.mxu0 0.0
        %5462 = vmatpush2.msra.mxu0 0.0
        %5463 = vmatprep.subr.mxu0 0.0
        %5464 = vmatpush2.msra.mxu0 0.0
        %5465 = vmatprep.subr.mxu0 0.0
        %5466 = vmatpush2.msra.mxu0 0.0
        %5467 = vmatprep.subr.mxu0 0.0
        %5468 = vmatpush2.msra.mxu0 0.0
        %5469 = vmatprep.subr.mxu0 0.0
        %5470 = vmatpush2.msra.mxu0 0.0
        %5471 = vmatprep.subr.mxu0 0.0
        %5472 = vmatpush2.msra.mxu0 0.0
        %5473 = vmatprep.subr.mxu0 0.0
        %5474 = vmatpush2.msra.mxu0 0.0
        %5475 = vmatprep.subr.mxu0 0.0
        %5476 = vmatpush2.msra.mxu0 0.0
        %5477 = vmatprep.subr.mxu0 0.0
        %5478 = vmatpush2.msra.mxu0 0.0
        %5479 = vmatprep.subr.mxu0 0.0
        %5480 = vmatpush2.msra.mxu0 0.0
        %5481 = vmatprep.subr.mxu0 0.0
        %5482 = vmatpush2.msra.mxu0 0.0
        %5483 = vmatprep.mubr.f32.mxu0 0.0
        %5484 = vmatmul.mubr.f32.gmra.mxu0 %v3840
        %v5485 = vpop.f32.mrf.mxu0
        %v5486 = vadd.f32 0.0, %v5485
        %v5487 = vpop.f32.mrf.mxu0
        %5488 = vmatprep.mubr.f32.mxu0 0.0
        %5489 = vmatmul.mubr.f32.gmra.mxu0 %v3843
        %v5490 = vpop.f32.mrf.mxu0
        %v5491 = vadd.f32 0.0, %v5490
        %v5492 = vpop.f32.mrf.mxu0
        %5493 = vmatprep.mubr.f32.mxu0 0.0
        %5494 = vmatmul.mubr.f32.gmra.mxu0 %v3846
        %v5495 = vpop.f32.mrf.mxu0
        %v5496 = vadd.f32 0.0, %v5495
        %v5497 = vpop.f32.mrf.mxu0
        %5498 = vmatprep.mubr.f32.mxu0 0.0
        %5499 = vmatmul.mubr.f32.gmra.mxu0 %v3849
        %v5500 = vpop.f32.mrf.mxu0
        %v5501 = vadd.f32 0.0, %v5500
        %v5502 = vpop.f32.mrf.mxu0
        %5503 = vdwg.mxu0
        %5504 = vst.msk [vmem:[#allocation2 + $0x200] sm:$0xff] %vm512, %v5486
        %5505 = vst.msk [vmem:[#allocation2 + $0x208] sm:$0xff] %vm512, %v5491
        %5506 = vst.msk [vmem:[#allocation2 + $0x210] sm:$0xff] %vm512, %v5496
        %5507 = vst.msk [vmem:[#allocation2 + $0x218] sm:$0x1] %vm1685, %v5501
        %s5508 = scalar_lea.vmem %s10, 1088
        %v5509 = vld [vmem:[%s5508] sm:$0xff]
        %v5510 = vld [vmem:[%s5508 + $0x8] sm:$0xff]
        %v5511 = vld [vmem:[%s5508 + $0x10] sm:$0xff]
        %v5512 = vld [vmem:[%s5508 + $0x18] sm:$0xff]
        %v5513 = vld [vmem:[%s5508 + $0x20] sm:$0xff]
        %v5514 = vld [vmem:[%s5508 + $0x28] sm:$0xff]
        %v5515 = vld [vmem:[%s5508 + $0x30] sm:$0xff]
        %v5516 = vld [vmem:[%s5508 + $0x38] sm:$0xff]
        %5517 = vmatprep.subr.mxu0 0.0
        %5518 = vmatpush1.msra.mxu0 0.0
        %5519 = vmatprep.subr.mxu0 0.0
        %5520 = vmatpush1.msra.mxu0 0.0
        %5521 = vmatprep.subr.mxu0 0.0
        %5522 = vmatpush1.msra.mxu0 0.0
        %5523 = vmatprep.subr.mxu0 0.0
        %5524 = vmatpush1.msra.mxu0 0.0
        %5525 = vmatprep.subr.mxu0 0.0
        %5526 = vmatpush1.msra.mxu0 0.0
        %5527 = vmatprep.subr.mxu0 0.0
        %5528 = vmatpush1.msra.mxu0 0.0
        %5529 = vmatprep.subr.mxu0 0.0
        %5530 = vmatpush1.msra.mxu0 0.0
        %5531 = vmatprep.subr.mxu0 0.0
        %5532 = vmatpush1.msra.mxu0 0.0
        %5533 = vmatprep.subr.mxu0 0.0
        %5534 = vmatpush1.msra.mxu0 %v5516
        %5535 = vmatprep.subr.mxu0 0.0
        %5536 = vmatpush1.msra.mxu0 %v5515
        %5537 = vmatprep.subr.mxu0 0.0
        %5538 = vmatpush1.msra.mxu0 %v5514
        %5539 = vmatprep.subr.mxu0 0.0
        %5540 = vmatpush1.msra.mxu0 %v5513
        %5541 = vmatprep.subr.mxu0 0.0
        %5542 = vmatpush1.msra.mxu0 %v5512
        %5543 = vmatprep.subr.mxu0 0.0
        %5544 = vmatpush1.msra.mxu0 %v5511
        %5545 = vmatprep.subr.mxu0 0.0
        %5546 = vmatpush1.msra.mxu0 %v5510
        %5547 = vmatprep.subr.mxu0 0.0
        %5548 = vmatpush1.msra.mxu0 %v5509
        %5549 = vmatprep.subr.mxu0 0.0
        %5550 = vmatpush2.msra.mxu0 0.0
        %5551 = vmatprep.subr.mxu0 0.0
        %5552 = vmatpush2.msra.mxu0 0.0
        %5553 = vmatprep.subr.mxu0 0.0
        %5554 = vmatpush2.msra.mxu0 0.0
        %5555 = vmatprep.subr.mxu0 0.0
        %5556 = vmatpush2.msra.mxu0 0.0
        %5557 = vmatprep.subr.mxu0 0.0
        %5558 = vmatpush2.msra.mxu0 0.0
        %5559 = vmatprep.subr.mxu0 0.0
        %5560 = vmatpush2.msra.mxu0 0.0
        %5561 = vmatprep.subr.mxu0 0.0
        %5562 = vmatpush2.msra.mxu0 0.0
        %5563 = vmatprep.subr.mxu0 0.0
        %5564 = vmatpush2.msra.mxu0 0.0
        %5565 = vmatprep.subr.mxu0 0.0
        %5566 = vmatpush2.msra.mxu0 0.0
        %5567 = vmatprep.subr.mxu0 0.0
        %5568 = vmatpush2.msra.mxu0 0.0
        %5569 = vmatprep.subr.mxu0 0.0
        %5570 = vmatpush2.msra.mxu0 0.0
        %5571 = vmatprep.subr.mxu0 0.0
        %5572 = vmatpush2.msra.mxu0 0.0
        %5573 = vmatprep.subr.mxu0 0.0
        %5574 = vmatpush2.msra.mxu0 0.0
        %5575 = vmatprep.subr.mxu0 0.0
        %5576 = vmatpush2.msra.mxu0 0.0
        %5577 = vmatprep.subr.mxu0 0.0
        %5578 = vmatpush2.msra.mxu0 0.0
        %5579 = vmatprep.subr.mxu0 0.0
        %5580 = vmatpush2.msra.mxu0 0.0
        %5581 = vmatprep.mubr.f32.mxu0 0.0
        %5582 = vmatmul.mubr.f32.gmra.mxu0 %v3840
        %v5583 = vpop.f32.mrf.mxu0
        %v5584 = vadd.f32 0.0, %v5583
        %v5585 = vpop.f32.mrf.mxu0
        %5586 = vmatprep.mubr.f32.mxu0 0.0
        %5587 = vmatmul.mubr.f32.gmra.mxu0 %v3843
        %v5588 = vpop.f32.mrf.mxu0
        %v5589 = vadd.f32 0.0, %v5588
        %v5590 = vpop.f32.mrf.mxu0
        %5591 = vmatprep.mubr.f32.mxu0 0.0
        %5592 = vmatmul.mubr.f32.gmra.mxu0 %v3846
        %v5593 = vpop.f32.mrf.mxu0
        %v5594 = vadd.f32 0.0, %v5593
        %v5595 = vpop.f32.mrf.mxu0
        %5596 = vmatprep.mubr.f32.mxu0 0.0
        %5597 = vmatmul.mubr.f32.gmra.mxu0 %v3849
        %v5598 = vpop.f32.mrf.mxu0
        %v5599 = vadd.f32 0.0, %v5598
        %v5600 = vpop.f32.mrf.mxu0
        %5601 = vdwg.mxu0
        %5602 = vst.msk [vmem:[#allocation2 + $0x220] sm:$0xff] %vm512, %v5584
        %5603 = vst.msk [vmem:[#allocation2 + $0x228] sm:$0xff] %vm512, %v5589
        %5604 = vst.msk [vmem:[#allocation2 + $0x230] sm:$0xff] %vm512, %v5594
        %5605 = vst.msk [vmem:[#allocation2 + $0x238] sm:$0x1] %vm1685, %v5599
        %s5606 = scalar_lea.vmem %s10, 1152
        %v5607 = vld [vmem:[%s5606] sm:$0xff]
        %v5608 = vld [vmem:[%s5606 + $0x8] sm:$0xff]
        %v5609 = vld [vmem:[%s5606 + $0x10] sm:$0xff]
        %v5610 = vld [vmem:[%s5606 + $0x18] sm:$0xff]
        %v5611 = vld [vmem:[%s5606 + $0x20] sm:$0xff]
        %v5612 = vld [vmem:[%s5606 + $0x28] sm:$0xff]
        %v5613 = vld [vmem:[%s5606 + $0x30] sm:$0xff]
        %v5614 = vld [vmem:[%s5606 + $0x38] sm:$0xff]
        %5615 = vmatprep.subr.mxu0 0.0
        %5616 = vmatpush1.msra.mxu0 0.0
        %5617 = vmatprep.subr.mxu0 0.0
        %5618 = vmatpush1.msra.mxu0 0.0
        %5619 = vmatprep.subr.mxu0 0.0
        %5620 = vmatpush1.msra.mxu0 0.0
        %5621 = vmatprep.subr.mxu0 0.0
        %5622 = vmatpush1.msra.mxu0 0.0
        %5623 = vmatprep.subr.mxu0 0.0
        %5624 = vmatpush1.msra.mxu0 0.0
        %5625 = vmatprep.subr.mxu0 0.0
        %5626 = vmatpush1.msra.mxu0 0.0
        %5627 = vmatprep.subr.mxu0 0.0
        %5628 = vmatpush1.msra.mxu0 0.0
        %5629 = vmatprep.subr.mxu0 0.0
        %5630 = vmatpush1.msra.mxu0 0.0
        %5631 = vmatprep.subr.mxu0 0.0
        %5632 = vmatpush1.msra.mxu0 %v5614
        %5633 = vmatprep.subr.mxu0 0.0
        %5634 = vmatpush1.msra.mxu0 %v5613
        %5635 = vmatprep.subr.mxu0 0.0
        %5636 = vmatpush1.msra.mxu0 %v5612
        %5637 = vmatprep.subr.mxu0 0.0
        %5638 = vmatpush1.msra.mxu0 %v5611
        %5639 = vmatprep.subr.mxu0 0.0
        %5640 = vmatpush1.msra.mxu0 %v5610
        %5641 = vmatprep.subr.mxu0 0.0
        %5642 = vmatpush1.msra.mxu0 %v5609
        %5643 = vmatprep.subr.mxu0 0.0
        %5644 = vmatpush1.msra.mxu0 %v5608
        %5645 = vmatprep.subr.mxu0 0.0
        %5646 = vmatpush1.msra.mxu0 %v5607
        %5647 = vmatprep.subr.mxu0 0.0
        %5648 = vmatpush2.msra.mxu0 0.0
        %5649 = vmatprep.subr.mxu0 0.0
        %5650 = vmatpush2.msra.mxu0 0.0
        %5651 = vmatprep.subr.mxu0 0.0
        %5652 = vmatpush2.msra.mxu0 0.0
        %5653 = vmatprep.subr.mxu0 0.0
        %5654 = vmatpush2.msra.mxu0 0.0
        %5655 = vmatprep.subr.mxu0 0.0
        %5656 = vmatpush2.msra.mxu0 0.0
        %5657 = vmatprep.subr.mxu0 0.0
        %5658 = vmatpush2.msra.mxu0 0.0
        %5659 = vmatprep.subr.mxu0 0.0
        %5660 = vmatpush2.msra.mxu0 0.0
        %5661 = vmatprep.subr.mxu0 0.0
        %5662 = vmatpush2.msra.mxu0 0.0
        %5663 = vmatprep.subr.mxu0 0.0
        %5664 = vmatpush2.msra.mxu0 0.0
        %5665 = vmatprep.subr.mxu0 0.0
        %5666 = vmatpush2.msra.mxu0 0.0
        %5667 = vmatprep.subr.mxu0 0.0
        %5668 = vmatpush2.msra.mxu0 0.0
        %5669 = vmatprep.subr.mxu0 0.0
        %5670 = vmatpush2.msra.mxu0 0.0
        %5671 = vmatprep.subr.mxu0 0.0
        %5672 = vmatpush2.msra.mxu0 0.0
        %5673 = vmatprep.subr.mxu0 0.0
        %5674 = vmatpush2.msra.mxu0 0.0
        %5675 = vmatprep.subr.mxu0 0.0
        %5676 = vmatpush2.msra.mxu0 0.0
        %5677 = vmatprep.subr.mxu0 0.0
        %5678 = vmatpush2.msra.mxu0 0.0
        %5679 = vmatprep.mubr.f32.mxu0 0.0
        %5680 = vmatmul.mubr.f32.gmra.mxu0 %v3840
        %v5681 = vpop.f32.mrf.mxu0
        %v5682 = vadd.f32 0.0, %v5681
        %v5683 = vpop.f32.mrf.mxu0
        %5684 = vmatprep.mubr.f32.mxu0 0.0
        %5685 = vmatmul.mubr.f32.gmra.mxu0 %v3843
        %v5686 = vpop.f32.mrf.mxu0
        %v5687 = vadd.f32 0.0, %v5686
        %v5688 = vpop.f32.mrf.mxu0
        %5689 = vmatprep.mubr.f32.mxu0 0.0
        %5690 = vmatmul.mubr.f32.gmra.mxu0 %v3846
        %v5691 = vpop.f32.mrf.mxu0
        %v5692 = vadd.f32 0.0, %v5691
        %v5693 = vpop.f32.mrf.mxu0
        %5694 = vmatprep.mubr.f32.mxu0 0.0
        %5695 = vmatmul.mubr.f32.gmra.mxu0 %v3849
        %v5696 = vpop.f32.mrf.mxu0
        %v5697 = vadd.f32 0.0, %v5696
        %v5698 = vpop.f32.mrf.mxu0
        %5699 = vdwg.mxu0
        %5700 = vst.msk [vmem:[#allocation2 + $0x240] sm:$0xff] %vm512, %v5682
        %5701 = vst.msk [vmem:[#allocation2 + $0x248] sm:$0xff] %vm512, %v5687
        %5702 = vst.msk [vmem:[#allocation2 + $0x250] sm:$0xff] %vm512, %v5692
        %5703 = vst.msk [vmem:[#allocation2 + $0x258] sm:$0x1] %vm1685, %v5697
        %s5704 = scalar_lea.vmem %s10, 1216
        %v5705 = vld [vmem:[%s5704] sm:$0xff]
        %v5706 = vld [vmem:[%s5704 + $0x8] sm:$0xff]
        %v5707 = vld [vmem:[%s5704 + $0x10] sm:$0xff]
        %v5708 = vld [vmem:[%s5704 + $0x18] sm:$0xff]
        %v5709 = vld [vmem:[%s5704 + $0x20] sm:$0xff]
        %v5710 = vld [vmem:[%s5704 + $0x28] sm:$0xff]
        %v5711 = vld [vmem:[%s5704 + $0x30] sm:$0xff]
        %v5712 = vld [vmem:[%s5704 + $0x38] sm:$0xff]
        %5713 = vmatprep.subr.mxu0 0.0
        %5714 = vmatpush1.msra.mxu0 0.0
        %5715 = vmatprep.subr.mxu0 0.0
        %5716 = vmatpush1.msra.mxu0 0.0
        %5717 = vmatprep.subr.mxu0 0.0
        %5718 = vmatpush1.msra.mxu0 0.0
        %5719 = vmatprep.subr.mxu0 0.0
        %5720 = vmatpush1.msra.mxu0 0.0
        %5721 = vmatprep.subr.mxu0 0.0
        %5722 = vmatpush1.msra.mxu0 0.0
        %5723 = vmatprep.subr.mxu0 0.0
        %5724 = vmatpush1.msra.mxu0 0.0
        %5725 = vmatprep.subr.mxu0 0.0
        %5726 = vmatpush1.msra.mxu0 0.0
        %5727 = vmatprep.subr.mxu0 0.0
        %5728 = vmatpush1.msra.mxu0 0.0
        %5729 = vmatprep.subr.mxu0 0.0
        %5730 = vmatpush1.msra.mxu0 %v5712
        %5731 = vmatprep.subr.mxu0 0.0
        %5732 = vmatpush1.msra.mxu0 %v5711
        %5733 = vmatprep.subr.mxu0 0.0
        %5734 = vmatpush1.msra.mxu0 %v5710
        %5735 = vmatprep.subr.mxu0 0.0
        %5736 = vmatpush1.msra.mxu0 %v5709
        %5737 = vmatprep.subr.mxu0 0.0
        %5738 = vmatpush1.msra.mxu0 %v5708
        %5739 = vmatprep.subr.mxu0 0.0
        %5740 = vmatpush1.msra.mxu0 %v5707
        %5741 = vmatprep.subr.mxu0 0.0
        %5742 = vmatpush1.msra.mxu0 %v5706
        %5743 = vmatprep.subr.mxu0 0.0
        %5744 = vmatpush1.msra.mxu0 %v5705
        %5745 = vmatprep.subr.mxu0 0.0
        %5746 = vmatpush2.msra.mxu0 0.0
        %5747 = vmatprep.subr.mxu0 0.0
        %5748 = vmatpush2.msra.mxu0 0.0
        %5749 = vmatprep.subr.mxu0 0.0
        %5750 = vmatpush2.msra.mxu0 0.0
        %5751 = vmatprep.subr.mxu0 0.0
        %5752 = vmatpush2.msra.mxu0 0.0
        %5753 = vmatprep.subr.mxu0 0.0
        %5754 = vmatpush2.msra.mxu0 0.0
        %5755 = vmatprep.subr.mxu0 0.0
        %5756 = vmatpush2.msra.mxu0 0.0
        %5757 = vmatprep.subr.mxu0 0.0
        %5758 = vmatpush2.msra.mxu0 0.0
        %5759 = vmatprep.subr.mxu0 0.0
        %5760 = vmatpush2.msra.mxu0 0.0
        %5761 = vmatprep.subr.mxu0 0.0
        %5762 = vmatpush2.msra.mxu0 0.0
        %5763 = vmatprep.subr.mxu0 0.0
        %5764 = vmatpush2.msra.mxu0 0.0
        %5765 = vmatprep.subr.mxu0 0.0
        %5766 = vmatpush2.msra.mxu0 0.0
        %5767 = vmatprep.subr.mxu0 0.0
        %5768 = vmatpush2.msra.mxu0 0.0
        %5769 = vmatprep.subr.mxu0 0.0
        %5770 = vmatpush2.msra.mxu0 0.0
        %5771 = vmatprep.subr.mxu0 0.0
        %5772 = vmatpush2.msra.mxu0 0.0
        %5773 = vmatprep.subr.mxu0 0.0
        %5774 = vmatpush2.msra.mxu0 0.0
        %5775 = vmatprep.subr.mxu0 0.0
        %5776 = vmatpush2.msra.mxu0 0.0
        %5777 = vmatprep.mubr.f32.mxu0 0.0
        %5778 = vmatmul.mubr.f32.gmra.mxu0 %v3840
        %v5779 = vpop.f32.mrf.mxu0
        %v5780 = vadd.f32 0.0, %v5779
        %v5781 = vpop.f32.mrf.mxu0
        %5782 = vmatprep.mubr.f32.mxu0 0.0
        %5783 = vmatmul.mubr.f32.gmra.mxu0 %v3843
        %v5784 = vpop.f32.mrf.mxu0
        %v5785 = vadd.f32 0.0, %v5784
        %v5786 = vpop.f32.mrf.mxu0
        %5787 = vmatprep.mubr.f32.mxu0 0.0
        %5788 = vmatmul.mubr.f32.gmra.mxu0 %v3846
        %v5789 = vpop.f32.mrf.mxu0
        %v5790 = vadd.f32 0.0, %v5789
        %v5791 = vpop.f32.mrf.mxu0
        %5792 = vmatprep.mubr.f32.mxu0 0.0
        %5793 = vmatmul.mubr.f32.gmra.mxu0 %v3849
        %v5794 = vpop.f32.mrf.mxu0
        %v5795 = vadd.f32 0.0, %v5794
        %v5796 = vpop.f32.mrf.mxu0
        %5797 = vdwg.mxu0
        %5798 = vst.msk [vmem:[#allocation2 + $0x260] sm:$0xff] %vm512, %v5780
        %5799 = vst.msk [vmem:[#allocation2 + $0x268] sm:$0xff] %vm512, %v5785
        %5800 = vst.msk [vmem:[#allocation2 + $0x270] sm:$0xff] %vm512, %v5790
        %5801 = vst.msk [vmem:[#allocation2 + $0x278] sm:$0x1] %vm1685, %v5795
        %s5802 = scalar_lea.vmem %s10, 1280
        %v5803 = vld [vmem:[%s5802] sm:$0xff]
        %v5804 = vld [vmem:[%s5802 + $0x8] sm:$0xff]
        %v5805 = vld [vmem:[%s5802 + $0x10] sm:$0xff]
        %v5806 = vld [vmem:[%s5802 + $0x18] sm:$0xff]
        %v5807 = vld [vmem:[%s5802 + $0x20] sm:$0xff]
        %v5808 = vld [vmem:[%s5802 + $0x28] sm:$0xff]
        %v5809 = vld [vmem:[%s5802 + $0x30] sm:$0xff]
        %v5810 = vld [vmem:[%s5802 + $0x38] sm:$0xff]
        %5811 = vmatprep.subr.mxu0 0.0
        %5812 = vmatpush1.msra.mxu0 0.0
        %5813 = vmatprep.subr.mxu0 0.0
        %5814 = vmatpush1.msra.mxu0 0.0
        %5815 = vmatprep.subr.mxu0 0.0
        %5816 = vmatpush1.msra.mxu0 0.0
        %5817 = vmatprep.subr.mxu0 0.0
        %5818 = vmatpush1.msra.mxu0 0.0
        %5819 = vmatprep.subr.mxu0 0.0
        %5820 = vmatpush1.msra.mxu0 0.0
        %5821 = vmatprep.subr.mxu0 0.0
        %5822 = vmatpush1.msra.mxu0 0.0
        %5823 = vmatprep.subr.mxu0 0.0
        %5824 = vmatpush1.msra.mxu0 0.0
        %5825 = vmatprep.subr.mxu0 0.0
        %5826 = vmatpush1.msra.mxu0 0.0
        %5827 = vmatprep.subr.mxu0 0.0
        %5828 = vmatpush1.msra.mxu0 %v5810
        %5829 = vmatprep.subr.mxu0 0.0
        %5830 = vmatpush1.msra.mxu0 %v5809
        %5831 = vmatprep.subr.mxu0 0.0
        %5832 = vmatpush1.msra.mxu0 %v5808
        %5833 = vmatprep.subr.mxu0 0.0
        %5834 = vmatpush1.msra.mxu0 %v5807
        %5835 = vmatprep.subr.mxu0 0.0
        %5836 = vmatpush1.msra.mxu0 %v5806
        %5837 = vmatprep.subr.mxu0 0.0
        %5838 = vmatpush1.msra.mxu0 %v5805
        %5839 = vmatprep.subr.mxu0 0.0
        %5840 = vmatpush1.msra.mxu0 %v5804
        %5841 = vmatprep.subr.mxu0 0.0
        %5842 = vmatpush1.msra.mxu0 %v5803
        %5843 = vmatprep.subr.mxu0 0.0
        %5844 = vmatpush2.msra.mxu0 0.0
        %5845 = vmatprep.subr.mxu0 0.0
        %5846 = vmatpush2.msra.mxu0 0.0
        %5847 = vmatprep.subr.mxu0 0.0
        %5848 = vmatpush2.msra.mxu0 0.0
        %5849 = vmatprep.subr.mxu0 0.0
        %5850 = vmatpush2.msra.mxu0 0.0
        %5851 = vmatprep.subr.mxu0 0.0
        %5852 = vmatpush2.msra.mxu0 0.0
        %5853 = vmatprep.subr.mxu0 0.0
        %5854 = vmatpush2.msra.mxu0 0.0
        %5855 = vmatprep.subr.mxu0 0.0
        %5856 = vmatpush2.msra.mxu0 0.0
        %5857 = vmatprep.subr.mxu0 0.0
        %5858 = vmatpush2.msra.mxu0 0.0
        %5859 = vmatprep.subr.mxu0 0.0
        %5860 = vmatpush2.msra.mxu0 0.0
        %5861 = vmatprep.subr.mxu0 0.0
        %5862 = vmatpush2.msra.mxu0 0.0
        %5863 = vmatprep.subr.mxu0 0.0
        %5864 = vmatpush2.msra.mxu0 0.0
        %5865 = vmatprep.subr.mxu0 0.0
        %5866 = vmatpush2.msra.mxu0 0.0
        %5867 = vmatprep.subr.mxu0 0.0
        %5868 = vmatpush2.msra.mxu0 0.0
        %5869 = vmatprep.subr.mxu0 0.0
        %5870 = vmatpush2.msra.mxu0 0.0
        %5871 = vmatprep.subr.mxu0 0.0
        %5872 = vmatpush2.msra.mxu0 0.0
        %5873 = vmatprep.subr.mxu0 0.0
        %5874 = vmatpush2.msra.mxu0 0.0
        %5875 = vmatprep.mubr.f32.mxu0 0.0
        %5876 = vmatmul.mubr.f32.gmra.mxu0 %v3840
        %v5877 = vpop.f32.mrf.mxu0
        %v5878 = vadd.f32 0.0, %v5877
        %v5879 = vpop.f32.mrf.mxu0
        %5880 = vmatprep.mubr.f32.mxu0 0.0
        %5881 = vmatmul.mubr.f32.gmra.mxu0 %v3843
        %v5882 = vpop.f32.mrf.mxu0
        %v5883 = vadd.f32 0.0, %v5882
        %v5884 = vpop.f32.mrf.mxu0
        %5885 = vmatprep.mubr.f32.mxu0 0.0
        %5886 = vmatmul.mubr.f32.gmra.mxu0 %v3846
        %v5887 = vpop.f32.mrf.mxu0
        %v5888 = vadd.f32 0.0, %v5887
        %v5889 = vpop.f32.mrf.mxu0
        %5890 = vmatprep.mubr.f32.mxu0 0.0
        %5891 = vmatmul.mubr.f32.gmra.mxu0 %v3849
        %v5892 = vpop.f32.mrf.mxu0
        %v5893 = vadd.f32 0.0, %v5892
        %v5894 = vpop.f32.mrf.mxu0
        %5895 = vdwg.mxu0
        %5896 = vst.msk [vmem:[#allocation2 + $0x280] sm:$0xff] %vm512, %v5878
        %5897 = vst.msk [vmem:[#allocation2 + $0x288] sm:$0xff] %vm512, %v5883
        %5898 = vst.msk [vmem:[#allocation2 + $0x290] sm:$0xff] %vm512, %v5888
        %5899 = vst.msk [vmem:[#allocation2 + $0x298] sm:$0x1] %vm1685, %v5893
        %s5900 = scalar_lea.vmem %s10, 1344
        %v5901 = vld [vmem:[%s5900] sm:$0xff]
        %v5902 = vld [vmem:[%s5900 + $0x8] sm:$0xff]
        %v5903 = vld [vmem:[%s5900 + $0x10] sm:$0xff]
        %v5904 = vld [vmem:[%s5900 + $0x18] sm:$0xff]
        %v5905 = vld [vmem:[%s5900 + $0x20] sm:$0xff]
        %v5906 = vld [vmem:[%s5900 + $0x28] sm:$0xff]
        %v5907 = vld [vmem:[%s5900 + $0x30] sm:$0xff]
        %v5908 = vld [vmem:[%s5900 + $0x38] sm:$0xff]
        %5909 = vmatprep.subr.mxu0 0.0
        %5910 = vmatpush1.msra.mxu0 0.0
        %5911 = vmatprep.subr.mxu0 0.0
        %5912 = vmatpush1.msra.mxu0 0.0
        %5913 = vmatprep.subr.mxu0 0.0
        %5914 = vmatpush1.msra.mxu0 0.0
        %5915 = vmatprep.subr.mxu0 0.0
        %5916 = vmatpush1.msra.mxu0 0.0
        %5917 = vmatprep.subr.mxu0 0.0
        %5918 = vmatpush1.msra.mxu0 0.0
        %5919 = vmatprep.subr.mxu0 0.0
        %5920 = vmatpush1.msra.mxu0 0.0
        %5921 = vmatprep.subr.mxu0 0.0
        %5922 = vmatpush1.msra.mxu0 0.0
        %5923 = vmatprep.subr.mxu0 0.0
        %5924 = vmatpush1.msra.mxu0 0.0
        %5925 = vmatprep.subr.mxu0 0.0
        %5926 = vmatpush1.msra.mxu0 %v5908
        %5927 = vmatprep.subr.mxu0 0.0
        %5928 = vmatpush1.msra.mxu0 %v5907
        %5929 = vmatprep.subr.mxu0 0.0
        %5930 = vmatpush1.msra.mxu0 %v5906
        %5931 = vmatprep.subr.mxu0 0.0
        %5932 = vmatpush1.msra.mxu0 %v5905
        %5933 = vmatprep.subr.mxu0 0.0
        %5934 = vmatpush1.msra.mxu0 %v5904
        %5935 = vmatprep.subr.mxu0 0.0
        %5936 = vmatpush1.msra.mxu0 %v5903
        %5937 = vmatprep.subr.mxu0 0.0
        %5938 = vmatpush1.msra.mxu0 %v5902
        %5939 = vmatprep.subr.mxu0 0.0
        %5940 = vmatpush1.msra.mxu0 %v5901
        %5941 = vmatprep.subr.mxu0 0.0
        %5942 = vmatpush2.msra.mxu0 0.0
        %5943 = vmatprep.subr.mxu0 0.0
        %5944 = vmatpush2.msra.mxu0 0.0
        %5945 = vmatprep.subr.mxu0 0.0
        %5946 = vmatpush2.msra.mxu0 0.0
        %5947 = vmatprep.subr.mxu0 0.0
        %5948 = vmatpush2.msra.mxu0 0.0
        %5949 = vmatprep.subr.mxu0 0.0
        %5950 = vmatpush2.msra.mxu0 0.0
        %5951 = vmatprep.subr.mxu0 0.0
        %5952 = vmatpush2.msra.mxu0 0.0
        %5953 = vmatprep.subr.mxu0 0.0
        %5954 = vmatpush2.msra.mxu0 0.0
        %5955 = vmatprep.subr.mxu0 0.0
        %5956 = vmatpush2.msra.mxu0 0.0
        %5957 = vmatprep.subr.mxu0 0.0
        %5958 = vmatpush2.msra.mxu0 0.0
        %5959 = vmatprep.subr.mxu0 0.0
        %5960 = vmatpush2.msra.mxu0 0.0
        %5961 = vmatprep.subr.mxu0 0.0
        %5962 = vmatpush2.msra.mxu0 0.0
        %5963 = vmatprep.subr.mxu0 0.0
        %5964 = vmatpush2.msra.mxu0 0.0
        %5965 = vmatprep.subr.mxu0 0.0
        %5966 = vmatpush2.msra.mxu0 0.0
        %5967 = vmatprep.subr.mxu0 0.0
        %5968 = vmatpush2.msra.mxu0 0.0
        %5969 = vmatprep.subr.mxu0 0.0
        %5970 = vmatpush2.msra.mxu0 0.0
        %5971 = vmatprep.subr.mxu0 0.0
        %5972 = vmatpush2.msra.mxu0 0.0
        %5973 = vmatprep.mubr.f32.mxu0 0.0
        %5974 = vmatmul.mubr.f32.gmra.mxu0 %v3840
        %v5975 = vpop.f32.mrf.mxu0
        %v5976 = vadd.f32 0.0, %v5975
        %v5977 = vpop.f32.mrf.mxu0
        %5978 = vmatprep.mubr.f32.mxu0 0.0
        %5979 = vmatmul.mubr.f32.gmra.mxu0 %v3843
        %v5980 = vpop.f32.mrf.mxu0
        %v5981 = vadd.f32 0.0, %v5980
        %v5982 = vpop.f32.mrf.mxu0
        %5983 = vmatprep.mubr.f32.mxu0 0.0
        %5984 = vmatmul.mubr.f32.gmra.mxu0 %v3846
        %v5985 = vpop.f32.mrf.mxu0
        %v5986 = vadd.f32 0.0, %v5985
        %v5987 = vpop.f32.mrf.mxu0
        %5988 = vmatprep.mubr.f32.mxu0 0.0
        %5989 = vmatmul.mubr.f32.gmra.mxu0 %v3849
        %v5990 = vpop.f32.mrf.mxu0
        %v5991 = vadd.f32 0.0, %v5990
        %v5992 = vpop.f32.mrf.mxu0
        %5993 = vdwg.mxu0
        %5994 = vst.msk [vmem:[#allocation2 + $0x2a0] sm:$0xff] %vm512, %v5976
        %5995 = vst.msk [vmem:[#allocation2 + $0x2a8] sm:$0xff] %vm512, %v5981
        %5996 = vst.msk [vmem:[#allocation2 + $0x2b0] sm:$0xff] %vm512, %v5986
        %5997 = vst.msk [vmem:[#allocation2 + $0x2b8] sm:$0x1] %vm1685, %v5991
        %s5998 = scalar_lea.vmem %s10, 1408
        %v5999 = vld [vmem:[%s5998] sm:$0xff]
        %v6000 = vld [vmem:[%s5998 + $0x8] sm:$0xff]
        %v6001 = vld [vmem:[%s5998 + $0x10] sm:$0xff]
        %v6002 = vld [vmem:[%s5998 + $0x18] sm:$0xff]
        %v6003 = vld [vmem:[%s5998 + $0x20] sm:$0xff]
        %v6004 = vld [vmem:[%s5998 + $0x28] sm:$0xff]
        %v6005 = vld [vmem:[%s5998 + $0x30] sm:$0xff]
        %v6006 = vld [vmem:[%s5998 + $0x38] sm:$0xff]
        %6007 = vmatprep.subr.mxu0 0.0
        %6008 = vmatpush1.msra.mxu0 0.0
        %6009 = vmatprep.subr.mxu0 0.0
        %6010 = vmatpush1.msra.mxu0 0.0
        %6011 = vmatprep.subr.mxu0 0.0
        %6012 = vmatpush1.msra.mxu0 0.0
        %6013 = vmatprep.subr.mxu0 0.0
        %6014 = vmatpush1.msra.mxu0 0.0
        %6015 = vmatprep.subr.mxu0 0.0
        %6016 = vmatpush1.msra.mxu0 0.0
        %6017 = vmatprep.subr.mxu0 0.0
        %6018 = vmatpush1.msra.mxu0 0.0
        %6019 = vmatprep.subr.mxu0 0.0
        %6020 = vmatpush1.msra.mxu0 0.0
        %6021 = vmatprep.subr.mxu0 0.0
        %6022 = vmatpush1.msra.mxu0 0.0
        %6023 = vmatprep.subr.mxu0 0.0
        %6024 = vmatpush1.msra.mxu0 %v6006
        %6025 = vmatprep.subr.mxu0 0.0
        %6026 = vmatpush1.msra.mxu0 %v6005
        %6027 = vmatprep.subr.mxu0 0.0
        %6028 = vmatpush1.msra.mxu0 %v6004
        %6029 = vmatprep.subr.mxu0 0.0
        %6030 = vmatpush1.msra.mxu0 %v6003
        %6031 = vmatprep.subr.mxu0 0.0
        %6032 = vmatpush1.msra.mxu0 %v6002
        %6033 = vmatprep.subr.mxu0 0.0
        %6034 = vmatpush1.msra.mxu0 %v6001
        %6035 = vmatprep.subr.mxu0 0.0
        %6036 = vmatpush1.msra.mxu0 %v6000
        %6037 = vmatprep.subr.mxu0 0.0
        %6038 = vmatpush1.msra.mxu0 %v5999
        %6039 = vmatprep.subr.mxu0 0.0
        %6040 = vmatpush2.msra.mxu0 0.0
        %6041 = vmatprep.subr.mxu0 0.0
        %6042 = vmatpush2.msra.mxu0 0.0
        %6043 = vmatprep.subr.mxu0 0.0
        %6044 = vmatpush2.msra.mxu0 0.0
        %6045 = vmatprep.subr.mxu0 0.0
        %6046 = vmatpush2.msra.mxu0 0.0
        %6047 = vmatprep.subr.mxu0 0.0
        %6048 = vmatpush2.msra.mxu0 0.0
        %6049 = vmatprep.subr.mxu0 0.0
        %6050 = vmatpush2.msra.mxu0 0.0
        %6051 = vmatprep.subr.mxu0 0.0
        %6052 = vmatpush2.msra.mxu0 0.0
        %6053 = vmatprep.subr.mxu0 0.0
        %6054 = vmatpush2.msra.mxu0 0.0
        %6055 = vmatprep.subr.mxu0 0.0
        %6056 = vmatpush2.msra.mxu0 0.0
        %6057 = vmatprep.subr.mxu0 0.0
        %6058 = vmatpush2.msra.mxu0 0.0
        %6059 = vmatprep.subr.mxu0 0.0
        %6060 = vmatpush2.msra.mxu0 0.0
        %6061 = vmatprep.subr.mxu0 0.0
        %6062 = vmatpush2.msra.mxu0 0.0
        %6063 = vmatprep.subr.mxu0 0.0
        %6064 = vmatpush2.msra.mxu0 0.0
        %6065 = vmatprep.subr.mxu0 0.0
        %6066 = vmatpush2.msra.mxu0 0.0
        %6067 = vmatprep.subr.mxu0 0.0
        %6068 = vmatpush2.msra.mxu0 0.0
        %6069 = vmatprep.subr.mxu0 0.0
        %6070 = vmatpush2.msra.mxu0 0.0
        %6071 = vmatprep.mubr.f32.mxu0 0.0
        %6072 = vmatmul.mubr.f32.gmra.mxu0 %v3840
        %v6073 = vpop.f32.mrf.mxu0
        %v6074 = vadd.f32 0.0, %v6073
        %v6075 = vpop.f32.mrf.mxu0
        %6076 = vmatprep.mubr.f32.mxu0 0.0
        %6077 = vmatmul.mubr.f32.gmra.mxu0 %v3843
        %v6078 = vpop.f32.mrf.mxu0
        %v6079 = vadd.f32 0.0, %v6078
        %v6080 = vpop.f32.mrf.mxu0
        %6081 = vmatprep.mubr.f32.mxu0 0.0
        %6082 = vmatmul.mubr.f32.gmra.mxu0 %v3846
        %v6083 = vpop.f32.mrf.mxu0
        %v6084 = vadd.f32 0.0, %v6083
        %v6085 = vpop.f32.mrf.mxu0
        %6086 = vmatprep.mubr.f32.mxu0 0.0
        %6087 = vmatmul.mubr.f32.gmra.mxu0 %v3849
        %v6088 = vpop.f32.mrf.mxu0
        %v6089 = vadd.f32 0.0, %v6088
        %v6090 = vpop.f32.mrf.mxu0
        %6091 = vdwg.mxu0
        %6092 = vst.msk [vmem:[#allocation2 + $0x2c0] sm:$0xff] %vm512, %v6074
        %6093 = vst.msk [vmem:[#allocation2 + $0x2c8] sm:$0xff] %vm512, %v6079
        %6094 = vst.msk [vmem:[#allocation2 + $0x2d0] sm:$0xff] %vm512, %v6084
        %6095 = vst.msk [vmem:[#allocation2 + $0x2d8] sm:$0x1] %vm1685, %v6089
        %s6096 = scalar_lea.vmem %s10, 1472
        %v6097 = vld [vmem:[%s6096] sm:$0xff]
        %v6098 = vld [vmem:[%s6096 + $0x8] sm:$0xff]
        %v6099 = vld [vmem:[%s6096 + $0x10] sm:$0xff]
        %v6100 = vld [vmem:[%s6096 + $0x18] sm:$0xff]
        %v6101 = vld [vmem:[%s6096 + $0x20] sm:$0xff]
        %v6102 = vld [vmem:[%s6096 + $0x28] sm:$0xff]
        %v6103 = vld [vmem:[%s6096 + $0x30] sm:$0xff]
        %v6104 = vld [vmem:[%s6096 + $0x38] sm:$0xff]
        %6105 = vmatprep.subr.mxu0 0.0
        %6106 = vmatpush1.msra.mxu0 0.0
        %6107 = vmatprep.subr.mxu0 0.0
        %6108 = vmatpush1.msra.mxu0 0.0
        %6109 = vmatprep.subr.mxu0 0.0
        %6110 = vmatpush1.msra.mxu0 0.0
        %6111 = vmatprep.subr.mxu0 0.0
        %6112 = vmatpush1.msra.mxu0 0.0
        %6113 = vmatprep.subr.mxu0 0.0
        %6114 = vmatpush1.msra.mxu0 0.0
        %6115 = vmatprep.subr.mxu0 0.0
        %6116 = vmatpush1.msra.mxu0 0.0
        %6117 = vmatprep.subr.mxu0 0.0
        %6118 = vmatpush1.msra.mxu0 0.0
        %6119 = vmatprep.subr.mxu0 0.0
        %6120 = vmatpush1.msra.mxu0 0.0
        %6121 = vmatprep.subr.mxu0 0.0
        %6122 = vmatpush1.msra.mxu0 %v6104
        %6123 = vmatprep.subr.mxu0 0.0
        %6124 = vmatpush1.msra.mxu0 %v6103
        %6125 = vmatprep.subr.mxu0 0.0
        %6126 = vmatpush1.msra.mxu0 %v6102
        %6127 = vmatprep.subr.mxu0 0.0
        %6128 = vmatpush1.msra.mxu0 %v6101
        %6129 = vmatprep.subr.mxu0 0.0
        %6130 = vmatpush1.msra.mxu0 %v6100
        %6131 = vmatprep.subr.mxu0 0.0
        %6132 = vmatpush1.msra.mxu0 %v6099
        %6133 = vmatprep.subr.mxu0 0.0
        %6134 = vmatpush1.msra.mxu0 %v6098
        %6135 = vmatprep.subr.mxu0 0.0
        %6136 = vmatpush1.msra.mxu0 %v6097
        %6137 = vmatprep.subr.mxu0 0.0
        %6138 = vmatpush2.msra.mxu0 0.0
        %6139 = vmatprep.subr.mxu0 0.0
        %6140 = vmatpush2.msra.mxu0 0.0
        %6141 = vmatprep.subr.mxu0 0.0
        %6142 = vmatpush2.msra.mxu0 0.0
        %6143 = vmatprep.subr.mxu0 0.0
        %6144 = vmatpush2.msra.mxu0 0.0
        %6145 = vmatprep.subr.mxu0 0.0
        %6146 = vmatpush2.msra.mxu0 0.0
        %6147 = vmatprep.subr.mxu0 0.0
        %6148 = vmatpush2.msra.mxu0 0.0
        %6149 = vmatprep.subr.mxu0 0.0
        %6150 = vmatpush2.msra.mxu0 0.0
        %6151 = vmatprep.subr.mxu0 0.0
        %6152 = vmatpush2.msra.mxu0 0.0
        %6153 = vmatprep.subr.mxu0 0.0
        %6154 = vmatpush2.msra.mxu0 0.0
        %6155 = vmatprep.subr.mxu0 0.0
        %6156 = vmatpush2.msra.mxu0 0.0
        %6157 = vmatprep.subr.mxu0 0.0
        %6158 = vmatpush2.msra.mxu0 0.0
        %6159 = vmatprep.subr.mxu0 0.0
        %6160 = vmatpush2.msra.mxu0 0.0
        %6161 = vmatprep.subr.mxu0 0.0
        %6162 = vmatpush2.msra.mxu0 0.0
        %6163 = vmatprep.subr.mxu0 0.0
        %6164 = vmatpush2.msra.mxu0 0.0
        %6165 = vmatprep.subr.mxu0 0.0
        %6166 = vmatpush2.msra.mxu0 0.0
        %6167 = vmatprep.subr.mxu0 0.0
        %6168 = vmatpush2.msra.mxu0 0.0
        %6169 = vmatprep.mubr.f32.mxu0 0.0
        %6170 = vmatmul.mubr.f32.gmra.mxu0 %v3840
        %v6171 = vpop.f32.mrf.mxu0
        %v6172 = vadd.f32 0.0, %v6171
        %v6173 = vpop.f32.mrf.mxu0
        %6174 = vmatprep.mubr.f32.mxu0 0.0
        %6175 = vmatmul.mubr.f32.gmra.mxu0 %v3843
        %v6176 = vpop.f32.mrf.mxu0
        %v6177 = vadd.f32 0.0, %v6176
        %v6178 = vpop.f32.mrf.mxu0
        %6179 = vmatprep.mubr.f32.mxu0 0.0
        %6180 = vmatmul.mubr.f32.gmra.mxu0 %v3846
        %v6181 = vpop.f32.mrf.mxu0
        %v6182 = vadd.f32 0.0, %v6181
        %v6183 = vpop.f32.mrf.mxu0
        %6184 = vmatprep.mubr.f32.mxu0 0.0
        %6185 = vmatmul.mubr.f32.gmra.mxu0 %v3849
        %v6186 = vpop.f32.mrf.mxu0
        %v6187 = vadd.f32 0.0, %v6186
        %v6188 = vpop.f32.mrf.mxu0
        %6189 = vdwg.mxu0
        %6190 = vst.msk [vmem:[#allocation2 + $0x2e0] sm:$0xff] %vm512, %v6172
        %6191 = vst.msk [vmem:[#allocation2 + $0x2e8] sm:$0xff] %vm512, %v6177
        %6192 = vst.msk [vmem:[#allocation2 + $0x2f0] sm:$0xff] %vm512, %v6182
        %6193 = vst.msk [vmem:[#allocation2 + $0x2f8] sm:$0x1] %vm1685, %v6187
        %s6194 = scalar_lea.vmem %s10, 1536
        %v6195 = vld [vmem:[%s6194] sm:$0xff]
        %v6196 = vld [vmem:[%s6194 + $0x8] sm:$0xff]
        %v6197 = vld [vmem:[%s6194 + $0x10] sm:$0xff]
        %v6198 = vld [vmem:[%s6194 + $0x18] sm:$0xff]
        %v6199 = vld [vmem:[%s6194 + $0x20] sm:$0xff]
        %v6200 = vld [vmem:[%s6194 + $0x28] sm:$0xff]
        %v6201 = vld [vmem:[%s6194 + $0x30] sm:$0xff]
        %v6202 = vld [vmem:[%s6194 + $0x38] sm:$0xff]
        %6203 = vmatprep.subr.mxu0 0.0
        %6204 = vmatpush1.msra.mxu0 0.0
        %6205 = vmatprep.subr.mxu0 0.0
        %6206 = vmatpush1.msra.mxu0 0.0
        %6207 = vmatprep.subr.mxu0 0.0
        %6208 = vmatpush1.msra.mxu0 0.0
        %6209 = vmatprep.subr.mxu0 0.0
        %6210 = vmatpush1.msra.mxu0 0.0
        %6211 = vmatprep.subr.mxu0 0.0
        %6212 = vmatpush1.msra.mxu0 0.0
        %6213 = vmatprep.subr.mxu0 0.0
        %6214 = vmatpush1.msra.mxu0 0.0
        %6215 = vmatprep.subr.mxu0 0.0
        %6216 = vmatpush1.msra.mxu0 0.0
        %6217 = vmatprep.subr.mxu0 0.0
        %6218 = vmatpush1.msra.mxu0 0.0
        %6219 = vmatprep.subr.mxu0 0.0
        %6220 = vmatpush1.msra.mxu0 %v6202
        %6221 = vmatprep.subr.mxu0 0.0
        %6222 = vmatpush1.msra.mxu0 %v6201
        %6223 = vmatprep.subr.mxu0 0.0
        %6224 = vmatpush1.msra.mxu0 %v6200
        %6225 = vmatprep.subr.mxu0 0.0
        %6226 = vmatpush1.msra.mxu0 %v6199
        %6227 = vmatprep.subr.mxu0 0.0
        %6228 = vmatpush1.msra.mxu0 %v6198
        %6229 = vmatprep.subr.mxu0 0.0
        %6230 = vmatpush1.msra.mxu0 %v6197
        %6231 = vmatprep.subr.mxu0 0.0
        %6232 = vmatpush1.msra.mxu0 %v6196
        %6233 = vmatprep.subr.mxu0 0.0
        %6234 = vmatpush1.msra.mxu0 %v6195
        %6235 = vmatprep.subr.mxu0 0.0
        %6236 = vmatpush2.msra.mxu0 0.0
        %6237 = vmatprep.subr.mxu0 0.0
        %6238 = vmatpush2.msra.mxu0 0.0
        %6239 = vmatprep.subr.mxu0 0.0
        %6240 = vmatpush2.msra.mxu0 0.0
        %6241 = vmatprep.subr.mxu0 0.0
        %6242 = vmatpush2.msra.mxu0 0.0
        %6243 = vmatprep.subr.mxu0 0.0
        %6244 = vmatpush2.msra.mxu0 0.0
        %6245 = vmatprep.subr.mxu0 0.0
        %6246 = vmatpush2.msra.mxu0 0.0
        %6247 = vmatprep.subr.mxu0 0.0
        %6248 = vmatpush2.msra.mxu0 0.0
        %6249 = vmatprep.subr.mxu0 0.0
        %6250 = vmatpush2.msra.mxu0 0.0
        %6251 = vmatprep.subr.mxu0 0.0
        %6252 = vmatpush2.msra.mxu0 0.0
        %6253 = vmatprep.subr.mxu0 0.0
        %6254 = vmatpush2.msra.mxu0 0.0
        %6255 = vmatprep.subr.mxu0 0.0
        %6256 = vmatpush2.msra.mxu0 0.0
        %6257 = vmatprep.subr.mxu0 0.0
        %6258 = vmatpush2.msra.mxu0 0.0
        %6259 = vmatprep.subr.mxu0 0.0
        %6260 = vmatpush2.msra.mxu0 0.0
        %6261 = vmatprep.subr.mxu0 0.0
        %6262 = vmatpush2.msra.mxu0 0.0
        %6263 = vmatprep.subr.mxu0 0.0
        %6264 = vmatpush2.msra.mxu0 0.0
        %6265 = vmatprep.subr.mxu0 0.0
        %6266 = vmatpush2.msra.mxu0 0.0
        %6267 = vmatprep.mubr.f32.mxu0 0.0
        %6268 = vmatmul.mubr.f32.gmra.mxu0 %v3840
        %v6269 = vpop.f32.mrf.mxu0
        %v6270 = vadd.f32 0.0, %v6269
        %v6271 = vpop.f32.mrf.mxu0
        %6272 = vmatprep.mubr.f32.mxu0 0.0
        %6273 = vmatmul.mubr.f32.gmra.mxu0 %v3843
        %v6274 = vpop.f32.mrf.mxu0
        %v6275 = vadd.f32 0.0, %v6274
        %v6276 = vpop.f32.mrf.mxu0
        %6277 = vmatprep.mubr.f32.mxu0 0.0
        %6278 = vmatmul.mubr.f32.gmra.mxu0 %v3846
        %v6279 = vpop.f32.mrf.mxu0
        %v6280 = vadd.f32 0.0, %v6279
        %v6281 = vpop.f32.mrf.mxu0
        %6282 = vmatprep.mubr.f32.mxu0 0.0
        %6283 = vmatmul.mubr.f32.gmra.mxu0 %v3849
        %v6284 = vpop.f32.mrf.mxu0
        %v6285 = vadd.f32 0.0, %v6284
        %v6286 = vpop.f32.mrf.mxu0
        %6287 = vdwg.mxu0
        %6288 = vst.msk [vmem:[#allocation2 + $0x300] sm:$0xff] %vm512, %v6270
        %6289 = vst.msk [vmem:[#allocation2 + $0x308] sm:$0xff] %vm512, %v6275
        %6290 = vst.msk [vmem:[#allocation2 + $0x310] sm:$0xff] %vm512, %v6280
        %6291 = vst.msk [vmem:[#allocation2 + $0x318] sm:$0x1] %vm1685, %v6285
        %v6292 = vld [vmem:[%s12] sm:$0xff]
        %v6293 = vld [vmem:[%s12 + $0x8] sm:$0xff]
        %v6294 = vld [vmem:[%s12 + $0x10] sm:$0xff]
        %v6295 = vld [vmem:[%s12 + $0x18] sm:$0xff]
        %v6296 = vld [vmem:[%s12 + $0x20] sm:$0xff]
        %v6297 = vld [vmem:[%s12 + $0x28] sm:$0xff]
        %v6298 = vld [vmem:[%s12 + $0x30] sm:$0xff]
        %v6299 = vld [vmem:[%s12 + $0x38] sm:$0xff]
        %v6300 = vld [vmem:[%s12 + $0x40] sm:$0xff]
        %v6301 = vld [vmem:[%s12 + $0x48] sm:$0xff]
        %v6302 = vld [vmem:[%s12 + $0x50] sm:$0xff]
        %v6303 = vld [vmem:[%s12 + $0x58] sm:$0xff]
        %v6304 = vld [vmem:[%s12 + $0x60] sm:$0xff]
        %v6305 = vld [vmem:[%s12 + $0x68] sm:$0xff]
        %v6306 = vld [vmem:[%s12 + $0x70] sm:$0xff]
        %v6307 = vld [vmem:[%s12 + $0x78] sm:$0xff]
        %v6308 = vld [vmem:[%s12 + $0x80] sm:$0xff]
        %v6309 = vld [vmem:[%s12 + $0x88] sm:$0xff]
        %v6310 = vld [vmem:[%s12 + $0x90] sm:$0xff]
        %v6311 = vld [vmem:[%s12 + $0x98] sm:$0xff]
        %v6312 = vld [vmem:[%s12 + $0xa0] sm:$0xff]
        %v6313 = vld [vmem:[%s12 + $0xa8] sm:$0xff]
        %v6314 = vld [vmem:[%s12 + $0xb0] sm:$0xff]
        %v6315 = vld [vmem:[%s12 + $0xb8] sm:$0xff]
        %v6316 = vld [vmem:[%s12 + $0xc0] sm:$0xff]
        %v6317 = vld [vmem:[%s12 + $0xc8] sm:$0xff]
        %v6318 = vld [vmem:[%s12 + $0xd0] sm:$0xff]
        %v6319 = vld [vmem:[%s12 + $0xd8] sm:$0xff]
        %v6320 = vld [vmem:[%s12 + $0xe0] sm:$0xff]
        %v6321 = vld [vmem:[%s12 + $0xe8] sm:$0xff]
        %v6322 = vld [vmem:[%s12 + $0xf0] sm:$0xff]
        %v6323 = vld [vmem:[%s12 + $0xf8] sm:$0xff]
        %v6324 = vld [vmem:[%s12 + $0x100] sm:$0xff]
        %v6325 = vld [vmem:[%s12 + $0x108] sm:$0xff]
        %v6326 = vld [vmem:[%s12 + $0x110] sm:$0xff]
        %v6327 = vld [vmem:[%s12 + $0x118] sm:$0xff]
        %v6328 = vld [vmem:[%s12 + $0x120] sm:$0xff]
        %v6329 = vld [vmem:[%s12 + $0x128] sm:$0xff]
        %v6330 = vld [vmem:[%s12 + $0x130] sm:$0xff]
        %v6331 = vld [vmem:[%s12 + $0x138] sm:$0xff]
        %v6332 = vld [vmem:[%s12 + $0x140] sm:$0xff]
        %v6333 = vld [vmem:[%s12 + $0x148] sm:$0xff]
        %v6334 = vld [vmem:[%s12 + $0x150] sm:$0xff]
        %v6335 = vld [vmem:[%s12 + $0x158] sm:$0xff]
        %v6336 = vld [vmem:[%s12 + $0x160] sm:$0xff]
        %v6337 = vld [vmem:[%s12 + $0x168] sm:$0xff]
        %v6338 = vld [vmem:[%s12 + $0x170] sm:$0xff]
        %v6339 = vld [vmem:[%s12 + $0x178] sm:$0xff]
        %v6340 = vld [vmem:[%s12 + $0x180] sm:$0xff]
        %v6341 = vld [vmem:[%s12 + $0x188] sm:$0xff]
        %v6342 = vld [vmem:[%s12 + $0x190] sm:$0xff]
        %v6343 = vld [vmem:[%s12 + $0x198] sm:$0xff]
        %v6344 = vld [vmem:[%s12 + $0x1a0] sm:$0xff]
        %v6345 = vld [vmem:[%s12 + $0x1a8] sm:$0xff]
        %v6346 = vld [vmem:[%s12 + $0x1b0] sm:$0xff]
        %v6347 = vld [vmem:[%s12 + $0x1b8] sm:$0xff]
        %v6348 = vld [vmem:[%s12 + $0x1c0] sm:$0xff]
        %v6349 = vld [vmem:[%s12 + $0x1c8] sm:$0xff]
        %v6350 = vld [vmem:[%s12 + $0x1d0] sm:$0xff]
        %v6351 = vld [vmem:[%s12 + $0x1d8] sm:$0xff]
        %v6352 = vld [vmem:[%s12 + $0x1e0] sm:$0xff]
        %v6353 = vld [vmem:[%s12 + $0x1e8] sm:$0xff]
        %v6354 = vld [vmem:[%s12 + $0x1f0] sm:$0xff]
        %v6355 = vld [vmem:[%s12 + $0x1f8] sm:$0xff]
        %v6356 = vld [vmem:[%s12 + $0x200] sm:$0xff]
        %v6357 = vld [vmem:[%s12 + $0x208] sm:$0xff]
        %v6358 = vld [vmem:[%s12 + $0x210] sm:$0xff]
        %v6359 = vld [vmem:[%s12 + $0x218] sm:$0xff]
        %v6360 = vld [vmem:[%s12 + $0x220] sm:$0xff]
        %v6361 = vld [vmem:[%s12 + $0x228] sm:$0xff]
        %v6362 = vld [vmem:[%s12 + $0x230] sm:$0xff]
        %v6363 = vld [vmem:[%s12 + $0x238] sm:$0xff]
        %v6364 = vld [vmem:[%s12 + $0x240] sm:$0xff]
        %v6365 = vld [vmem:[%s12 + $0x248] sm:$0xff]
        %v6366 = vld [vmem:[%s12 + $0x250] sm:$0xff]
        %v6367 = vld [vmem:[%s12 + $0x258] sm:$0xff]
        %v6368 = vld [vmem:[%s12 + $0x260] sm:$0xff]
        %v6369 = vld [vmem:[%s12 + $0x268] sm:$0xff]
        %v6370 = vld [vmem:[%s12 + $0x270] sm:$0xff]
        %v6371 = vld [vmem:[%s12 + $0x278] sm:$0xff]
        %v6372 = vld [vmem:[%s12 + $0x280] sm:$0xff]
        %v6373 = vld [vmem:[%s12 + $0x288] sm:$0xff]
        %v6374 = vld [vmem:[%s12 + $0x290] sm:$0xff]
        %v6375 = vld [vmem:[%s12 + $0x298] sm:$0xff]
        %v6376 = vld [vmem:[%s12 + $0x2a0] sm:$0xff]
        %v6377 = vld [vmem:[%s12 + $0x2a8] sm:$0xff]
        %v6378 = vld [vmem:[%s12 + $0x2b0] sm:$0xff]
        %v6379 = vld [vmem:[%s12 + $0x2b8] sm:$0xff]
        %v6380 = vld [vmem:[%s12 + $0x2c0] sm:$0xff]
        %v6381 = vld [vmem:[%s12 + $0x2c8] sm:$0xff]
        %v6382 = vld [vmem:[%s12 + $0x2d0] sm:$0xff]
        %v6383 = vld [vmem:[%s12 + $0x2d8] sm:$0xff]
        %v6384 = vld [vmem:[%s12 + $0x2e0] sm:$0xff]
        %v6385 = vld [vmem:[%s12 + $0x2e8] sm:$0xff]
        %v6386 = vld [vmem:[%s12 + $0x2f0] sm:$0xff]
        %v6387 = vld [vmem:[%s12 + $0x2f8] sm:$0xff]
        %v6388 = vld [vmem:[%s12 + $0x300] sm:$0xff]
        %v6389 = vld [vmem:[%s12 + $0x308] sm:$0xff]
        %v6390 = vld [vmem:[%s12 + $0x310] sm:$0xff]
        %v6391 = vld [vmem:[%s12 + $0x318] sm:$0xff]
        %v6392 = vld [vmem:[%s12 + $0x320] sm:$0xff]
        %v6393 = vld [vmem:[%s12 + $0x328] sm:$0xff]
        %v6394 = vld [vmem:[%s12 + $0x330] sm:$0xff]
        %v6395 = vld [vmem:[%s12 + $0x338] sm:$0xff]
        %v6396 = vld [vmem:[%s12 + $0x340] sm:$0xff]
        %v6397 = vld [vmem:[%s12 + $0x348] sm:$0xff]
        %v6398 = vld [vmem:[%s12 + $0x350] sm:$0xff]
        %v6399 = vld [vmem:[%s12 + $0x358] sm:$0xff]
        %v6400 = vld [vmem:[%s12 + $0x360] sm:$0xff]
        %v6401 = vld [vmem:[%s12 + $0x368] sm:$0xff]
        %v6402 = vld [vmem:[%s12 + $0x370] sm:$0xff]
        %v6403 = vld [vmem:[%s12 + $0x378] sm:$0xff]
        %v6404 = vld [vmem:[%s12 + $0x380] sm:$0xff]
        %v6405 = vld [vmem:[%s12 + $0x388] sm:$0xff]
        %v6406 = vld [vmem:[%s12 + $0x390] sm:$0xff]
        %v6407 = vld [vmem:[%s12 + $0x398] sm:$0xff]
        %v6408 = vld [vmem:[%s12 + $0x3a0] sm:$0xff]
        %v6409 = vld [vmem:[%s12 + $0x3a8] sm:$0xff]
        %v6410 = vld [vmem:[%s12 + $0x3b0] sm:$0xff]
        %v6411 = vld [vmem:[%s12 + $0x3b8] sm:$0xff]
        %v6412 = vld [vmem:[%s12 + $0x3c0] sm:$0xff]
        %v6413 = vld [vmem:[%s12 + $0x3c8] sm:$0xff]
        %v6414 = vld [vmem:[%s12 + $0x3d0] sm:$0xff]
        %v6415 = vld [vmem:[%s12 + $0x3d8] sm:$0xff]
        %v6416 = vld [vmem:[%s12 + $0x3e0] sm:$0xff]
        %v6417 = vld [vmem:[%s12 + $0x3e8] sm:$0xff]
        %v6418 = vld [vmem:[%s12 + $0x3f0] sm:$0xff]
        %v6419 = vld [vmem:[%s12 + $0x3f8] sm:$0xff]
        %v6420 = vld [vmem:[%s12 + $0x400] sm:$0xff]
        %v6421 = vld [vmem:[%s12 + $0x408] sm:$0xff]
        %v6422 = vld [vmem:[%s12 + $0x410] sm:$0xff]
        %v6423 = vld [vmem:[%s12 + $0x418] sm:$0xff]
        %v6424 = vld [vmem:[%s12 + $0x420] sm:$0xff]
        %v6425 = vld [vmem:[%s12 + $0x428] sm:$0xff]
        %v6426 = vld [vmem:[%s12 + $0x430] sm:$0xff]
        %v6427 = vld [vmem:[%s12 + $0x438] sm:$0xff]
        %v6428 = vld [vmem:[%s12 + $0x440] sm:$0xff]
        %v6429 = vld [vmem:[%s12 + $0x448] sm:$0xff]
        %v6430 = vld [vmem:[%s12 + $0x450] sm:$0xff]
        %v6431 = vld [vmem:[%s12 + $0x458] sm:$0xff]
        %v6432 = vld [vmem:[%s12 + $0x460] sm:$0xff]
        %v6433 = vld [vmem:[%s12 + $0x468] sm:$0xff]
        %v6434 = vld [vmem:[%s12 + $0x470] sm:$0xff]
        %v6435 = vld [vmem:[%s12 + $0x478] sm:$0xff]
        %v6436 = vld [vmem:[%s12 + $0x480] sm:$0xff]
        %v6437 = vld [vmem:[%s12 + $0x488] sm:$0xff]
        %v6438 = vld [vmem:[%s12 + $0x490] sm:$0xff]
        %v6439 = vld [vmem:[%s12 + $0x498] sm:$0xff]
        %v6440 = vld [vmem:[%s12 + $0x4a0] sm:$0xff]
        %v6441 = vld [vmem:[%s12 + $0x4a8] sm:$0xff]
        %v6442 = vld [vmem:[%s12 + $0x4b0] sm:$0xff]
        %v6443 = vld [vmem:[%s12 + $0x4b8] sm:$0xff]
        %v6444 = vld [vmem:[%s12 + $0x4c0] sm:$0xff]
        %v6445 = vld [vmem:[%s12 + $0x4c8] sm:$0xff]
        %v6446 = vld [vmem:[%s12 + $0x4d0] sm:$0xff]
        %v6447 = vld [vmem:[%s12 + $0x4d8] sm:$0xff]
        %v6448 = vld [vmem:[%s12 + $0x4e0] sm:$0xff]
        %v6449 = vld [vmem:[%s12 + $0x4e8] sm:$0xff]
        %v6450 = vld [vmem:[%s12 + $0x4f0] sm:$0xff]
        %v6451 = vld [vmem:[%s12 + $0x4f8] sm:$0xff]
        %v6452 = vld [vmem:[%s12 + $0x500] sm:$0xff]
        %v6453 = vld [vmem:[%s12 + $0x508] sm:$0xff]
        %v6454 = vld [vmem:[%s12 + $0x510] sm:$0xff]
        %v6455 = vld [vmem:[%s12 + $0x518] sm:$0xff]
        %v6456 = vld [vmem:[%s12 + $0x520] sm:$0xff]
        %v6457 = vld [vmem:[%s12 + $0x528] sm:$0xff]
        %v6458 = vld [vmem:[%s12 + $0x530] sm:$0xff]
        %v6459 = vld [vmem:[%s12 + $0x538] sm:$0xff]
        %v6460 = vld [vmem:[%s12 + $0x540] sm:$0xff]
        %v6461 = vld [vmem:[%s12 + $0x548] sm:$0xff]
        %v6462 = vld [vmem:[%s12 + $0x550] sm:$0xff]
        %v6463 = vld [vmem:[%s12 + $0x558] sm:$0xff]
        %v6464 = vld [vmem:[%s12 + $0x560] sm:$0xff]
        %v6465 = vld [vmem:[%s12 + $0x568] sm:$0xff]
        %v6466 = vld [vmem:[%s12 + $0x570] sm:$0xff]
        %v6467 = vld [vmem:[%s12 + $0x578] sm:$0xff]
        %v6468 = vld [vmem:[%s12 + $0x580] sm:$0xff]
        %v6469 = vld [vmem:[%s12 + $0x588] sm:$0xff]
        %v6470 = vld [vmem:[%s12 + $0x590] sm:$0xff]
        %v6471 = vld [vmem:[%s12 + $0x598] sm:$0xff]
        %v6472 = vld [vmem:[%s12 + $0x5a0] sm:$0xff]
        %v6473 = vld [vmem:[%s12 + $0x5a8] sm:$0xff]
        %v6474 = vld [vmem:[%s12 + $0x5b0] sm:$0xff]
        %v6475 = vld [vmem:[%s12 + $0x5b8] sm:$0xff]
        %v6476 = vld [vmem:[%s12 + $0x5c0] sm:$0xff]
        %v6477 = vld [vmem:[%s12 + $0x5c8] sm:$0xff]
        %v6478 = vld [vmem:[%s12 + $0x5d0] sm:$0xff]
        %v6479 = vld [vmem:[%s12 + $0x5d8] sm:$0xff]
        %v6480 = vld [vmem:[%s12 + $0x5e0] sm:$0xff]
        %v6481 = vld [vmem:[%s12 + $0x5e8] sm:$0xff]
        %v6482 = vld [vmem:[%s12 + $0x5f0] sm:$0xff]
        %v6483 = vld [vmem:[%s12 + $0x5f8] sm:$0xff]
        %v6484 = vld [vmem:[%s12 + $0x600] sm:$0xff]
        %v6485 = vld [vmem:[%s12 + $0x608] sm:$0xff]
        %v6486 = vld [vmem:[%s12 + $0x610] sm:$0xff]
        %v6487 = vld [vmem:[%s12 + $0x618] sm:$0xff]
        %v6488 = vld [vmem:[%s12 + $0x620] sm:$0x1]
        %v6489 = vld [vmem:[%s12 + $0x628] sm:$0x1]
        %v6490 = vld [vmem:[%s12 + $0x630] sm:$0x1]
        %v6491 = vld [vmem:[%s12 + $0x638] sm:$0x1]
        %v6492 = vld [vmem:[%s12 + $0x640] sm:$0x1]
        %v6493 = vld [vmem:[%s12 + $0x648] sm:$0x1]
        %v6494 = vld [vmem:[%s12 + $0x650] sm:$0x1]
        %v6495 = vld [vmem:[#allocation2] sm:$0xff]
        %v6496 = vld [vmem:[#allocation2 + $0x8] sm:$0xff]
        %v6497 = vld [vmem:[#allocation2 + $0x10] sm:$0xff]
        %v6498 = vld [vmem:[#allocation2 + $0x18] sm:$0xff]
        %v6499 = vld [vmem:[#allocation2 + $0x20] sm:$0xff]
        %v6500 = vld [vmem:[#allocation2 + $0x28] sm:$0xff]
        %v6501 = vld [vmem:[#allocation2 + $0x30] sm:$0xff]
        %v6502 = vld [vmem:[#allocation2 + $0x38] sm:$0xff]
        %v6503 = vld [vmem:[#allocation2 + $0x40] sm:$0xff]
        %v6504 = vld [vmem:[#allocation2 + $0x48] sm:$0xff]
        %v6505 = vld [vmem:[#allocation2 + $0x50] sm:$0xff]
        %v6506 = vld [vmem:[#allocation2 + $0x58] sm:$0xff]
        %v6507 = vld [vmem:[#allocation2 + $0x60] sm:$0xff]
        %v6508 = vld [vmem:[#allocation2 + $0x68] sm:$0xff]
        %v6509 = vld [vmem:[#allocation2 + $0x70] sm:$0xff]
        %v6510 = vld [vmem:[#allocation2 + $0x78] sm:$0xff]
        %v6511 = vld [vmem:[#allocation2 + $0x80] sm:$0xff]
        %v6512 = vld [vmem:[#allocation2 + $0x88] sm:$0xff]
        %v6513 = vld [vmem:[#allocation2 + $0x90] sm:$0xff]
        %v6514 = vld [vmem:[#allocation2 + $0x98] sm:$0xff]
        %v6515 = vld [vmem:[#allocation2 + $0xa0] sm:$0xff]
        %v6516 = vld [vmem:[#allocation2 + $0xa8] sm:$0xff]
        %v6517 = vld [vmem:[#allocation2 + $0xb0] sm:$0xff]
        %v6518 = vld [vmem:[#allocation2 + $0xb8] sm:$0xff]
        %v6519 = vld [vmem:[#allocation2 + $0xc0] sm:$0xff]
        %v6520 = vld [vmem:[#allocation2 + $0xc8] sm:$0xff]
        %v6521 = vld [vmem:[#allocation2 + $0xd0] sm:$0xff]
        %v6522 = vld [vmem:[#allocation2 + $0xd8] sm:$0xff]
        %v6523 = vld [vmem:[#allocation2 + $0xe0] sm:$0xff]
        %v6524 = vld [vmem:[#allocation2 + $0xe8] sm:$0xff]
        %v6525 = vld [vmem:[#allocation2 + $0xf0] sm:$0xff]
        %v6526 = vld [vmem:[#allocation2 + $0xf8] sm:$0xff]
        %v6527 = vld [vmem:[#allocation2 + $0x100] sm:$0xff]
        %v6528 = vld [vmem:[#allocation2 + $0x108] sm:$0xff]
        %v6529 = vld [vmem:[#allocation2 + $0x110] sm:$0xff]
        %v6530 = vld [vmem:[#allocation2 + $0x118] sm:$0xff]
        %v6531 = vld [vmem:[#allocation2 + $0x120] sm:$0xff]
        %v6532 = vld [vmem:[#allocation2 + $0x128] sm:$0xff]
        %v6533 = vld [vmem:[#allocation2 + $0x130] sm:$0xff]
        %v6534 = vld [vmem:[#allocation2 + $0x138] sm:$0xff]
        %v6535 = vld [vmem:[#allocation2 + $0x140] sm:$0xff]
        %v6536 = vld [vmem:[#allocation2 + $0x148] sm:$0xff]
        %v6537 = vld [vmem:[#allocation2 + $0x150] sm:$0xff]
        %v6538 = vld [vmem:[#allocation2 + $0x158] sm:$0xff]
        %v6539 = vld [vmem:[#allocation2 + $0x160] sm:$0xff]
        %v6540 = vld [vmem:[#allocation2 + $0x168] sm:$0xff]
        %v6541 = vld [vmem:[#allocation2 + $0x170] sm:$0xff]
        %v6542 = vld [vmem:[#allocation2 + $0x178] sm:$0xff]
        %v6543 = vld [vmem:[#allocation2 + $0x180] sm:$0xff]
        %v6544 = vld [vmem:[#allocation2 + $0x188] sm:$0xff]
        %v6545 = vld [vmem:[#allocation2 + $0x190] sm:$0xff]
        %v6546 = vld [vmem:[#allocation2 + $0x198] sm:$0xff]
        %v6547 = vld [vmem:[#allocation2 + $0x1a0] sm:$0xff]
        %v6548 = vld [vmem:[#allocation2 + $0x1a8] sm:$0xff]
        %v6549 = vld [vmem:[#allocation2 + $0x1b0] sm:$0xff]
        %v6550 = vld [vmem:[#allocation2 + $0x1b8] sm:$0xff]
        %v6551 = vld [vmem:[#allocation2 + $0x1c0] sm:$0xff]
        %v6552 = vld [vmem:[#allocation2 + $0x1c8] sm:$0xff]
        %v6553 = vld [vmem:[#allocation2 + $0x1d0] sm:$0xff]
        %v6554 = vld [vmem:[#allocation2 + $0x1d8] sm:$0xff]
        %v6555 = vld [vmem:[#allocation2 + $0x1e0] sm:$0xff]
        %v6556 = vld [vmem:[#allocation2 + $0x1e8] sm:$0xff]
        %v6557 = vld [vmem:[#allocation2 + $0x1f0] sm:$0xff]
        %v6558 = vld [vmem:[#allocation2 + $0x1f8] sm:$0xff]
        %v6559 = vld [vmem:[#allocation2 + $0x200] sm:$0xff]
        %v6560 = vld [vmem:[#allocation2 + $0x208] sm:$0xff]
        %v6561 = vld [vmem:[#allocation2 + $0x210] sm:$0xff]
        %v6562 = vld [vmem:[#allocation2 + $0x218] sm:$0xff]
        %v6563 = vld [vmem:[#allocation2 + $0x220] sm:$0xff]
        %v6564 = vld [vmem:[#allocation2 + $0x228] sm:$0xff]
        %v6565 = vld [vmem:[#allocation2 + $0x230] sm:$0xff]
        %v6566 = vld [vmem:[#allocation2 + $0x238] sm:$0xff]
        %v6567 = vld [vmem:[#allocation2 + $0x240] sm:$0xff]
        %v6568 = vld [vmem:[#allocation2 + $0x248] sm:$0xff]
        %v6569 = vld [vmem:[#allocation2 + $0x250] sm:$0xff]
        %v6570 = vld [vmem:[#allocation2 + $0x258] sm:$0xff]
        %v6571 = vld [vmem:[#allocation2 + $0x260] sm:$0xff]
        %v6572 = vld [vmem:[#allocation2 + $0x268] sm:$0xff]
        %v6573 = vld [vmem:[#allocation2 + $0x270] sm:$0xff]
        %v6574 = vld [vmem:[#allocation2 + $0x278] sm:$0xff]
        %v6575 = vld [vmem:[#allocation2 + $0x280] sm:$0xff]
        %v6576 = vld [vmem:[#allocation2 + $0x288] sm:$0xff]
        %v6577 = vld [vmem:[#allocation2 + $0x290] sm:$0xff]
        %v6578 = vld [vmem:[#allocation2 + $0x298] sm:$0xff]
        %v6579 = vld [vmem:[#allocation2 + $0x2a0] sm:$0xff]
        %v6580 = vld [vmem:[#allocation2 + $0x2a8] sm:$0xff]
        %v6581 = vld [vmem:[#allocation2 + $0x2b0] sm:$0xff]
        %v6582 = vld [vmem:[#allocation2 + $0x2b8] sm:$0xff]
        %v6583 = vld [vmem:[#allocation2 + $0x2c0] sm:$0xff]
        %v6584 = vld [vmem:[#allocation2 + $0x2c8] sm:$0xff]
        %v6585 = vld [vmem:[#allocation2 + $0x2d0] sm:$0xff]
        %v6586 = vld [vmem:[#allocation2 + $0x2d8] sm:$0xff]
        %v6587 = vld [vmem:[#allocation2 + $0x2e0] sm:$0xff]
        %v6588 = vld [vmem:[#allocation2 + $0x2e8] sm:$0xff]
        %v6589 = vld [vmem:[#allocation2 + $0x2f0] sm:$0xff]
        %v6590 = vld [vmem:[#allocation2 + $0x2f8] sm:$0xff]
        %v6591 = vld [vmem:[#allocation2 + $0x300] sm:$0xff]
        %v6592 = vld [vmem:[#allocation2 + $0x308] sm:$0xff]
        %v6593 = vld [vmem:[#allocation2 + $0x310] sm:$0xff]
        %v6594 = vld [vmem:[#allocation2 + $0x318] sm:$0xff]
        %v6595 = vld [vmem:[%s11] sm:$0x1]
        %v6597 = vlaneseq
        %v6598 = vshrl.u32 %v6597, 7
        %v6599 = vsub.s32 0, %v6598
        %v6600 = vrot.slane %v6595, %v6599
        %v6603 = vsel %vm2520, %v6298, 0
        %v6606 = vsel %vm2520, %v6305, 0
        %v6609 = vsel %vm2520, %v6312, 0
        %v6612 = vsel %vm2520, %v6319, 0
        %v6615 = vsel %vm2520, %v6326, 0
        %v6618 = vsel %vm2520, %v6333, 0
        %v6621 = vsel %vm2520, %v6340, 0
        %v6624 = vsel %vm2520, %v6347, 0
        %v6627 = vsel %vm2520, %v6354, 0
        %v6630 = vsel %vm2520, %v6361, 0
        %v6633 = vsel %vm2520, %v6368, 0
        %v6636 = vsel %vm2520, %v6375, 0
        %v6639 = vsel %vm2520, %v6382, 0
        %v6642 = vsel %vm2520, %v6389, 0
        %v6645 = vsel %vm2520, %v6396, 0
        %v6648 = vsel %vm2520, %v6403, 0
        %v6651 = vsel %vm2520, %v6410, 0
        %v6654 = vsel %vm2520, %v6417, 0
        %v6657 = vsel %vm2520, %v6424, 0
        %v6660 = vsel %vm2520, %v6431, 0
        %v6663 = vsel %vm2520, %v6438, 0
        %v6666 = vsel %vm2520, %v6445, 0
        %v6669 = vsel %vm2520, %v6452, 0
        %v6672 = vsel %vm2520, %v6459, 0
        %v6675 = vsel %vm2520, %v6466, 0
        %v6678 = vsel %vm2520, %v6473, 0
        %v6681 = vsel %vm2520, %v6480, 0
        %v6684 = vsel %vm2520, %v6487, 0
        %v6687 = vsel %vm2520, %v6494, 0
        %6689 = vmatprep.subr.mxu0 0.0
        %6690 = vmatpush1.msra.mxu0 %v6510
        %6691 = vmatprep.subr.mxu0 0.0
        %6692 = vmatpush1.msra.mxu0 %v6509
        %6693 = vmatprep.subr.mxu0 0.0
        %6694 = vmatpush1.msra.mxu0 %v6508
        %6695 = vmatprep.subr.mxu0 0.0
        %6696 = vmatpush1.msra.mxu0 %v6507
        %6697 = vmatprep.subr.mxu0 0.0
        %6698 = vmatpush1.msra.mxu0 %v6506
        %6699 = vmatprep.subr.mxu0 0.0
        %6700 = vmatpush1.msra.mxu0 %v6505
        %6701 = vmatprep.subr.mxu0 0.0
        %6702 = vmatpush1.msra.mxu0 %v6504
        %6703 = vmatprep.subr.mxu0 0.0
        %6704 = vmatpush1.msra.mxu0 %v6503
        %6705 = vmatprep.subr.mxu0 0.0
        %6706 = vmatpush1.msra.mxu0 %v6502
        %6707 = vmatprep.subr.mxu0 0.0
        %6708 = vmatpush1.msra.mxu0 %v6501
        %6709 = vmatprep.subr.mxu0 0.0
        %6710 = vmatpush1.msra.mxu0 %v6500
        %6711 = vmatprep.subr.mxu0 0.0
        %6712 = vmatpush1.msra.mxu0 %v6499
        %6713 = vmatprep.subr.mxu0 0.0
        %6714 = vmatpush1.msra.mxu0 %v6498
        %6715 = vmatprep.subr.mxu0 0.0
        %6716 = vmatpush1.msra.mxu0 %v6497
        %6717 = vmatprep.subr.mxu0 0.0
        %6718 = vmatpush1.msra.mxu0 %v6496
        %6719 = vmatprep.subr.mxu0 0.0
        %6720 = vmatpush1.msra.mxu0 %v6495
        %6721 = vmatprep.subr.mxu0 0.0
        %6722 = vmatpush2.msra.mxu0 %v6526
        %6723 = vmatprep.subr.mxu0 0.0
        %6724 = vmatpush2.msra.mxu0 %v6525
        %6725 = vmatprep.subr.mxu0 0.0
        %6726 = vmatpush2.msra.mxu0 %v6524
        %6727 = vmatprep.subr.mxu0 0.0
        %6728 = vmatpush2.msra.mxu0 %v6523
        %6729 = vmatprep.subr.mxu0 0.0
        %6730 = vmatpush2.msra.mxu0 %v6522
        %6731 = vmatprep.subr.mxu0 0.0
        %6732 = vmatpush2.msra.mxu0 %v6521
        %6733 = vmatprep.subr.mxu0 0.0
        %6734 = vmatpush2.msra.mxu0 %v6520
        %6735 = vmatprep.subr.mxu0 0.0
        %6736 = vmatpush2.msra.mxu0 %v6519
        %6737 = vmatprep.subr.mxu0 0.0
        %6738 = vmatpush2.msra.mxu0 %v6518
        %6739 = vmatprep.subr.mxu0 0.0
        %6740 = vmatpush2.msra.mxu0 %v6517
        %6741 = vmatprep.subr.mxu0 0.0
        %6742 = vmatpush2.msra.mxu0 %v6516
        %6743 = vmatprep.subr.mxu0 0.0
        %6744 = vmatpush2.msra.mxu0 %v6515
        %6745 = vmatprep.subr.mxu0 0.0
        %6746 = vmatpush2.msra.mxu0 %v6514
        %6747 = vmatprep.subr.mxu0 0.0
        %6748 = vmatpush2.msra.mxu0 %v6513
        %6749 = vmatprep.subr.mxu0 0.0
        %6750 = vmatpush2.msra.mxu0 %v6512
        %6751 = vmatprep.subr.mxu0 0.0
        %6752 = vmatpush2.msra.mxu0 %v6511
        %6753 = vmatprep.mubr.f32.mxu0 %v6293
        %6754 = vmatmul.mubr.f32.gmra.mxu0 %v6292
        %v6755 = vpop.f32.mrf.mxu0
        %v6756 = vadd.f32 %v6600, %v6755
        %v6757 = vpop.f32.mrf.mxu0
        %6758 = vmatprep.mubr.f32.mxu0 %v6300
        %6759 = vmatmul.mubr.f32.gmra.mxu0 %v6299
        %v6760 = vpop.f32.mrf.mxu0
        %v6761 = vadd.f32 %v6600, %v6760
        %v6762 = vpop.f32.mrf.mxu0
        %6763 = vmatprep.mubr.f32.mxu0 %v6307
        %6764 = vmatmul.mubr.f32.gmra.mxu0 %v6306
        %v6765 = vpop.f32.mrf.mxu0
        %v6766 = vadd.f32 %v6600, %v6765
        %v6767 = vpop.f32.mrf.mxu0
        %6768 = vmatprep.mubr.f32.mxu0 %v6314
        %6769 = vmatmul.mubr.f32.gmra.mxu0 %v6313
        %v6770 = vpop.f32.mrf.mxu0
        %v6771 = vadd.f32 %v6600, %v6770
        %v6772 = vpop.f32.mrf.mxu0
        %6773 = vmatprep.mubr.f32.mxu0 %v6321
        %6774 = vmatmul.mubr.f32.gmra.mxu0 %v6320
        %v6775 = vpop.f32.mrf.mxu0
        %v6776 = vadd.f32 %v6600, %v6775
        %v6777 = vpop.f32.mrf.mxu0
        %6778 = vmatprep.mubr.f32.mxu0 %v6328
        %6779 = vmatmul.mubr.f32.gmra.mxu0 %v6327
        %v6780 = vpop.f32.mrf.mxu0
        %v6781 = vadd.f32 %v6600, %v6780
        %v6782 = vpop.f32.mrf.mxu0
        %6783 = vmatprep.mubr.f32.mxu0 %v6335
        %6784 = vmatmul.mubr.f32.gmra.mxu0 %v6334
        %v6785 = vpop.f32.mrf.mxu0
        %v6786 = vadd.f32 %v6600, %v6785
        %v6787 = vpop.f32.mrf.mxu0
        %6788 = vmatprep.mubr.f32.mxu0 %v6342
        %6789 = vmatmul.mubr.f32.gmra.mxu0 %v6341
        %v6790 = vpop.f32.mrf.mxu0
        %v6791 = vadd.f32 %v6600, %v6790
        %v6792 = vpop.f32.mrf.mxu0
        %6793 = vmatprep.mubr.f32.mxu0 %v6349
        %6794 = vmatmul.mubr.f32.gmra.mxu0 %v6348
        %v6795 = vpop.f32.mrf.mxu0
        %v6796 = vadd.f32 %v6600, %v6795
        %v6797 = vpop.f32.mrf.mxu0
        %6798 = vmatprep.mubr.f32.mxu0 %v6356
        %6799 = vmatmul.mubr.f32.gmra.mxu0 %v6355
        %v6800 = vpop.f32.mrf.mxu0
        %v6801 = vadd.f32 %v6600, %v6800
        %v6802 = vpop.f32.mrf.mxu0
        %6803 = vmatprep.mubr.f32.mxu0 %v6363
        %6804 = vmatmul.mubr.f32.gmra.mxu0 %v6362
        %v6805 = vpop.f32.mrf.mxu0
        %v6806 = vadd.f32 %v6600, %v6805
        %v6807 = vpop.f32.mrf.mxu0
        %6808 = vmatprep.mubr.f32.mxu0 %v6370
        %6809 = vmatmul.mubr.f32.gmra.mxu0 %v6369
        %v6810 = vpop.f32.mrf.mxu0
        %v6811 = vadd.f32 %v6600, %v6810
        %v6812 = vpop.f32.mrf.mxu0
        %6813 = vmatprep.mubr.f32.mxu0 %v6377
        %6814 = vmatmul.mubr.f32.gmra.mxu0 %v6376
        %v6815 = vpop.f32.mrf.mxu0
        %v6816 = vadd.f32 %v6600, %v6815
        %v6817 = vpop.f32.mrf.mxu0
        %6818 = vmatprep.mubr.f32.mxu0 %v6384
        %6819 = vmatmul.mubr.f32.gmra.mxu0 %v6383
        %v6820 = vpop.f32.mrf.mxu0
        %v6821 = vadd.f32 %v6600, %v6820
        %v6822 = vpop.f32.mrf.mxu0
        %6823 = vmatprep.mubr.f32.mxu0 %v6391
        %6824 = vmatmul.mubr.f32.gmra.mxu0 %v6390
        %v6825 = vpop.f32.mrf.mxu0
        %v6826 = vadd.f32 %v6600, %v6825
        %v6827 = vpop.f32.mrf.mxu0
        %6828 = vmatprep.mubr.f32.mxu0 %v6398
        %6829 = vmatmul.mubr.f32.gmra.mxu0 %v6397
        %v6830 = vpop.f32.mrf.mxu0
        %v6831 = vadd.f32 %v6600, %v6830
        %v6832 = vpop.f32.mrf.mxu0
        %6833 = vmatprep.mubr.f32.mxu0 %v6405
        %6834 = vmatmul.mubr.f32.gmra.mxu0 %v6404
        %v6835 = vpop.f32.mrf.mxu0
        %v6836 = vadd.f32 %v6600, %v6835
        %v6837 = vpop.f32.mrf.mxu0
        %6838 = vmatprep.mubr.f32.mxu0 %v6412
        %6839 = vmatmul.mubr.f32.gmra.mxu0 %v6411
        %v6840 = vpop.f32.mrf.mxu0
        %v6841 = vadd.f32 %v6600, %v6840
        %v6842 = vpop.f32.mrf.mxu0
        %6843 = vmatprep.mubr.f32.mxu0 %v6419
        %6844 = vmatmul.mubr.f32.gmra.mxu0 %v6418
        %v6845 = vpop.f32.mrf.mxu0
        %v6846 = vadd.f32 %v6600, %v6845
        %v6847 = vpop.f32.mrf.mxu0
        %6848 = vmatprep.mubr.f32.mxu0 %v6426
        %6849 = vmatmul.mubr.f32.gmra.mxu0 %v6425
        %v6850 = vpop.f32.mrf.mxu0
        %v6851 = vadd.f32 %v6600, %v6850
        %v6852 = vpop.f32.mrf.mxu0
        %6853 = vmatprep.mubr.f32.mxu0 %v6433
        %6854 = vmatmul.mubr.f32.gmra.mxu0 %v6432
        %v6855 = vpop.f32.mrf.mxu0
        %v6856 = vadd.f32 %v6600, %v6855
        %v6857 = vpop.f32.mrf.mxu0
        %6858 = vmatprep.mubr.f32.mxu0 %v6440
        %6859 = vmatmul.mubr.f32.gmra.mxu0 %v6439
        %v6860 = vpop.f32.mrf.mxu0
        %v6861 = vadd.f32 %v6600, %v6860
        %v6862 = vpop.f32.mrf.mxu0
        %6863 = vmatprep.mubr.f32.mxu0 %v6447
        %6864 = vmatmul.mubr.f32.gmra.mxu0 %v6446
        %v6865 = vpop.f32.mrf.mxu0
        %v6866 = vadd.f32 %v6600, %v6865
        %v6867 = vpop.f32.mrf.mxu0
        %6868 = vmatprep.mubr.f32.mxu0 %v6454
        %6869 = vmatmul.mubr.f32.gmra.mxu0 %v6453
        %v6870 = vpop.f32.mrf.mxu0
        %v6871 = vadd.f32 %v6600, %v6870
        %v6872 = vpop.f32.mrf.mxu0
        %6873 = vmatprep.mubr.f32.mxu0 %v6461
        %6874 = vmatmul.mubr.f32.gmra.mxu0 %v6460
        %v6875 = vpop.f32.mrf.mxu0
        %v6876 = vadd.f32 %v6600, %v6875
        %v6877 = vpop.f32.mrf.mxu0
        %6878 = vmatprep.mubr.f32.mxu0 %v6468
        %6879 = vmatmul.mubr.f32.gmra.mxu0 %v6467
        %v6880 = vpop.f32.mrf.mxu0
        %v6881 = vadd.f32 %v6600, %v6880
        %v6882 = vpop.f32.mrf.mxu0
        %6883 = vmatprep.mubr.f32.mxu0 %v6475
        %6884 = vmatmul.mubr.f32.gmra.mxu0 %v6474
        %v6885 = vpop.f32.mrf.mxu0
        %v6886 = vadd.f32 %v6600, %v6885
        %v6887 = vpop.f32.mrf.mxu0
        %6888 = vmatprep.mubr.f32.mxu0 %v6482
        %6889 = vmatmul.mubr.f32.gmra.mxu0 %v6481
        %v6890 = vpop.f32.mrf.mxu0
        %v6891 = vadd.f32 %v6600, %v6890
        %v6892 = vpop.f32.mrf.mxu0
        %6893 = vmatprep.mubr.f32.mxu0 %v6489
        %6894 = vmatmul.mubr.f32.gmra.mxu0 %v6488
        %v6895 = vpop.f32.mrf.mxu0
        %v6896 = vadd.f32 %v6600, %v6895
        %v6897 = vpop.f32.mrf.mxu0
        %6898 = vdwg.mxu0
        %6899 = vmatprep.subr.mxu0 0.0
        %6900 = vmatpush1.msra.mxu0 %v6542
        %6901 = vmatprep.subr.mxu0 0.0
        %6902 = vmatpush1.msra.mxu0 %v6541
        %6903 = vmatprep.subr.mxu0 0.0
        %6904 = vmatpush1.msra.mxu0 %v6540
        %6905 = vmatprep.subr.mxu0 0.0
        %6906 = vmatpush1.msra.mxu0 %v6539
        %6907 = vmatprep.subr.mxu0 0.0
        %6908 = vmatpush1.msra.mxu0 %v6538
        %6909 = vmatprep.subr.mxu0 0.0
        %6910 = vmatpush1.msra.mxu0 %v6537
        %6911 = vmatprep.subr.mxu0 0.0
        %6912 = vmatpush1.msra.mxu0 %v6536
        %6913 = vmatprep.subr.mxu0 0.0
        %6914 = vmatpush1.msra.mxu0 %v6535
        %6915 = vmatprep.subr.mxu0 0.0
        %6916 = vmatpush1.msra.mxu0 %v6534
        %6917 = vmatprep.subr.mxu0 0.0
        %6918 = vmatpush1.msra.mxu0 %v6533
        %6919 = vmatprep.subr.mxu0 0.0
        %6920 = vmatpush1.msra.mxu0 %v6532
        %6921 = vmatprep.subr.mxu0 0.0
        %6922 = vmatpush1.msra.mxu0 %v6531
        %6923 = vmatprep.subr.mxu0 0.0
        %6924 = vmatpush1.msra.mxu0 %v6530
        %6925 = vmatprep.subr.mxu0 0.0
        %6926 = vmatpush1.msra.mxu0 %v6529
        %6927 = vmatprep.subr.mxu0 0.0
        %6928 = vmatpush1.msra.mxu0 %v6528
        %6929 = vmatprep.subr.mxu0 0.0
        %6930 = vmatpush1.msra.mxu0 %v6527
        %6931 = vmatprep.subr.mxu0 0.0
        %6932 = vmatpush2.msra.mxu0 %v6558
        %6933 = vmatprep.subr.mxu0 0.0
        %6934 = vmatpush2.msra.mxu0 %v6557
        %6935 = vmatprep.subr.mxu0 0.0
        %6936 = vmatpush2.msra.mxu0 %v6556
        %6937 = vmatprep.subr.mxu0 0.0
        %6938 = vmatpush2.msra.mxu0 %v6555
        %6939 = vmatprep.subr.mxu0 0.0
        %6940 = vmatpush2.msra.mxu0 %v6554
        %6941 = vmatprep.subr.mxu0 0.0
        %6942 = vmatpush2.msra.mxu0 %v6553
        %6943 = vmatprep.subr.mxu0 0.0
        %6944 = vmatpush2.msra.mxu0 %v6552
        %6945 = vmatprep.subr.mxu0 0.0
        %6946 = vmatpush2.msra.mxu0 %v6551
        %6947 = vmatprep.subr.mxu0 0.0
        %6948 = vmatpush2.msra.mxu0 %v6550
        %6949 = vmatprep.subr.mxu0 0.0
        %6950 = vmatpush2.msra.mxu0 %v6549
        %6951 = vmatprep.subr.mxu0 0.0
        %6952 = vmatpush2.msra.mxu0 %v6548
        %6953 = vmatprep.subr.mxu0 0.0
        %6954 = vmatpush2.msra.mxu0 %v6547
        %6955 = vmatprep.subr.mxu0 0.0
        %6956 = vmatpush2.msra.mxu0 %v6546
        %6957 = vmatprep.subr.mxu0 0.0
        %6958 = vmatpush2.msra.mxu0 %v6545
        %6959 = vmatprep.subr.mxu0 0.0
        %6960 = vmatpush2.msra.mxu0 %v6544
        %6961 = vmatprep.subr.mxu0 0.0
        %6962 = vmatpush2.msra.mxu0 %v6543
        %6963 = vmatprep.mubr.f32.mxu0 %v6295
        %6964 = vmatmul.mubr.f32.gmra.mxu0 %v6294
        %v6965 = vpop.f32.mrf.mxu0
        %v6966 = vadd.f32 %v6756, %v6965
        %v6967 = vpop.f32.mrf.mxu0
        %6968 = vmatprep.mubr.f32.mxu0 %v6302
        %6969 = vmatmul.mubr.f32.gmra.mxu0 %v6301
        %v6970 = vpop.f32.mrf.mxu0
        %v6971 = vadd.f32 %v6761, %v6970
        %v6972 = vpop.f32.mrf.mxu0
        %6973 = vmatprep.mubr.f32.mxu0 %v6309
        %6974 = vmatmul.mubr.f32.gmra.mxu0 %v6308
        %v6975 = vpop.f32.mrf.mxu0
        %v6976 = vadd.f32 %v6766, %v6975
        %v6977 = vpop.f32.mrf.mxu0
        %6978 = vmatprep.mubr.f32.mxu0 %v6316
        %6979 = vmatmul.mubr.f32.gmra.mxu0 %v6315
        %v6980 = vpop.f32.mrf.mxu0
        %v6981 = vadd.f32 %v6771, %v6980
        %v6982 = vpop.f32.mrf.mxu0
        %6983 = vmatprep.mubr.f32.mxu0 %v6323
        %6984 = vmatmul.mubr.f32.gmra.mxu0 %v6322
        %v6985 = vpop.f32.mrf.mxu0
        %v6986 = vadd.f32 %v6776, %v6985
        %v6987 = vpop.f32.mrf.mxu0
        %6988 = vmatprep.mubr.f32.mxu0 %v6330
        %6989 = vmatmul.mubr.f32.gmra.mxu0 %v6329
        %v6990 = vpop.f32.mrf.mxu0
        %v6991 = vadd.f32 %v6781, %v6990
        %v6992 = vpop.f32.mrf.mxu0
        %6993 = vmatprep.mubr.f32.mxu0 %v6337
        %6994 = vmatmul.mubr.f32.gmra.mxu0 %v6336
        %v6995 = vpop.f32.mrf.mxu0
        %v6996 = vadd.f32 %v6786, %v6995
        %v6997 = vpop.f32.mrf.mxu0
        %6998 = vmatprep.mubr.f32.mxu0 %v6344
        %6999 = vmatmul.mubr.f32.gmra.mxu0 %v6343
        %v7000 = vpop.f32.mrf.mxu0
        %v7001 = vadd.f32 %v6791, %v7000
        %v7002 = vpop.f32.mrf.mxu0
        %7003 = vmatprep.mubr.f32.mxu0 %v6351
        %7004 = vmatmul.mubr.f32.gmra.mxu0 %v6350
        %v7005 = vpop.f32.mrf.mxu0
        %v7006 = vadd.f32 %v6796, %v7005
        %v7007 = vpop.f32.mrf.mxu0
        %7008 = vmatprep.mubr.f32.mxu0 %v6358
        %7009 = vmatmul.mubr.f32.gmra.mxu0 %v6357
        %v7010 = vpop.f32.mrf.mxu0
        %v7011 = vadd.f32 %v6801, %v7010
        %v7012 = vpop.f32.mrf.mxu0
        %7013 = vmatprep.mubr.f32.mxu0 %v6365
        %7014 = vmatmul.mubr.f32.gmra.mxu0 %v6364
        %v7015 = vpop.f32.mrf.mxu0
        %v7016 = vadd.f32 %v6806, %v7015
        %v7017 = vpop.f32.mrf.mxu0
        %7018 = vmatprep.mubr.f32.mxu0 %v6372
        %7019 = vmatmul.mubr.f32.gmra.mxu0 %v6371
        %v7020 = vpop.f32.mrf.mxu0
        %v7021 = vadd.f32 %v6811, %v7020
        %v7022 = vpop.f32.mrf.mxu0
        %7023 = vmatprep.mubr.f32.mxu0 %v6379
        %7024 = vmatmul.mubr.f32.gmra.mxu0 %v6378
        %v7025 = vpop.f32.mrf.mxu0
        %v7026 = vadd.f32 %v6816, %v7025
        %v7027 = vpop.f32.mrf.mxu0
        %7028 = vmatprep.mubr.f32.mxu0 %v6386
        %7029 = vmatmul.mubr.f32.gmra.mxu0 %v6385
        %v7030 = vpop.f32.mrf.mxu0
        %v7031 = vadd.f32 %v6821, %v7030
        %v7032 = vpop.f32.mrf.mxu0
        %7033 = vmatprep.mubr.f32.mxu0 %v6393
        %7034 = vmatmul.mubr.f32.gmra.mxu0 %v6392
        %v7035 = vpop.f32.mrf.mxu0
        %v7036 = vadd.f32 %v6826, %v7035
        %v7037 = vpop.f32.mrf.mxu0
        %7038 = vmatprep.mubr.f32.mxu0 %v6400
        %7039 = vmatmul.mubr.f32.gmra.mxu0 %v6399
        %v7040 = vpop.f32.mrf.mxu0
        %v7041 = vadd.f32 %v6831, %v7040
        %v7042 = vpop.f32.mrf.mxu0
        %7043 = vmatprep.mubr.f32.mxu0 %v6407
        %7044 = vmatmul.mubr.f32.gmra.mxu0 %v6406
        %v7045 = vpop.f32.mrf.mxu0
        %v7046 = vadd.f32 %v6836, %v7045
        %v7047 = vpop.f32.mrf.mxu0
        %7048 = vmatprep.mubr.f32.mxu0 %v6414
        %7049 = vmatmul.mubr.f32.gmra.mxu0 %v6413
        %v7050 = vpop.f32.mrf.mxu0
        %v7051 = vadd.f32 %v6841, %v7050
        %v7052 = vpop.f32.mrf.mxu0
        %7053 = vmatprep.mubr.f32.mxu0 %v6421
        %7054 = vmatmul.mubr.f32.gmra.mxu0 %v6420
        %v7055 = vpop.f32.mrf.mxu0
        %v7056 = vadd.f32 %v6846, %v7055
        %v7057 = vpop.f32.mrf.mxu0
        %7058 = vmatprep.mubr.f32.mxu0 %v6428
        %7059 = vmatmul.mubr.f32.gmra.mxu0 %v6427
        %v7060 = vpop.f32.mrf.mxu0
        %v7061 = vadd.f32 %v6851, %v7060
        %v7062 = vpop.f32.mrf.mxu0
        %7063 = vmatprep.mubr.f32.mxu0 %v6435
        %7064 = vmatmul.mubr.f32.gmra.mxu0 %v6434
        %v7065 = vpop.f32.mrf.mxu0
        %v7066 = vadd.f32 %v6856, %v7065
        %v7067 = vpop.f32.mrf.mxu0
        %7068 = vmatprep.mubr.f32.mxu0 %v6442
        %7069 = vmatmul.mubr.f32.gmra.mxu0 %v6441
        %v7070 = vpop.f32.mrf.mxu0
        %v7071 = vadd.f32 %v6861, %v7070
        %v7072 = vpop.f32.mrf.mxu0
        %7073 = vmatprep.mubr.f32.mxu0 %v6449
        %7074 = vmatmul.mubr.f32.gmra.mxu0 %v6448
        %v7075 = vpop.f32.mrf.mxu0
        %v7076 = vadd.f32 %v6866, %v7075
        %v7077 = vpop.f32.mrf.mxu0
        %7078 = vmatprep.mubr.f32.mxu0 %v6456
        %7079 = vmatmul.mubr.f32.gmra.mxu0 %v6455
        %v7080 = vpop.f32.mrf.mxu0
        %v7081 = vadd.f32 %v6871, %v7080
        %v7082 = vpop.f32.mrf.mxu0
        %7083 = vmatprep.mubr.f32.mxu0 %v6463
        %7084 = vmatmul.mubr.f32.gmra.mxu0 %v6462
        %v7085 = vpop.f32.mrf.mxu0
        %v7086 = vadd.f32 %v6876, %v7085
        %v7087 = vpop.f32.mrf.mxu0
        %7088 = vmatprep.mubr.f32.mxu0 %v6470
        %7089 = vmatmul.mubr.f32.gmra.mxu0 %v6469
        %v7090 = vpop.f32.mrf.mxu0
        %v7091 = vadd.f32 %v6881, %v7090
        %v7092 = vpop.f32.mrf.mxu0
        %7093 = vmatprep.mubr.f32.mxu0 %v6477
        %7094 = vmatmul.mubr.f32.gmra.mxu0 %v6476
        %v7095 = vpop.f32.mrf.mxu0
        %v7096 = vadd.f32 %v6886, %v7095
        %v7097 = vpop.f32.mrf.mxu0
        %7098 = vmatprep.mubr.f32.mxu0 %v6484
        %7099 = vmatmul.mubr.f32.gmra.mxu0 %v6483
        %v7100 = vpop.f32.mrf.mxu0
        %v7101 = vadd.f32 %v6891, %v7100
        %v7102 = vpop.f32.mrf.mxu0
        %7103 = vmatprep.mubr.f32.mxu0 %v6491
        %7104 = vmatmul.mubr.f32.gmra.mxu0 %v6490
        %v7105 = vpop.f32.mrf.mxu0
        %v7106 = vadd.f32 %v6896, %v7105
        %v7107 = vpop.f32.mrf.mxu0
        %7108 = vdwg.mxu0
        %7109 = vmatprep.subr.mxu0 0.0
        %7110 = vmatpush1.msra.mxu0 %v6574
        %7111 = vmatprep.subr.mxu0 0.0
        %7112 = vmatpush1.msra.mxu0 %v6573
        %7113 = vmatprep.subr.mxu0 0.0
        %7114 = vmatpush1.msra.mxu0 %v6572
        %7115 = vmatprep.subr.mxu0 0.0
        %7116 = vmatpush1.msra.mxu0 %v6571
        %7117 = vmatprep.subr.mxu0 0.0
        %7118 = vmatpush1.msra.mxu0 %v6570
        %7119 = vmatprep.subr.mxu0 0.0
        %7120 = vmatpush1.msra.mxu0 %v6569
        %7121 = vmatprep.subr.mxu0 0.0
        %7122 = vmatpush1.msra.mxu0 %v6568
        %7123 = vmatprep.subr.mxu0 0.0
        %7124 = vmatpush1.msra.mxu0 %v6567
        %7125 = vmatprep.subr.mxu0 0.0
        %7126 = vmatpush1.msra.mxu0 %v6566
        %7127 = vmatprep.subr.mxu0 0.0
        %7128 = vmatpush1.msra.mxu0 %v6565
        %7129 = vmatprep.subr.mxu0 0.0
        %7130 = vmatpush1.msra.mxu0 %v6564
        %7131 = vmatprep.subr.mxu0 0.0
        %7132 = vmatpush1.msra.mxu0 %v6563
        %7133 = vmatprep.subr.mxu0 0.0
        %7134 = vmatpush1.msra.mxu0 %v6562
        %7135 = vmatprep.subr.mxu0 0.0
        %7136 = vmatpush1.msra.mxu0 %v6561
        %7137 = vmatprep.subr.mxu0 0.0
        %7138 = vmatpush1.msra.mxu0 %v6560
        %7139 = vmatprep.subr.mxu0 0.0
        %7140 = vmatpush1.msra.mxu0 %v6559
        %7141 = vmatprep.subr.mxu0 0.0
        %7142 = vmatpush2.msra.mxu0 %v6590
        %7143 = vmatprep.subr.mxu0 0.0
        %7144 = vmatpush2.msra.mxu0 %v6589
        %7145 = vmatprep.subr.mxu0 0.0
        %7146 = vmatpush2.msra.mxu0 %v6588
        %7147 = vmatprep.subr.mxu0 0.0
        %7148 = vmatpush2.msra.mxu0 %v6587
        %7149 = vmatprep.subr.mxu0 0.0
        %7150 = vmatpush2.msra.mxu0 %v6586
        %7151 = vmatprep.subr.mxu0 0.0
        %7152 = vmatpush2.msra.mxu0 %v6585
        %7153 = vmatprep.subr.mxu0 0.0
        %7154 = vmatpush2.msra.mxu0 %v6584
        %7155 = vmatprep.subr.mxu0 0.0
        %7156 = vmatpush2.msra.mxu0 %v6583
        %7157 = vmatprep.subr.mxu0 0.0
        %7158 = vmatpush2.msra.mxu0 %v6582
        %7159 = vmatprep.subr.mxu0 0.0
        %7160 = vmatpush2.msra.mxu0 %v6581
        %7161 = vmatprep.subr.mxu0 0.0
        %7162 = vmatpush2.msra.mxu0 %v6580
        %7163 = vmatprep.subr.mxu0 0.0
        %7164 = vmatpush2.msra.mxu0 %v6579
        %7165 = vmatprep.subr.mxu0 0.0
        %7166 = vmatpush2.msra.mxu0 %v6578
        %7167 = vmatprep.subr.mxu0 0.0
        %7168 = vmatpush2.msra.mxu0 %v6577
        %7169 = vmatprep.subr.mxu0 0.0
        %7170 = vmatpush2.msra.mxu0 %v6576
        %7171 = vmatprep.subr.mxu0 0.0
        %7172 = vmatpush2.msra.mxu0 %v6575
        %7173 = vmatprep.mubr.f32.mxu0 %v6297
        %7174 = vmatmul.mubr.f32.gmra.mxu0 %v6296
        %v7175 = vpop.f32.mrf.mxu0
        %v7176 = vadd.f32 %v6966, %v7175
        %v7177 = vpop.f32.mrf.mxu0
        %7178 = vmatprep.mubr.f32.mxu0 %v6304
        %7179 = vmatmul.mubr.f32.gmra.mxu0 %v6303
        %v7180 = vpop.f32.mrf.mxu0
        %v7181 = vadd.f32 %v6971, %v7180
        %v7182 = vpop.f32.mrf.mxu0
        %7183 = vmatprep.mubr.f32.mxu0 %v6311
        %7184 = vmatmul.mubr.f32.gmra.mxu0 %v6310
        %v7185 = vpop.f32.mrf.mxu0
        %v7186 = vadd.f32 %v6976, %v7185
        %v7187 = vpop.f32.mrf.mxu0
        %7188 = vmatprep.mubr.f32.mxu0 %v6318
        %7189 = vmatmul.mubr.f32.gmra.mxu0 %v6317
        %v7190 = vpop.f32.mrf.mxu0
        %v7191 = vadd.f32 %v6981, %v7190
        %v7192 = vpop.f32.mrf.mxu0
        %7193 = vmatprep.mubr.f32.mxu0 %v6325
        %7194 = vmatmul.mubr.f32.gmra.mxu0 %v6324
        %v7195 = vpop.f32.mrf.mxu0
        %v7196 = vadd.f32 %v6986, %v7195
        %v7197 = vpop.f32.mrf.mxu0
        %7198 = vmatprep.mubr.f32.mxu0 %v6332
        %7199 = vmatmul.mubr.f32.gmra.mxu0 %v6331
        %v7200 = vpop.f32.mrf.mxu0
        %v7201 = vadd.f32 %v6991, %v7200
        %v7202 = vpop.f32.mrf.mxu0
        %7203 = vmatprep.mubr.f32.mxu0 %v6339
        %7204 = vmatmul.mubr.f32.gmra.mxu0 %v6338
        %v7205 = vpop.f32.mrf.mxu0
        %v7206 = vadd.f32 %v6996, %v7205
        %v7207 = vpop.f32.mrf.mxu0
        %7208 = vmatprep.mubr.f32.mxu0 %v6346
        %7209 = vmatmul.mubr.f32.gmra.mxu0 %v6345
        %v7210 = vpop.f32.mrf.mxu0
        %v7211 = vadd.f32 %v7001, %v7210
        %v7212 = vpop.f32.mrf.mxu0
        %7213 = vmatprep.mubr.f32.mxu0 %v6353
        %7214 = vmatmul.mubr.f32.gmra.mxu0 %v6352
        %v7215 = vpop.f32.mrf.mxu0
        %v7216 = vadd.f32 %v7006, %v7215
        %v7217 = vpop.f32.mrf.mxu0
        %7218 = vmatprep.mubr.f32.mxu0 %v6360
        %7219 = vmatmul.mubr.f32.gmra.mxu0 %v6359
        %v7220 = vpop.f32.mrf.mxu0
        %v7221 = vadd.f32 %v7011, %v7220
        %v7222 = vpop.f32.mrf.mxu0
        %7223 = vmatprep.mubr.f32.mxu0 %v6367
        %7224 = vmatmul.mubr.f32.gmra.mxu0 %v6366
        %v7225 = vpop.f32.mrf.mxu0
        %v7226 = vadd.f32 %v7016, %v7225
        %v7227 = vpop.f32.mrf.mxu0
        %7228 = vmatprep.mubr.f32.mxu0 %v6374
        %7229 = vmatmul.mubr.f32.gmra.mxu0 %v6373
        %v7230 = vpop.f32.mrf.mxu0
        %v7231 = vadd.f32 %v7021, %v7230
        %v7232 = vpop.f32.mrf.mxu0
        %7233 = vmatprep.mubr.f32.mxu0 %v6381
        %7234 = vmatmul.mubr.f32.gmra.mxu0 %v6380
        %v7235 = vpop.f32.mrf.mxu0
        %v7236 = vadd.f32 %v7026, %v7235
        %v7237 = vpop.f32.mrf.mxu0
        %7238 = vmatprep.mubr.f32.mxu0 %v6388
        %7239 = vmatmul.mubr.f32.gmra.mxu0 %v6387
        %v7240 = vpop.f32.mrf.mxu0
        %v7241 = vadd.f32 %v7031, %v7240
        %v7242 = vpop.f32.mrf.mxu0
        %7243 = vmatprep.mubr.f32.mxu0 %v6395
        %7244 = vmatmul.mubr.f32.gmra.mxu0 %v6394
        %v7245 = vpop.f32.mrf.mxu0
        %v7246 = vadd.f32 %v7036, %v7245
        %v7247 = vpop.f32.mrf.mxu0
        %7248 = vmatprep.mubr.f32.mxu0 %v6402
        %7249 = vmatmul.mubr.f32.gmra.mxu0 %v6401
        %v7250 = vpop.f32.mrf.mxu0
        %v7251 = vadd.f32 %v7041, %v7250
        %v7252 = vpop.f32.mrf.mxu0
        %7253 = vmatprep.mubr.f32.mxu0 %v6409
        %7254 = vmatmul.mubr.f32.gmra.mxu0 %v6408
        %v7255 = vpop.f32.mrf.mxu0
        %v7256 = vadd.f32 %v7046, %v7255
        %v7257 = vpop.f32.mrf.mxu0
        %7258 = vmatprep.mubr.f32.mxu0 %v6416
        %7259 = vmatmul.mubr.f32.gmra.mxu0 %v6415
        %v7260 = vpop.f32.mrf.mxu0
        %v7261 = vadd.f32 %v7051, %v7260
        %v7262 = vpop.f32.mrf.mxu0
        %7263 = vmatprep.mubr.f32.mxu0 %v6423
        %7264 = vmatmul.mubr.f32.gmra.mxu0 %v6422
        %v7265 = vpop.f32.mrf.mxu0
        %v7266 = vadd.f32 %v7056, %v7265
        %v7267 = vpop.f32.mrf.mxu0
        %7268 = vmatprep.mubr.f32.mxu0 %v6430
        %7269 = vmatmul.mubr.f32.gmra.mxu0 %v6429
        %v7270 = vpop.f32.mrf.mxu0
        %v7271 = vadd.f32 %v7061, %v7270
        %v7272 = vpop.f32.mrf.mxu0
        %7273 = vmatprep.mubr.f32.mxu0 %v6437
        %7274 = vmatmul.mubr.f32.gmra.mxu0 %v6436
        %v7275 = vpop.f32.mrf.mxu0
        %v7276 = vadd.f32 %v7066, %v7275
        %v7277 = vpop.f32.mrf.mxu0
        %7278 = vmatprep.mubr.f32.mxu0 %v6444
        %7279 = vmatmul.mubr.f32.gmra.mxu0 %v6443
        %v7280 = vpop.f32.mrf.mxu0
        %v7281 = vadd.f32 %v7071, %v7280
        %v7282 = vpop.f32.mrf.mxu0
        %7283 = vmatprep.mubr.f32.mxu0 %v6451
        %7284 = vmatmul.mubr.f32.gmra.mxu0 %v6450
        %v7285 = vpop.f32.mrf.mxu0
        %v7286 = vadd.f32 %v7076, %v7285
        %v7287 = vpop.f32.mrf.mxu0
        %7288 = vmatprep.mubr.f32.mxu0 %v6458
        %7289 = vmatmul.mubr.f32.gmra.mxu0 %v6457
        %v7290 = vpop.f32.mrf.mxu0
        %v7291 = vadd.f32 %v7081, %v7290
        %v7292 = vpop.f32.mrf.mxu0
        %7293 = vmatprep.mubr.f32.mxu0 %v6465
        %7294 = vmatmul.mubr.f32.gmra.mxu0 %v6464
        %v7295 = vpop.f32.mrf.mxu0
        %v7296 = vadd.f32 %v7086, %v7295
        %v7297 = vpop.f32.mrf.mxu0
        %7298 = vmatprep.mubr.f32.mxu0 %v6472
        %7299 = vmatmul.mubr.f32.gmra.mxu0 %v6471
        %v7300 = vpop.f32.mrf.mxu0
        %v7301 = vadd.f32 %v7091, %v7300
        %v7302 = vpop.f32.mrf.mxu0
        %7303 = vmatprep.mubr.f32.mxu0 %v6479
        %7304 = vmatmul.mubr.f32.gmra.mxu0 %v6478
        %v7305 = vpop.f32.mrf.mxu0
        %v7306 = vadd.f32 %v7096, %v7305
        %v7307 = vpop.f32.mrf.mxu0
        %7308 = vmatprep.mubr.f32.mxu0 %v6486
        %7309 = vmatmul.mubr.f32.gmra.mxu0 %v6485
        %v7310 = vpop.f32.mrf.mxu0
        %v7311 = vadd.f32 %v7101, %v7310
        %v7312 = vpop.f32.mrf.mxu0
        %7313 = vmatprep.mubr.f32.mxu0 %v6493
        %7314 = vmatmul.mubr.f32.gmra.mxu0 %v6492
        %v7315 = vpop.f32.mrf.mxu0
        %v7316 = vadd.f32 %v7106, %v7315
        %v7317 = vpop.f32.mrf.mxu0
        %7318 = vdwg.mxu0
        %7319 = vmatprep.subr.mxu0 0.0
        %7320 = vmatpush1.msra.mxu0 0.0
        %7321 = vmatprep.subr.mxu0 0.0
        %7322 = vmatpush1.msra.mxu0 0.0
        %7323 = vmatprep.subr.mxu0 0.0
        %7324 = vmatpush1.msra.mxu0 0.0
        %7325 = vmatprep.subr.mxu0 0.0
        %7326 = vmatpush1.msra.mxu0 0.0
        %7327 = vmatprep.subr.mxu0 0.0
        %7328 = vmatpush1.msra.mxu0 0.0
        %7329 = vmatprep.subr.mxu0 0.0
        %7330 = vmatpush1.msra.mxu0 0.0
        %7331 = vmatprep.subr.mxu0 0.0
        %7332 = vmatpush1.msra.mxu0 0.0
        %7333 = vmatprep.subr.mxu0 0.0
        %7334 = vmatpush1.msra.mxu0 0.0
        %7335 = vmatprep.subr.mxu0 0.0
        %7336 = vmatpush1.msra.mxu0 0.0
        %7337 = vmatprep.subr.mxu0 0.0
        %7338 = vmatpush1.msra.mxu0 0.0
        %7339 = vmatprep.subr.mxu0 0.0
        %7340 = vmatpush1.msra.mxu0 0.0
        %7341 = vmatprep.subr.mxu0 0.0
        %7342 = vmatpush1.msra.mxu0 0.0
        %7343 = vmatprep.subr.mxu0 0.0
        %7344 = vmatpush1.msra.mxu0 %v6594
        %7345 = vmatprep.subr.mxu0 0.0
        %7346 = vmatpush1.msra.mxu0 %v6593
        %7347 = vmatprep.subr.mxu0 0.0
        %7348 = vmatpush1.msra.mxu0 %v6592
        %7349 = vmatprep.subr.mxu0 0.0
        %7350 = vmatpush1.msra.mxu0 %v6591
        %7351 = vmatprep.subr.mxu0 0.0
        %7352 = vmatpush2.msra.mxu0 0.0
        %7353 = vmatprep.subr.mxu0 0.0
        %7354 = vmatpush2.msra.mxu0 0.0
        %7355 = vmatprep.subr.mxu0 0.0
        %7356 = vmatpush2.msra.mxu0 0.0
        %7357 = vmatprep.subr.mxu0 0.0
        %7358 = vmatpush2.msra.mxu0 0.0
        %7359 = vmatprep.subr.mxu0 0.0
        %7360 = vmatpush2.msra.mxu0 0.0
        %7361 = vmatprep.subr.mxu0 0.0
        %7362 = vmatpush2.msra.mxu0 0.0
        %7363 = vmatprep.subr.mxu0 0.0
        %7364 = vmatpush2.msra.mxu0 0.0
        %7365 = vmatprep.subr.mxu0 0.0
        %7366 = vmatpush2.msra.mxu0 0.0
        %7367 = vmatprep.subr.mxu0 0.0
        %7368 = vmatpush2.msra.mxu0 0.0
        %7369 = vmatprep.subr.mxu0 0.0
        %7370 = vmatpush2.msra.mxu0 0.0
        %7371 = vmatprep.subr.mxu0 0.0
        %7372 = vmatpush2.msra.mxu0 0.0
        %7373 = vmatprep.subr.mxu0 0.0
        %7374 = vmatpush2.msra.mxu0 0.0
        %7375 = vmatprep.subr.mxu0 0.0
        %7376 = vmatpush2.msra.mxu0 0.0
        %7377 = vmatprep.subr.mxu0 0.0
        %7378 = vmatpush2.msra.mxu0 0.0
        %7379 = vmatprep.subr.mxu0 0.0
        %7380 = vmatpush2.msra.mxu0 0.0
        %7381 = vmatprep.subr.mxu0 0.0
        %7382 = vmatpush2.msra.mxu0 0.0
        %7383 = vmatprep.mubr.f32.mxu0 0.0
        %7384 = vmatmul.mubr.f32.gmra.mxu0 %v6603
        %v7385 = vpop.f32.mrf.mxu0
        %v7386 = vadd.f32 %v7176, %v7385
        %v7387 = vpop.f32.mrf.mxu0
        %7388 = vmatprep.mubr.f32.mxu0 0.0
        %7389 = vmatmul.mubr.f32.gmra.mxu0 %v6606
        %v7390 = vpop.f32.mrf.mxu0
        %v7391 = vadd.f32 %v7181, %v7390
        %v7392 = vpop.f32.mrf.mxu0
        %7393 = vmatprep.mubr.f32.mxu0 0.0
        %7394 = vmatmul.mubr.f32.gmra.mxu0 %v6609
        %v7395 = vpop.f32.mrf.mxu0
        %v7396 = vadd.f32 %v7186, %v7395
        %v7397 = vpop.f32.mrf.mxu0
        %7398 = vmatprep.mubr.f32.mxu0 0.0
        %7399 = vmatmul.mubr.f32.gmra.mxu0 %v6612
        %v7400 = vpop.f32.mrf.mxu0
        %v7401 = vadd.f32 %v7191, %v7400
        %v7402 = vpop.f32.mrf.mxu0
        %7403 = vmatprep.mubr.f32.mxu0 0.0
        %7404 = vmatmul.mubr.f32.gmra.mxu0 %v6615
        %v7405 = vpop.f32.mrf.mxu0
        %v7406 = vadd.f32 %v7196, %v7405
        %v7407 = vpop.f32.mrf.mxu0
        %7408 = vmatprep.mubr.f32.mxu0 0.0
        %7409 = vmatmul.mubr.f32.gmra.mxu0 %v6618
        %v7410 = vpop.f32.mrf.mxu0
        %v7411 = vadd.f32 %v7201, %v7410
        %v7412 = vpop.f32.mrf.mxu0
        %7413 = vmatprep.mubr.f32.mxu0 0.0
        %7414 = vmatmul.mubr.f32.gmra.mxu0 %v6621
        %v7415 = vpop.f32.mrf.mxu0
        %v7416 = vadd.f32 %v7206, %v7415
        %v7417 = vpop.f32.mrf.mxu0
        %7418 = vmatprep.mubr.f32.mxu0 0.0
        %7419 = vmatmul.mubr.f32.gmra.mxu0 %v6624
        %v7420 = vpop.f32.mrf.mxu0
        %v7421 = vadd.f32 %v7211, %v7420
        %v7422 = vpop.f32.mrf.mxu0
        %7423 = vmatprep.mubr.f32.mxu0 0.0
        %7424 = vmatmul.mubr.f32.gmra.mxu0 %v6627
        %v7425 = vpop.f32.mrf.mxu0
        %v7426 = vadd.f32 %v7216, %v7425
        %v7427 = vpop.f32.mrf.mxu0
        %7428 = vmatprep.mubr.f32.mxu0 0.0
        %7429 = vmatmul.mubr.f32.gmra.mxu0 %v6630
        %v7430 = vpop.f32.mrf.mxu0
        %v7431 = vadd.f32 %v7221, %v7430
        %v7432 = vpop.f32.mrf.mxu0
        %7433 = vmatprep.mubr.f32.mxu0 0.0
        %7434 = vmatmul.mubr.f32.gmra.mxu0 %v6633
        %v7435 = vpop.f32.mrf.mxu0
        %v7436 = vadd.f32 %v7226, %v7435
        %v7437 = vpop.f32.mrf.mxu0
        %7438 = vmatprep.mubr.f32.mxu0 0.0
        %7439 = vmatmul.mubr.f32.gmra.mxu0 %v6636
        %v7440 = vpop.f32.mrf.mxu0
        %v7441 = vadd.f32 %v7231, %v7440
        %v7442 = vpop.f32.mrf.mxu0
        %7443 = vmatprep.mubr.f32.mxu0 0.0
        %7444 = vmatmul.mubr.f32.gmra.mxu0 %v6639
        %v7445 = vpop.f32.mrf.mxu0
        %v7446 = vadd.f32 %v7236, %v7445
        %v7447 = vpop.f32.mrf.mxu0
        %7448 = vmatprep.mubr.f32.mxu0 0.0
        %7449 = vmatmul.mubr.f32.gmra.mxu0 %v6642
        %v7450 = vpop.f32.mrf.mxu0
        %v7451 = vadd.f32 %v7241, %v7450
        %v7452 = vpop.f32.mrf.mxu0
        %7453 = vmatprep.mubr.f32.mxu0 0.0
        %7454 = vmatmul.mubr.f32.gmra.mxu0 %v6645
        %v7455 = vpop.f32.mrf.mxu0
        %v7456 = vadd.f32 %v7246, %v7455
        %v7457 = vpop.f32.mrf.mxu0
        %7458 = vmatprep.mubr.f32.mxu0 0.0
        %7459 = vmatmul.mubr.f32.gmra.mxu0 %v6648
        %v7460 = vpop.f32.mrf.mxu0
        %v7461 = vadd.f32 %v7251, %v7460
        %v7462 = vpop.f32.mrf.mxu0
        %7463 = vmatprep.mubr.f32.mxu0 0.0
        %7464 = vmatmul.mubr.f32.gmra.mxu0 %v6651
        %v7465 = vpop.f32.mrf.mxu0
        %v7466 = vadd.f32 %v7256, %v7465
        %v7467 = vpop.f32.mrf.mxu0
        %7468 = vmatprep.mubr.f32.mxu0 0.0
        %7469 = vmatmul.mubr.f32.gmra.mxu0 %v6654
        %v7470 = vpop.f32.mrf.mxu0
        %v7471 = vadd.f32 %v7261, %v7470
        %v7472 = vpop.f32.mrf.mxu0
        %7473 = vmatprep.mubr.f32.mxu0 0.0
        %7474 = vmatmul.mubr.f32.gmra.mxu0 %v6657
        %v7475 = vpop.f32.mrf.mxu0
        %v7476 = vadd.f32 %v7266, %v7475
        %v7477 = vpop.f32.mrf.mxu0
        %7478 = vmatprep.mubr.f32.mxu0 0.0
        %7479 = vmatmul.mubr.f32.gmra.mxu0 %v6660
        %v7480 = vpop.f32.mrf.mxu0
        %v7481 = vadd.f32 %v7271, %v7480
        %v7482 = vpop.f32.mrf.mxu0
        %7483 = vmatprep.mubr.f32.mxu0 0.0
        %7484 = vmatmul.mubr.f32.gmra.mxu0 %v6663
        %v7485 = vpop.f32.mrf.mxu0
        %v7486 = vadd.f32 %v7276, %v7485
        %v7487 = vpop.f32.mrf.mxu0
        %7488 = vmatprep.mubr.f32.mxu0 0.0
        %7489 = vmatmul.mubr.f32.gmra.mxu0 %v6666
        %v7490 = vpop.f32.mrf.mxu0
        %v7491 = vadd.f32 %v7281, %v7490
        %v7492 = vpop.f32.mrf.mxu0
        %7493 = vmatprep.mubr.f32.mxu0 0.0
        %7494 = vmatmul.mubr.f32.gmra.mxu0 %v6669
        %v7495 = vpop.f32.mrf.mxu0
        %v7496 = vadd.f32 %v7286, %v7495
        %v7497 = vpop.f32.mrf.mxu0
        %7498 = vmatprep.mubr.f32.mxu0 0.0
        %7499 = vmatmul.mubr.f32.gmra.mxu0 %v6672
        %v7500 = vpop.f32.mrf.mxu0
        %v7501 = vadd.f32 %v7291, %v7500
        %v7502 = vpop.f32.mrf.mxu0
        %7503 = vmatprep.mubr.f32.mxu0 0.0
        %7504 = vmatmul.mubr.f32.gmra.mxu0 %v6675
        %v7505 = vpop.f32.mrf.mxu0
        %v7506 = vadd.f32 %v7296, %v7505
        %v7507 = vpop.f32.mrf.mxu0
        %7508 = vmatprep.mubr.f32.mxu0 0.0
        %7509 = vmatmul.mubr.f32.gmra.mxu0 %v6678
        %v7510 = vpop.f32.mrf.mxu0
        %v7511 = vadd.f32 %v7301, %v7510
        %v7512 = vpop.f32.mrf.mxu0
        %7513 = vmatprep.mubr.f32.mxu0 0.0
        %7514 = vmatmul.mubr.f32.gmra.mxu0 %v6681
        %v7515 = vpop.f32.mrf.mxu0
        %v7516 = vadd.f32 %v7306, %v7515
        %v7517 = vpop.f32.mrf.mxu0
        %7518 = vmatprep.mubr.f32.mxu0 0.0
        %7519 = vmatmul.mubr.f32.gmra.mxu0 %v6684
        %v7520 = vpop.f32.mrf.mxu0
        %v7521 = vadd.f32 %v7311, %v7520
        %v7522 = vpop.f32.mrf.mxu0
        %7523 = vmatprep.mubr.f32.mxu0 0.0
        %7524 = vmatmul.mubr.f32.gmra.mxu0 %v6687
        %v7525 = vpop.f32.mrf.mxu0
        %v7526 = vadd.f32 %v7316, %v7525
        %v7527 = vpop.f32.mrf.mxu0
        %7528 = vdwg.mxu0
        %v7529 = vmax.f32 %v7386, 0.0
        %v7530 = vmax.f32 %v7391, 0.0
        %v7531 = vmax.f32 %v7396, 0.0
        %v7532 = vmax.f32 %v7401, 0.0
        %v7533 = vmax.f32 %v7406, 0.0
        %v7534 = vmax.f32 %v7411, 0.0
        %v7535 = vmax.f32 %v7416, 0.0
        %v7536 = vmax.f32 %v7421, 0.0
        %v7537 = vmax.f32 %v7426, 0.0
        %v7538 = vmax.f32 %v7431, 0.0
        %v7539 = vmax.f32 %v7436, 0.0
        %v7540 = vmax.f32 %v7441, 0.0
        %v7541 = vmax.f32 %v7446, 0.0
        %v7542 = vmax.f32 %v7451, 0.0
        %v7543 = vmax.f32 %v7456, 0.0
        %v7544 = vmax.f32 %v7461, 0.0
        %v7545 = vmax.f32 %v7466, 0.0
        %v7546 = vmax.f32 %v7471, 0.0
        %v7547 = vmax.f32 %v7476, 0.0
        %v7548 = vmax.f32 %v7481, 0.0
        %v7549 = vmax.f32 %v7486, 0.0
        %v7550 = vmax.f32 %v7491, 0.0
        %v7551 = vmax.f32 %v7496, 0.0
        %v7552 = vmax.f32 %v7501, 0.0
        %v7553 = vmax.f32 %v7506, 0.0
        %v7554 = vmax.f32 %v7511, 0.0
        %v7555 = vmax.f32 %v7516, 0.0
        %v7556 = vmax.f32 %v7521, 0.0
        %v7557 = vmax.f32 %v7526, 0.0
        %v7558 = vld [vmem:[%s13] sm:$0xff]
        %v7559 = vld [vmem:[%s13 + $0x8] sm:$0xff]
        %v7560 = vld [vmem:[%s13 + $0x10] sm:$0xff]
        %v7561 = vld [vmem:[%s13 + $0x18] sm:$0xff]
        %v7562 = vld [vmem:[%s13 + $0x20] sm:$0xff]
        %v7563 = vld [vmem:[%s13 + $0x28] sm:$0xff]
        %v7564 = vld [vmem:[%s13 + $0x30] sm:$0xff]
        %v7565 = vld [vmem:[%s13 + $0x38] sm:$0xff]
        %v7566 = vld [vmem:[#allocation3] sm:$0x1]
        %v7568 = vlaneseq
        %v7569 = vshrl.u32 %v7568, 7
        %v7570 = vsub.s32 0, %v7569
        %v7571 = vrot.slane %v7566, %v7570
        %7572 = vset.pattern.permute.xlu0 0
        %7573 = vperm.xlu0 %7572, %v7571
        %v7574 = vpop.permute.xlu0 %7573
        %v7577 = vsel %vm512, %v7529, 0
        %v7580 = vsel %vm512, %v7530, 0
        %v7583 = vsel %vm512, %v7531, 0
        %v7586 = vsel %vm512, %v7532, 0
        %v7589 = vsel %vm512, %v7533, 0
        %v7592 = vsel %vm512, %v7534, 0
        %v7595 = vsel %vm512, %v7535, 0
        %v7598 = vsel %vm512, %v7536, 0
        %v7601 = vsel %vm512, %v7537, 0
        %v7604 = vsel %vm512, %v7538, 0
        %v7607 = vsel %vm512, %v7539, 0
        %v7610 = vsel %vm512, %v7540, 0
        %v7613 = vsel %vm512, %v7541, 0
        %v7616 = vsel %vm512, %v7542, 0
        %v7619 = vsel %vm512, %v7543, 0
        %v7622 = vsel %vm512, %v7544, 0
        %v7625 = vsel %vm512, %v7545, 0
        %v7628 = vsel %vm512, %v7546, 0
        %v7631 = vsel %vm512, %v7547, 0
        %v7634 = vsel %vm512, %v7548, 0
        %v7637 = vsel %vm512, %v7549, 0
        %v7640 = vsel %vm512, %v7550, 0
        %v7643 = vsel %vm512, %v7551, 0
        %v7646 = vsel %vm512, %v7552, 0
        %v7649 = vsel %vm512, %v7553, 0
        %v7652 = vsel %vm512, %v7554, 0
        %v7655 = vsel %vm512, %v7555, 0
        %v7658 = vsel %vm512, %v7556, 0
        %v7661 = vsel %vm512, %v7557, 0
        %7663 = vmatprep.subr.mxu0 0.0
        %7664 = vmatpush1.msra.mxu0 0.0
        %7665 = vmatprep.subr.mxu0 0.0
        %7666 = vmatpush1.msra.mxu0 0.0
        %7667 = vmatprep.subr.mxu0 0.0
        %7668 = vmatpush1.msra.mxu0 0.0
        %7669 = vmatprep.subr.mxu0 0.0
        %7670 = vmatpush1.msra.mxu0 0.0
        %7671 = vmatprep.subr.mxu0 0.0
        %7672 = vmatpush1.msra.mxu0 0.0
        %7673 = vmatprep.subr.mxu0 0.0
        %7674 = vmatpush1.msra.mxu0 0.0
        %7675 = vmatprep.subr.mxu0 0.0
        %7676 = vmatpush1.msra.mxu0 0.0
        %7677 = vmatprep.subr.mxu0 0.0
        %7678 = vmatpush1.msra.mxu0 0.0
        %7679 = vmatprep.subr.mxu0 0.0
        %7680 = vmatpush1.msra.mxu0 %v7565
        %7681 = vmatprep.subr.mxu0 0.0
        %7682 = vmatpush1.msra.mxu0 %v7564
        %7683 = vmatprep.subr.mxu0 0.0
        %7684 = vmatpush1.msra.mxu0 %v7563
        %7685 = vmatprep.subr.mxu0 0.0
        %7686 = vmatpush1.msra.mxu0 %v7562
        %7687 = vmatprep.subr.mxu0 0.0
        %7688 = vmatpush1.msra.mxu0 %v7561
        %7689 = vmatprep.subr.mxu0 0.0
        %7690 = vmatpush1.msra.mxu0 %v7560
        %7691 = vmatprep.subr.mxu0 0.0
        %7692 = vmatpush1.msra.mxu0 %v7559
        %7693 = vmatprep.subr.mxu0 0.0
        %7694 = vmatpush1.msra.mxu0 %v7558
        %7695 = vmatprep.subr.mxu0 0.0
        %7696 = vmatpush2.msra.mxu0 0.0
        %7697 = vmatprep.subr.mxu0 0.0
        %7698 = vmatpush2.msra.mxu0 0.0
        %7699 = vmatprep.subr.mxu0 0.0
        %7700 = vmatpush2.msra.mxu0 0.0
        %7701 = vmatprep.subr.mxu0 0.0
        %7702 = vmatpush2.msra.mxu0 0.0
        %7703 = vmatprep.subr.mxu0 0.0
        %7704 = vmatpush2.msra.mxu0 0.0
        %7705 = vmatprep.subr.mxu0 0.0
        %7706 = vmatpush2.msra.mxu0 0.0
        %7707 = vmatprep.subr.mxu0 0.0
        %7708 = vmatpush2.msra.mxu0 0.0
        %7709 = vmatprep.subr.mxu0 0.0
        %7710 = vmatpush2.msra.mxu0 0.0
        %7711 = vmatprep.subr.mxu0 0.0
        %7712 = vmatpush2.msra.mxu0 0.0
        %7713 = vmatprep.subr.mxu0 0.0
        %7714 = vmatpush2.msra.mxu0 0.0
        %7715 = vmatprep.subr.mxu0 0.0
        %7716 = vmatpush2.msra.mxu0 0.0
        %7717 = vmatprep.subr.mxu0 0.0
        %7718 = vmatpush2.msra.mxu0 0.0
        %7719 = vmatprep.subr.mxu0 0.0
        %7720 = vmatpush2.msra.mxu0 0.0
        %7721 = vmatprep.subr.mxu0 0.0
        %7722 = vmatpush2.msra.mxu0 0.0
        %7723 = vmatprep.subr.mxu0 0.0
        %7724 = vmatpush2.msra.mxu0 0.0
        %7725 = vmatprep.subr.mxu0 0.0
        %7726 = vmatpush2.msra.mxu0 0.0
        %7727 = vmatprep.mubr.f32.mxu0 0.0
        %7728 = vmatmul.mubr.f32.gmra.mxu0 %v7577
        %v7729 = vpop.f32.mrf.mxu0
        %v7730 = vadd.f32 %v7574, %v7729
        %v7731 = vpop.f32.mrf.mxu0
        %7732 = vmatprep.mubr.f32.mxu0 0.0
        %7733 = vmatmul.mubr.f32.gmra.mxu0 %v7580
        %v7734 = vpop.f32.mrf.mxu0
        %v7735 = vadd.f32 %v7574, %v7734
        %v7736 = vpop.f32.mrf.mxu0
        %7737 = vmatprep.mubr.f32.mxu0 0.0
        %7738 = vmatmul.mubr.f32.gmra.mxu0 %v7583
        %v7739 = vpop.f32.mrf.mxu0
        %v7740 = vadd.f32 %v7574, %v7739
        %v7741 = vpop.f32.mrf.mxu0
        %7742 = vmatprep.mubr.f32.mxu0 0.0
        %7743 = vmatmul.mubr.f32.gmra.mxu0 %v7586
        %v7744 = vpop.f32.mrf.mxu0
        %v7745 = vadd.f32 %v7574, %v7744
        %v7746 = vpop.f32.mrf.mxu0
        %7747 = vmatprep.mubr.f32.mxu0 0.0
        %7748 = vmatmul.mubr.f32.gmra.mxu0 %v7589
        %v7749 = vpop.f32.mrf.mxu0
        %v7750 = vadd.f32 %v7574, %v7749
        %v7751 = vpop.f32.mrf.mxu0
        %7752 = vmatprep.mubr.f32.mxu0 0.0
        %7753 = vmatmul.mubr.f32.gmra.mxu0 %v7592
        %v7754 = vpop.f32.mrf.mxu0
        %v7755 = vadd.f32 %v7574, %v7754
        %v7756 = vpop.f32.mrf.mxu0
        %7757 = vmatprep.mubr.f32.mxu0 0.0
        %7758 = vmatmul.mubr.f32.gmra.mxu0 %v7595
        %v7759 = vpop.f32.mrf.mxu0
        %v7760 = vadd.f32 %v7574, %v7759
        %v7761 = vpop.f32.mrf.mxu0
        %7762 = vmatprep.mubr.f32.mxu0 0.0
        %7763 = vmatmul.mubr.f32.gmra.mxu0 %v7598
        %v7764 = vpop.f32.mrf.mxu0
        %v7765 = vadd.f32 %v7574, %v7764
        %v7766 = vpop.f32.mrf.mxu0
        %7767 = vmatprep.mubr.f32.mxu0 0.0
        %7768 = vmatmul.mubr.f32.gmra.mxu0 %v7601
        %v7769 = vpop.f32.mrf.mxu0
        %v7770 = vadd.f32 %v7574, %v7769
        %v7771 = vpop.f32.mrf.mxu0
        %7772 = vmatprep.mubr.f32.mxu0 0.0
        %7773 = vmatmul.mubr.f32.gmra.mxu0 %v7604
        %v7774 = vpop.f32.mrf.mxu0
        %v7775 = vadd.f32 %v7574, %v7774
        %v7776 = vpop.f32.mrf.mxu0
        %7777 = vmatprep.mubr.f32.mxu0 0.0
        %7778 = vmatmul.mubr.f32.gmra.mxu0 %v7607
        %v7779 = vpop.f32.mrf.mxu0
        %v7780 = vadd.f32 %v7574, %v7779
        %v7781 = vpop.f32.mrf.mxu0
        %7782 = vmatprep.mubr.f32.mxu0 0.0
        %7783 = vmatmul.mubr.f32.gmra.mxu0 %v7610
        %v7784 = vpop.f32.mrf.mxu0
        %v7785 = vadd.f32 %v7574, %v7784
        %v7786 = vpop.f32.mrf.mxu0
        %7787 = vmatprep.mubr.f32.mxu0 0.0
        %7788 = vmatmul.mubr.f32.gmra.mxu0 %v7613
        %v7789 = vpop.f32.mrf.mxu0
        %v7790 = vadd.f32 %v7574, %v7789
        %v7791 = vpop.f32.mrf.mxu0
        %7792 = vmatprep.mubr.f32.mxu0 0.0
        %7793 = vmatmul.mubr.f32.gmra.mxu0 %v7616
        %v7794 = vpop.f32.mrf.mxu0
        %v7795 = vadd.f32 %v7574, %v7794
        %v7796 = vpop.f32.mrf.mxu0
        %7797 = vmatprep.mubr.f32.mxu0 0.0
        %7798 = vmatmul.mubr.f32.gmra.mxu0 %v7619
        %v7799 = vpop.f32.mrf.mxu0
        %v7800 = vadd.f32 %v7574, %v7799
        %v7801 = vpop.f32.mrf.mxu0
        %7802 = vmatprep.mubr.f32.mxu0 0.0
        %7803 = vmatmul.mubr.f32.gmra.mxu0 %v7622
        %v7804 = vpop.f32.mrf.mxu0
        %v7805 = vadd.f32 %v7574, %v7804
        %v7806 = vpop.f32.mrf.mxu0
        %7807 = vmatprep.mubr.f32.mxu0 0.0
        %7808 = vmatmul.mubr.f32.gmra.mxu0 %v7625
        %v7809 = vpop.f32.mrf.mxu0
        %v7810 = vadd.f32 %v7574, %v7809
        %v7811 = vpop.f32.mrf.mxu0
        %7812 = vmatprep.mubr.f32.mxu0 0.0
        %7813 = vmatmul.mubr.f32.gmra.mxu0 %v7628
        %v7814 = vpop.f32.mrf.mxu0
        %v7815 = vadd.f32 %v7574, %v7814
        %v7816 = vpop.f32.mrf.mxu0
        %7817 = vmatprep.mubr.f32.mxu0 0.0
        %7818 = vmatmul.mubr.f32.gmra.mxu0 %v7631
        %v7819 = vpop.f32.mrf.mxu0
        %v7820 = vadd.f32 %v7574, %v7819
        %v7821 = vpop.f32.mrf.mxu0
        %7822 = vmatprep.mubr.f32.mxu0 0.0
        %7823 = vmatmul.mubr.f32.gmra.mxu0 %v7634
        %v7824 = vpop.f32.mrf.mxu0
        %v7825 = vadd.f32 %v7574, %v7824
        %v7826 = vpop.f32.mrf.mxu0
        %7827 = vmatprep.mubr.f32.mxu0 0.0
        %7828 = vmatmul.mubr.f32.gmra.mxu0 %v7637
        %v7829 = vpop.f32.mrf.mxu0
        %v7830 = vadd.f32 %v7574, %v7829
        %v7831 = vpop.f32.mrf.mxu0
        %7832 = vmatprep.mubr.f32.mxu0 0.0
        %7833 = vmatmul.mubr.f32.gmra.mxu0 %v7640
        %v7834 = vpop.f32.mrf.mxu0
        %v7835 = vadd.f32 %v7574, %v7834
        %v7836 = vpop.f32.mrf.mxu0
        %7837 = vmatprep.mubr.f32.mxu0 0.0
        %7838 = vmatmul.mubr.f32.gmra.mxu0 %v7643
        %v7839 = vpop.f32.mrf.mxu0
        %v7840 = vadd.f32 %v7574, %v7839
        %v7841 = vpop.f32.mrf.mxu0
        %7842 = vmatprep.mubr.f32.mxu0 0.0
        %7843 = vmatmul.mubr.f32.gmra.mxu0 %v7646
        %v7844 = vpop.f32.mrf.mxu0
        %v7845 = vadd.f32 %v7574, %v7844
        %v7846 = vpop.f32.mrf.mxu0
        %7847 = vmatprep.mubr.f32.mxu0 0.0
        %7848 = vmatmul.mubr.f32.gmra.mxu0 %v7649
        %v7849 = vpop.f32.mrf.mxu0
        %v7850 = vadd.f32 %v7574, %v7849
        %v7851 = vpop.f32.mrf.mxu0
        %7852 = vmatprep.mubr.f32.mxu0 0.0
        %7853 = vmatmul.mubr.f32.gmra.mxu0 %v7652
        %v7854 = vpop.f32.mrf.mxu0
        %v7855 = vadd.f32 %v7574, %v7854
        %v7856 = vpop.f32.mrf.mxu0
        %7857 = vmatprep.mubr.f32.mxu0 0.0
        %7858 = vmatmul.mubr.f32.gmra.mxu0 %v7655
        %v7859 = vpop.f32.mrf.mxu0
        %v7860 = vadd.f32 %v7574, %v7859
        %v7861 = vpop.f32.mrf.mxu0
        %7862 = vmatprep.mubr.f32.mxu0 0.0
        %7863 = vmatmul.mubr.f32.gmra.mxu0 %v7658
        %v7864 = vpop.f32.mrf.mxu0
        %v7865 = vadd.f32 %v7574, %v7864
        %v7866 = vpop.f32.mrf.mxu0
        %7867 = vmatprep.mubr.f32.mxu0 0.0
        %7868 = vmatmul.mubr.f32.gmra.mxu0 %v7661
        %v7869 = vpop.f32.mrf.mxu0
        %v7870 = vadd.f32 %v7574, %v7869
        %v7871 = vpop.f32.mrf.mxu0
        %7872 = vdwg.mxu0
        %v7873 = vxor.u32 %v7730, 2147483648
        %v7874 = vxor.u32 %v7735, 2147483648
        %v7875 = vxor.u32 %v7740, 2147483648
        %v7876 = vxor.u32 %v7745, 2147483648
        %v7877 = vxor.u32 %v7750, 2147483648
        %v7878 = vxor.u32 %v7755, 2147483648
        %v7879 = vxor.u32 %v7760, 2147483648
        %v7880 = vxor.u32 %v7765, 2147483648
        %v7881 = vxor.u32 %v7770, 2147483648
        %v7882 = vxor.u32 %v7775, 2147483648
        %v7883 = vxor.u32 %v7780, 2147483648
        %v7884 = vxor.u32 %v7785, 2147483648
        %v7885 = vxor.u32 %v7790, 2147483648
        %v7886 = vxor.u32 %v7795, 2147483648
        %v7887 = vxor.u32 %v7800, 2147483648
        %v7888 = vxor.u32 %v7805, 2147483648
        %v7889 = vxor.u32 %v7810, 2147483648
        %v7890 = vxor.u32 %v7815, 2147483648
        %v7891 = vxor.u32 %v7820, 2147483648
        %v7892 = vxor.u32 %v7825, 2147483648
        %v7893 = vxor.u32 %v7830, 2147483648
        %v7894 = vxor.u32 %v7835, 2147483648
        %v7895 = vxor.u32 %v7840, 2147483648
        %v7896 = vxor.u32 %v7845, 2147483648
        %v7897 = vxor.u32 %v7850, 2147483648
        %v7898 = vxor.u32 %v7855, 2147483648
        %v7899 = vxor.u32 %v7860, 2147483648
        %v7900 = vxor.u32 %v7865, 2147483648
        %v7901 = vxor.u32 %v7870, 2147483648
        %v7902 = vmul.f32 %v7873, 1.442695
        %v7903 = vpow.pop %v7902
        %v7904 = vmul.f32 %v7874, 1.442695
        %v7905 = vpow.pop %v7904
        %v7906 = vmul.f32 %v7875, 1.442695
        %v7907 = vpow.pop %v7906
        %v7908 = vmul.f32 %v7876, 1.442695
        %v7909 = vpow.pop %v7908
        %v7910 = vmul.f32 %v7877, 1.442695
        %v7911 = vpow.pop %v7910
        %v7912 = vmul.f32 %v7878, 1.442695
        %v7913 = vpow.pop %v7912
        %v7914 = vmul.f32 %v7879, 1.442695
        %v7915 = vpow.pop %v7914
        %v7916 = vmul.f32 %v7880, 1.442695
        %v7917 = vpow.pop %v7916
        %v7918 = vmul.f32 %v7881, 1.442695
        %v7919 = vpow.pop %v7918
        %v7920 = vmul.f32 %v7882, 1.442695
        %v7921 = vpow.pop %v7920
        %v7922 = vmul.f32 %v7883, 1.442695
        %v7923 = vpow.pop %v7922
        %v7924 = vmul.f32 %v7884, 1.442695
        %v7925 = vpow.pop %v7924
        %v7926 = vmul.f32 %v7885, 1.442695
        %v7927 = vpow.pop %v7926
        %v7928 = vmul.f32 %v7886, 1.442695
        %v7929 = vpow.pop %v7928
        %v7930 = vmul.f32 %v7887, 1.442695
        %v7931 = vpow.pop %v7930
        %v7932 = vmul.f32 %v7888, 1.442695
        %v7933 = vpow.pop %v7932
        %v7934 = vmul.f32 %v7889, 1.442695
        %v7935 = vpow.pop %v7934
        %v7936 = vmul.f32 %v7890, 1.442695
        %v7937 = vpow.pop %v7936
        %v7938 = vmul.f32 %v7891, 1.442695
        %v7939 = vpow.pop %v7938
        %v7940 = vmul.f32 %v7892, 1.442695
        %v7941 = vpow.pop %v7940
        %v7942 = vmul.f32 %v7893, 1.442695
        %v7943 = vpow.pop %v7942
        %v7944 = vmul.f32 %v7894, 1.442695
        %v7945 = vpow.pop %v7944
        %v7946 = vmul.f32 %v7895, 1.442695
        %v7947 = vpow.pop %v7946
        %v7948 = vmul.f32 %v7896, 1.442695
        %v7949 = vpow.pop %v7948
        %v7950 = vmul.f32 %v7897, 1.442695
        %v7951 = vpow.pop %v7950
        %v7952 = vmul.f32 %v7898, 1.442695
        %v7953 = vpow.pop %v7952
        %v7954 = vmul.f32 %v7899, 1.442695
        %v7955 = vpow.pop %v7954
        %v7956 = vmul.f32 %v7900, 1.442695
        %v7957 = vpow.pop %v7956
        %v7958 = vmul.f32 %v7901, 1.442695
        %v7959 = vpow.pop %v7958
        %v7960 = vadd.f32 %v7903, 1.0
        %v7961 = vadd.f32 %v7905, 1.0
        %v7962 = vadd.f32 %v7907, 1.0
        %v7963 = vadd.f32 %v7909, 1.0
        %v7964 = vadd.f32 %v7911, 1.0
        %v7965 = vadd.f32 %v7913, 1.0
        %v7966 = vadd.f32 %v7915, 1.0
        %v7967 = vadd.f32 %v7917, 1.0
        %v7968 = vadd.f32 %v7919, 1.0
        %v7969 = vadd.f32 %v7921, 1.0
        %v7970 = vadd.f32 %v7923, 1.0
        %v7971 = vadd.f32 %v7925, 1.0
        %v7972 = vadd.f32 %v7927, 1.0
        %v7973 = vadd.f32 %v7929, 1.0
        %v7974 = vadd.f32 %v7931, 1.0
        %v7975 = vadd.f32 %v7933, 1.0
        %v7976 = vadd.f32 %v7935, 1.0
        %v7977 = vadd.f32 %v7937, 1.0
        %v7978 = vadd.f32 %v7939, 1.0
        %v7979 = vadd.f32 %v7941, 1.0
        %v7980 = vadd.f32 %v7943, 1.0
        %v7981 = vadd.f32 %v7945, 1.0
        %v7982 = vadd.f32 %v7947, 1.0
        %v7983 = vadd.f32 %v7949, 1.0
        %v7984 = vadd.f32 %v7951, 1.0
        %v7985 = vadd.f32 %v7953, 1.0
        %v7986 = vadd.f32 %v7955, 1.0
        %v7987 = vadd.f32 %v7957, 1.0
        %v7988 = vadd.f32 %v7959, 1.0
        %v7989 = vrcp.pop %v7960
        %v7990 = vmul.f32 1.0, %v7989
        %v7991 = vrcp.pop %v7961
        %v7992 = vmul.f32 1.0, %v7991
        %v7993 = vrcp.pop %v7962
        %v7994 = vmul.f32 1.0, %v7993
        %v7995 = vrcp.pop %v7963
        %v7996 = vmul.f32 1.0, %v7995
        %v7997 = vrcp.pop %v7964
        %v7998 = vmul.f32 1.0, %v7997
        %v7999 = vrcp.pop %v7965
        %v8000 = vmul.f32 1.0, %v7999
        %v8001 = vrcp.pop %v7966
        %v8002 = vmul.f32 1.0, %v8001
        %v8003 = vrcp.pop %v7967
        %v8004 = vmul.f32 1.0, %v8003
        %v8005 = vrcp.pop %v7968
        %v8006 = vmul.f32 1.0, %v8005
        %v8007 = vrcp.pop %v7969
        %v8008 = vmul.f32 1.0, %v8007
        %v8009 = vrcp.pop %v7970
        %v8010 = vmul.f32 1.0, %v8009
        %v8011 = vrcp.pop %v7971
        %v8012 = vmul.f32 1.0, %v8011
        %v8013 = vrcp.pop %v7972
        %v8014 = vmul.f32 1.0, %v8013
        %v8015 = vrcp.pop %v7973
        %v8016 = vmul.f32 1.0, %v8015
        %v8017 = vrcp.pop %v7974
        %v8018 = vmul.f32 1.0, %v8017
        %v8019 = vrcp.pop %v7975
        %v8020 = vmul.f32 1.0, %v8019
        %v8021 = vrcp.pop %v7976
        %v8022 = vmul.f32 1.0, %v8021
        %v8023 = vrcp.pop %v7977
        %v8024 = vmul.f32 1.0, %v8023
        %v8025 = vrcp.pop %v7978
        %v8026 = vmul.f32 1.0, %v8025
        %v8027 = vrcp.pop %v7979
        %v8028 = vmul.f32 1.0, %v8027
        %v8029 = vrcp.pop %v7980
        %v8030 = vmul.f32 1.0, %v8029
        %v8031 = vrcp.pop %v7981
        %v8032 = vmul.f32 1.0, %v8031
        %v8033 = vrcp.pop %v7982
        %v8034 = vmul.f32 1.0, %v8033
        %v8035 = vrcp.pop %v7983
        %v8036 = vmul.f32 1.0, %v8035
        %v8037 = vrcp.pop %v7984
        %v8038 = vmul.f32 1.0, %v8037
        %v8039 = vrcp.pop %v7985
        %v8040 = vmul.f32 1.0, %v8039
        %v8041 = vrcp.pop %v7986
        %v8042 = vmul.f32 1.0, %v8041
        %v8043 = vrcp.pop %v7987
        %v8044 = vmul.f32 1.0, %v8043
        %v8045 = vrcp.pop %v7988
        %v8046 = vmul.f32 1.0, %v8045
        %vm8047 = vcmask 31744
        %8048 = vst.msk [vmem:[%s511] sm:$0xff] %vm8047, %v7990
        %8049 = vst.msk [vmem:[%s511 + $0x8] sm:$0xff] %vm8047, %v7992
        %8050 = vst.msk [vmem:[%s511 + $0x10] sm:$0xff] %vm8047, %v7994
        %8051 = vst.msk [vmem:[%s511 + $0x18] sm:$0xff] %vm8047, %v7996
        %8052 = vst.msk [vmem:[%s511 + $0x20] sm:$0xff] %vm8047, %v7998
        %8053 = vst.msk [vmem:[%s511 + $0x28] sm:$0xff] %vm8047, %v8000
        %8054 = vst.msk [vmem:[%s511 + $0x30] sm:$0xff] %vm8047, %v8002
        %8055 = vst.msk [vmem:[%s511 + $0x38] sm:$0xff] %vm8047, %v8004
        %8056 = vst.msk [vmem:[%s511 + $0x40] sm:$0xff] %vm8047, %v8006
        %8057 = vst.msk [vmem:[%s511 + $0x48] sm:$0xff] %vm8047, %v8008
        %8058 = vst.msk [vmem:[%s511 + $0x50] sm:$0xff] %vm8047, %v8010
        %8059 = vst.msk [vmem:[%s511 + $0x58] sm:$0xff] %vm8047, %v8012
        %8060 = vst.msk [vmem:[%s511 + $0x60] sm:$0xff] %vm8047, %v8014
        %8061 = vst.msk [vmem:[%s511 + $0x68] sm:$0xff] %vm8047, %v8016
        %8062 = vst.msk [vmem:[%s511 + $0x70] sm:$0xff] %vm8047, %v8018
        %8063 = vst.msk [vmem:[%s511 + $0x78] sm:$0xff] %vm8047, %v8020
        %8064 = vst.msk [vmem:[%s511 + $0x80] sm:$0xff] %vm8047, %v8022
        %8065 = vst.msk [vmem:[%s511 + $0x88] sm:$0xff] %vm8047, %v8024
        %8066 = vst.msk [vmem:[%s511 + $0x90] sm:$0xff] %vm8047, %v8026
        %8067 = vst.msk [vmem:[%s511 + $0x98] sm:$0xff] %vm8047, %v8028
        %8068 = vst.msk [vmem:[%s511 + $0xa0] sm:$0xff] %vm8047, %v8030
        %8069 = vst.msk [vmem:[%s511 + $0xa8] sm:$0xff] %vm8047, %v8032
        %8070 = vst.msk [vmem:[%s511 + $0xb0] sm:$0xff] %vm8047, %v8034
        %8071 = vst.msk [vmem:[%s511 + $0xb8] sm:$0xff] %vm8047, %v8036
        %8072 = vst.msk [vmem:[%s511 + $0xc0] sm:$0xff] %vm8047, %v8038
        %8073 = vst.msk [vmem:[%s511 + $0xc8] sm:$0xff] %vm8047, %v8040
        %8074 = vst.msk [vmem:[%s511 + $0xd0] sm:$0xff] %vm8047, %v8042
        %8075 = vst.msk [vmem:[%s511 + $0xd8] sm:$0xff] %vm8047, %v8044
        %vm8076 = vcmask 24576
        %8077 = vst.msk [vmem:[%s511 + $0xe0] sm:$0x1] %vm8076, %v8046
        %p8078 = scmp.lt.s32.totalorder %s29, 1
        %s8079 = scalar_select %p8078, %s29, 1
        %s8080 = smul.addr %s8079, 29
        %s8081 = smul.addr %s8080, 8
        %s8082 = scalar_lea.vmem %s15, %s8081
        // Predicated region
        $region85: #{model_forward.1} parent=79 // pred_check
          %p8083 = pneg %p367
        $region86: #{model_forward.1} parent=79 // pred_check_branch
          %8085 = sbr.rel (%p8083) target = $region88
        $region87: #{model_forward.1} parent=79 // pred_region
          _
        $region88: #{model_forward.1} parent=79 // pred_fallthru
          _
      $region80: #{model_forward.1} parent=5 // pred_fallthru
        _
      %p8086 = scmp.le.s32.totalorder 2, %s24
      // Predicated region
      $region89: #{model_forward.1} parent=5 // pred_check
        %p8087 = pneg %p8086
      $region90: #{model_forward.1} parent=5 // pred_check_branch
        %8089 = sbr.rel (%p8087) target = $region92
      $region91: #{model_forward.1} parent=5 // pred_region
        %s8090 = ssub.s32 %s24, 2
        // Predicated region
        $region93: #{model_forward.1} parent=91 // pred_check
          %p8091 = pneg %p373
        $region94: #{model_forward.1} parent=91 // pred_check_branch
          %8093 = sbr.rel (%p8091) target = $region96
        $region95: #{model_forward.1} parent=91 // pred_region
          %p8094 = scmp.lt.s32.totalorder %s30, 1
          %s8095 = scalar_select %p8094, %s30, 1
          %s8096 = smul.addr %s8095, 29
          %s8097 = smul.addr %s8096, 8
          %s8098 = scalar_lea.vmem %s15, %s8097
        $region96: #{model_forward.1} parent=91 // pred_fallthru
          _
      $region92: #{model_forward.1} parent=5 // pred_fallthru
        _
    $region6: #{model_forward.1} parent=1 // loop_footer
      %s28 = sadd.s32 1, %s24
    $region7: #{model_forward.1} parent=1 // loop_footer_branch
      %23 = sbr.rel target = $region3
    $region8: #{model_forward.1} parent=1 // loop_exit
      _
    %8099 = vsyncpa [#allocation5], 1
    %s8100 = scalar_lea.sflag [#allocation5], 1
    %8101 = vsyncpa %s8100, 1

</llo_original>
